<compile_context>
chip_gen: v6e
topology: v6e:2x2x1
jax: 0.10.0
libtpu: 0.0.40
codegen_flags: <defaults>
</compile_context>

<pallas_src>
import math
import jax
import jax.numpy as jnp
from jax import lax
from jax.experimental import pallas as pl
from jax.experimental.pallas import tpu as pltpu
import numpy as np

# ---------------- config (MambaConfig with dim=32) ----------------
DIM = 32                      # config.dim
D_STATE = 16                  # config.d_state
EXPAND = 2                    # config.expand_factor
D_CONV = 4                    # config.d_conv
DT_RANK = math.ceil(DIM / 16) # 'auto' -> 2
D_INNER = EXPAND * DIM        # 64
DN = D_INNER * D_STATE        # 1024 = lane-dense flattened state width
B = 2
L = 8


def _silu(v):
    return v * (1.0 / (1.0 + jnp.exp(-v)))


def _softplus(v):
    # numerically stable softplus using only exp/log (Mosaic-friendly)
    return jnp.maximum(v, 0.0) + jnp.log(1.0 + jnp.exp(-jnp.abs(v)))


# ------------------------- Pallas kernel ---------------------------
def _make_kernel(BB):
    M = L * BB   # rows per grid step, time-major / batch-minor

    def kernel(x_ref, win_ref, convw_ref, convb_ref, wxdt_ref, wdt_ref, bdt_ref,
               aflat_ref, dpar_ref, wout_ref, erep_ref, ered_ref,
               wbrep_ref, wcrep_ref, out_ref,
               dA_ref, bx_ref, crep_ref):
        f32 = jnp.float32
        x = x_ref[...]                                                 # (M, DIM)

        # in_proj (no bias), split into x / z branches
        xz = jnp.dot(x, win_ref[...], preferred_element_type=f32)      # (M, 2*D_INNER)
        xin = xz[:, :D_INNER]
        z = xz[:, D_INNER:]

        # causal depthwise conv1d along time.  Rows are time-major, so tap k
        # is a uniform (D_CONV-1-k)*BB row shift; BB % 8 == 0 makes every shift
        # a whole-vreg sublane move and the zero block the causal left pad.
        acc = jnp.broadcast_to(convb_ref[...], (M, D_INNER))           # hoisted bias
        for k in range(D_CONV):
            s = (D_CONV - 1 - k) * BB
            if s == 0:
                shifted = xin
            else:
                shifted = jnp.concatenate(
                    [jnp.zeros((s, D_INNER), f32), xin[:M - s, :]], axis=0)
            acc = acc + convw_ref[k:k + 1, :] * shifted
        xc = _silu(acc)                                                # (M, D_INNER)

        # x_proj (dt part only; B/C parts are pre-fused into WB_rep / WC_rep)
        dlt = jnp.dot(xc, wxdt_ref[...], preferred_element_type=f32)   # (M, DT_RANK)

        # dt_proj: K == DT_RANK == 2 -> VPU broadcast-FMAs, skip the MXU
        dpre = jnp.broadcast_to(bdt_ref[...], (M, D_INNER))            # hoisted bias
        for r in range(DT_RANK):
            dpre = dpre + dlt[:, r:r + 1] * wdt_ref[r:r + 1, :]
        delta = _softplus(dpre)                                        # (M, D_INNER)

        # discretize in lane-dense flattened layout (M, DN), i = n*D_INNER + d.
        # A_flat = -exp(A_log) is precomputed in the wrapper.  Results go
        # straight into VMEM scratch so no (M, DN) tensor stays live as a
        # value across the scan (short live ranges, no vreg spills).
        a_flat = aflat_ref[...]                                        # (1, DN)
        dA_ref[...] = jnp.exp(
            jnp.dot(delta, erep_ref[...], preferred_element_type=f32) * a_flat)
        bx_ref[...] = (jnp.dot(delta * xc, erep_ref[...], preferred_element_type=f32)
                       * jnp.dot(xc, wbrep_ref[...], preferred_element_type=f32))
        crep_ref[...] = jnp.dot(xc, wcrep_ref[...], preferred_element_type=f32)

        # selective scan (== PScan forward): unrolled over L, h is a (BB, DN)
        # value, deltaA/BX/Crep sliced per step from VMEM (8-row aligned).
        # y_t = sum_n h_t * C_t is fused per step via one small MXU reduction.
        h = bx_ref[0:BB, :]
        y_parts = [jnp.dot(h * crep_ref[0:BB, :], ered_ref[...],
                           preferred_element_type=f32)]                # (BB, D_INNER)
        for t in range(1, L):
            r0 = t * BB
            h = dA_ref[r0:r0 + BB, :] * h + bx_ref[r0:r0 + BB, :]
            y_parts.append(jnp.dot(h * crep_ref[r0:r0 + BB, :], ered_ref[...],
                                   preferred_element_type=f32))
        y = jnp.concatenate(y_parts, axis=0)                           # (M, D_INNER)
        y = y + dpar_ref[...] * xc                                     # D * x skip

        # gate with silu(z), then out_proj
        out = jnp.dot(y * _silu(z), wout_ref[...], preferred_element_type=f32)  # (M, DIM)
        out_ref[...] = out.astype(out_ref.dtype)

    return kernel


# --------------------------- wrapper -------------------------------
def mamba_block(x, params):
    (W_in, conv_w, conv_b, W_x, W_dt, b_dt, A_log, D_par, W_out) = params
    Bsz, Lseq, _ = x.shape
    assert Lseq == L

    # --- BB policy: multiple of 8 (whole-vreg scan slices / conv shifts),
    #     grow toward M = L*BB >= 128 when the batch allows, and keep nb >= 2
    #     grid steps so v7x megacore ("parallel" axis) has work for both TCs.
    BB = 8
    while L * BB < 128 and Bsz >= 4 * BB:
        BB *= 2
    nb = max(2, -(-Bsz // BB))          # ceil-div, at least 2 grid steps
    Bpad = nb * BB
    M = L * BB

    # zero-pad the batch (padded rows are finite garbage, sliced off below)
    if Bpad != Bsz:
        x = jnp.concatenate(
            [x, jnp.zeros((Bpad - Bsz, L, DIM), x.dtype)], axis=0)

    # split x_proj weight; pre-fuse the 0/1 state replication of B and C into
    # the weights (pure column replication -> bitwise exact).
    Wx_dt = W_x[:, :DT_RANK]
    Wx_B = W_x[:, DT_RANK:DT_RANK + D_STATE]
    Wx_C = W_x[:, DT_RANK + D_STATE:]
    ii = jnp.arange(DN)
    E_rep = (ii[None, :] % D_INNER == jnp.arange(D_INNER)[:, None]).astype(jnp.float32)   # (D_INNER, DN)
    F_rep = (ii[None, :] // D_INNER == jnp.arange(D_STATE)[:, None]).astype(jnp.float32)  # (D_STATE, DN)
    E_red = E_rep.T                                                                       # (DN, D_INNER)
    WB_rep = Wx_B @ F_rep                                                                 # (D_INNER, DN)
    WC_rep = Wx_C @ F_rep                                                                 # (D_INNER, DN)

    # hoist A = -exp(A_log), flattened n-major / d-minor: [0, n*D_INNER + d]
    A_flat = (-jnp.exp(A_log)).T.reshape(1, DN)

    # reorder activations: rows = (block, time, batch-within-block), time-major
    x2 = x.reshape(nb, BB, L, DIM).transpose(0, 2, 1, 3).reshape(nb * M, DIM)

    def wspec(a):
        return pl.BlockSpec(a.shape, lambda i: (0, 0))

    grid_spec = pltpu.PrefetchScalarGridSpec(
        num_scalar_prefetch=0,
        grid=(nb,),
        in_specs=[
            pl.BlockSpec((M, DIM), lambda i: (i, 0)),   # x (reordered 2-D slab)
            wspec(W_in), wspec(conv_w), wspec(conv_b),
            wspec(Wx_dt), wspec(W_dt), wspec(b_dt),
            wspec(A_flat), wspec(D_par), wspec(W_out),
            wspec(E_rep), wspec(E_red), wspec(WB_rep), wspec(WC_rep),
        ],
        out_specs=pl.BlockSpec((M, DIM), lambda i: (i, 0)),
        # deltaA / BX / C-replicated live in explicit VMEM scratch (~3*M*4KiB)
        scratch_shapes=[pltpu.VMEM((M, DN), jnp.float32)] * 3,
    )

    out2 = pl.pallas_call(
        _make_kernel(BB),
        out_shape=jax.ShapeDtypeStruct((nb * M, DIM), jnp.float32),
        grid_spec=grid_spec,
        compiler_params=pltpu.CompilerParams(dimension_semantics=("parallel",)),
    )(x2, W_in, conv_w, conv_b, Wx_dt, W_dt, b_dt, A_flat, D_par, W_out,
      E_rep, E_red, WB_rep, WC_rep)

    out = out2.reshape(nb, L, BB, DIM).transpose(0, 2, 1, 3).reshape(Bpad, L, DIM)
    return out[:Bsz]


# ---------------------- pure-JAX reference -------------------------
def ref_forward(x, params):
    (W_in, conv_w, conv_b, W_x, W_dt, b_dt, A_log, D_par, W_out) = params
    Bsz, Lseq, _ = x.shape
    xz = x @ W_in
    xin, z = xz[..., :D_INNER], xz[..., D_INNER:]
    xpad = jnp.pad(xin, ((0, 0), (D_CONV - 1, 0), (0, 0)))
    xc = jnp.zeros((Bsz, Lseq, D_INNER), jnp.float32) + conv_b
    for k in range(D_CONV):
        xc = xc + conv_w[k] * xpad[:, k:k + Lseq, :]
    xc = _silu(xc)
    dbc = xc @ W_x
    dlt = dbc[..., :DT_RANK]
    Bm = dbc[..., DT_RANK:DT_RANK + D_STATE]
    Cm = dbc[..., DT_RANK + D_STATE:]
    delta = _softplus(dlt @ W_dt + b_dt)
    A = -jnp.exp(A_log)
    deltaA = jnp.exp(delta[..., None] * A)
    BX = (delta[..., None] * Bm[:, :, None, :]) * xc[..., None]

    def step(h, inp):
        da, bx = inp
        h = da * h + bx
        return h, h

    _, hs = lax.scan(step, jnp.zeros((Bsz, D_INNER, D_STATE), jnp.float32),
                     (deltaA.transpose(1, 0, 2, 3), BX.transpose(1, 0, 2, 3)))
    hs = hs.transpose(1, 0, 2, 3)
    y = jnp.sum(hs * Cm[:, :, None, :], axis=-1) + D_par * xc
    return (y * _silu(z)) @ W_out


# ----------------------------- main --------------------------------
if __name__ == "__main__":
    key = jax.random.PRNGKey(0)
    ks = jax.random.split(key, 8)

    # deterministic synthetic parameters (shapes follow MambaBlock.__init__)
    W_in = jax.random.normal(ks[0], (DIM, 2 * D_INNER), jnp.float32) / math.sqrt(DIM)
    conv_w = jax.random.normal(ks[1], (D_CONV, D_INNER), jnp.float32) / math.sqrt(D_CONV)
    conv_b = jax.random.normal(ks[2], (1, D_INNER), jnp.float32) * 0.1
    W_x = jax.random.normal(ks[3], (D_INNER, DT_RANK + 2 * D_STATE), jnp.float32) / math.sqrt(D_INNER)

    dt_init_std = DT_RANK ** -0.5  # dt_init == 'random'
    W_dt = jax.random.uniform(ks[4], (DT_RANK, D_INNER), jnp.float32, -dt_init_std, dt_init_std)
    dt = jnp.exp(jax.random.uniform(ks[5], (D_INNER,), jnp.float32)
                 * (math.log(0.1) - math.log(0.001)) + math.log(0.001))
    dt = jnp.maximum(dt, 1e-4)
    b_dt = (dt + jnp.log(-jnp.expm1(-dt))).reshape(1, D_INNER).astype(jnp.float32)

    A_log = jnp.log(jnp.tile(jnp.arange(1, D_STATE + 1, dtype=jnp.float32), (D_INNER, 1)))
    D_par = jnp.ones((1, D_INNER), jnp.float32)
    W_out = jax.random.normal(ks[6], (D_INNER, DIM), jnp.float32) / math.sqrt(D_INNER)

    params = (W_in, conv_w, conv_b, W_x, W_dt, b_dt, A_log, D_par, W_out)

    x = jax.random.normal(ks[7], (B, L, DIM), jnp.float32)

    out = mamba_block(x, params)
    out = jax.block_until_ready(out)

    ref = ref_forward(x, params)
    np.testing.assert_allclose(np.asarray(out), np.asarray(ref), rtol=1e-3, atol=1e-3)
    print("KERNEL_OK")
</pallas_src>

<mosaic_0001>
module attributes {stable_mosaic.version = 11 : i64} {
  func.func @kernel(%arg0: i32, %arg1: memref<64x32xf32, #tpu.memory_space<vmem>>, %arg2: memref<32x128xf32, #tpu.memory_space<vmem>>, %arg3: memref<4x64xf32, #tpu.memory_space<vmem>>, %arg4: memref<1x64xf32, #tpu.memory_space<vmem>>, %arg5: memref<64x2xf32, #tpu.memory_space<vmem>>, %arg6: memref<2x64xf32, #tpu.memory_space<vmem>>, %arg7: memref<1x64xf32, #tpu.memory_space<vmem>>, %arg8: memref<1x1024xf32, #tpu.memory_space<vmem>>, %arg9: memref<1x64xf32, #tpu.memory_space<vmem>>, %arg10: memref<64x32xf32, #tpu.memory_space<vmem>>, %arg11: memref<64x1024xf32, #tpu.memory_space<vmem>>, %arg12: memref<1024x64xf32, #tpu.memory_space<vmem>>, %arg13: memref<64x1024xf32, #tpu.memory_space<vmem>>, %arg14: memref<64x1024xf32, #tpu.memory_space<vmem>>, %arg15: memref<64x32xf32, #tpu.memory_space<vmem>>, %arg16: memref<64x1024xf32, #tpu.memory_space<vmem>>, %arg17: memref<64x1024xf32, #tpu.memory_space<vmem>>, %arg18: memref<64x1024xf32, #tpu.memory_space<vmem>>) attributes {dimension_semantics = [#tpu.dimension_semantics<parallel>], iteration_bounds = array<i64: 2>, scalar_prefetch = 0 : i64, scratch_operands = 3 : i64, tpu.core_type = #tpu.core_type<tc>, window_params = [{transform_indices = @transform_0, window_bounds = array<i64: 64, 32>}, {pipeline_mode = #tpu.pipeline_mode<synchronous>, transform_indices = @transform_1, window_bounds = array<i64: 32, 128>}, {pipeline_mode = #tpu.pipeline_mode<synchronous>, transform_indices = @transform_2, window_bounds = array<i64: 4, 64>}, {pipeline_mode = #tpu.pipeline_mode<synchronous>, transform_indices = @transform_3, window_bounds = array<i64: 1, 64>}, {pipeline_mode = #tpu.pipeline_mode<synchronous>, transform_indices = @transform_4, window_bounds = array<i64: 64, 2>}, {pipeline_mode = #tpu.pipeline_mode<synchronous>, transform_indices = @transform_5, window_bounds = array<i64: 2, 64>}, {pipeline_mode = #tpu.pipeline_mode<synchronous>, transform_indices = @transform_6, window_bounds = array<i64: 1, 64>}, {pipeline_mode = #tpu.pipeline_mode<synchronous>, transform_indices = @transform_7, window_bounds = array<i64: 1, 1024>}, {pipeline_mode = #tpu.pipeline_mode<synchronous>, transform_indices = @transform_8, window_bounds = array<i64: 1, 64>}, {pipeline_mode = #tpu.pipeline_mode<synchronous>, transform_indices = @transform_9, window_bounds = array<i64: 64, 32>}, {pipeline_mode = #tpu.pipeline_mode<synchronous>, transform_indices = @transform_10, window_bounds = array<i64: 64, 1024>}, {pipeline_mode = #tpu.pipeline_mode<synchronous>, transform_indices = @transform_11, window_bounds = array<i64: 1024, 64>}, {pipeline_mode = #tpu.pipeline_mode<synchronous>, transform_indices = @transform_12, window_bounds = array<i64: 64, 1024>}, {pipeline_mode = #tpu.pipeline_mode<synchronous>, transform_indices = @transform_13, window_bounds = array<i64: 64, 1024>}, {transform_indices = @transform_14, window_bounds = array<i64: 64, 32>}]} {
    %c0 = arith.constant 0 : index
    %c0_0 = arith.constant 0 : index
    %0 = vector.load %arg1[%c0, %c0_0] : memref<64x32xf32, #tpu.memory_space<vmem>>, vector<64x32xf32>
    %c0_1 = arith.constant 0 : index
    %c0_2 = arith.constant 0 : index
    %1 = vector.load %arg2[%c0_1, %c0_2] : memref<32x128xf32, #tpu.memory_space<vmem>>, vector<32x128xf32>
    %cst = arith.constant dense<0.000000e+00> : vector<64x128xf32>
    %2 = tpu.matmul %0, %1, %cst {dimension_numbers = #tpu.dot_dimension_numbers<[1], [0], [0], [1], [0, 0, 1, 1], [], []>} : vector<64x32xf32>, vector<32x128xf32>, vector<64x128xf32> -> vector<64x128xf32>
    %3 = vector.extract_strided_slice %2 {offsets = [0, 0], sizes = [64, 64], strides = [1, 1]} : vector<64x128xf32> to vector<64x64xf32>
    %4 = vector.extract_strided_slice %2 {offsets = [0, 64], sizes = [64, 64], strides = [1, 1]} : vector<64x128xf32> to vector<64x64xf32>
    %c0_3 = arith.constant 0 : index
    %c0_4 = arith.constant 0 : index
    %5 = vector.load %arg4[%c0_3, %c0_4] : memref<1x64xf32, #tpu.memory_space<vmem>>, vector<1x64xf32>
    %6 = vector.shape_cast %5 : vector<1x64xf32> to vector<1x64xf32>
    %7 = vector.broadcast %6 : vector<1x64xf32> to vector<64x64xf32>
    %cst_5 = arith.constant 0.000000e+00 : f32
    %8 = vector.broadcast %cst_5 : f32 to vector<24x64xf32>
    %9 = vector.extract_strided_slice %3 {offsets = [0, 0], sizes = [40, 64], strides = [1, 1]} : vector<64x64xf32> to vector<40x64xf32>
    %10 = tpu.concatenate %8, %9 in 0 : vector<24x64xf32>, vector<40x64xf32> -> vector<64x64xf32>
    %c0_6 = arith.constant 0 : index
    %c0_7 = arith.constant 0 : index
    %11 = vector.load %arg3[%c0_6, %c0_7] : memref<4x64xf32, #tpu.memory_space<vmem>>, vector<1x64xf32>
    %12 = vector.broadcast %11 : vector<1x64xf32> to vector<64x64xf32>
    %13 = arith.mulf %12, %10 : vector<64x64xf32>
    %14 = arith.addf %7, %13 : vector<64x64xf32>
    %cst_8 = arith.constant 0.000000e+00 : f32
    %15 = vector.broadcast %cst_8 : f32 to vector<16x64xf32>
    %16 = vector.extract_strided_slice %3 {offsets = [0, 0], sizes = [48, 64], strides = [1, 1]} : vector<64x64xf32> to vector<48x64xf32>
    %17 = tpu.concatenate %15, %16 in 0 : vector<16x64xf32>, vector<48x64xf32> -> vector<64x64xf32>
    %c1 = arith.constant 1 : index
    %c0_9 = arith.constant 0 : index
    %18 = vector.load %arg3[%c1, %c0_9] : memref<4x64xf32, #tpu.memory_space<vmem>>, vector<1x64xf32>
    %19 = vector.broadcast %18 : vector<1x64xf32> to vector<64x64xf32>
    %20 = arith.mulf %19, %17 : vector<64x64xf32>
    %21 = arith.addf %14, %20 : vector<64x64xf32>
    %cst_10 = arith.constant 0.000000e+00 : f32
    %22 = vector.broadcast %cst_10 : f32 to vector<8x64xf32>
    %23 = vector.extract_strided_slice %3 {offsets = [0, 0], sizes = [56, 64], strides = [1, 1]} : vector<64x64xf32> to vector<56x64xf32>
    %24 = tpu.concatenate %22, %23 in 0 : vector<8x64xf32>, vector<56x64xf32> -> vector<64x64xf32>
    %c2 = arith.constant 2 : index
    %c0_11 = arith.constant 0 : index
    %25 = vector.load %arg3[%c2, %c0_11] : memref<4x64xf32, #tpu.memory_space<vmem>>, vector<1x64xf32>
    %26 = vector.broadcast %25 : vector<1x64xf32> to vector<64x64xf32>
    %27 = arith.mulf %26, %24 : vector<64x64xf32>
    %28 = arith.addf %21, %27 : vector<64x64xf32>
    %c3 = arith.constant 3 : index
    %c0_12 = arith.constant 0 : index
    %29 = vector.load %arg3[%c3, %c0_12] : memref<4x64xf32, #tpu.memory_space<vmem>>, vector<1x64xf32>
    %30 = vector.broadcast %29 : vector<1x64xf32> to vector<64x64xf32>
    %31 = arith.mulf %30, %3 : vector<64x64xf32>
    %32 = arith.addf %28, %31 : vector<64x64xf32>
    %cst_13 = arith.constant 0.000000e+00 : f32
    %33 = vector.broadcast %cst_13 : f32 to vector<64x64xf32>
    %34 = arith.subf %33, %32 : vector<64x64xf32>
    %35 = math.exp %34 : vector<64x64xf32>
    %cst_14 = arith.constant 1.000000e+00 : f32
    %36 = vector.broadcast %cst_14 : f32 to vector<64x64xf32>
    %37 = arith.addf %36, %35 : vector<64x64xf32>
    %cst_15 = arith.constant 1.000000e+00 : f32
    %38 = vector.broadcast %cst_15 : f32 to vector<64x64xf32>
    %39 = arith.divf %38, %37 : vector<64x64xf32>
    %40 = arith.mulf %32, %39 : vector<64x64xf32>
    %c0_16 = arith.constant 0 : index
    %c0_17 = arith.constant 0 : index
    %41 = vector.load %arg5[%c0_16, %c0_17] : memref<64x2xf32, #tpu.memory_space<vmem>>, vector<64x2xf32>
    %cst_18 = arith.constant dense<0.000000e+00> : vector<64x2xf32>
    %42 = tpu.matmul %40, %41, %cst_18 {dimension_numbers = #tpu.dot_dimension_numbers<[1], [0], [0], [1], [0, 0, 1, 1], [], []>} : vector<64x64xf32>, vector<64x2xf32>, vector<64x2xf32> -> vector<64x2xf32>
    %c0_19 = arith.constant 0 : index
    %c0_20 = arith.constant 0 : index
    %43 = vector.load %arg7[%c0_19, %c0_20] : memref<1x64xf32, #tpu.memory_space<vmem>>, vector<1x64xf32>
    %44 = vector.shape_cast %43 : vector<1x64xf32> to vector<1x64xf32>
    %45 = vector.broadcast %44 : vector<1x64xf32> to vector<64x64xf32>
    %46 = vector.extract_strided_slice %42 {offsets = [0, 0], sizes = [64, 1], strides = [1, 1]} : vector<64x2xf32> to vector<64x1xf32>
    %c0_21 = arith.constant 0 : index
    %c0_22 = arith.constant 0 : index
    %47 = vector.load %arg6[%c0_21, %c0_22] : memref<2x64xf32, #tpu.memory_space<vmem>>, vector<1x64xf32>
    %48 = vector.broadcast %46 : vector<64x1xf32> to vector<64x64xf32>
    %49 = vector.broadcast %47 : vector<1x64xf32> to vector<64x64xf32>
    %50 = arith.mulf %48, %49 : vector<64x64xf32>
    %51 = arith.addf %45, %50 : vector<64x64xf32>
    %52 = vector.extract_strided_slice %42 {offsets = [0, 1], sizes = [64, 1], strides = [1, 1]} : vector<64x2xf32> to vector<64x1xf32>
    %c1_23 = arith.constant 1 : index
    %c0_24 = arith.constant 0 : index
    %53 = vector.load %arg6[%c1_23, %c0_24] : memref<2x64xf32, #tpu.memory_space<vmem>>, vector<1x64xf32>
    %54 = vector.broadcast %52 : vector<64x1xf32> to vector<64x64xf32>
    %55 = vector.broadcast %53 : vector<1x64xf32> to vector<64x64xf32>
    %56 = arith.mulf %54, %55 : vector<64x64xf32>
    %57 = arith.addf %51, %56 : vector<64x64xf32>
    %cst_25 = arith.constant 0.000000e+00 : f32
    %58 = vector.broadcast %cst_25 : f32 to vector<64x64xf32>
    %59 = arith.maximumf %57, %58 : vector<64x64xf32>
    %60 = math.absf %57 : vector<64x64xf32>
    %cst_26 = arith.constant 0.000000e+00 : f32
    %61 = vector.broadcast %cst_26 : f32 to vector<64x64xf32>
    %62 = arith.subf %61, %60 : vector<64x64xf32>
    %63 = math.exp %62 : vector<64x64xf32>
    %cst_27 = arith.constant 1.000000e+00 : f32
    %64 = vector.broadcast %cst_27 : f32 to vector<64x64xf32>
    %65 = arith.addf %64, %63 : vector<64x64xf32>
    %66 = math.log %65 : vector<64x64xf32>
    %67 = arith.addf %59, %66 : vector<64x64xf32>
    %c0_28 = arith.constant 0 : index
    %c0_29 = arith.constant 0 : index
    %68 = vector.load %arg8[%c0_28, %c0_29] : memref<1x1024xf32, #tpu.memory_space<vmem>>, vector<1x1024xf32>
    %c0_30 = arith.constant 0 : index
    %c0_31 = arith.constant 0 : index
    %69 = vector.load %arg11[%c0_30, %c0_31] : memref<64x1024xf32, #tpu.memory_space<vmem>>, vector<64x1024xf32>
    %cst_32 = arith.constant dense<0.000000e+00> : vector<64x1024xf32>
    %70 = tpu.matmul %67, %69, %cst_32 {dimension_numbers = #tpu.dot_dimension_numbers<[1], [0], [0], [1], [0, 0, 1, 1], [], []>} : vector<64x64xf32>, vector<64x1024xf32>, vector<64x1024xf32> -> vector<64x1024xf32>
    %71 = vector.broadcast %68 : vector<1x1024xf32> to vector<64x1024xf32>
    %72 = arith.mulf %70, %71 : vector<64x1024xf32>
    %73 = math.exp %72 : vector<64x1024xf32>
    %c0_33 = arith.constant 0 : index
    %c0_34 = arith.constant 0 : index
    %74 = vector.load %arg16[%c0_33, %c0_34] : memref<64x1024xf32, #tpu.memory_space<vmem>>, vector<64x1024xf32>
    tpu.vector_store %arg16[%c0_33, %c0_34], %73 {strides = array<i32>} : memref<64x1024xf32, #tpu.memory_space<vmem>>, vector<64x1024xf32>,
    %75 = arith.mulf %67, %40 : vector<64x64xf32>
    %c0_35 = arith.constant 0 : index
    %c0_36 = arith.constant 0 : index
    %76 = vector.load %arg11[%c0_35, %c0_36] : memref<64x1024xf32, #tpu.memory_space<vmem>>, vector<64x1024xf32>
    %cst_37 = arith.constant dense<0.000000e+00> : vector<64x1024xf32>
    %77 = tpu.matmul %75, %76, %cst_37 {dimension_numbers = #tpu.dot_dimension_numbers<[1], [0], [0], [1], [0, 0, 1, 1], [], []>} : vector<64x64xf32>, vector<64x1024xf32>, vector<64x1024xf32> -> vector<64x1024xf32>
    %c0_38 = arith.constant 0 : index
    %c0_39 = arith.constant 0 : index
    %78 = vector.load %arg13[%c0_38, %c0_39] : memref<64x1024xf32, #tpu.memory_space<vmem>>, vector<64x1024xf32>
    %cst_40 = arith.constant dense<0.000000e+00> : vector<64x1024xf32>
    %79 = tpu.matmul %40, %78, %cst_40 {dimension_numbers = #tpu.dot_dimension_numbers<[1], [0], [0], [1], [0, 0, 1, 1], [], []>} : vector<64x64xf32>, vector<64x1024xf32>, vector<64x1024xf32> -> vector<64x1024xf32>
    %80 = arith.mulf %77, %79 : vector<64x1024xf32>
    %c0_41 = arith.constant 0 : index
    %c0_42 = arith.constant 0 : index
    %81 = vector.load %arg17[%c0_41, %c0_42] : memref<64x1024xf32, #tpu.memory_space<vmem>>, vector<64x1024xf32>
    tpu.vector_store %arg17[%c0_41, %c0_42], %80 {strides = array<i32>} : memref<64x1024xf32, #tpu.memory_space<vmem>>, vector<64x1024xf32>,
    %c0_43 = arith.constant 0 : index
    %c0_44 = arith.constant 0 : index
    %82 = vector.load %arg14[%c0_43, %c0_44] : memref<64x1024xf32, #tpu.memory_space<vmem>>, vector<64x1024xf32>
    %cst_45 = arith.constant dense<0.000000e+00> : vector<64x1024xf32>
    %83 = tpu.matmul %40, %82, %cst_45 {dimension_numbers = #tpu.dot_dimension_numbers<[1], [0], [0], [1], [0, 0, 1, 1], [], []>} : vector<64x64xf32>, vector<64x1024xf32>, vector<64x1024xf32> -> vector<64x1024xf32>
    %c0_46 = arith.constant 0 : index
    %c0_47 = arith.constant 0 : index
    %84 = vector.load %arg18[%c0_46, %c0_47] : memref<64x1024xf32, #tpu.memory_space<vmem>>, vector<64x1024xf32>
    tpu.vector_store %arg18[%c0_46, %c0_47], %83 {strides = array<i32>} : memref<64x1024xf32, #tpu.memory_space<vmem>>, vector<64x1024xf32>,
    %c0_48 = arith.constant 0 : index
    %c0_49 = arith.constant 0 : index
    %85 = vector.load %arg17[%c0_48, %c0_49] : memref<64x1024xf32, #tpu.memory_space<vmem>>, vector<8x1024xf32>
    %c0_50 = arith.constant 0 : index
    %c0_51 = arith.constant 0 : index
    %86 = vector.load %arg18[%c0_50, %c0_51] : memref<64x1024xf32, #tpu.memory_space<vmem>>, vector<8x1024xf32>
    %87 = arith.mulf %85, %86 : vector<8x1024xf32>
    %c0_52 = arith.constant 0 : index
    %c0_53 = arith.constant 0 : index
    %88 = vector.load %arg12[%c0_52, %c0_53] : memref<1024x64xf32, #tpu.memory_space<vmem>>, vector<1024x64xf32>
    %cst_54 = arith.constant dense<0.000000e+00> : vector<8x64xf32>
    %89 = tpu.matmul %87, %88, %cst_54 {dimension_numbers = #tpu.dot_dimension_numbers<[1], [0], [0], [1], [0, 0, 1, 1], [], []>} : vector<8x1024xf32>, vector<1024x64xf32>, vector<8x64xf32> -> vector<8x64xf32>
    %c8 = arith.constant 8 : index
    %c0_55 = arith.constant 0 : index
    %90 = vector.load %arg16[%c8, %c0_55] : memref<64x1024xf32, #tpu.memory_space<vmem>>, vector<8x1024xf32>
    %91 = arith.mulf %90, %85 : vector<8x1024xf32>
    %c8_56 = arith.constant 8 : index
    %c0_57 = arith.constant 0 : index
    %92 = vector.load %arg17[%c8_56, %c0_57] : memref<64x1024xf32, #tpu.memory_space<vmem>>, vector<8x1024xf32>
    %93 = arith.addf %91, %92 : vector<8x1024xf32>
    %c8_58 = arith.constant 8 : index
    %c0_59 = arith.constant 0 : index
    %94 = vector.load %arg18[%c8_58, %c0_59] : memref<64x1024xf32, #tpu.memory_space<vmem>>, vector<8x1024xf32>
    %95 = arith.mulf %93, %94 : vector<8x1024xf32>
    %c0_60 = arith.constant 0 : index
    %c0_61 = arith.constant 0 : index
    %96 = vector.load %arg12[%c0_60, %c0_61] : memref<1024x64xf32, #tpu.memory_space<vmem>>, vector<1024x64xf32>
    %cst_62 = arith.constant dense<0.000000e+00> : vector<8x64xf32>
    %97 = tpu.matmul %95, %96, %cst_62 {dimension_numbers = #tpu.dot_dimension_numbers<[1], [0], [0], [1], [0, 0, 1, 1], [], []>} : vector<8x1024xf32>, vector<1024x64xf32>, vector<8x64xf32> -> vector<8x64xf32>
    %c16 = arith.constant 16 : index
    %c0_63 = arith.constant 0 : index
    %98 = vector.load %arg16[%c16, %c0_63] : memref<64x1024xf32, #tpu.memory_space<vmem>>, vector<8x1024xf32>
    %99 = arith.mulf %98, %93 : vector<8x1024xf32>
    %c16_64 = arith.constant 16 : index
    %c0_65 = arith.constant 0 : index
    %100 = vector.load %arg17[%c16_64, %c0_65] : memref<64x1024xf32, #tpu.memory_space<vmem>>, vector<8x1024xf32>
    %101 = arith.addf %99, %100 : vector<8x1024xf32>
    %c16_66 = arith.constant 16 : index
    %c0_67 = arith.constant 0 : index
    %102 = vector.load %arg18[%c16_66, %c0_67] : memref<64x1024xf32, #tpu.memory_space<vmem>>, vector<8x1024xf32>
    %103 = arith.mulf %101, %102 : vector<8x1024xf32>
    %c0_68 = arith.constant 0 : index
    %c0_69 = arith.constant 0 : index
    %104 = vector.load %arg12[%c0_68, %c0_69] : memref<1024x64xf32, #tpu.memory_space<vmem>>, vector<1024x64xf32>
    %cst_70 = arith.constant dense<0.000000e+00> : vector<8x64xf32>
    %105 = tpu.matmul %103, %104, %cst_70 {dimension_numbers = #tpu.dot_dimension_numbers<[1], [0], [0], [1], [0, 0, 1, 1], [], []>} : vector<8x1024xf32>, vector<1024x64xf32>, vector<8x64xf32> -> vector<8x64xf32>
    %c24 = arith.constant 24 : index
    %c0_71 = arith.constant 0 : index
    %106 = vector.load %arg16[%c24, %c0_71] : memref<64x1024xf32, #tpu.memory_space<vmem>>, vector<8x1024xf32>
    %107 = arith.mulf %106, %101 : vector<8x1024xf32>
    %c24_72 = arith.constant 24 : index
    %c0_73 = arith.constant 0 : index
    %108 = vector.load %arg17[%c24_72, %c0_73] : memref<64x1024xf32, #tpu.memory_space<vmem>>, vector<8x1024xf32>
    %109 = arith.addf %107, %108 : vector<8x1024xf32>
    %c24_74 = arith.constant 24 : index
    %c0_75 = arith.constant 0 : index
    %110 = vector.load %arg18[%c24_74, %c0_75] : memref<64x1024xf32, #tpu.memory_space<vmem>>, vector<8x1024xf32>
    %111 = arith.mulf %109, %110 : vector<8x1024xf32>
    %c0_76 = arith.constant 0 : index
    %c0_77 = arith.constant 0 : index
    %112 = vector.load %arg12[%c0_76, %c0_77] : memref<1024x64xf32, #tpu.memory_space<vmem>>, vector<1024x64xf32>
    %cst_78 = arith.constant dense<0.000000e+00> : vector<8x64xf32>
    %113 = tpu.matmul %111, %112, %cst_78 {dimension_numbers = #tpu.dot_dimension_numbers<[1], [0], [0], [1], [0, 0, 1, 1], [], []>} : vector<8x1024xf32>, vector<1024x64xf32>, vector<8x64xf32> -> vector<8x64xf32>
    %c32 = arith.constant 32 : index
    %c0_79 = arith.constant 0 : index
    %114 = vector.load %arg16[%c32, %c0_79] : memref<64x1024xf32, #tpu.memory_space<vmem>>, vector<8x1024xf32>
    %115 = arith.mulf %114, %109 : vector<8x1024xf32>
    %c32_80 = arith.constant 32 : index
    %c0_81 = arith.constant 0 : index
    %116 = vector.load %arg17[%c32_80, %c0_81] : memref<64x1024xf32, #tpu.memory_space<vmem>>, vector<8x1024xf32>
    %117 = arith.addf %115, %116 : vector<8x1024xf32>
    %c32_82 = arith.constant 32 : index
    %c0_83 = arith.constant 0 : index
    %118 = vector.load %arg18[%c32_82, %c0_83] : memref<64x1024xf32, #tpu.memory_space<vmem>>, vector<8x1024xf32>
    %119 = arith.mulf %117, %118 : vector<8x1024xf32>
    %c0_84 = arith.constant 0 : index
    %c0_85 = arith.constant 0 : index
    %120 = vector.load %arg12[%c0_84, %c0_85] : memref<1024x64xf32, #tpu.memory_space<vmem>>, vector<1024x64xf32>
    %cst_86 = arith.constant dense<0.000000e+00> : vector<8x64xf32>
    %121 = tpu.matmul %119, %120, %cst_86 {dimension_numbers = #tpu.dot_dimension_numbers<[1], [0], [0], [1], [0, 0, 1, 1], [], []>} : vector<8x1024xf32>, vector<1024x64xf32>, vector<8x64xf32> -> vector<8x64xf32>
    %c40 = arith.constant 40 : index
    %c0_87 = arith.constant 0 : index
    %122 = vector.load %arg16[%c40, %c0_87] : memref<64x1024xf32, #tpu.memory_space<vmem>>, vector<8x1024xf32>
    %123 = arith.mulf %122, %117 : vector<8x1024xf32>
    %c40_88 = arith.constant 40 : index
    %c0_89 = arith.constant 0 : index
    %124 = vector.load %arg17[%c40_88, %c0_89] : memref<64x1024xf32, #tpu.memory_space<vmem>>, vector<8x1024xf32>
    %125 = arith.addf %123, %124 : vector<8x1024xf32>
    %c40_90 = arith.constant 40 : index
    %c0_91 = arith.constant 0 : index
    %126 = vector.load %arg18[%c40_90, %c0_91] : memref<64x1024xf32, #tpu.memory_space<vmem>>, vector<8x1024xf32>
    %127 = arith.mulf %125, %126 : vector<8x1024xf32>
    %c0_92 = arith.constant 0 : index
    %c0_93 = arith.constant 0 : index
    %128 = vector.load %arg12[%c0_92, %c0_93] : memref<1024x64xf32, #tpu.memory_space<vmem>>, vector<1024x64xf32>
    %cst_94 = arith.constant dense<0.000000e+00> : vector<8x64xf32>
    %129 = tpu.matmul %127, %128, %cst_94 {dimension_numbers = #tpu.dot_dimension_numbers<[1], [0], [0], [1], [0, 0, 1, 1], [], []>} : vector<8x1024xf32>, vector<1024x64xf32>, vector<8x64xf32> -> vector<8x64xf32>
    %c48 = arith.constant 48 : index
    %c0_95 = arith.constant 0 : index
    %130 = vector.load %arg16[%c48, %c0_95] : memref<64x1024xf32, #tpu.memory_space<vmem>>, vector<8x1024xf32>
    %131 = arith.mulf %130, %125 : vector<8x1024xf32>
    %c48_96 = arith.constant 48 : index
    %c0_97 = arith.constant 0 : index
    %132 = vector.load %arg17[%c48_96, %c0_97] : memref<64x1024xf32, #tpu.memory_space<vmem>>, vector<8x1024xf32>
    %133 = arith.addf %131, %132 : vector<8x1024xf32>
    %c48_98 = arith.constant 48 : index
    %c0_99 = arith.constant 0 : index
    %134 = vector.load %arg18[%c48_98, %c0_99] : memref<64x1024xf32, #tpu.memory_space<vmem>>, vector<8x1024xf32>
    %135 = arith.mulf %133, %134 : vector<8x1024xf32>
    %c0_100 = arith.constant 0 : index
    %c0_101 = arith.constant 0 : index
    %136 = vector.load %arg12[%c0_100, %c0_101] : memref<1024x64xf32, #tpu.memory_space<vmem>>, vector<1024x64xf32>
    %cst_102 = arith.constant dense<0.000000e+00> : vector<8x64xf32>
    %137 = tpu.matmul %135, %136, %cst_102 {dimension_numbers = #tpu.dot_dimension_numbers<[1], [0], [0], [1], [0, 0, 1, 1], [], []>} : vector<8x1024xf32>, vector<1024x64xf32>, vector<8x64xf32> -> vector<8x64xf32>
    %c56 = arith.constant 56 : index
    %c0_103 = arith.constant 0 : index
    %138 = vector.load %arg16[%c56, %c0_103] : memref<64x1024xf32, #tpu.memory_space<vmem>>, vector<8x1024xf32>
    %139 = arith.mulf %138, %133 : vector<8x1024xf32>
    %c56_104 = arith.constant 56 : index
    %c0_105 = arith.constant 0 : index
    %140 = vector.load %arg17[%c56_104, %c0_105] : memref<64x1024xf32, #tpu.memory_space<vmem>>, vector<8x1024xf32>
    %141 = arith.addf %139, %140 : vector<8x1024xf32>
    %c56_106 = arith.constant 56 : index
    %c0_107 = arith.constant 0 : index
    %142 = vector.load %arg18[%c56_106, %c0_107] : memref<64x1024xf32, #tpu.memory_space<vmem>>, vector<8x1024xf32>
    %143 = arith.mulf %141, %142 : vector<8x1024xf32>
    %c0_108 = arith.constant 0 : index
    %c0_109 = arith.constant 0 : index
    %144 = vector.load %arg12[%c0_108, %c0_109] : memref<1024x64xf32, #tpu.memory_space<vmem>>, vector<1024x64xf32>
    %cst_110 = arith.constant dense<0.000000e+00> : vector<8x64xf32>
    %145 = tpu.matmul %143, %144, %cst_110 {dimension_numbers = #tpu.dot_dimension_numbers<[1], [0], [0], [1], [0, 0, 1, 1], [], []>} : vector<8x1024xf32>, vector<1024x64xf32>, vector<8x64xf32> -> vector<8x64xf32>
    %146 = tpu.concatenate %89, %97, %105, %113, %121, %129, %137, %145 in 0 : vector<8x64xf32>, vector<8x64xf32>, vector<8x64xf32>, vector<8x64xf32>, vector<8x64xf32>, vector<8x64xf32>, vector<8x64xf32>, vector<8x64xf32> -> vector<64x64xf32>
    %c0_111 = arith.constant 0 : index
    %c0_112 = arith.constant 0 : index
    %147 = vector.load %arg9[%c0_111, %c0_112] : memref<1x64xf32, #tpu.memory_space<vmem>>, vector<1x64xf32>
    %148 = vector.broadcast %147 : vector<1x64xf32> to vector<64x64xf32>
    %149 = arith.mulf %148, %40 : vector<64x64xf32>
    %150 = arith.addf %146, %149 : vector<64x64xf32>
    %cst_113 = arith.constant 0.000000e+00 : f32
    %151 = vector.broadcast %cst_113 : f32 to vector<64x64xf32>
    %152 = arith.subf %151, %4 : vector<64x64xf32>
    %153 = math.exp %152 : vector<64x64xf32>
    %cst_114 = arith.constant 1.000000e+00 : f32
    %154 = vector.broadcast %cst_114 : f32 to vector<64x64xf32>
    %155 = arith.addf %154, %153 : vector<64x64xf32>
    %cst_115 = arith.constant 1.000000e+00 : f32
    %156 = vector.broadcast %cst_115 : f32 to vector<64x64xf32>
    %157 = arith.divf %156, %155 : vector<64x64xf32>
    %158 = arith.mulf %4, %157 : vector<64x64xf32>
    %159 = arith.mulf %150, %158 : vector<64x64xf32>
    %c0_116 = arith.constant 0 : index
    %c0_117 = arith.constant 0 : index
    %160 = vector.load %arg10[%c0_116, %c0_117] : memref<64x32xf32, #tpu.memory_space<vmem>>, vector<64x32xf32>
    %cst_118 = arith.constant dense<0.000000e+00> : vector<64x32xf32>
    %161 = tpu.matmul %159, %160, %cst_118 {dimension_numbers = #tpu.dot_dimension_numbers<[1], [0], [0], [1], [0, 0, 1, 1], [], []>} : vector<64x64xf32>, vector<64x32xf32>, vector<64x32xf32> -> vector<64x32xf32>
    %c0_119 = arith.constant 0 : index
    %c0_120 = arith.constant 0 : index
    %162 = vector.load %arg15[%c0_119, %c0_120] : memref<64x32xf32, #tpu.memory_space<vmem>>, vector<64x32xf32>
    tpu.vector_store %arg15[%c0_119, %c0_120], %161 {strides = array<i32>} : memref<64x32xf32, #tpu.memory_space<vmem>>, vector<64x32xf32>,
    return
  }
  func.func @transform_0(%arg0: i32) -> (i32, i32) {
    %c0_i32 = arith.constant 0 : i32
    %c0_i32_0 = arith.constant 0 : i32
    return %arg0, %c0_i32 : i32, i32
  }
  func.func @transform_1(%arg0: i32) -> (i32, i32) {
    %c0_i32 = arith.constant 0 : i32
    %c0_i32_0 = arith.constant 0 : i32
    %c0_i32_1 = arith.constant 0 : i32
    return %c0_i32, %c0_i32_0 : i32, i32
  }
  func.func @transform_2(%arg0: i32) -> (i32, i32) {
    %c0_i32 = arith.constant 0 : i32
    %c0_i32_0 = arith.constant 0 : i32
    %c0_i32_1 = arith.constant 0 : i32
    return %c0_i32, %c0_i32_0 : i32, i32
  }
  func.func @transform_3(%arg0: i32) -> (i32, i32) {
    %c0_i32 = arith.constant 0 : i32
    %c0_i32_0 = arith.constant 0 : i32
    %c0_i32_1 = arith.constant 0 : i32
    return %c0_i32, %c0_i32_0 : i32, i32
  }
  func.func @transform_4(%arg0: i32) -> (i32, i32) {
    %c0_i32 = arith.constant 0 : i32
    %c0_i32_0 = arith.constant 0 : i32
    %c0_i32_1 = arith.constant 0 : i32
    return %c0_i32, %c0_i32_0 : i32, i32
  }
  func.func @transform_5(%arg0: i32) -> (i32, i32) {
    %c0_i32 = arith.constant 0 : i32
    %c0_i32_0 = arith.constant 0 : i32
    %c0_i32_1 = arith.constant 0 : i32
    return %c0_i32, %c0_i32_0 : i32, i32
  }
  func.func @transform_6(%arg0: i32) -> (i32, i32) {
    %c0_i32 = arith.constant 0 : i32
    %c0_i32_0 = arith.constant 0 : i32
    %c0_i32_1 = arith.constant 0 : i32
    return %c0_i32, %c0_i32_0 : i32, i32
  }
  func.func @transform_7(%arg0: i32) -> (i32, i32) {
    %c0_i32 = arith.constant 0 : i32
    %c0_i32_0 = arith.constant 0 : i32
    %c0_i32_1 = arith.constant 0 : i32
    return %c0_i32, %c0_i32_0 : i32, i32
  }
  func.func @transform_8(%arg0: i32) -> (i32, i32) {
    %c0_i32 = arith.constant 0 : i32
    %c0_i32_0 = arith.constant 0 : i32
    %c0_i32_1 = arith.constant 0 : i32
    return %c0_i32, %c0_i32_0 : i32, i32
  }
  func.func @transform_9(%arg0: i32) -> (i32, i32) {
    %c0_i32 = arith.constant 0 : i32
    %c0_i32_0 = arith.constant 0 : i32
    %c0_i32_1 = arith.constant 0 : i32
    return %c0_i32, %c0_i32_0 : i32, i32
  }
  func.func @transform_10(%arg0: i32) -> (i32, i32) {
    %c0_i32 = arith.constant 0 : i32
    %c0_i32_0 = arith.constant 0 : i32
    %c0_i32_1 = arith.constant 0 : i32
    return %c0_i32, %c0_i32_0 : i32, i32
  }
  func.func @transform_11(%arg0: i32) -> (i32, i32) {
    %c0_i32 = arith.constant 0 : i32
    %c0_i32_0 = arith.constant 0 : i32
    %c0_i32_1 = arith.constant 0 : i32
    return %c0_i32, %c0_i32_0 : i32, i32
  }
  func.func @transform_12(%arg0: i32) -> (i32, i32) {
    %c0_i32 = arith.constant 0 : i32
    %c0_i32_0 = arith.constant 0 : i32
    %c0_i32_1 = arith.constant 0 : i32
    return %c0_i32, %c0_i32_0 : i32, i32
  }
  func.func @transform_13(%arg0: i32) -> (i32, i32) {
    %c0_i32 = arith.constant 0 : i32
    %c0_i32_0 = arith.constant 0 : i32
    %c0_i32_1 = arith.constant 0 : i32
    return %c0_i32, %c0_i32_0 : i32, i32
  }
  func.func @transform_14(%arg0: i32) -> (i32, i32) {
    %c0_i32 = arith.constant 0 : i32
    %c0_i32_0 = arith.constant 0 : i32
    return %arg0, %c0_i32 : i32, i32
  }
}

</mosaic_0001>

<llo_original>
// kernel: tpu_custom_call.1
$region0: #{tpu_custom_call.1}
  #allocation0 [shape = 'u32[]', space=smem, size = 0x4, offset = 0x4, fixed_abs, tag = 'smem constant byte address 0x4 - core index']
  #allocation1 [shape = 'u32[144,128]{1,0:T(1,128)}', space=vmem, size = 0x12000, scoped, tag = 'internal scratch']
  #allocation2 [shape = 'f32[64,1024]{1,0:T(8,128)}', space=vmem, size = 0x40000, scoped, tag = 'scratch operand']
  #allocation3 [shape = 'f32[64,1024]{1,0:T(8,128)}', space=vmem, size = 0x40000, scoped, tag = 'scratch operand']
  #allocation4 [shape = 'f32[64,1024]{1,0:T(8,128)}', space=vmem, size = 0x40000, scoped, tag = 'scratch operand']
  %s0 = inlined_call_operand.vmem [shape: f32[128,32], index: 0, kind: input, shape index: {}]
  %s1 = inlined_call_operand.vmem [shape: f32[32,128], index: 1, kind: input, shape index: {}]
  %s2 = inlined_call_operand.vmem [shape: f32[4,64], index: 2, kind: input, shape index: {}]
  %s3 = inlined_call_operand.vmem [shape: f32[1,64], index: 3, kind: input, shape index: {}]
  %s4 = inlined_call_operand.vmem [shape: f32[64,2], index: 4, kind: input, shape index: {}]
  %s5 = inlined_call_operand.vmem [shape: f32[2,64], index: 5, kind: input, shape index: {}]
  %s6 = inlined_call_operand.vmem [shape: f32[1,64], index: 6, kind: input, shape index: {}]
  %s7 = inlined_call_operand.vmem [shape: f32[1,1024], index: 7, kind: input, shape index: {}]
  %s8 = inlined_call_operand.vmem [shape: f32[1,64], index: 8, kind: input, shape index: {}]
  %s9 = inlined_call_operand.vmem [shape: f32[64,32], index: 9, kind: input, shape index: {}]
  %s10 = inlined_call_operand.vmem [shape: f32[64,1024], index: 10, kind: input, shape index: {}]
  %s11 = inlined_call_operand.vmem [shape: f32[1024,64], index: 11, kind: input, shape index: {}]
  %s12 = inlined_call_operand.vmem [shape: f32[64,1024], index: 12, kind: input, shape index: {}]
  %s13 = inlined_call_operand.vmem [shape: f32[64,1024], index: 13, kind: input, shape index: {}]
  %s14 = inlined_call_operand.vmem [shape: f32[128,32], index: 14, kind: output, shape index: {}]
  %s15 = sld [smem:[#allocation0]]
  $region89: #{tpu_custom_call.1} parent=0
    _
  %s17 = ssub.s32 1, %s15
  %s18 = scalar_select 0, %s17, %s15
  loop: start=0, step=1, limit=4
  $region2: #{tpu_custom_call.1} parent=0 // loop_pre_header
    _
  $region3: #{tpu_custom_call.1} parent=0 // loop_header
    %s20 = sphi 0, %s24
    %p21 = scmp.ge.s32.totalorder %s20, 4
    %s30 = sphi 0, %s32
    %s33 = sphi 0, %s30
    %s34 = sphi 0, %s33
    %s50 = sphi 0, %s34
    %s54 = sphi 0, %s54
    %s56 = sphi 0, %s54
    %s57 = sphi 0, %s56
    %s71 = sphi 0, %s57
    %s75 = sphi 0, %s75
    %s77 = sphi 0, %s75
    %s78 = sphi 0, %s77
    %s92 = sphi 0, %s78
    %s96 = sphi 0, %s96
    %s98 = sphi 0, %s96
    %s99 = sphi 0, %s98
    %s113 = sphi 0, %s99
    %s117 = sphi 0, %s117
    %s119 = sphi 0, %s117
    %s120 = sphi 0, %s119
    %s134 = sphi 0, %s120
    %s138 = sphi 0, %s138
    %s140 = sphi 0, %s138
    %s141 = sphi 0, %s140
    %s155 = sphi 0, %s141
    %s159 = sphi 0, %s159
    %s161 = sphi 0, %s159
    %s162 = sphi 0, %s161
    %s176 = sphi 0, %s162
    %s180 = sphi 0, %s180
    %s182 = sphi 0, %s180
    %s183 = sphi 0, %s182
    %s197 = sphi 0, %s183
    %s201 = sphi 0, %s201
    %s203 = sphi 0, %s201
    %s204 = sphi 0, %s203
    %s218 = sphi 0, %s204
    %s222 = sphi 0, %s222
    %s224 = sphi 0, %s222
    %s225 = sphi 0, %s224
    %s239 = sphi 0, %s225
    %s243 = sphi 0, %s243
    %s245 = sphi 0, %s243
    %s246 = sphi 0, %s245
    %s260 = sphi 0, %s246
    %s264 = sphi 0, %s264
    %s266 = sphi 0, %s264
    %s267 = sphi 0, %s266
    %s281 = sphi 0, %s267
    %s285 = sphi 0, %s285
    %s287 = sphi 0, %s285
    %s288 = sphi 0, %s287
    %s302 = sphi 0, %s288
    %s306 = sphi 0, %s306
    %s308 = sphi 0, %s306
    %s309 = sphi 0, %s308
    %s323 = sphi 0, %s309
    %s329 = sphi 0, %s331
    %s332 = sphi 0, %s329
    %s333 = sphi 0, %s332
    %s349 = sphi 0, %s333
  $region4: #{tpu_custom_call.1} parent=0 // loop_header_branch
    %23 = sbr.rel (%p21) target = $region8
  $region5: #{tpu_custom_call.1} parent=0 // loop_body
    %s25 = ssub.s32 %s20, 1
    %s26 = ssub.s32 %s20, 2
    %s27 = sadd.s32 %s20, 1
    %s28 = ssub.s32 %s20, %s27
    %p29 = scmp.eq.s32.totalorder %s28, 0
    %s31 = sadd.s32 %s30, 1
    %s32 = scalar_select %p29, %s30, %s31
    %p35 = pneg %p29
    %p36 = scmp.eq.s32.totalorder %s20, 1
    %p37 = por %p35, %p36
    %p38 = scmp.ne.s32.totalorder %s30, %s33
    %p39 = scmp.eq.s32.totalorder %s20, 0
    %p40 = por %p38, %p39
    %p41 = scmp.ne.s32.totalorder %s30, %s33
    %p42 = scmp.eq.s32.totalorder %s25, 1
    %p43 = por %p41, %p42
    %p44 = scmp.ne.s32.totalorder %s33, %s34
    %p45 = scmp.eq.s32.totalorder %s25, 0
    %p46 = por %p44, %p45
    %p47 = scmp.ne.s32.totalorder %s33, %s34
    %p48 = scmp.eq.s32.totalorder %s26, 1
    %p49 = por %p47, %p48
    %p51 = scmp.ne.s32.totalorder %s34, %s50
    %p52 = scmp.eq.s32.totalorder %s26, 0
    %p53 = por %p51, %p52
    %s55 = sadd.s32 %s54, 1
    %p58 = scmp.eq.s32.totalorder %s20, 1
    %p59 = scmp.ne.s32.totalorder %s54, %s56
    %p60 = scmp.eq.s32.totalorder %s20, 0
    %p61 = por %p59, %p60
    %p62 = scmp.ne.s32.totalorder %s54, %s56
    %p63 = scmp.eq.s32.totalorder %s25, 1
    %p64 = por %p62, %p63
    %p65 = scmp.ne.s32.totalorder %s56, %s57
    %p66 = scmp.eq.s32.totalorder %s25, 0
    %p67 = por %p65, %p66
    %p68 = scmp.ne.s32.totalorder %s56, %s57
    %p69 = scmp.eq.s32.totalorder %s26, 1
    %p70 = por %p68, %p69
    %p72 = scmp.ne.s32.totalorder %s57, %s71
    %p73 = scmp.eq.s32.totalorder %s26, 0
    %p74 = por %p72, %p73
    %s76 = sadd.s32 %s75, 1
    %p79 = scmp.eq.s32.totalorder %s20, 1
    %p80 = scmp.ne.s32.totalorder %s75, %s77
    %p81 = scmp.eq.s32.totalorder %s20, 0
    %p82 = por %p80, %p81
    %p83 = scmp.ne.s32.totalorder %s75, %s77
    %p84 = scmp.eq.s32.totalorder %s25, 1
    %p85 = por %p83, %p84
    %p86 = scmp.ne.s32.totalorder %s77, %s78
    %p87 = scmp.eq.s32.totalorder %s25, 0
    %p88 = por %p86, %p87
    %p89 = scmp.ne.s32.totalorder %s77, %s78
    %p90 = scmp.eq.s32.totalorder %s26, 1
    %p91 = por %p89, %p90
    %p93 = scmp.ne.s32.totalorder %s78, %s92
    %p94 = scmp.eq.s32.totalorder %s26, 0
    %p95 = por %p93, %p94
    %s97 = sadd.s32 %s96, 1
    %p100 = scmp.eq.s32.totalorder %s20, 1
    %p101 = scmp.ne.s32.totalorder %s96, %s98
    %p102 = scmp.eq.s32.totalorder %s20, 0
    %p103 = por %p101, %p102
    %p104 = scmp.ne.s32.totalorder %s96, %s98
    %p105 = scmp.eq.s32.totalorder %s25, 1
    %p106 = por %p104, %p105
    %p107 = scmp.ne.s32.totalorder %s98, %s99
    %p108 = scmp.eq.s32.totalorder %s25, 0
    %p109 = por %p107, %p108
    %p110 = scmp.ne.s32.totalorder %s98, %s99
    %p111 = scmp.eq.s32.totalorder %s26, 1
    %p112 = por %p110, %p111
    %p114 = scmp.ne.s32.totalorder %s99, %s113
    %p115 = scmp.eq.s32.totalorder %s26, 0
    %p116 = por %p114, %p115
    %s118 = sadd.s32 %s117, 1
    %p121 = scmp.eq.s32.totalorder %s20, 1
    %p122 = scmp.ne.s32.totalorder %s117, %s119
    %p123 = scmp.eq.s32.totalorder %s20, 0
    %p124 = por %p122, %p123
    %p125 = scmp.ne.s32.totalorder %s117, %s119
    %p126 = scmp.eq.s32.totalorder %s25, 1
    %p127 = por %p125, %p126
    %p128 = scmp.ne.s32.totalorder %s119, %s120
    %p129 = scmp.eq.s32.totalorder %s25, 0
    %p130 = por %p128, %p129
    %p131 = scmp.ne.s32.totalorder %s119, %s120
    %p132 = scmp.eq.s32.totalorder %s26, 1
    %p133 = por %p131, %p132
    %p135 = scmp.ne.s32.totalorder %s120, %s134
    %p136 = scmp.eq.s32.totalorder %s26, 0
    %p137 = por %p135, %p136
    %s139 = sadd.s32 %s138, 1
    %p142 = scmp.eq.s32.totalorder %s20, 1
    %p143 = scmp.ne.s32.totalorder %s138, %s140
    %p144 = scmp.eq.s32.totalorder %s20, 0
    %p145 = por %p143, %p144
    %p146 = scmp.ne.s32.totalorder %s138, %s140
    %p147 = scmp.eq.s32.totalorder %s25, 1
    %p148 = por %p146, %p147
    %p149 = scmp.ne.s32.totalorder %s140, %s141
    %p150 = scmp.eq.s32.totalorder %s25, 0
    %p151 = por %p149, %p150
    %p152 = scmp.ne.s32.totalorder %s140, %s141
    %p153 = scmp.eq.s32.totalorder %s26, 1
    %p154 = por %p152, %p153
    %p156 = scmp.ne.s32.totalorder %s141, %s155
    %p157 = scmp.eq.s32.totalorder %s26, 0
    %p158 = por %p156, %p157
    %s160 = sadd.s32 %s159, 1
    %p163 = scmp.eq.s32.totalorder %s20, 1
    %p164 = scmp.ne.s32.totalorder %s159, %s161
    %p165 = scmp.eq.s32.totalorder %s20, 0
    %p166 = por %p164, %p165
    %p167 = scmp.ne.s32.totalorder %s159, %s161
    %p168 = scmp.eq.s32.totalorder %s25, 1
    %p169 = por %p167, %p168
    %p170 = scmp.ne.s32.totalorder %s161, %s162
    %p171 = scmp.eq.s32.totalorder %s25, 0
    %p172 = por %p170, %p171
    %p173 = scmp.ne.s32.totalorder %s161, %s162
    %p174 = scmp.eq.s32.totalorder %s26, 1
    %p175 = por %p173, %p174
    %p177 = scmp.ne.s32.totalorder %s162, %s176
    %p178 = scmp.eq.s32.totalorder %s26, 0
    %p179 = por %p177, %p178
    %s181 = sadd.s32 %s180, 1
    %p184 = scmp.eq.s32.totalorder %s20, 1
    %p185 = scmp.ne.s32.totalorder %s180, %s182
    %p186 = scmp.eq.s32.totalorder %s20, 0
    %p187 = por %p185, %p186
    %p188 = scmp.ne.s32.totalorder %s180, %s182
    %p189 = scmp.eq.s32.totalorder %s25, 1
    %p190 = por %p188, %p189
    %p191 = scmp.ne.s32.totalorder %s182, %s183
    %p192 = scmp.eq.s32.totalorder %s25, 0
    %p193 = por %p191, %p192
    %p194 = scmp.ne.s32.totalorder %s182, %s183
    %p195 = scmp.eq.s32.totalorder %s26, 1
    %p196 = por %p194, %p195
    %p198 = scmp.ne.s32.totalorder %s183, %s197
    %p199 = scmp.eq.s32.totalorder %s26, 0
    %p200 = por %p198, %p199
    %s202 = sadd.s32 %s201, 1
    %p205 = scmp.eq.s32.totalorder %s20, 1
    %p206 = scmp.ne.s32.totalorder %s201, %s203
    %p207 = scmp.eq.s32.totalorder %s20, 0
    %p208 = por %p206, %p207
    %p209 = scmp.ne.s32.totalorder %s201, %s203
    %p210 = scmp.eq.s32.totalorder %s25, 1
    %p211 = por %p209, %p210
    %p212 = scmp.ne.s32.totalorder %s203, %s204
    %p213 = scmp.eq.s32.totalorder %s25, 0
    %p214 = por %p212, %p213
    %p215 = scmp.ne.s32.totalorder %s203, %s204
    %p216 = scmp.eq.s32.totalorder %s26, 1
    %p217 = por %p215, %p216
    %p219 = scmp.ne.s32.totalorder %s204, %s218
    %p220 = scmp.eq.s32.totalorder %s26, 0
    %p221 = por %p219, %p220
    %s223 = sadd.s32 %s222, 1
    %p226 = scmp.eq.s32.totalorder %s20, 1
    %p227 = scmp.ne.s32.totalorder %s222, %s224
    %p228 = scmp.eq.s32.totalorder %s20, 0
    %p229 = por %p227, %p228
    %p230 = scmp.ne.s32.totalorder %s222, %s224
    %p231 = scmp.eq.s32.totalorder %s25, 1
    %p232 = por %p230, %p231
    %p233 = scmp.ne.s32.totalorder %s224, %s225
    %p234 = scmp.eq.s32.totalorder %s25, 0
    %p235 = por %p233, %p234
    %p236 = scmp.ne.s32.totalorder %s224, %s225
    %p237 = scmp.eq.s32.totalorder %s26, 1
    %p238 = por %p236, %p237
    %p240 = scmp.ne.s32.totalorder %s225, %s239
    %p241 = scmp.eq.s32.totalorder %s26, 0
    %p242 = por %p240, %p241
    %s244 = sadd.s32 %s243, 1
    %p247 = scmp.eq.s32.totalorder %s20, 1
    %p248 = scmp.ne.s32.totalorder %s243, %s245
    %p249 = scmp.eq.s32.totalorder %s20, 0
    %p250 = por %p248, %p249
    %p251 = scmp.ne.s32.totalorder %s243, %s245
    %p252 = scmp.eq.s32.totalorder %s25, 1
    %p253 = por %p251, %p252
    %p254 = scmp.ne.s32.totalorder %s245, %s246
    %p255 = scmp.eq.s32.totalorder %s25, 0
    %p256 = por %p254, %p255
    %p257 = scmp.ne.s32.totalorder %s245, %s246
    %p258 = scmp.eq.s32.totalorder %s26, 1
    %p259 = por %p257, %p258
    %p261 = scmp.ne.s32.totalorder %s246, %s260
    %p262 = scmp.eq.s32.totalorder %s26, 0
    %p263 = por %p261, %p262
    %s265 = sadd.s32 %s264, 1
    %p268 = scmp.eq.s32.totalorder %s20, 1
    %p269 = scmp.ne.s32.totalorder %s264, %s266
    %p270 = scmp.eq.s32.totalorder %s20, 0
    %p271 = por %p269, %p270
    %p272 = scmp.ne.s32.totalorder %s264, %s266
    %p273 = scmp.eq.s32.totalorder %s25, 1
    %p274 = por %p272, %p273
    %p275 = scmp.ne.s32.totalorder %s266, %s267
    %p276 = scmp.eq.s32.totalorder %s25, 0
    %p277 = por %p275, %p276
    %p278 = scmp.ne.s32.totalorder %s266, %s267
    %p279 = scmp.eq.s32.totalorder %s26, 1
    %p280 = por %p278, %p279
    %p282 = scmp.ne.s32.totalorder %s267, %s281
    %p283 = scmp.eq.s32.totalorder %s26, 0
    %p284 = por %p282, %p283
    %s286 = sadd.s32 %s285, 1
    %p289 = scmp.eq.s32.totalorder %s20, 1
    %p290 = scmp.ne.s32.totalorder %s285, %s287
    %p291 = scmp.eq.s32.totalorder %s20, 0
    %p292 = por %p290, %p291
    %p293 = scmp.ne.s32.totalorder %s285, %s287
    %p294 = scmp.eq.s32.totalorder %s25, 1
    %p295 = por %p293, %p294
    %p296 = scmp.ne.s32.totalorder %s287, %s288
    %p297 = scmp.eq.s32.totalorder %s25, 0
    %p298 = por %p296, %p297
    %p299 = scmp.ne.s32.totalorder %s287, %s288
    %p300 = scmp.eq.s32.totalorder %s26, 1
    %p301 = por %p299, %p300
    %p303 = scmp.ne.s32.totalorder %s288, %s302
    %p304 = scmp.eq.s32.totalorder %s26, 0
    %p305 = por %p303, %p304
    %s307 = sadd.s32 %s306, 1
    %p310 = scmp.eq.s32.totalorder %s20, 1
    %p311 = scmp.ne.s32.totalorder %s306, %s308
    %p312 = scmp.eq.s32.totalorder %s20, 0
    %p313 = por %p311, %p312
    %p314 = scmp.ne.s32.totalorder %s306, %s308
    %p315 = scmp.eq.s32.totalorder %s25, 1
    %p316 = por %p314, %p315
    %p317 = scmp.ne.s32.totalorder %s308, %s309
    %p318 = scmp.eq.s32.totalorder %s25, 0
    %p319 = por %p317, %p318
    %p320 = scmp.ne.s32.totalorder %s308, %s309
    %p321 = scmp.eq.s32.totalorder %s26, 1
    %p322 = por %p320, %p321
    %p324 = scmp.ne.s32.totalorder %s309, %s323
    %p325 = scmp.eq.s32.totalorder %s26, 0
    %p326 = por %p324, %p325
    %s327 = ssub.s32 %s20, %s27
    %p328 = scmp.eq.s32.totalorder %s327, 0
    %s330 = sadd.s32 %s329, 1
    %s331 = scalar_select %p328, %s329, %s330
    %p334 = pneg %p328
    %p335 = scmp.eq.s32.totalorder %s20, 1
    %p336 = por %p334, %p335
    %p337 = scmp.ne.s32.totalorder %s329, %s332
    %p338 = scmp.eq.s32.totalorder %s20, 0
    %p339 = por %p337, %p338
    %p340 = scmp.ne.s32.totalorder %s329, %s332
    %p341 = scmp.eq.s32.totalorder %s25, 1
    %p342 = por %p340, %p341
    %p343 = scmp.ne.s32.totalorder %s332, %s333
    %p344 = scmp.eq.s32.totalorder %s25, 0
    %p345 = por %p343, %p344
    %p346 = scmp.ne.s32.totalorder %s332, %s333
    %p347 = scmp.eq.s32.totalorder %s26, 1
    %p348 = por %p346, %p347
    %p350 = scmp.ne.s32.totalorder %s333, %s349
    %p351 = scmp.eq.s32.totalorder %s26, 0
    %p352 = por %p350, %p351
    %p353 = scmp.le.s32.totalorder 1, %s20
    %p354 = scmp.lt.s32.totalorder %s20, 3
    %p355 = pnand %p353, %p354
    %p356 = pneg %p355
    // Predicated region
    $region9: #{tpu_custom_call.1} parent=5 // pred_check
      _
    $region10: #{tpu_custom_call.1} parent=5 // pred_check_branch
      %358 = sbr.rel (%p355) target = $region12
    $region11: #{tpu_custom_call.1} parent=5 // pred_region
      %s359 = ssub.s32 %s20, 1
      // Predicated region
      $region13: #{tpu_custom_call.1} parent=11 // pred_check
        %p360 = pneg %p67
      $region14: #{tpu_custom_call.1} parent=11 // pred_check_branch
        %362 = sbr.rel (%p360) target = $region16
      $region15: #{tpu_custom_call.1} parent=11 // pred_region
        _
      $region16: #{tpu_custom_call.1} parent=11 // pred_fallthru
        _
      // Predicated region
      $region17: #{tpu_custom_call.1} parent=11 // pred_check
        %p363 = pneg %p88
      $region18: #{tpu_custom_call.1} parent=11 // pred_check_branch
        %365 = sbr.rel (%p363) target = $region20
      $region19: #{tpu_custom_call.1} parent=11 // pred_region
        _
      $region20: #{tpu_custom_call.1} parent=11 // pred_fallthru
        _
      // Predicated region
      $region21: #{tpu_custom_call.1} parent=11 // pred_check
        %p366 = pneg %p109
      $region22: #{tpu_custom_call.1} parent=11 // pred_check_branch
        %368 = sbr.rel (%p366) target = $region24
      $region23: #{tpu_custom_call.1} parent=11 // pred_region
        _
      $region24: #{tpu_custom_call.1} parent=11 // pred_fallthru
        _
      // Predicated region
      $region25: #{tpu_custom_call.1} parent=11 // pred_check
        %p369 = pneg %p130
      $region26: #{tpu_custom_call.1} parent=11 // pred_check_branch
        %371 = sbr.rel (%p369) target = $region28
      $region27: #{tpu_custom_call.1} parent=11 // pred_region
        _
      $region28: #{tpu_custom_call.1} parent=11 // pred_fallthru
        _
      // Predicated region
      $region29: #{tpu_custom_call.1} parent=11 // pred_check
        %p372 = pneg %p151
      $region30: #{tpu_custom_call.1} parent=11 // pred_check_branch
        %374 = sbr.rel (%p372) target = $region32
      $region31: #{tpu_custom_call.1} parent=11 // pred_region
        _
      $region32: #{tpu_custom_call.1} parent=11 // pred_fallthru
        _
      // Predicated region
      $region33: #{tpu_custom_call.1} parent=11 // pred_check
        %p375 = pneg %p172
      $region34: #{tpu_custom_call.1} parent=11 // pred_check_branch
        %377 = sbr.rel (%p375) target = $region36
      $region35: #{tpu_custom_call.1} parent=11 // pred_region
        _
      $region36: #{tpu_custom_call.1} parent=11 // pred_fallthru
        _
      // Predicated region
      $region37: #{tpu_custom_call.1} parent=11 // pred_check
        %p378 = pneg %p193
      $region38: #{tpu_custom_call.1} parent=11 // pred_check_branch
        %380 = sbr.rel (%p378) target = $region40
      $region39: #{tpu_custom_call.1} parent=11 // pred_region
        _
      $region40: #{tpu_custom_call.1} parent=11 // pred_fallthru
        _
      // Predicated region
      $region41: #{tpu_custom_call.1} parent=11 // pred_check
        %p381 = pneg %p214
      $region42: #{tpu_custom_call.1} parent=11 // pred_check_branch
        %383 = sbr.rel (%p381) target = $region44
      $region43: #{tpu_custom_call.1} parent=11 // pred_region
        _
      $region44: #{tpu_custom_call.1} parent=11 // pred_fallthru
        _
      // Predicated region
      $region45: #{tpu_custom_call.1} parent=11 // pred_check
        %p384 = pneg %p235
      $region46: #{tpu_custom_call.1} parent=11 // pred_check_branch
        %386 = sbr.rel (%p384) target = $region48
      $region47: #{tpu_custom_call.1} parent=11 // pred_region
        _
      $region48: #{tpu_custom_call.1} parent=11 // pred_fallthru
        _
      // Predicated region
      $region49: #{tpu_custom_call.1} parent=11 // pred_check
        %p387 = pneg %p256
      $region50: #{tpu_custom_call.1} parent=11 // pred_check_branch
        %389 = sbr.rel (%p387) target = $region52
      $region51: #{tpu_custom_call.1} parent=11 // pred_region
        _
      $region52: #{tpu_custom_call.1} parent=11 // pred_fallthru
        _
      // Predicated region
      $region53: #{tpu_custom_call.1} parent=11 // pred_check
        %p390 = pneg %p277
      $region54: #{tpu_custom_call.1} parent=11 // pred_check_branch
        %392 = sbr.rel (%p390) target = $region56
      $region55: #{tpu_custom_call.1} parent=11 // pred_region
        _
      $region56: #{tpu_custom_call.1} parent=11 // pred_fallthru
        _
      // Predicated region
      $region57: #{tpu_custom_call.1} parent=11 // pred_check
        %p393 = pneg %p298
      $region58: #{tpu_custom_call.1} parent=11 // pred_check_branch
        %395 = sbr.rel (%p393) target = $region60
      $region59: #{tpu_custom_call.1} parent=11 // pred_region
        _
      $region60: #{tpu_custom_call.1} parent=11 // pred_fallthru
        _
      // Predicated region
      $region61: #{tpu_custom_call.1} parent=11 // pred_check
        %p396 = pneg %p319
      $region62: #{tpu_custom_call.1} parent=11 // pred_check_branch
        %398 = sbr.rel (%p396) target = $region64
      $region63: #{tpu_custom_call.1} parent=11 // pred_region
        _
      $region64: #{tpu_custom_call.1} parent=11 // pred_fallthru
        _
    $region12: #{tpu_custom_call.1} parent=5 // pred_fallthru
      _
    %p399 = scmp.lt.s32.totalorder %s20, 2
    // Predicated region
    $region65: #{tpu_custom_call.1} parent=5 // pred_check
      %p400 = pneg %p399
    $region66: #{tpu_custom_call.1} parent=5 // pred_check_branch
      %402 = sbr.rel (%p400) target = $region68
    $region67: #{tpu_custom_call.1} parent=5 // pred_region
      // Predicated region
      $region69: #{tpu_custom_call.1} parent=67 // pred_check
        %p403 = pneg %p40
      $region70: #{tpu_custom_call.1} parent=67 // pred_check_branch
        %405 = sbr.rel (%p403) target = $region72
      $region71: #{tpu_custom_call.1} parent=67 // pred_region
        %s406 = smul.u32 8, %s20
        %p407 = scmp.lt.s32.totalorder %s406, 15
        %s408 = scalar_select %p407, %s406, 15
        %s409 = smul.addr %s408, 8
        %s410 = scalar_lea.vmem %s0, %s409
        %s411 = smul.u32 8, %s20
      $region72: #{tpu_custom_call.1} parent=67 // pred_fallthru
        _
    $region68: #{tpu_custom_call.1} parent=5 // pred_fallthru
      _
    %p412 = scmp.le.s32.totalorder 1, %s20
    %p413 = scmp.lt.s32.totalorder %s20, 3
    %p414 = pnand %p412, %p413
    %p415 = pneg %p414
    // Predicated region
    $region73: #{tpu_custom_call.1} parent=5 // pred_check
      _
    $region74: #{tpu_custom_call.1} parent=5 // pred_check_branch
      %417 = sbr.rel (%p414) target = $region76
    $region75: #{tpu_custom_call.1} parent=5 // pred_region
      %s418 = ssub.s32 %s20, 1
      %s419 = smul.u32 8, %s25
      %p420 = scmp.lt.s32.totalorder %s419, 15
      %s421 = scalar_select %p420, %s419, 15
      %s422 = smul.addr %s421, 8
      %s423 = scalar_lea.vmem %s0, %s422
      %p424 = pneg %p46
      %p425 = pneg %p43
      %p426 = pneg %p67
      %p427 = pneg %p64
      %p428 = pneg %p88
      %p429 = pneg %p85
      %p430 = pneg %p109
      %p431 = pneg %p106
      %p432 = pneg %p130
      %p433 = pneg %p127
      %p434 = pneg %p151
      %p435 = pneg %p148
      %p436 = pneg %p172
      %p437 = pneg %p169
      %p438 = pneg %p193
      %p439 = pneg %p190
      %p440 = pneg %p214
      %p441 = pneg %p211
      %p442 = pneg %p235
      %p443 = pneg %p232
      %p444 = pneg %p256
      %p445 = pneg %p253
      %p446 = pneg %p277
      %p447 = pneg %p274
      %p448 = pneg %p298
      %p449 = pneg %p295
      %p450 = pneg %p319
      %p451 = pneg %p316
      %p452 = pneg %p345
      %p453 = pneg %p342
      %s454 = smul.u32 8, %s25
      %p455 = scmp.lt.s32.totalorder %s454, 15
      %s456 = scalar_select %p455, %s454, 15
      %s457 = smul.addr %s456, 8
      %s458 = scalar_lea.vmem %s14, %s457
      %s459 = smul.u32 8, %s25
      %p460 = scmp.lt.s32.totalorder %s459, 15
      %s461 = scalar_select %p460, %s459, 15
      %s462 = smul.addr %s461, 8
      %s463 = scalar_lea.vmem %s0, %s462
      %s464 = smul.u32 8, %s25
      %s465 = smul.u32 8, %s25
      %p466 = scmp.lt.s32.totalorder %s465, 15
      %s467 = scalar_select %p466, %s465, 15
      %s468 = smul.addr %s467, 8
      %s469 = scalar_lea.vmem %s14, %s468
      %s470 = smul.u32 8, %s25
      %v471 = vld [vmem:[%s463] sm:$0xff]
      %v472 = vld [vmem:[%s463 + $0x8] sm:$0xff]
      %v473 = vld [vmem:[%s463 + $0x10] sm:$0xff]
      %v474 = vld [vmem:[%s463 + $0x18] sm:$0xff]
      %v475 = vld [vmem:[%s463 + $0x20] sm:$0xff]
      %v476 = vld [vmem:[%s463 + $0x28] sm:$0xff]
      %v477 = vld [vmem:[%s463 + $0x30] sm:$0xff]
      %v478 = vld [vmem:[%s463 + $0x38] sm:$0xff]
      %v479 = vld [vmem:[%s1] sm:$0xff]
      %v480 = vld [vmem:[%s1 + $0x8] sm:$0xff]
      %v481 = vld [vmem:[%s1 + $0x10] sm:$0xff]
      %v482 = vld [vmem:[%s1 + $0x18] sm:$0xff]
      %vm483 = vcmask 261120
      %v485 = vsel %vm483, %v471, 0
      %v488 = vsel %vm483, %v472, 0
      %v491 = vsel %vm483, %v473, 0
      %v494 = vsel %vm483, %v474, 0
      %v497 = vsel %vm483, %v475, 0
      %v500 = vsel %vm483, %v476, 0
      %v503 = vsel %vm483, %v477, 0
      %v506 = vsel %vm483, %v478, 0
      %508 = vmatprep.subr.mxu0 0.0
      %509 = vmatpush1.msra.mxu0 0.0
      %510 = vmatprep.subr.mxu0 0.0
      %511 = vmatpush1.msra.mxu0 0.0
      %512 = vmatprep.subr.mxu0 0.0
      %513 = vmatpush1.msra.mxu0 0.0
      %514 = vmatprep.subr.mxu0 0.0
      %515 = vmatpush1.msra.mxu0 0.0
      %516 = vmatprep.subr.mxu0 0.0
      %517 = vmatpush1.msra.mxu0 0.0
      %518 = vmatprep.subr.mxu0 0.0
      %519 = vmatpush1.msra.mxu0 0.0
      %520 = vmatprep.subr.mxu0 0.0
      %521 = vmatpush1.msra.mxu0 0.0
      %522 = vmatprep.subr.mxu0 0.0
      %523 = vmatpush1.msra.mxu0 0.0
      %524 = vmatprep.subr.mxu0 0.0
      %525 = vmatpush1.msra.mxu0 0.0
      %526 = vmatprep.subr.mxu0 0.0
      %527 = vmatpush1.msra.mxu0 0.0
      %528 = vmatprep.subr.mxu0 0.0
      %529 = vmatpush1.msra.mxu0 0.0
      %530 = vmatprep.subr.mxu0 0.0
      %531 = vmatpush1.msra.mxu0 0.0
      %532 = vmatprep.subr.mxu0 0.0
      %533 = vmatpush1.msra.mxu0 %v482
      %534 = vmatprep.subr.mxu0 0.0
      %535 = vmatpush1.msra.mxu0 %v481
      %536 = vmatprep.subr.mxu0 0.0
      %537 = vmatpush1.msra.mxu0 %v480
      %538 = vmatprep.subr.mxu0 0.0
      %539 = vmatpush1.msra.mxu0 %v479
      %540 = vmatprep.subr.mxu0 0.0
      %541 = vmatpush2.msra.mxu0 0.0
      %542 = vmatprep.subr.mxu0 0.0
      %543 = vmatpush2.msra.mxu0 0.0
      %544 = vmatprep.subr.mxu0 0.0
      %545 = vmatpush2.msra.mxu0 0.0
      %546 = vmatprep.subr.mxu0 0.0
      %547 = vmatpush2.msra.mxu0 0.0
      %548 = vmatprep.subr.mxu0 0.0
      %549 = vmatpush2.msra.mxu0 0.0
      %550 = vmatprep.subr.mxu0 0.0
      %551 = vmatpush2.msra.mxu0 0.0
      %552 = vmatprep.subr.mxu0 0.0
      %553 = vmatpush2.msra.mxu0 0.0
      %554 = vmatprep.subr.mxu0 0.0
      %555 = vmatpush2.msra.mxu0 0.0
      %556 = vmatprep.subr.mxu0 0.0
      %557 = vmatpush2.msra.mxu0 0.0
      %558 = vmatprep.subr.mxu0 0.0
      %559 = vmatpush2.msra.mxu0 0.0
      %560 = vmatprep.subr.mxu0 0.0
      %561 = vmatpush2.msra.mxu0 0.0
      %562 = vmatprep.subr.mxu0 0.0
      %563 = vmatpush2.msra.mxu0 0.0
      %564 = vmatprep.subr.mxu0 0.0
      %565 = vmatpush2.msra.mxu0 0.0
      %566 = vmatprep.subr.mxu0 0.0
      %567 = vmatpush2.msra.mxu0 0.0
      %568 = vmatprep.subr.mxu0 0.0
      %569 = vmatpush2.msra.mxu0 0.0
      %570 = vmatprep.subr.mxu0 0.0
      %571 = vmatpush2.msra.mxu0 0.0
      %572 = vmatprep.mubr.f32.mxu0 0.0
      %573 = vmatmul.mubr.f32.gmra.mxu0 %v485
      %v574 = vpop.f32.mrf.mxu0
      %v575 = vadd.f32 0.0, %v574
      %v576 = vpop.f32.mrf.mxu0
      %577 = vmatprep.mubr.f32.mxu0 0.0
      %578 = vmatmul.mubr.f32.gmra.mxu0 %v488
      %v579 = vpop.f32.mrf.mxu0
      %v580 = vadd.f32 0.0, %v579
      %v581 = vpop.f32.mrf.mxu0
      %582 = vmatprep.mubr.f32.mxu0 0.0
      %583 = vmatmul.mubr.f32.gmra.mxu0 %v491
      %v584 = vpop.f32.mrf.mxu0
      %v585 = vadd.f32 0.0, %v584
      %v586 = vpop.f32.mrf.mxu0
      %587 = vmatprep.mubr.f32.mxu0 0.0
      %588 = vmatmul.mubr.f32.gmra.mxu0 %v494
      %v589 = vpop.f32.mrf.mxu0
      %v590 = vadd.f32 0.0, %v589
      %v591 = vpop.f32.mrf.mxu0
      %592 = vmatprep.mubr.f32.mxu0 0.0
      %593 = vmatmul.mubr.f32.gmra.mxu0 %v497
      %v594 = vpop.f32.mrf.mxu0
      %v595 = vadd.f32 0.0, %v594
      %v596 = vpop.f32.mrf.mxu0
      %597 = vmatprep.mubr.f32.mxu0 0.0
      %598 = vmatmul.mubr.f32.gmra.mxu0 %v500
      %v599 = vpop.f32.mrf.mxu0
      %v600 = vadd.f32 0.0, %v599
      %v601 = vpop.f32.mrf.mxu0
      %602 = vmatprep.mubr.f32.mxu0 0.0
      %603 = vmatmul.mubr.f32.gmra.mxu0 %v503
      %v604 = vpop.f32.mrf.mxu0
      %v605 = vadd.f32 0.0, %v604
      %v606 = vpop.f32.mrf.mxu0
      %607 = vmatprep.mubr.f32.mxu0 0.0
      %608 = vmatmul.mubr.f32.gmra.mxu0 %v506
      %v609 = vpop.f32.mrf.mxu0
      %v610 = vadd.f32 0.0, %v609
      %v611 = vpop.f32.mrf.mxu0
      %612 = vdwg.mxu0
      %v613 = vld [vmem:[%s3] sm:$0x1]
      %v615 = vlaneseq
      %v616 = vshrl.u32 %v615, 7
      %v617 = vsub.s32 0, %v616
      %v618 = vrot.slane %v613, %v617
      %v620 = vld [vmem:[%s2] sm:$0x1]
      %v621 = vlaneseq
      %v622 = vshrl.u32 %v621, 7
      %v623 = vsub.s32 0, %v622
      %v624 = vrot.slane %v620, %v623
      %v625 = vmul.f32 %v624, 0.0
      %v626 = vmul.f32 %v624, %v575
      %v627 = vmul.f32 %v624, %v580
      %v628 = vmul.f32 %v624, %v585
      %v629 = vmul.f32 %v624, %v590
      %v630 = vmul.f32 %v624, %v595
      %v631 = vadd.f32 %v618, %v625
      %v632 = vadd.f32 %v618, %v626
      %v633 = vadd.f32 %v618, %v627
      %v634 = vadd.f32 %v618, %v628
      %v635 = vadd.f32 %v618, %v629
      %v636 = vadd.f32 %v618, %v630
      %v637 = vld [vmem:[%s2 + $0x1] sm:$0x1]
      %v638 = vlaneseq
      %v639 = vshrl.u32 %v638, 7
      %v640 = vsub.s32 0, %v639
      %v641 = vrot.slane %v637, %v640
      %v642 = vmul.f32 %v641, 0.0
      %v643 = vmul.f32 %v641, %v575
      %v644 = vmul.f32 %v641, %v580
      %v645 = vmul.f32 %v641, %v585
      %v646 = vmul.f32 %v641, %v590
      %v647 = vmul.f32 %v641, %v595
      %v648 = vmul.f32 %v641, %v600
      %v649 = vadd.f32 %v631, %v642
      %v650 = vadd.f32 %v631, %v643
      %v651 = vadd.f32 %v632, %v644
      %v652 = vadd.f32 %v633, %v645
      %v653 = vadd.f32 %v634, %v646
      %v654 = vadd.f32 %v635, %v647
      %v655 = vadd.f32 %v636, %v648
      %v656 = vld [vmem:[%s2 + $0x2] sm:$0x1]
      %v657 = vlaneseq
      %v658 = vshrl.u32 %v657, 7
      %v659 = vsub.s32 0, %v658
      %v660 = vrot.slane %v656, %v659
      %v661 = vmul.f32 %v660, 0.0
      %v662 = vmul.f32 %v660, %v575
      %v663 = vmul.f32 %v660, %v580
      %v664 = vmul.f32 %v660, %v585
      %v665 = vmul.f32 %v660, %v590
      %v666 = vmul.f32 %v660, %v595
      %v667 = vmul.f32 %v660, %v600
      %v668 = vmul.f32 %v660, %v605
      %v669 = vadd.f32 %v649, %v661
      %v670 = vadd.f32 %v649, %v662
      %v671 = vadd.f32 %v650, %v663
      %v672 = vadd.f32 %v651, %v664
      %v673 = vadd.f32 %v652, %v665
      %v674 = vadd.f32 %v653, %v666
      %v675 = vadd.f32 %v654, %v667
      %v676 = vadd.f32 %v655, %v668
      %v677 = vld [vmem:[%s2 + $0x3] sm:$0x1]
      %v678 = vlaneseq
      %v679 = vshrl.u32 %v678, 7
      %v680 = vsub.s32 0, %v679
      %v681 = vrot.slane %v677, %v680
      %v682 = vmul.f32 %v681, %v575
      %v683 = vmul.f32 %v681, %v580
      %v684 = vmul.f32 %v681, %v585
      %v685 = vmul.f32 %v681, %v590
      %v686 = vmul.f32 %v681, %v595
      %v687 = vmul.f32 %v681, %v600
      %v688 = vmul.f32 %v681, %v605
      %v689 = vmul.f32 %v681, %v610
      %v690 = vadd.f32 %v669, %v682
      %v691 = vadd.f32 %v670, %v683
      %v692 = vadd.f32 %v671, %v684
      %v693 = vadd.f32 %v672, %v685
      %v694 = vadd.f32 %v673, %v686
      %v695 = vadd.f32 %v674, %v687
      %v696 = vadd.f32 %v675, %v688
      %v697 = vadd.f32 %v676, %v689
      %v698 = vsub.f32 0.0, %v690
      %v699 = vsub.f32 0.0, %v691
      %v700 = vsub.f32 0.0, %v692
      %v701 = vsub.f32 0.0, %v693
      %v702 = vsub.f32 0.0, %v694
      %v703 = vsub.f32 0.0, %v695
      %v704 = vsub.f32 0.0, %v696
      %v705 = vsub.f32 0.0, %v697
      %v706 = vmul.f32 %v698, 1.442695
      %v707 = vpow.pop %v706
      %v708 = vmul.f32 %v699, 1.442695
      %v709 = vpow.pop %v708
      %v710 = vmul.f32 %v700, 1.442695
      %v711 = vpow.pop %v710
      %v712 = vmul.f32 %v701, 1.442695
      %v713 = vpow.pop %v712
      %v714 = vmul.f32 %v702, 1.442695
      %v715 = vpow.pop %v714
      %v716 = vmul.f32 %v703, 1.442695
      %v717 = vpow.pop %v716
      %v718 = vmul.f32 %v704, 1.442695
      %v719 = vpow.pop %v718
      %v720 = vmul.f32 %v705, 1.442695
      %v721 = vpow.pop %v720
      %v722 = vadd.f32 %v707, 1.0
      %v723 = vadd.f32 %v709, 1.0
      %v724 = vadd.f32 %v711, 1.0
      %v725 = vadd.f32 %v713, 1.0
      %v726 = vadd.f32 %v715, 1.0
      %v727 = vadd.f32 %v717, 1.0
      %v728 = vadd.f32 %v719, 1.0
      %v729 = vadd.f32 %v721, 1.0
      %v730 = vrcp.pop %v722
      %v731 = vmul.f32 1.0, %v730
      %v732 = vrcp.pop %v723
      %v733 = vmul.f32 1.0, %v732
      %v734 = vrcp.pop %v724
      %v735 = vmul.f32 1.0, %v734
      %v736 = vrcp.pop %v725
      %v737 = vmul.f32 1.0, %v736
      %v738 = vrcp.pop %v726
      %v739 = vmul.f32 1.0, %v738
      %v740 = vrcp.pop %v727
      %v741 = vmul.f32 1.0, %v740
      %v742 = vrcp.pop %v728
      %v743 = vmul.f32 1.0, %v742
      %v744 = vrcp.pop %v729
      %v745 = vmul.f32 1.0, %v744
      %v746 = vmul.f32 %v690, %v731
      %v747 = vmul.f32 %v691, %v733
      %v748 = vmul.f32 %v692, %v735
      %v749 = vmul.f32 %v693, %v737
      %v750 = vmul.f32 %v694, %v739
      %v751 = vmul.f32 %v695, %v741
      %v752 = vmul.f32 %v696, %v743
      %v753 = vmul.f32 %v697, %v745
      %v754 = vld [vmem:[%s4] sm:$0xff]
      %v755 = vld [vmem:[%s4 + $0x8] sm:$0xff]
      %v756 = vld [vmem:[%s4 + $0x10] sm:$0xff]
      %v757 = vld [vmem:[%s4 + $0x18] sm:$0xff]
      %v758 = vld [vmem:[%s4 + $0x20] sm:$0xff]
      %v759 = vld [vmem:[%s4 + $0x28] sm:$0xff]
      %v760 = vld [vmem:[%s4 + $0x30] sm:$0xff]
      %v761 = vld [vmem:[%s4 + $0x38] sm:$0xff]
      %vm762 = vcmask 523264
      %v764 = vsel %vm762, %v746, 0
      %v767 = vsel %vm762, %v747, 0
      %v770 = vsel %vm762, %v748, 0
      %v773 = vsel %vm762, %v749, 0
      %v776 = vsel %vm762, %v750, 0
      %v779 = vsel %vm762, %v751, 0
      %v782 = vsel %vm762, %v752, 0
      %v785 = vsel %vm762, %v753, 0
      %787 = vmatprep.subr.mxu0 0.0
      %788 = vmatpush1.msra.mxu0 0.0
      %789 = vmatprep.subr.mxu0 0.0
      %790 = vmatpush1.msra.mxu0 0.0
      %791 = vmatprep.subr.mxu0 0.0
      %792 = vmatpush1.msra.mxu0 0.0
      %793 = vmatprep.subr.mxu0 0.0
      %794 = vmatpush1.msra.mxu0 0.0
      %795 = vmatprep.subr.mxu0 0.0
      %796 = vmatpush1.msra.mxu0 0.0
      %797 = vmatprep.subr.mxu0 0.0
      %798 = vmatpush1.msra.mxu0 0.0
      %799 = vmatprep.subr.mxu0 0.0
      %800 = vmatpush1.msra.mxu0 0.0
      %801 = vmatprep.subr.mxu0 0.0
      %802 = vmatpush1.msra.mxu0 0.0
      %803 = vmatprep.subr.mxu0 0.0
      %804 = vmatpush1.msra.mxu0 %v761
      %805 = vmatprep.subr.mxu0 0.0
      %806 = vmatpush1.msra.mxu0 %v760
      %807 = vmatprep.subr.mxu0 0.0
      %808 = vmatpush1.msra.mxu0 %v759
      %809 = vmatprep.subr.mxu0 0.0
      %810 = vmatpush1.msra.mxu0 %v758
      %811 = vmatprep.subr.mxu0 0.0
      %812 = vmatpush1.msra.mxu0 %v757
      %813 = vmatprep.subr.mxu0 0.0
      %814 = vmatpush1.msra.mxu0 %v756
      %815 = vmatprep.subr.mxu0 0.0
      %816 = vmatpush1.msra.mxu0 %v755
      %817 = vmatprep.subr.mxu0 0.0
      %818 = vmatpush1.msra.mxu0 %v754
      %819 = vmatprep.subr.mxu0 0.0
      %820 = vmatpush2.msra.mxu0 0.0
      %821 = vmatprep.subr.mxu0 0.0
      %822 = vmatpush2.msra.mxu0 0.0
      %823 = vmatprep.subr.mxu0 0.0
      %824 = vmatpush2.msra.mxu0 0.0
      %825 = vmatprep.subr.mxu0 0.0
      %826 = vmatpush2.msra.mxu0 0.0
      %827 = vmatprep.subr.mxu0 0.0
      %828 = vmatpush2.msra.mxu0 0.0
      %829 = vmatprep.subr.mxu0 0.0
      %830 = vmatpush2.msra.mxu0 0.0
      %831 = vmatprep.subr.mxu0 0.0
      %832 = vmatpush2.msra.mxu0 0.0
      %833 = vmatprep.subr.mxu0 0.0
      %834 = vmatpush2.msra.mxu0 0.0
      %835 = vmatprep.subr.mxu0 0.0
      %836 = vmatpush2.msra.mxu0 0.0
      %837 = vmatprep.subr.mxu0 0.0
      %838 = vmatpush2.msra.mxu0 0.0
      %839 = vmatprep.subr.mxu0 0.0
      %840 = vmatpush2.msra.mxu0 0.0
      %841 = vmatprep.subr.mxu0 0.0
      %842 = vmatpush2.msra.mxu0 0.0
      %843 = vmatprep.subr.mxu0 0.0
      %844 = vmatpush2.msra.mxu0 0.0
      %845 = vmatprep.subr.mxu0 0.0
      %846 = vmatpush2.msra.mxu0 0.0
      %847 = vmatprep.subr.mxu0 0.0
      %848 = vmatpush2.msra.mxu0 0.0
      %849 = vmatprep.subr.mxu0 0.0
      %850 = vmatpush2.msra.mxu0 0.0
      %851 = vmatprep.mubr.f32.mxu0 0.0
      %852 = vmatmul.mubr.f32.gmra.mxu0 %v764
      %v853 = vpop.f32.mrf.mxu0
      %v854 = vadd.f32 0.0, %v853
      %v855 = vpop.f32.mrf.mxu0
      %856 = vmatprep.mubr.f32.mxu0 0.0
      %857 = vmatmul.mubr.f32.gmra.mxu0 %v767
      %v858 = vpop.f32.mrf.mxu0
      %v859 = vadd.f32 0.0, %v858
      %v860 = vpop.f32.mrf.mxu0
      %861 = vmatprep.mubr.f32.mxu0 0.0
      %862 = vmatmul.mubr.f32.gmra.mxu0 %v770
      %v863 = vpop.f32.mrf.mxu0
      %v864 = vadd.f32 0.0, %v863
      %v865 = vpop.f32.mrf.mxu0
      %866 = vmatprep.mubr.f32.mxu0 0.0
      %867 = vmatmul.mubr.f32.gmra.mxu0 %v773
      %v868 = vpop.f32.mrf.mxu0
      %v869 = vadd.f32 0.0, %v868
      %v870 = vpop.f32.mrf.mxu0
      %871 = vmatprep.mubr.f32.mxu0 0.0
      %872 = vmatmul.mubr.f32.gmra.mxu0 %v776
      %v873 = vpop.f32.mrf.mxu0
      %v874 = vadd.f32 0.0, %v873
      %v875 = vpop.f32.mrf.mxu0
      %876 = vmatprep.mubr.f32.mxu0 0.0
      %877 = vmatmul.mubr.f32.gmra.mxu0 %v779
      %v878 = vpop.f32.mrf.mxu0
      %v879 = vadd.f32 0.0, %v878
      %v880 = vpop.f32.mrf.mxu0
      %881 = vmatprep.mubr.f32.mxu0 0.0
      %882 = vmatmul.mubr.f32.gmra.mxu0 %v782
      %v883 = vpop.f32.mrf.mxu0
      %v884 = vadd.f32 0.0, %v883
      %v885 = vpop.f32.mrf.mxu0
      %886 = vmatprep.mubr.f32.mxu0 0.0
      %887 = vmatmul.mubr.f32.gmra.mxu0 %v785
      %v888 = vpop.f32.mrf.mxu0
      %v889 = vadd.f32 0.0, %v888
      %v890 = vpop.f32.mrf.mxu0
      %891 = vdwg.mxu0
      %v892 = vld [vmem:[%s6] sm:$0x1]
      %v894 = vlaneseq
      %v895 = vshrl.u32 %v894, 7
      %v896 = vsub.s32 0, %v895
      %v897 = vrot.slane %v892, %v896
      %v899 = vld [vmem:[%s5] sm:$0x1]
      %901 = vset.pattern.permute.xlu0 0
      %902 = vperm.xlu0 %901, %v854
      %v903 = vpop.permute.xlu0 %902
      %906 = vset.pattern.permute.xlu0 0
      %907 = vperm.xlu0 %906, %v859
      %v908 = vpop.permute.xlu0 %907
      %911 = vset.pattern.permute.xlu0 0
      %912 = vperm.xlu0 %911, %v864
      %v913 = vpop.permute.xlu0 %912
      %916 = vset.pattern.permute.xlu0 0
      %917 = vperm.xlu0 %916, %v869
      %v918 = vpop.permute.xlu0 %917
      %921 = vset.pattern.permute.xlu0 0
      %922 = vperm.xlu0 %921, %v874
      %v923 = vpop.permute.xlu0 %922
      %926 = vset.pattern.permute.xlu0 0
      %927 = vperm.xlu0 %926, %v879
      %v928 = vpop.permute.xlu0 %927
      %931 = vset.pattern.permute.xlu0 0
      %932 = vperm.xlu0 %931, %v884
      %v933 = vpop.permute.xlu0 %932
      %936 = vset.pattern.permute.xlu0 0
      %937 = vperm.xlu0 %936, %v889
      %v938 = vpop.permute.xlu0 %937
      %v940 = vlaneseq
      %v941 = vshrl.u32 %v940, 7
      %v942 = vsub.s32 0, %v941
      %v943 = vrot.slane %v899, %v942
      %v944 = vmul.f32 %v903, %v943
      %v945 = vmul.f32 %v908, %v943
      %v946 = vmul.f32 %v913, %v943
      %v947 = vmul.f32 %v918, %v943
      %v948 = vmul.f32 %v923, %v943
      %v949 = vmul.f32 %v928, %v943
      %v950 = vmul.f32 %v933, %v943
      %v951 = vmul.f32 %v938, %v943
      %v952 = vadd.f32 %v897, %v944
      %v953 = vadd.f32 %v897, %v945
      %v954 = vadd.f32 %v897, %v946
      %v955 = vadd.f32 %v897, %v947
      %v956 = vadd.f32 %v897, %v948
      %v957 = vadd.f32 %v897, %v949
      %v958 = vadd.f32 %v897, %v950
      %v959 = vadd.f32 %v897, %v951
      %v960 = vld [vmem:[%s5 + $0x1] sm:$0x1]
      %961 = vset.pattern.permute.xlu0 1
      %962 = vperm.xlu0 %961, %v854
      %v963 = vpop.permute.xlu0 %962
      %965 = vset.pattern.permute.xlu0 1
      %966 = vperm.xlu0 %965, %v859
      %v967 = vpop.permute.xlu0 %966
      %969 = vset.pattern.permute.xlu0 1
      %970 = vperm.xlu0 %969, %v864
      %v971 = vpop.permute.xlu0 %970
      %973 = vset.pattern.permute.xlu0 1
      %974 = vperm.xlu0 %973, %v869
      %v975 = vpop.permute.xlu0 %974
      %977 = vset.pattern.permute.xlu0 1
      %978 = vperm.xlu0 %977, %v874
      %v979 = vpop.permute.xlu0 %978
      %981 = vset.pattern.permute.xlu0 1
      %982 = vperm.xlu0 %981, %v879
      %v983 = vpop.permute.xlu0 %982
      %985 = vset.pattern.permute.xlu0 1
      %986 = vperm.xlu0 %985, %v884
      %v987 = vpop.permute.xlu0 %986
      %989 = vset.pattern.permute.xlu0 1
      %990 = vperm.xlu0 %989, %v889
      %v991 = vpop.permute.xlu0 %990
      %v993 = vlaneseq
      %v994 = vshrl.u32 %v993, 7
      %v995 = vsub.s32 0, %v994
      %v996 = vrot.slane %v960, %v995
      %v997 = vmul.f32 %v963, %v996
      %v998 = vmul.f32 %v967, %v996
      %v999 = vmul.f32 %v971, %v996
      %v1000 = vmul.f32 %v975, %v996
      %v1001 = vmul.f32 %v979, %v996
      %v1002 = vmul.f32 %v983, %v996
      %v1003 = vmul.f32 %v987, %v996
      %v1004 = vmul.f32 %v991, %v996
      %v1005 = vadd.f32 %v952, %v997
      %v1006 = vadd.f32 %v953, %v998
      %v1007 = vadd.f32 %v954, %v999
      %v1008 = vadd.f32 %v955, %v1000
      %v1009 = vadd.f32 %v956, %v1001
      %v1010 = vadd.f32 %v957, %v1002
      %v1011 = vadd.f32 %v958, %v1003
      %v1012 = vadd.f32 %v959, %v1004
      %v1013 = vmax.f32 %v1005, 0.0
      %v1014 = vmax.f32 %v1006, 0.0
      %v1015 = vmax.f32 %v1007, 0.0
      %v1016 = vmax.f32 %v1008, 0.0
      %v1017 = vmax.f32 %v1009, 0.0
      %v1018 = vmax.f32 %v1010, 0.0
      %v1019 = vmax.f32 %v1011, 0.0
      %v1020 = vmax.f32 %v1012, 0.0
      %v1021 = vand.u32 2147483647, %v1005
      %v1022 = vand.u32 2147483647, %v1006
      %v1023 = vand.u32 2147483647, %v1007
      %v1024 = vand.u32 2147483647, %v1008
      %v1025 = vand.u32 2147483647, %v1009
      %v1026 = vand.u32 2147483647, %v1010
      %v1027 = vand.u32 2147483647, %v1011
      %v1028 = vand.u32 2147483647, %v1012
      %v1029 = vsub.f32 0.0, %v1021
      %v1030 = vsub.f32 0.0, %v1022
      %v1031 = vsub.f32 0.0, %v1023
      %v1032 = vsub.f32 0.0, %v1024
      %v1033 = vsub.f32 0.0, %v1025
      %v1034 = vsub.f32 0.0, %v1026
      %v1035 = vsub.f32 0.0, %v1027
      %v1036 = vsub.f32 0.0, %v1028
      %v1037 = vmul.f32 %v1029, 1.442695
      %v1038 = vpow.pop %v1037
      %v1039 = vmul.f32 %v1030, 1.442695
      %v1040 = vpow.pop %v1039
      %v1041 = vmul.f32 %v1031, 1.442695
      %v1042 = vpow.pop %v1041
      %v1043 = vmul.f32 %v1032, 1.442695
      %v1044 = vpow.pop %v1043
      %v1045 = vmul.f32 %v1033, 1.442695
      %v1046 = vpow.pop %v1045
      %v1047 = vmul.f32 %v1034, 1.442695
      %v1048 = vpow.pop %v1047
      %v1049 = vmul.f32 %v1035, 1.442695
      %v1050 = vpow.pop %v1049
      %v1051 = vmul.f32 %v1036, 1.442695
      %v1052 = vpow.pop %v1051
      %v1053 = vadd.f32 %v1038, 1.0
      %v1054 = vadd.f32 %v1040, 1.0
      %v1055 = vadd.f32 %v1042, 1.0
      %v1056 = vadd.f32 %v1044, 1.0
      %v1057 = vadd.f32 %v1046, 1.0
      %v1058 = vadd.f32 %v1048, 1.0
      %v1059 = vadd.f32 %v1050, 1.0
      %v1060 = vadd.f32 %v1052, 1.0
      %v1061 = vlog2.pop %v1053
      %v1062 = vmul.f32 %v1061, 0.6931472
      %v1063 = vlog2.pop %v1054
      %v1064 = vmul.f32 %v1063, 0.6931472
      %v1065 = vlog2.pop %v1055
      %v1066 = vmul.f32 %v1065, 0.6931472
      %v1067 = vlog2.pop %v1056
      %v1068 = vmul.f32 %v1067, 0.6931472
      %v1069 = vlog2.pop %v1057
      %v1070 = vmul.f32 %v1069, 0.6931472
      %v1071 = vlog2.pop %v1058
      %v1072 = vmul.f32 %v1071, 0.6931472
      %v1073 = vlog2.pop %v1059
      %v1074 = vmul.f32 %v1073, 0.6931472
      %v1075 = vlog2.pop %v1060
      %v1076 = vmul.f32 %v1075, 0.6931472
      %v1077 = vadd.f32 %v1013, %v1062
      %v1078 = vadd.f32 %v1014, %v1064
      %v1079 = vadd.f32 %v1015, %v1066
      %v1080 = vadd.f32 %v1016, %v1068
      %v1081 = vadd.f32 %v1017, %v1070
      %v1082 = vadd.f32 %v1018, %v1072
      %v1083 = vadd.f32 %v1019, %v1074
      %v1084 = vadd.f32 %v1020, %v1076
      %v1085 = vld [vmem:[%s7] sm:$0xff]
      %v1086 = vld [vmem:[%s10] sm:$0xff]
      %v1087 = vld [vmem:[%s10 + $0x8] sm:$0xff]
      %v1088 = vld [vmem:[%s10 + $0x10] sm:$0xff]
      %v1089 = vld [vmem:[%s10 + $0x18] sm:$0xff]
      %v1090 = vld [vmem:[%s10 + $0x20] sm:$0xff]
      %v1091 = vld [vmem:[%s10 + $0x28] sm:$0xff]
      %v1092 = vld [vmem:[%s10 + $0x30] sm:$0xff]
      %v1093 = vld [vmem:[%s10 + $0x38] sm:$0xff]
      %v1094 = vld [vmem:[%s10 + $0x40] sm:$0xff]
      %v1095 = vld [vmem:[%s10 + $0x48] sm:$0xff]
      %v1096 = vld [vmem:[%s10 + $0x50] sm:$0xff]
      %v1097 = vld [vmem:[%s10 + $0x58] sm:$0xff]
      %v1098 = vld [vmem:[%s10 + $0x60] sm:$0xff]
      %v1099 = vld [vmem:[%s10 + $0x68] sm:$0xff]
      %v1100 = vld [vmem:[%s10 + $0x70] sm:$0xff]
      %v1101 = vld [vmem:[%s10 + $0x78] sm:$0xff]
      %v1102 = vld [vmem:[%s10 + $0x80] sm:$0xff]
      %v1103 = vld [vmem:[%s10 + $0x88] sm:$0xff]
      %v1104 = vld [vmem:[%s10 + $0x90] sm:$0xff]
      %v1105 = vld [vmem:[%s10 + $0x98] sm:$0xff]
      %v1106 = vld [vmem:[%s10 + $0xa0] sm:$0xff]
      %v1107 = vld [vmem:[%s10 + $0xa8] sm:$0xff]
      %v1108 = vld [vmem:[%s10 + $0xb0] sm:$0xff]
      %v1109 = vld [vmem:[%s10 + $0xb8] sm:$0xff]
      %v1110 = vld [vmem:[%s10 + $0xc0] sm:$0xff]
      %v1111 = vld [vmem:[%s10 + $0xc8] sm:$0xff]
      %v1112 = vld [vmem:[%s10 + $0xd0] sm:$0xff]
      %v1113 = vld [vmem:[%s10 + $0xd8] sm:$0xff]
      %v1114 = vld [vmem:[%s10 + $0xe0] sm:$0xff]
      %v1115 = vld [vmem:[%s10 + $0xe8] sm:$0xff]
      %v1116 = vld [vmem:[%s10 + $0xf0] sm:$0xff]
      %v1117 = vld [vmem:[%s10 + $0xf8] sm:$0xff]
      %v1118 = vld [vmem:[%s10 + $0x100] sm:$0xff]
      %v1119 = vld [vmem:[%s10 + $0x108] sm:$0xff]
      %v1120 = vld [vmem:[%s10 + $0x110] sm:$0xff]
      %v1121 = vld [vmem:[%s10 + $0x118] sm:$0xff]
      %v1122 = vld [vmem:[%s10 + $0x120] sm:$0xff]
      %v1123 = vld [vmem:[%s10 + $0x128] sm:$0xff]
      %v1124 = vld [vmem:[%s10 + $0x130] sm:$0xff]
      %v1125 = vld [vmem:[%s10 + $0x138] sm:$0xff]
      %v1126 = vld [vmem:[%s10 + $0x140] sm:$0xff]
      %v1127 = vld [vmem:[%s10 + $0x148] sm:$0xff]
      %v1128 = vld [vmem:[%s10 + $0x150] sm:$0xff]
      %v1129 = vld [vmem:[%s10 + $0x158] sm:$0xff]
      %v1130 = vld [vmem:[%s10 + $0x160] sm:$0xff]
      %v1131 = vld [vmem:[%s10 + $0x168] sm:$0xff]
      %v1132 = vld [vmem:[%s10 + $0x170] sm:$0xff]
      %v1133 = vld [vmem:[%s10 + $0x178] sm:$0xff]
      %v1134 = vld [vmem:[%s10 + $0x180] sm:$0xff]
      %v1135 = vld [vmem:[%s10 + $0x188] sm:$0xff]
      %v1136 = vld [vmem:[%s10 + $0x190] sm:$0xff]
      %v1137 = vld [vmem:[%s10 + $0x198] sm:$0xff]
      %v1138 = vld [vmem:[%s10 + $0x1a0] sm:$0xff]
      %v1139 = vld [vmem:[%s10 + $0x1a8] sm:$0xff]
      %v1140 = vld [vmem:[%s10 + $0x1b0] sm:$0xff]
      %v1141 = vld [vmem:[%s10 + $0x1b8] sm:$0xff]
      %v1142 = vld [vmem:[%s10 + $0x1c0] sm:$0xff]
      %v1143 = vld [vmem:[%s10 + $0x1c8] sm:$0xff]
      %v1144 = vld [vmem:[%s10 + $0x1d0] sm:$0xff]
      %v1145 = vld [vmem:[%s10 + $0x1d8] sm:$0xff]
      %v1146 = vld [vmem:[%s10 + $0x1e0] sm:$0xff]
      %v1147 = vld [vmem:[%s10 + $0x1e8] sm:$0xff]
      %v1148 = vld [vmem:[%s10 + $0x1f0] sm:$0xff]
      %v1149 = vld [vmem:[%s10 + $0x1f8] sm:$0xff]
      %v1151 = vsel %vm762, %v1077, 0
      %v1154 = vsel %vm762, %v1078, 0
      %v1157 = vsel %vm762, %v1079, 0
      %v1160 = vsel %vm762, %v1080, 0
      %v1163 = vsel %vm762, %v1081, 0
      %v1166 = vsel %vm762, %v1082, 0
      %v1169 = vsel %vm762, %v1083, 0
      %v1172 = vsel %vm762, %v1084, 0
      %1174 = vmatprep.subr.mxu0 0.0
      %1175 = vmatpush1.msra.mxu0 0.0
      %1176 = vmatprep.subr.mxu0 0.0
      %1177 = vmatpush1.msra.mxu0 0.0
      %1178 = vmatprep.subr.mxu0 0.0
      %1179 = vmatpush1.msra.mxu0 0.0
      %1180 = vmatprep.subr.mxu0 0.0
      %1181 = vmatpush1.msra.mxu0 0.0
      %1182 = vmatprep.subr.mxu0 0.0
      %1183 = vmatpush1.msra.mxu0 0.0
      %1184 = vmatprep.subr.mxu0 0.0
      %1185 = vmatpush1.msra.mxu0 0.0
      %1186 = vmatprep.subr.mxu0 0.0
      %1187 = vmatpush1.msra.mxu0 0.0
      %1188 = vmatprep.subr.mxu0 0.0
      %1189 = vmatpush1.msra.mxu0 0.0
      %1190 = vmatprep.subr.mxu0 %v1143
      %1191 = vmatpush1.msra.mxu0 %v1142
      %1192 = vmatprep.subr.mxu0 %v1135
      %1193 = vmatpush1.msra.mxu0 %v1134
      %1194 = vmatprep.subr.mxu0 %v1127
      %1195 = vmatpush1.msra.mxu0 %v1126
      %1196 = vmatprep.subr.mxu0 %v1119
      %1197 = vmatpush1.msra.mxu0 %v1118
      %1198 = vmatprep.subr.mxu0 %v1111
      %1199 = vmatpush1.msra.mxu0 %v1110
      %1200 = vmatprep.subr.mxu0 %v1103
      %1201 = vmatpush1.msra.mxu0 %v1102
      %1202 = vmatprep.subr.mxu0 %v1095
      %1203 = vmatpush1.msra.mxu0 %v1094
      %1204 = vmatprep.subr.mxu0 %v1087
      %1205 = vmatpush1.msra.mxu0 %v1086
      %1206 = vmatprep.subr.mxu0 0.0
      %1207 = vmatpush2.msra.mxu0 0.0
      %1208 = vmatprep.subr.mxu0 0.0
      %1209 = vmatpush2.msra.mxu0 0.0
      %1210 = vmatprep.subr.mxu0 0.0
      %1211 = vmatpush2.msra.mxu0 0.0
      %1212 = vmatprep.subr.mxu0 0.0
      %1213 = vmatpush2.msra.mxu0 0.0
      %1214 = vmatprep.subr.mxu0 0.0
      %1215 = vmatpush2.msra.mxu0 0.0
      %1216 = vmatprep.subr.mxu0 0.0
      %1217 = vmatpush2.msra.mxu0 0.0
      %1218 = vmatprep.subr.mxu0 0.0
      %1219 = vmatpush2.msra.mxu0 0.0
      %1220 = vmatprep.subr.mxu0 0.0
      %1221 = vmatpush2.msra.mxu0 0.0
      %1222 = vmatprep.subr.mxu0 0.0
      %1223 = vmatpush2.msra.mxu0 0.0
      %1224 = vmatprep.subr.mxu0 0.0
      %1225 = vmatpush2.msra.mxu0 0.0
      %1226 = vmatprep.subr.mxu0 0.0
      %1227 = vmatpush2.msra.mxu0 0.0
      %1228 = vmatprep.subr.mxu0 0.0
      %1229 = vmatpush2.msra.mxu0 0.0
      %1230 = vmatprep.subr.mxu0 0.0
      %1231 = vmatpush2.msra.mxu0 0.0
      %1232 = vmatprep.subr.mxu0 0.0
      %1233 = vmatpush2.msra.mxu0 0.0
      %1234 = vmatprep.subr.mxu0 0.0
      %1235 = vmatpush2.msra.mxu0 0.0
      %1236 = vmatprep.subr.mxu0 0.0
      %1237 = vmatpush2.msra.mxu0 0.0
      %1238 = vmatprep.mubr.f32.mxu0 0.0
      %1239 = vmatmul.mubr.f32.gmra.mxu0 %v1151
      %v1240 = vpop.f32.mrf.mxu0
      %v1241 = vadd.f32 0.0, %v1240
      %v1242 = vpop.f32.mrf.mxu0
      %v1243 = vadd.f32 0.0, %v1242
      %1244 = vmatprep.mubr.f32.mxu0 0.0
      %1245 = vmatmul.mubr.f32.gmra.mxu0 %v1154
      %v1246 = vpop.f32.mrf.mxu0
      %v1247 = vadd.f32 0.0, %v1246
      %v1248 = vpop.f32.mrf.mxu0
      %v1249 = vadd.f32 0.0, %v1248
      %1250 = vmatprep.mubr.f32.mxu0 0.0
      %1251 = vmatmul.mubr.f32.gmra.mxu0 %v1157
      %v1252 = vpop.f32.mrf.mxu0
      %v1253 = vadd.f32 0.0, %v1252
      %v1254 = vpop.f32.mrf.mxu0
      %v1255 = vadd.f32 0.0, %v1254
      %1256 = vmatprep.mubr.f32.mxu0 0.0
      %1257 = vmatmul.mubr.f32.gmra.mxu0 %v1160
      %v1258 = vpop.f32.mrf.mxu0
      %v1259 = vadd.f32 0.0, %v1258
      %v1260 = vpop.f32.mrf.mxu0
      %v1261 = vadd.f32 0.0, %v1260
      %1262 = vmatprep.mubr.f32.mxu0 0.0
      %1263 = vmatmul.mubr.f32.gmra.mxu0 %v1163
      %v1264 = vpop.f32.mrf.mxu0
      %v1265 = vadd.f32 0.0, %v1264
      %v1266 = vpop.f32.mrf.mxu0
      %v1267 = vadd.f32 0.0, %v1266
      %1268 = vmatprep.mubr.f32.mxu0 0.0
      %1269 = vmatmul.mubr.f32.gmra.mxu0 %v1166
      %v1270 = vpop.f32.mrf.mxu0
      %v1271 = vadd.f32 0.0, %v1270
      %v1272 = vpop.f32.mrf.mxu0
      %v1273 = vadd.f32 0.0, %v1272
      %1274 = vmatprep.mubr.f32.mxu0 0.0
      %1275 = vmatmul.mubr.f32.gmra.mxu0 %v1169
      %v1276 = vpop.f32.mrf.mxu0
      %v1277 = vadd.f32 0.0, %v1276
      %v1278 = vpop.f32.mrf.mxu0
      %v1279 = vadd.f32 0.0, %v1278
      %1280 = vmatprep.mubr.f32.mxu0 0.0
      %1281 = vmatmul.mubr.f32.gmra.mxu0 %v1172
      %v1282 = vpop.f32.mrf.mxu0
      %v1283 = vadd.f32 0.0, %v1282
      %v1284 = vpop.f32.mrf.mxu0
      %v1285 = vadd.f32 0.0, %v1284
      %1286 = vdwg.mxu0
      %1287 = vmatprep.subr.mxu0 0.0
      %1288 = vmatpush1.msra.mxu0 0.0
      %1289 = vmatprep.subr.mxu0 0.0
      %1290 = vmatpush1.msra.mxu0 0.0
      %1291 = vmatprep.subr.mxu0 0.0
      %1292 = vmatpush1.msra.mxu0 0.0
      %1293 = vmatprep.subr.mxu0 0.0
      %1294 = vmatpush1.msra.mxu0 0.0
      %1295 = vmatprep.subr.mxu0 0.0
      %1296 = vmatpush1.msra.mxu0 0.0
      %1297 = vmatprep.subr.mxu0 0.0
      %1298 = vmatpush1.msra.mxu0 0.0
      %1299 = vmatprep.subr.mxu0 0.0
      %1300 = vmatpush1.msra.mxu0 0.0
      %1301 = vmatprep.subr.mxu0 0.0
      %1302 = vmatpush1.msra.mxu0 0.0
      %1303 = vmatprep.subr.mxu0 %v1145
      %1304 = vmatpush1.msra.mxu0 %v1144
      %1305 = vmatprep.subr.mxu0 %v1137
      %1306 = vmatpush1.msra.mxu0 %v1136
      %1307 = vmatprep.subr.mxu0 %v1129
      %1308 = vmatpush1.msra.mxu0 %v1128
      %1309 = vmatprep.subr.mxu0 %v1121
      %1310 = vmatpush1.msra.mxu0 %v1120
      %1311 = vmatprep.subr.mxu0 %v1113
      %1312 = vmatpush1.msra.mxu0 %v1112
      %1313 = vmatprep.subr.mxu0 %v1105
      %1314 = vmatpush1.msra.mxu0 %v1104
      %1315 = vmatprep.subr.mxu0 %v1097
      %1316 = vmatpush1.msra.mxu0 %v1096
      %1317 = vmatprep.subr.mxu0 %v1089
      %1318 = vmatpush1.msra.mxu0 %v1088
      %1319 = vmatprep.subr.mxu0 0.0
      %1320 = vmatpush2.msra.mxu0 0.0
      %1321 = vmatprep.subr.mxu0 0.0
      %1322 = vmatpush2.msra.mxu0 0.0
      %1323 = vmatprep.subr.mxu0 0.0
      %1324 = vmatpush2.msra.mxu0 0.0
      %1325 = vmatprep.subr.mxu0 0.0
      %1326 = vmatpush2.msra.mxu0 0.0
      %1327 = vmatprep.subr.mxu0 0.0
      %1328 = vmatpush2.msra.mxu0 0.0
      %1329 = vmatprep.subr.mxu0 0.0
      %1330 = vmatpush2.msra.mxu0 0.0
      %1331 = vmatprep.subr.mxu0 0.0
      %1332 = vmatpush2.msra.mxu0 0.0
      %1333 = vmatprep.subr.mxu0 0.0
      %1334 = vmatpush2.msra.mxu0 0.0
      %1335 = vmatprep.subr.mxu0 0.0
      %1336 = vmatpush2.msra.mxu0 0.0
      %1337 = vmatprep.subr.mxu0 0.0
      %1338 = vmatpush2.msra.mxu0 0.0
      %1339 = vmatprep.subr.mxu0 0.0
      %1340 = vmatpush2.msra.mxu0 0.0
      %1341 = vmatprep.subr.mxu0 0.0
      %1342 = vmatpush2.msra.mxu0 0.0
      %1343 = vmatprep.subr.mxu0 0.0
      %1344 = vmatpush2.msra.mxu0 0.0
      %1345 = vmatprep.subr.mxu0 0.0
      %1346 = vmatpush2.msra.mxu0 0.0
      %1347 = vmatprep.subr.mxu0 0.0
      %1348 = vmatpush2.msra.mxu0 0.0
      %1349 = vmatprep.subr.mxu0 0.0
      %1350 = vmatpush2.msra.mxu0 0.0
      %1351 = vmatprep.mubr.f32.mxu0 0.0
      %1352 = vmatmul.mubr.f32.gmra.mxu0 %v1151
      %v1353 = vpop.f32.mrf.mxu0
      %v1354 = vadd.f32 0.0, %v1353
      %v1355 = vpop.f32.mrf.mxu0
      %v1356 = vadd.f32 0.0, %v1355
      %1357 = vmatprep.mubr.f32.mxu0 0.0
      %1358 = vmatmul.mubr.f32.gmra.mxu0 %v1154
      %v1359 = vpop.f32.mrf.mxu0
      %v1360 = vadd.f32 0.0, %v1359
      %v1361 = vpop.f32.mrf.mxu0
      %v1362 = vadd.f32 0.0, %v1361
      %1363 = vmatprep.mubr.f32.mxu0 0.0
      %1364 = vmatmul.mubr.f32.gmra.mxu0 %v1157
      %v1365 = vpop.f32.mrf.mxu0
      %v1366 = vadd.f32 0.0, %v1365
      %v1367 = vpop.f32.mrf.mxu0
      %v1368 = vadd.f32 0.0, %v1367
      %1369 = vmatprep.mubr.f32.mxu0 0.0
      %1370 = vmatmul.mubr.f32.gmra.mxu0 %v1160
      %v1371 = vpop.f32.mrf.mxu0
      %v1372 = vadd.f32 0.0, %v1371
      %v1373 = vpop.f32.mrf.mxu0
      %v1374 = vadd.f32 0.0, %v1373
      %1375 = vmatprep.mubr.f32.mxu0 0.0
      %1376 = vmatmul.mubr.f32.gmra.mxu0 %v1163
      %v1377 = vpop.f32.mrf.mxu0
      %v1378 = vadd.f32 0.0, %v1377
      %v1379 = vpop.f32.mrf.mxu0
      %v1380 = vadd.f32 0.0, %v1379
      %1381 = vmatprep.mubr.f32.mxu0 0.0
      %1382 = vmatmul.mubr.f32.gmra.mxu0 %v1166
      %v1383 = vpop.f32.mrf.mxu0
      %v1384 = vadd.f32 0.0, %v1383
      %v1385 = vpop.f32.mrf.mxu0
      %v1386 = vadd.f32 0.0, %v1385
      %1387 = vmatprep.mubr.f32.mxu0 0.0
      %1388 = vmatmul.mubr.f32.gmra.mxu0 %v1169
      %v1389 = vpop.f32.mrf.mxu0
      %v1390 = vadd.f32 0.0, %v1389
      %v1391 = vpop.f32.mrf.mxu0
      %v1392 = vadd.f32 0.0, %v1391
      %1393 = vmatprep.mubr.f32.mxu0 0.0
      %1394 = vmatmul.mubr.f32.gmra.mxu0 %v1172
      %v1395 = vpop.f32.mrf.mxu0
      %v1396 = vadd.f32 0.0, %v1395
      %v1397 = vpop.f32.mrf.mxu0
      %v1398 = vadd.f32 0.0, %v1397
      %1399 = vdwg.mxu0
      %1400 = vmatprep.subr.mxu0 0.0
      %1401 = vmatpush1.msra.mxu0 0.0
      %1402 = vmatprep.subr.mxu0 0.0
      %1403 = vmatpush1.msra.mxu0 0.0
      %1404 = vmatprep.subr.mxu0 0.0
      %1405 = vmatpush1.msra.mxu0 0.0
      %1406 = vmatprep.subr.mxu0 0.0
      %1407 = vmatpush1.msra.mxu0 0.0
      %1408 = vmatprep.subr.mxu0 0.0
      %1409 = vmatpush1.msra.mxu0 0.0
      %1410 = vmatprep.subr.mxu0 0.0
      %1411 = vmatpush1.msra.mxu0 0.0
      %1412 = vmatprep.subr.mxu0 0.0
      %1413 = vmatpush1.msra.mxu0 0.0
      %1414 = vmatprep.subr.mxu0 0.0
      %1415 = vmatpush1.msra.mxu0 0.0
      %1416 = vmatprep.subr.mxu0 %v1147
      %1417 = vmatpush1.msra.mxu0 %v1146
      %1418 = vmatprep.subr.mxu0 %v1139
      %1419 = vmatpush1.msra.mxu0 %v1138
      %1420 = vmatprep.subr.mxu0 %v1131
      %1421 = vmatpush1.msra.mxu0 %v1130
      %1422 = vmatprep.subr.mxu0 %v1123
      %1423 = vmatpush1.msra.mxu0 %v1122
      %1424 = vmatprep.subr.mxu0 %v1115
      %1425 = vmatpush1.msra.mxu0 %v1114
      %1426 = vmatprep.subr.mxu0 %v1107
      %1427 = vmatpush1.msra.mxu0 %v1106
      %1428 = vmatprep.subr.mxu0 %v1099
      %1429 = vmatpush1.msra.mxu0 %v1098
      %1430 = vmatprep.subr.mxu0 %v1091
      %1431 = vmatpush1.msra.mxu0 %v1090
      %1432 = vmatprep.subr.mxu0 0.0
      %1433 = vmatpush2.msra.mxu0 0.0
      %1434 = vmatprep.subr.mxu0 0.0
      %1435 = vmatpush2.msra.mxu0 0.0
      %1436 = vmatprep.subr.mxu0 0.0
      %1437 = vmatpush2.msra.mxu0 0.0
      %1438 = vmatprep.subr.mxu0 0.0
      %1439 = vmatpush2.msra.mxu0 0.0
      %1440 = vmatprep.subr.mxu0 0.0
      %1441 = vmatpush2.msra.mxu0 0.0
      %1442 = vmatprep.subr.mxu0 0.0
      %1443 = vmatpush2.msra.mxu0 0.0
      %1444 = vmatprep.subr.mxu0 0.0
      %1445 = vmatpush2.msra.mxu0 0.0
      %1446 = vmatprep.subr.mxu0 0.0
      %1447 = vmatpush2.msra.mxu0 0.0
      %1448 = vmatprep.subr.mxu0 0.0
      %1449 = vmatpush2.msra.mxu0 0.0
      %1450 = vmatprep.subr.mxu0 0.0
      %1451 = vmatpush2.msra.mxu0 0.0
      %1452 = vmatprep.subr.mxu0 0.0
      %1453 = vmatpush2.msra.mxu0 0.0
      %1454 = vmatprep.subr.mxu0 0.0
      %1455 = vmatpush2.msra.mxu0 0.0
      %1456 = vmatprep.subr.mxu0 0.0
      %1457 = vmatpush2.msra.mxu0 0.0
      %1458 = vmatprep.subr.mxu0 0.0
      %1459 = vmatpush2.msra.mxu0 0.0
      %1460 = vmatprep.subr.mxu0 0.0
      %1461 = vmatpush2.msra.mxu0 0.0
      %1462 = vmatprep.subr.mxu0 0.0
      %1463 = vmatpush2.msra.mxu0 0.0
      %1464 = vmatprep.mubr.f32.mxu0 0.0
      %1465 = vmatmul.mubr.f32.gmra.mxu0 %v1151
      %v1466 = vpop.f32.mrf.mxu0
      %v1467 = vadd.f32 0.0, %v1466
      %v1468 = vpop.f32.mrf.mxu0
      %v1469 = vadd.f32 0.0, %v1468
      %1470 = vmatprep.mubr.f32.mxu0 0.0
      %1471 = vmatmul.mubr.f32.gmra.mxu0 %v1154
      %v1472 = vpop.f32.mrf.mxu0
      %v1473 = vadd.f32 0.0, %v1472
      %v1474 = vpop.f32.mrf.mxu0
      %v1475 = vadd.f32 0.0, %v1474
      %1476 = vmatprep.mubr.f32.mxu0 0.0
      %1477 = vmatmul.mubr.f32.gmra.mxu0 %v1157
      %v1478 = vpop.f32.mrf.mxu0
      %v1479 = vadd.f32 0.0, %v1478
      %v1480 = vpop.f32.mrf.mxu0
      %v1481 = vadd.f32 0.0, %v1480
      %1482 = vmatprep.mubr.f32.mxu0 0.0
      %1483 = vmatmul.mubr.f32.gmra.mxu0 %v1160
      %v1484 = vpop.f32.mrf.mxu0
      %v1485 = vadd.f32 0.0, %v1484
      %v1486 = vpop.f32.mrf.mxu0
      %v1487 = vadd.f32 0.0, %v1486
      %1488 = vmatprep.mubr.f32.mxu0 0.0
      %1489 = vmatmul.mubr.f32.gmra.mxu0 %v1163
      %v1490 = vpop.f32.mrf.mxu0
      %v1491 = vadd.f32 0.0, %v1490
      %v1492 = vpop.f32.mrf.mxu0
      %v1493 = vadd.f32 0.0, %v1492
      %1494 = vmatprep.mubr.f32.mxu0 0.0
      %1495 = vmatmul.mubr.f32.gmra.mxu0 %v1166
      %v1496 = vpop.f32.mrf.mxu0
      %v1497 = vadd.f32 0.0, %v1496
      %v1498 = vpop.f32.mrf.mxu0
      %v1499 = vadd.f32 0.0, %v1498
      %1500 = vmatprep.mubr.f32.mxu0 0.0
      %1501 = vmatmul.mubr.f32.gmra.mxu0 %v1169
      %v1502 = vpop.f32.mrf.mxu0
      %v1503 = vadd.f32 0.0, %v1502
      %v1504 = vpop.f32.mrf.mxu0
      %v1505 = vadd.f32 0.0, %v1504
      %1506 = vmatprep.mubr.f32.mxu0 0.0
      %1507 = vmatmul.mubr.f32.gmra.mxu0 %v1172
      %v1508 = vpop.f32.mrf.mxu0
      %v1509 = vadd.f32 0.0, %v1508
      %v1510 = vpop.f32.mrf.mxu0
      %v1511 = vadd.f32 0.0, %v1510
      %1512 = vdwg.mxu0
      %1513 = vmatprep.subr.mxu0 0.0
      %1514 = vmatpush1.msra.mxu0 0.0
      %1515 = vmatprep.subr.mxu0 0.0
      %1516 = vmatpush1.msra.mxu0 0.0
      %1517 = vmatprep.subr.mxu0 0.0
      %1518 = vmatpush1.msra.mxu0 0.0
      %1519 = vmatprep.subr.mxu0 0.0
      %1520 = vmatpush1.msra.mxu0 0.0
      %1521 = vmatprep.subr.mxu0 0.0
      %1522 = vmatpush1.msra.mxu0 0.0
      %1523 = vmatprep.subr.mxu0 0.0
      %1524 = vmatpush1.msra.mxu0 0.0
      %1525 = vmatprep.subr.mxu0 0.0
      %1526 = vmatpush1.msra.mxu0 0.0
      %1527 = vmatprep.subr.mxu0 0.0
      %1528 = vmatpush1.msra.mxu0 0.0
      %1529 = vmatprep.subr.mxu0 %v1149
      %1530 = vmatpush1.msra.mxu0 %v1148
      %1531 = vmatprep.subr.mxu0 %v1141
      %1532 = vmatpush1.msra.mxu0 %v1140
      %1533 = vmatprep.subr.mxu0 %v1133
      %1534 = vmatpush1.msra.mxu0 %v1132
      %1535 = vmatprep.subr.mxu0 %v1125
      %1536 = vmatpush1.msra.mxu0 %v1124
      %1537 = vmatprep.subr.mxu0 %v1117
      %1538 = vmatpush1.msra.mxu0 %v1116
      %1539 = vmatprep.subr.mxu0 %v1109
      %1540 = vmatpush1.msra.mxu0 %v1108
      %1541 = vmatprep.subr.mxu0 %v1101
      %1542 = vmatpush1.msra.mxu0 %v1100
      %1543 = vmatprep.subr.mxu0 %v1093
      %1544 = vmatpush1.msra.mxu0 %v1092
      %1545 = vmatprep.subr.mxu0 0.0
      %1546 = vmatpush2.msra.mxu0 0.0
      %1547 = vmatprep.subr.mxu0 0.0
      %1548 = vmatpush2.msra.mxu0 0.0
      %1549 = vmatprep.subr.mxu0 0.0
      %1550 = vmatpush2.msra.mxu0 0.0
      %1551 = vmatprep.subr.mxu0 0.0
      %1552 = vmatpush2.msra.mxu0 0.0
      %1553 = vmatprep.subr.mxu0 0.0
      %1554 = vmatpush2.msra.mxu0 0.0
      %1555 = vmatprep.subr.mxu0 0.0
      %1556 = vmatpush2.msra.mxu0 0.0
      %1557 = vmatprep.subr.mxu0 0.0
      %1558 = vmatpush2.msra.mxu0 0.0
      %1559 = vmatprep.subr.mxu0 0.0
      %1560 = vmatpush2.msra.mxu0 0.0
      %1561 = vmatprep.subr.mxu0 0.0
      %1562 = vmatpush2.msra.mxu0 0.0
      %1563 = vmatprep.subr.mxu0 0.0
      %1564 = vmatpush2.msra.mxu0 0.0
      %1565 = vmatprep.subr.mxu0 0.0
      %1566 = vmatpush2.msra.mxu0 0.0
      %1567 = vmatprep.subr.mxu0 0.0
      %1568 = vmatpush2.msra.mxu0 0.0
      %1569 = vmatprep.subr.mxu0 0.0
      %1570 = vmatpush2.msra.mxu0 0.0
      %1571 = vmatprep.subr.mxu0 0.0
      %1572 = vmatpush2.msra.mxu0 0.0
      %1573 = vmatprep.subr.mxu0 0.0
      %1574 = vmatpush2.msra.mxu0 0.0
      %1575 = vmatprep.subr.mxu0 0.0
      %1576 = vmatpush2.msra.mxu0 0.0
      %1577 = vmatprep.mubr.f32.mxu0 0.0
      %1578 = vmatmul.mubr.f32.gmra.mxu0 %v1151
      %v1579 = vpop.f32.mrf.mxu0
      %v1580 = vadd.f32 0.0, %v1579
      %v1581 = vpop.f32.mrf.mxu0
      %v1582 = vadd.f32 0.0, %v1581
      %1583 = vmatprep.mubr.f32.mxu0 0.0
      %1584 = vmatmul.mubr.f32.gmra.mxu0 %v1154
      %v1585 = vpop.f32.mrf.mxu0
      %v1586 = vadd.f32 0.0, %v1585
      %v1587 = vpop.f32.mrf.mxu0
      %v1588 = vadd.f32 0.0, %v1587
      %1589 = vmatprep.mubr.f32.mxu0 0.0
      %1590 = vmatmul.mubr.f32.gmra.mxu0 %v1157
      %v1591 = vpop.f32.mrf.mxu0
      %v1592 = vadd.f32 0.0, %v1591
      %v1593 = vpop.f32.mrf.mxu0
      %v1594 = vadd.f32 0.0, %v1593
      %1595 = vmatprep.mubr.f32.mxu0 0.0
      %1596 = vmatmul.mubr.f32.gmra.mxu0 %v1160
      %v1597 = vpop.f32.mrf.mxu0
      %v1598 = vadd.f32 0.0, %v1597
      %v1599 = vpop.f32.mrf.mxu0
      %v1600 = vadd.f32 0.0, %v1599
      %1601 = vmatprep.mubr.f32.mxu0 0.0
      %1602 = vmatmul.mubr.f32.gmra.mxu0 %v1163
      %v1603 = vpop.f32.mrf.mxu0
      %v1604 = vadd.f32 0.0, %v1603
      %v1605 = vpop.f32.mrf.mxu0
      %v1606 = vadd.f32 0.0, %v1605
      %1607 = vmatprep.mubr.f32.mxu0 0.0
      %1608 = vmatmul.mubr.f32.gmra.mxu0 %v1166
      %v1609 = vpop.f32.mrf.mxu0
      %v1610 = vadd.f32 0.0, %v1609
      %v1611 = vpop.f32.mrf.mxu0
      %v1612 = vadd.f32 0.0, %v1611
      %1613 = vmatprep.mubr.f32.mxu0 0.0
      %1614 = vmatmul.mubr.f32.gmra.mxu0 %v1169
      %v1615 = vpop.f32.mrf.mxu0
      %v1616 = vadd.f32 0.0, %v1615
      %v1617 = vpop.f32.mrf.mxu0
      %v1618 = vadd.f32 0.0, %v1617
      %1619 = vmatprep.mubr.f32.mxu0 0.0
      %1620 = vmatmul.mubr.f32.gmra.mxu0 %v1172
      %v1621 = vpop.f32.mrf.mxu0
      %v1622 = vadd.f32 0.0, %v1621
      %v1623 = vpop.f32.mrf.mxu0
      %v1624 = vadd.f32 0.0, %v1623
      %1625 = vdwg.mxu0
      %v1627 = vlaneseq
      %v1628 = vshrl.u32 %v1627, 7
      %v1629 = vsub.s32 0, %v1628
      %v1630 = vrot.slane %v1085, %v1629
      %v1631 = vlaneseq
      %v1632 = vshrl.u32 %v1631, 7
      %v1633 = vsub.s32 1, %v1632
      %v1634 = vrot.slane %v1085, %v1633
      %v1635 = vlaneseq
      %v1636 = vshrl.u32 %v1635, 7
      %v1637 = vsub.s32 2, %v1636
      %v1638 = vrot.slane %v1085, %v1637
      %v1639 = vlaneseq
      %v1640 = vshrl.u32 %v1639, 7
      %v1641 = vsub.s32 3, %v1640
      %v1642 = vrot.slane %v1085, %v1641
      %v1643 = vlaneseq
      %v1644 = vshrl.u32 %v1643, 7
      %v1645 = vsub.s32 4, %v1644
      %v1646 = vrot.slane %v1085, %v1645
      %v1647 = vlaneseq
      %v1648 = vshrl.u32 %v1647, 7
      %v1649 = vsub.s32 5, %v1648
      %v1650 = vrot.slane %v1085, %v1649
      %v1651 = vlaneseq
      %v1652 = vshrl.u32 %v1651, 7
      %v1653 = vsub.s32 6, %v1652
      %v1654 = vrot.slane %v1085, %v1653
      %v1655 = vlaneseq
      %v1656 = vshrl.u32 %v1655, 7
      %v1657 = vsub.s32 7, %v1656
      %v1658 = vrot.slane %v1085, %v1657
      %v1667 = vmul.f32 %v1241, %v1630
      %v1668 = vmul.f32 %v1243, %v1634
      %v1669 = vmul.f32 %v1354, %v1638
      %v1670 = vmul.f32 %v1356, %v1642
      %v1671 = vmul.f32 %v1467, %v1646
      %v1672 = vmul.f32 %v1469, %v1650
      %v1673 = vmul.f32 %v1580, %v1654
      %v1674 = vmul.f32 %v1582, %v1658
      %v1675 = vmul.f32 %v1247, %v1630
      %v1676 = vmul.f32 %v1249, %v1634
      %v1677 = vmul.f32 %v1360, %v1638
      %v1678 = vmul.f32 %v1362, %v1642
      %v1679 = vmul.f32 %v1473, %v1646
      %v1680 = vmul.f32 %v1475, %v1650
      %v1681 = vmul.f32 %v1586, %v1654
      %v1682 = vmul.f32 %v1588, %v1658
      %v1683 = vmul.f32 %v1253, %v1630
      %v1684 = vmul.f32 %v1255, %v1634
      %v1685 = vmul.f32 %v1366, %v1638
      %v1686 = vmul.f32 %v1368, %v1642
      %v1687 = vmul.f32 %v1479, %v1646
      %v1688 = vmul.f32 %v1481, %v1650
      %v1689 = vmul.f32 %v1592, %v1654
      %v1690 = vmul.f32 %v1594, %v1658
      %v1691 = vmul.f32 %v1259, %v1630
      %v1692 = vmul.f32 %v1261, %v1634
      %v1693 = vmul.f32 %v1372, %v1638
      %v1694 = vmul.f32 %v1374, %v1642
      %v1695 = vmul.f32 %v1485, %v1646
      %v1696 = vmul.f32 %v1487, %v1650
      %v1697 = vmul.f32 %v1598, %v1654
      %v1698 = vmul.f32 %v1600, %v1658
      %v1699 = vmul.f32 %v1265, %v1630
      %v1700 = vmul.f32 %v1267, %v1634
      %v1701 = vmul.f32 %v1378, %v1638
      %v1702 = vmul.f32 %v1380, %v1642
      %v1703 = vmul.f32 %v1491, %v1646
      %v1704 = vmul.f32 %v1493, %v1650
      %v1705 = vmul.f32 %v1604, %v1654
      %v1706 = vmul.f32 %v1606, %v1658
      %v1707 = vmul.f32 %v1271, %v1630
      %v1708 = vmul.f32 %v1273, %v1634
      %v1709 = vmul.f32 %v1384, %v1638
      %v1710 = vmul.f32 %v1386, %v1642
      %v1711 = vmul.f32 %v1497, %v1646
      %v1712 = vmul.f32 %v1499, %v1650
      %v1713 = vmul.f32 %v1610, %v1654
      %v1714 = vmul.f32 %v1612, %v1658
      %v1715 = vmul.f32 %v1277, %v1630
      %v1716 = vmul.f32 %v1279, %v1634
      %v1717 = vmul.f32 %v1390, %v1638
      %v1718 = vmul.f32 %v1392, %v1642
      %v1719 = vmul.f32 %v1503, %v1646
      %v1720 = vmul.f32 %v1505, %v1650
      %v1721 = vmul.f32 %v1616, %v1654
      %v1722 = vmul.f32 %v1618, %v1658
      %v1723 = vmul.f32 %v1283, %v1630
      %v1724 = vmul.f32 %v1285, %v1634
      %v1725 = vmul.f32 %v1396, %v1638
      %v1726 = vmul.f32 %v1398, %v1642
      %v1727 = vmul.f32 %v1509, %v1646
      %v1728 = vmul.f32 %v1511, %v1650
      %v1729 = vmul.f32 %v1622, %v1654
      %v1730 = vmul.f32 %v1624, %v1658
      %v1731 = vmul.f32 %v1667, 1.442695
      %v1732 = vpow.pop %v1731
      %v1733 = vmul.f32 %v1668, 1.442695
      %v1734 = vpow.pop %v1733
      %v1735 = vmul.f32 %v1669, 1.442695
      %v1736 = vpow.pop %v1735
      %v1737 = vmul.f32 %v1670, 1.442695
      %v1738 = vpow.pop %v1737
      %v1739 = vmul.f32 %v1671, 1.442695
      %v1740 = vpow.pop %v1739
      %v1741 = vmul.f32 %v1672, 1.442695
      %v1742 = vpow.pop %v1741
      %v1743 = vmul.f32 %v1673, 1.442695
      %v1744 = vpow.pop %v1743
      %v1745 = vmul.f32 %v1674, 1.442695
      %v1746 = vpow.pop %v1745
      %v1747 = vmul.f32 %v1675, 1.442695
      %v1748 = vpow.pop %v1747
      %v1749 = vmul.f32 %v1676, 1.442695
      %v1750 = vpow.pop %v1749
      %v1751 = vmul.f32 %v1677, 1.442695
      %v1752 = vpow.pop %v1751
      %v1753 = vmul.f32 %v1678, 1.442695
      %v1754 = vpow.pop %v1753
      %v1755 = vmul.f32 %v1679, 1.442695
      %v1756 = vpow.pop %v1755
      %v1757 = vmul.f32 %v1680, 1.442695
      %v1758 = vpow.pop %v1757
      %v1759 = vmul.f32 %v1681, 1.442695
      %v1760 = vpow.pop %v1759
      %v1761 = vmul.f32 %v1682, 1.442695
      %v1762 = vpow.pop %v1761
      %v1763 = vmul.f32 %v1683, 1.442695
      %v1764 = vpow.pop %v1763
      %v1765 = vmul.f32 %v1684, 1.442695
      %v1766 = vpow.pop %v1765
      %v1767 = vmul.f32 %v1685, 1.442695
      %v1768 = vpow.pop %v1767
      %v1769 = vmul.f32 %v1686, 1.442695
      %v1770 = vpow.pop %v1769
      %v1771 = vmul.f32 %v1687, 1.442695
      %v1772 = vpow.pop %v1771
      %v1773 = vmul.f32 %v1688, 1.442695
      %v1774 = vpow.pop %v1773
      %v1775 = vmul.f32 %v1689, 1.442695
      %v1776 = vpow.pop %v1775
      %v1777 = vmul.f32 %v1690, 1.442695
      %v1778 = vpow.pop %v1777
      %v1779 = vmul.f32 %v1691, 1.442695
      %v1780 = vpow.pop %v1779
      %v1781 = vmul.f32 %v1692, 1.442695
      %v1782 = vpow.pop %v1781
      %v1783 = vmul.f32 %v1693, 1.442695
      %v1784 = vpow.pop %v1783
      %v1785 = vmul.f32 %v1694, 1.442695
      %v1786 = vpow.pop %v1785
      %v1787 = vmul.f32 %v1695, 1.442695
      %v1788 = vpow.pop %v1787
      %v1789 = vmul.f32 %v1696, 1.442695
      %v1790 = vpow.pop %v1789
      %v1791 = vmul.f32 %v1697, 1.442695
      %v1792 = vpow.pop %v1791
      %v1793 = vmul.f32 %v1698, 1.442695
      %v1794 = vpow.pop %v1793
      %v1795 = vmul.f32 %v1699, 1.442695
      %v1796 = vpow.pop %v1795
      %v1797 = vmul.f32 %v1700, 1.442695
      %v1798 = vpow.pop %v1797
      %v1799 = vmul.f32 %v1701, 1.442695
      %v1800 = vpow.pop %v1799
      %v1801 = vmul.f32 %v1702, 1.442695
      %v1802 = vpow.pop %v1801
      %v1803 = vmul.f32 %v1703, 1.442695
      %v1804 = vpow.pop %v1803
      %v1805 = vmul.f32 %v1704, 1.442695
      %v1806 = vpow.pop %v1805
      %v1807 = vmul.f32 %v1705, 1.442695
      %v1808 = vpow.pop %v1807
      %v1809 = vmul.f32 %v1706, 1.442695
      %v1810 = vpow.pop %v1809
      %v1811 = vmul.f32 %v1707, 1.442695
      %v1812 = vpow.pop %v1811
      %v1813 = vmul.f32 %v1708, 1.442695
      %v1814 = vpow.pop %v1813
      %v1815 = vmul.f32 %v1709, 1.442695
      %v1816 = vpow.pop %v1815
      %v1817 = vmul.f32 %v1710, 1.442695
      %v1818 = vpow.pop %v1817
      %v1819 = vmul.f32 %v1711, 1.442695
      %v1820 = vpow.pop %v1819
      %v1821 = vmul.f32 %v1712, 1.442695
      %v1822 = vpow.pop %v1821
      %v1823 = vmul.f32 %v1713, 1.442695
      %v1824 = vpow.pop %v1823
      %v1825 = vmul.f32 %v1714, 1.442695
      %v1826 = vpow.pop %v1825
      %v1827 = vmul.f32 %v1715, 1.442695
      %v1828 = vpow.pop %v1827
      %v1829 = vmul.f32 %v1716, 1.442695
      %v1830 = vpow.pop %v1829
      %v1831 = vmul.f32 %v1717, 1.442695
      %v1832 = vpow.pop %v1831
      %v1833 = vmul.f32 %v1718, 1.442695
      %v1834 = vpow.pop %v1833
      %v1835 = vmul.f32 %v1719, 1.442695
      %v1836 = vpow.pop %v1835
      %v1837 = vmul.f32 %v1720, 1.442695
      %v1838 = vpow.pop %v1837
      %v1839 = vmul.f32 %v1721, 1.442695
      %v1840 = vpow.pop %v1839
      %v1841 = vmul.f32 %v1722, 1.442695
      %v1842 = vpow.pop %v1841
      %v1843 = vmul.f32 %v1723, 1.442695
      %v1844 = vpow.pop %v1843
      %v1845 = vmul.f32 %v1724, 1.442695
      %v1846 = vpow.pop %v1845
      %v1847 = vmul.f32 %v1725, 1.442695
      %v1848 = vpow.pop %v1847
      %v1849 = vmul.f32 %v1726, 1.442695
      %v1850 = vpow.pop %v1849
      %v1851 = vmul.f32 %v1727, 1.442695
      %v1852 = vpow.pop %v1851
      %v1853 = vmul.f32 %v1728, 1.442695
      %v1854 = vpow.pop %v1853
      %v1855 = vmul.f32 %v1729, 1.442695
      %v1856 = vpow.pop %v1855
      %v1857 = vmul.f32 %v1730, 1.442695
      %v1858 = vpow.pop %v1857
      %1859 = vst [vmem:[#allocation2] sm:$0xff] %v1732
      %1860 = vst [vmem:[#allocation2 + $0x8] sm:$0xff] %v1734
      %1861 = vst [vmem:[#allocation2 + $0x10] sm:$0xff] %v1736
      %1862 = vst [vmem:[#allocation2 + $0x18] sm:$0xff] %v1738
      %1863 = vst [vmem:[#allocation2 + $0x20] sm:$0xff] %v1740
      %1864 = vst [vmem:[#allocation2 + $0x28] sm:$0xff] %v1742
      %1865 = vst [vmem:[#allocation2 + $0x30] sm:$0xff] %v1744
      %1866 = vst [vmem:[#allocation2 + $0x38] sm:$0xff] %v1746
      %1867 = vst [vmem:[#allocation2 + $0x40] sm:$0xff] %v1748
      %1868 = vst [vmem:[#allocation2 + $0x48] sm:$0xff] %v1750
      %1869 = vst [vmem:[#allocation2 + $0x50] sm:$0xff] %v1752
      %1870 = vst [vmem:[#allocation2 + $0x58] sm:$0xff] %v1754
      %1871 = vst [vmem:[#allocation2 + $0x60] sm:$0xff] %v1756
      %1872 = vst [vmem:[#allocation2 + $0x68] sm:$0xff] %v1758
      %1873 = vst [vmem:[#allocation2 + $0x70] sm:$0xff] %v1760
      %1874 = vst [vmem:[#allocation2 + $0x78] sm:$0xff] %v1762
      %1875 = vst [vmem:[#allocation2 + $0x80] sm:$0xff] %v1764
      %1876 = vst [vmem:[#allocation2 + $0x88] sm:$0xff] %v1766
      %1877 = vst [vmem:[#allocation2 + $0x90] sm:$0xff] %v1768
      %1878 = vst [vmem:[#allocation2 + $0x98] sm:$0xff] %v1770
      %1879 = vst [vmem:[#allocation2 + $0xa0] sm:$0xff] %v1772
      %1880 = vst [vmem:[#allocation2 + $0xa8] sm:$0xff] %v1774
      %1881 = vst [vmem:[#allocation2 + $0xb0] sm:$0xff] %v1776
      %1882 = vst [vmem:[#allocation2 + $0xb8] sm:$0xff] %v1778
      %1883 = vst [vmem:[#allocation2 + $0xc0] sm:$0xff] %v1780
      %1884 = vst [vmem:[#allocation2 + $0xc8] sm:$0xff] %v1782
      %1885 = vst [vmem:[#allocation2 + $0xd0] sm:$0xff] %v1784
      %1886 = vst [vmem:[#allocation2 + $0xd8] sm:$0xff] %v1786
      %1887 = vst [vmem:[#allocation2 + $0xe0] sm:$0xff] %v1788
      %1888 = vst [vmem:[#allocation2 + $0xe8] sm:$0xff] %v1790
      %1889 = vst [vmem:[#allocation2 + $0xf0] sm:$0xff] %v1792
      %1890 = vst [vmem:[#allocation2 + $0xf8] sm:$0xff] %v1794
      %1891 = vst [vmem:[#allocation2 + $0x100] sm:$0xff] %v1796
      %1892 = vst [vmem:[#allocation2 + $0x108] sm:$0xff] %v1798
      %1893 = vst [vmem:[#allocation2 + $0x110] sm:$0xff] %v1800
      %1894 = vst [vmem:[#allocation2 + $0x118] sm:$0xff] %v1802
      %1895 = vst [vmem:[#allocation2 + $0x120] sm:$0xff] %v1804
      %1896 = vst [vmem:[#allocation2 + $0x128] sm:$0xff] %v1806
      %1897 = vst [vmem:[#allocation2 + $0x130] sm:$0xff] %v1808
      %1898 = vst [vmem:[#allocation2 + $0x138] sm:$0xff] %v1810
      %1899 = vst [vmem:[#allocation2 + $0x140] sm:$0xff] %v1812
      %1900 = vst [vmem:[#allocation2 + $0x148] sm:$0xff] %v1814
      %1901 = vst [vmem:[#allocation2 + $0x150] sm:$0xff] %v1816
      %1902 = vst [vmem:[#allocation2 + $0x158] sm:$0xff] %v1818
      %1903 = vst [vmem:[#allocation2 + $0x160] sm:$0xff] %v1820
      %1904 = vst [vmem:[#allocation2 + $0x168] sm:$0xff] %v1822
      %1905 = vst [vmem:[#allocation2 + $0x170] sm:$0xff] %v1824
      %1906 = vst [vmem:[#allocation2 + $0x178] sm:$0xff] %v1826
      %1907 = vst [vmem:[#allocation2 + $0x180] sm:$0xff] %v1828
      %1908 = vst [vmem:[#allocation2 + $0x188] sm:$0xff] %v1830
      %1909 = vst [vmem:[#allocation2 + $0x190] sm:$0xff] %v1832
      %1910 = vst [vmem:[#allocation2 + $0x198] sm:$0xff] %v1834
      %1911 = vst [vmem:[#allocation2 + $0x1a0] sm:$0xff] %v1836
      %1912 = vst [vmem:[#allocation2 + $0x1a8] sm:$0xff] %v1838
      %1913 = vst [vmem:[#allocation2 + $0x1b0] sm:$0xff] %v1840
      %1914 = vst [vmem:[#allocation2 + $0x1b8] sm:$0xff] %v1842
      %1915 = vst [vmem:[#allocation2 + $0x1c0] sm:$0xff] %v1844
      %1916 = vst [vmem:[#allocation2 + $0x1c8] sm:$0xff] %v1846
      %1917 = vst [vmem:[#allocation2 + $0x1d0] sm:$0xff] %v1848
      %1918 = vst [vmem:[#allocation2 + $0x1d8] sm:$0xff] %v1850
      %1919 = vst [vmem:[#allocation2 + $0x1e0] sm:$0xff] %v1852
      %1920 = vst [vmem:[#allocation2 + $0x1e8] sm:$0xff] %v1854
      %1921 = vst [vmem:[#allocation2 + $0x1f0] sm:$0xff] %v1856
      %1922 = vst [vmem:[#allocation2 + $0x1f8] sm:$0xff] %v1858
      %v1923 = vmul.f32 %v1077, %v746
      %v1924 = vmul.f32 %v1078, %v747
      %v1925 = vmul.f32 %v1079, %v748
      %v1926 = vmul.f32 %v1080, %v749
      %v1927 = vmul.f32 %v1081, %v750
      %v1928 = vmul.f32 %v1082, %v751
      %v1929 = vmul.f32 %v1083, %v752
      %v1930 = vmul.f32 %v1084, %v753
      %v1931 = vld [vmem:[%s10] sm:$0xff]
      %v1932 = vld [vmem:[%s10 + $0x8] sm:$0xff]
      %v1933 = vld [vmem:[%s10 + $0x10] sm:$0xff]
      %v1934 = vld [vmem:[%s10 + $0x18] sm:$0xff]
      %v1935 = vld [vmem:[%s10 + $0x20] sm:$0xff]
      %v1936 = vld [vmem:[%s10 + $0x28] sm:$0xff]
      %v1937 = vld [vmem:[%s10 + $0x30] sm:$0xff]
      %v1938 = vld [vmem:[%s10 + $0x38] sm:$0xff]
      %v1939 = vld [vmem:[%s10 + $0x40] sm:$0xff]
      %v1940 = vld [vmem:[%s10 + $0x48] sm:$0xff]
      %v1941 = vld [vmem:[%s10 + $0x50] sm:$0xff]
      %v1942 = vld [vmem:[%s10 + $0x58] sm:$0xff]
      %v1943 = vld [vmem:[%s10 + $0x60] sm:$0xff]
      %v1944 = vld [vmem:[%s10 + $0x68] sm:$0xff]
      %v1945 = vld [vmem:[%s10 + $0x70] sm:$0xff]
      %v1946 = vld [vmem:[%s10 + $0x78] sm:$0xff]
      %v1947 = vld [vmem:[%s10 + $0x80] sm:$0xff]
      %v1948 = vld [vmem:[%s10 + $0x88] sm:$0xff]
      %v1949 = vld [vmem:[%s10 + $0x90] sm:$0xff]
      %v1950 = vld [vmem:[%s10 + $0x98] sm:$0xff]
      %v1951 = vld [vmem:[%s10 + $0xa0] sm:$0xff]
      %v1952 = vld [vmem:[%s10 + $0xa8] sm:$0xff]
      %v1953 = vld [vmem:[%s10 + $0xb0] sm:$0xff]
      %v1954 = vld [vmem:[%s10 + $0xb8] sm:$0xff]
      %v1955 = vld [vmem:[%s10 + $0xc0] sm:$0xff]
      %v1956 = vld [vmem:[%s10 + $0xc8] sm:$0xff]
      %v1957 = vld [vmem:[%s10 + $0xd0] sm:$0xff]
      %v1958 = vld [vmem:[%s10 + $0xd8] sm:$0xff]
      %v1959 = vld [vmem:[%s10 + $0xe0] sm:$0xff]
      %v1960 = vld [vmem:[%s10 + $0xe8] sm:$0xff]
      %v1961 = vld [vmem:[%s10 + $0xf0] sm:$0xff]
      %v1962 = vld [vmem:[%s10 + $0xf8] sm:$0xff]
      %v1963 = vld [vmem:[%s10 + $0x100] sm:$0xff]
      %v1964 = vld [vmem:[%s10 + $0x108] sm:$0xff]
      %v1965 = vld [vmem:[%s10 + $0x110] sm:$0xff]
      %v1966 = vld [vmem:[%s10 + $0x118] sm:$0xff]
      %v1967 = vld [vmem:[%s10 + $0x120] sm:$0xff]
      %v1968 = vld [vmem:[%s10 + $0x128] sm:$0xff]
      %v1969 = vld [vmem:[%s10 + $0x130] sm:$0xff]
      %v1970 = vld [vmem:[%s10 + $0x138] sm:$0xff]
      %v1971 = vld [vmem:[%s10 + $0x140] sm:$0xff]
      %v1972 = vld [vmem:[%s10 + $0x148] sm:$0xff]
      %v1973 = vld [vmem:[%s10 + $0x150] sm:$0xff]
      %v1974 = vld [vmem:[%s10 + $0x158] sm:$0xff]
      %v1975 = vld [vmem:[%s10 + $0x160] sm:$0xff]
      %v1976 = vld [vmem:[%s10 + $0x168] sm:$0xff]
      %v1977 = vld [vmem:[%s10 + $0x170] sm:$0xff]
      %v1978 = vld [vmem:[%s10 + $0x178] sm:$0xff]
      %v1979 = vld [vmem:[%s10 + $0x180] sm:$0xff]
      %v1980 = vld [vmem:[%s10 + $0x188] sm:$0xff]
      %v1981 = vld [vmem:[%s10 + $0x190] sm:$0xff]
      %v1982 = vld [vmem:[%s10 + $0x198] sm:$0xff]
      %v1983 = vld [vmem:[%s10 + $0x1a0] sm:$0xff]
      %v1984 = vld [vmem:[%s10 + $0x1a8] sm:$0xff]
      %v1985 = vld [vmem:[%s10 + $0x1b0] sm:$0xff]
      %v1986 = vld [vmem:[%s10 + $0x1b8] sm:$0xff]
      %v1987 = vld [vmem:[%s10 + $0x1c0] sm:$0xff]
      %v1988 = vld [vmem:[%s10 + $0x1c8] sm:$0xff]
      %v1989 = vld [vmem:[%s10 + $0x1d0] sm:$0xff]
      %v1990 = vld [vmem:[%s10 + $0x1d8] sm:$0xff]
      %v1991 = vld [vmem:[%s10 + $0x1e0] sm:$0xff]
      %v1992 = vld [vmem:[%s10 + $0x1e8] sm:$0xff]
      %v1993 = vld [vmem:[%s10 + $0x1f0] sm:$0xff]
      %v1994 = vld [vmem:[%s10 + $0x1f8] sm:$0xff]
      %v1996 = vsel %vm762, %v1923, 0
      %v1999 = vsel %vm762, %v1924, 0
      %v2002 = vsel %vm762, %v1925, 0
      %v2005 = vsel %vm762, %v1926, 0
      %v2008 = vsel %vm762, %v1927, 0
      %v2011 = vsel %vm762, %v1928, 0
      %v2014 = vsel %vm762, %v1929, 0
      %v2017 = vsel %vm762, %v1930, 0
      %2019 = vmatprep.subr.mxu0 0.0
      %2020 = vmatpush1.msra.mxu0 0.0
      %2021 = vmatprep.subr.mxu0 0.0
      %2022 = vmatpush1.msra.mxu0 0.0
      %2023 = vmatprep.subr.mxu0 0.0
      %2024 = vmatpush1.msra.mxu0 0.0
      %2025 = vmatprep.subr.mxu0 0.0
      %2026 = vmatpush1.msra.mxu0 0.0
      %2027 = vmatprep.subr.mxu0 0.0
      %2028 = vmatpush1.msra.mxu0 0.0
      %2029 = vmatprep.subr.mxu0 0.0
      %2030 = vmatpush1.msra.mxu0 0.0
      %2031 = vmatprep.subr.mxu0 0.0
      %2032 = vmatpush1.msra.mxu0 0.0
      %2033 = vmatprep.subr.mxu0 0.0
      %2034 = vmatpush1.msra.mxu0 0.0
      %2035 = vmatprep.subr.mxu0 %v1988
      %2036 = vmatpush1.msra.mxu0 %v1987
      %2037 = vmatprep.subr.mxu0 %v1980
      %2038 = vmatpush1.msra.mxu0 %v1979
      %2039 = vmatprep.subr.mxu0 %v1972
      %2040 = vmatpush1.msra.mxu0 %v1971
      %2041 = vmatprep.subr.mxu0 %v1964
      %2042 = vmatpush1.msra.mxu0 %v1963
      %2043 = vmatprep.subr.mxu0 %v1956
      %2044 = vmatpush1.msra.mxu0 %v1955
      %2045 = vmatprep.subr.mxu0 %v1948
      %2046 = vmatpush1.msra.mxu0 %v1947
      %2047 = vmatprep.subr.mxu0 %v1940
      %2048 = vmatpush1.msra.mxu0 %v1939
      %2049 = vmatprep.subr.mxu0 %v1932
      %2050 = vmatpush1.msra.mxu0 %v1931
      %2051 = vmatprep.subr.mxu0 0.0
      %2052 = vmatpush2.msra.mxu0 0.0
      %2053 = vmatprep.subr.mxu0 0.0
      %2054 = vmatpush2.msra.mxu0 0.0
      %2055 = vmatprep.subr.mxu0 0.0
      %2056 = vmatpush2.msra.mxu0 0.0
      %2057 = vmatprep.subr.mxu0 0.0
      %2058 = vmatpush2.msra.mxu0 0.0
      %2059 = vmatprep.subr.mxu0 0.0
      %2060 = vmatpush2.msra.mxu0 0.0
      %2061 = vmatprep.subr.mxu0 0.0
      %2062 = vmatpush2.msra.mxu0 0.0
      %2063 = vmatprep.subr.mxu0 0.0
      %2064 = vmatpush2.msra.mxu0 0.0
      %2065 = vmatprep.subr.mxu0 0.0
      %2066 = vmatpush2.msra.mxu0 0.0
      %2067 = vmatprep.subr.mxu0 0.0
      %2068 = vmatpush2.msra.mxu0 0.0
      %2069 = vmatprep.subr.mxu0 0.0
      %2070 = vmatpush2.msra.mxu0 0.0
      %2071 = vmatprep.subr.mxu0 0.0
      %2072 = vmatpush2.msra.mxu0 0.0
      %2073 = vmatprep.subr.mxu0 0.0
      %2074 = vmatpush2.msra.mxu0 0.0
      %2075 = vmatprep.subr.mxu0 0.0
      %2076 = vmatpush2.msra.mxu0 0.0
      %2077 = vmatprep.subr.mxu0 0.0
      %2078 = vmatpush2.msra.mxu0 0.0
      %2079 = vmatprep.subr.mxu0 0.0
      %2080 = vmatpush2.msra.mxu0 0.0
      %2081 = vmatprep.subr.mxu0 0.0
      %2082 = vmatpush2.msra.mxu0 0.0
      %2083 = vmatprep.mubr.f32.mxu0 0.0
      %2084 = vmatmul.mubr.f32.gmra.mxu0 %v1996
      %v2085 = vpop.f32.mrf.mxu0
      %v2086 = vadd.f32 0.0, %v2085
      %v2087 = vpop.f32.mrf.mxu0
      %v2088 = vadd.f32 0.0, %v2087
      %2089 = vmatprep.mubr.f32.mxu0 0.0
      %2090 = vmatmul.mubr.f32.gmra.mxu0 %v1999
      %v2091 = vpop.f32.mrf.mxu0
      %v2092 = vadd.f32 0.0, %v2091
      %v2093 = vpop.f32.mrf.mxu0
      %v2094 = vadd.f32 0.0, %v2093
      %2095 = vmatprep.mubr.f32.mxu0 0.0
      %2096 = vmatmul.mubr.f32.gmra.mxu0 %v2002
      %v2097 = vpop.f32.mrf.mxu0
      %v2098 = vadd.f32 0.0, %v2097
      %v2099 = vpop.f32.mrf.mxu0
      %v2100 = vadd.f32 0.0, %v2099
      %2101 = vmatprep.mubr.f32.mxu0 0.0
      %2102 = vmatmul.mubr.f32.gmra.mxu0 %v2005
      %v2103 = vpop.f32.mrf.mxu0
      %v2104 = vadd.f32 0.0, %v2103
      %v2105 = vpop.f32.mrf.mxu0
      %v2106 = vadd.f32 0.0, %v2105
      %2107 = vmatprep.mubr.f32.mxu0 0.0
      %2108 = vmatmul.mubr.f32.gmra.mxu0 %v2008
      %v2109 = vpop.f32.mrf.mxu0
      %v2110 = vadd.f32 0.0, %v2109
      %v2111 = vpop.f32.mrf.mxu0
      %v2112 = vadd.f32 0.0, %v2111
      %2113 = vmatprep.mubr.f32.mxu0 0.0
      %2114 = vmatmul.mubr.f32.gmra.mxu0 %v2011
      %v2115 = vpop.f32.mrf.mxu0
      %v2116 = vadd.f32 0.0, %v2115
      %v2117 = vpop.f32.mrf.mxu0
      %v2118 = vadd.f32 0.0, %v2117
      %2119 = vmatprep.mubr.f32.mxu0 0.0
      %2120 = vmatmul.mubr.f32.gmra.mxu0 %v2014
      %v2121 = vpop.f32.mrf.mxu0
      %v2122 = vadd.f32 0.0, %v2121
      %v2123 = vpop.f32.mrf.mxu0
      %v2124 = vadd.f32 0.0, %v2123
      %2125 = vmatprep.mubr.f32.mxu0 0.0
      %2126 = vmatmul.mubr.f32.gmra.mxu0 %v2017
      %v2127 = vpop.f32.mrf.mxu0
      %v2128 = vadd.f32 0.0, %v2127
      %v2129 = vpop.f32.mrf.mxu0
      %v2130 = vadd.f32 0.0, %v2129
      %2131 = vdwg.mxu0
      %2132 = vmatprep.subr.mxu0 0.0
      %2133 = vmatpush1.msra.mxu0 0.0
      %2134 = vmatprep.subr.mxu0 0.0
      %2135 = vmatpush1.msra.mxu0 0.0
      %2136 = vmatprep.subr.mxu0 0.0
      %2137 = vmatpush1.msra.mxu0 0.0
      %2138 = vmatprep.subr.mxu0 0.0
      %2139 = vmatpush1.msra.mxu0 0.0
      %2140 = vmatprep.subr.mxu0 0.0
      %2141 = vmatpush1.msra.mxu0 0.0
      %2142 = vmatprep.subr.mxu0 0.0
      %2143 = vmatpush1.msra.mxu0 0.0
      %2144 = vmatprep.subr.mxu0 0.0
      %2145 = vmatpush1.msra.mxu0 0.0
      %2146 = vmatprep.subr.mxu0 0.0
      %2147 = vmatpush1.msra.mxu0 0.0
      %2148 = vmatprep.subr.mxu0 %v1990
      %2149 = vmatpush1.msra.mxu0 %v1989
      %2150 = vmatprep.subr.mxu0 %v1982
      %2151 = vmatpush1.msra.mxu0 %v1981
      %2152 = vmatprep.subr.mxu0 %v1974
      %2153 = vmatpush1.msra.mxu0 %v1973
      %2154 = vmatprep.subr.mxu0 %v1966
      %2155 = vmatpush1.msra.mxu0 %v1965
      %2156 = vmatprep.subr.mxu0 %v1958
      %2157 = vmatpush1.msra.mxu0 %v1957
      %2158 = vmatprep.subr.mxu0 %v1950
      %2159 = vmatpush1.msra.mxu0 %v1949
      %2160 = vmatprep.subr.mxu0 %v1942
      %2161 = vmatpush1.msra.mxu0 %v1941
      %2162 = vmatprep.subr.mxu0 %v1934
      %2163 = vmatpush1.msra.mxu0 %v1933
      %2164 = vmatprep.subr.mxu0 0.0
      %2165 = vmatpush2.msra.mxu0 0.0
      %2166 = vmatprep.subr.mxu0 0.0
      %2167 = vmatpush2.msra.mxu0 0.0
      %2168 = vmatprep.subr.mxu0 0.0
      %2169 = vmatpush2.msra.mxu0 0.0
      %2170 = vmatprep.subr.mxu0 0.0
      %2171 = vmatpush2.msra.mxu0 0.0
      %2172 = vmatprep.subr.mxu0 0.0
      %2173 = vmatpush2.msra.mxu0 0.0
      %2174 = vmatprep.subr.mxu0 0.0
      %2175 = vmatpush2.msra.mxu0 0.0
      %2176 = vmatprep.subr.mxu0 0.0
      %2177 = vmatpush2.msra.mxu0 0.0
      %2178 = vmatprep.subr.mxu0 0.0
      %2179 = vmatpush2.msra.mxu0 0.0
      %2180 = vmatprep.subr.mxu0 0.0
      %2181 = vmatpush2.msra.mxu0 0.0
      %2182 = vmatprep.subr.mxu0 0.0
      %2183 = vmatpush2.msra.mxu0 0.0
      %2184 = vmatprep.subr.mxu0 0.0
      %2185 = vmatpush2.msra.mxu0 0.0
      %2186 = vmatprep.subr.mxu0 0.0
      %2187 = vmatpush2.msra.mxu0 0.0
      %2188 = vmatprep.subr.mxu0 0.0
      %2189 = vmatpush2.msra.mxu0 0.0
      %2190 = vmatprep.subr.mxu0 0.0
      %2191 = vmatpush2.msra.mxu0 0.0
      %2192 = vmatprep.subr.mxu0 0.0
      %2193 = vmatpush2.msra.mxu0 0.0
      %2194 = vmatprep.subr.mxu0 0.0
      %2195 = vmatpush2.msra.mxu0 0.0
      %2196 = vmatprep.mubr.f32.mxu0 0.0
      %2197 = vmatmul.mubr.f32.gmra.mxu0 %v1996
      %v2198 = vpop.f32.mrf.mxu0
      %v2199 = vadd.f32 0.0, %v2198
      %v2200 = vpop.f32.mrf.mxu0
      %v2201 = vadd.f32 0.0, %v2200
      %2202 = vmatprep.mubr.f32.mxu0 0.0
      %2203 = vmatmul.mubr.f32.gmra.mxu0 %v1999
      %v2204 = vpop.f32.mrf.mxu0
      %v2205 = vadd.f32 0.0, %v2204
      %v2206 = vpop.f32.mrf.mxu0
      %v2207 = vadd.f32 0.0, %v2206
      %2208 = vmatprep.mubr.f32.mxu0 0.0
      %2209 = vmatmul.mubr.f32.gmra.mxu0 %v2002
      %v2210 = vpop.f32.mrf.mxu0
      %v2211 = vadd.f32 0.0, %v2210
      %v2212 = vpop.f32.mrf.mxu0
      %v2213 = vadd.f32 0.0, %v2212
      %2214 = vmatprep.mubr.f32.mxu0 0.0
      %2215 = vmatmul.mubr.f32.gmra.mxu0 %v2005
      %v2216 = vpop.f32.mrf.mxu0
      %v2217 = vadd.f32 0.0, %v2216
      %v2218 = vpop.f32.mrf.mxu0
      %v2219 = vadd.f32 0.0, %v2218
      %2220 = vmatprep.mubr.f32.mxu0 0.0
      %2221 = vmatmul.mubr.f32.gmra.mxu0 %v2008
      %v2222 = vpop.f32.mrf.mxu0
      %v2223 = vadd.f32 0.0, %v2222
      %v2224 = vpop.f32.mrf.mxu0
      %v2225 = vadd.f32 0.0, %v2224
      %2226 = vmatprep.mubr.f32.mxu0 0.0
      %2227 = vmatmul.mubr.f32.gmra.mxu0 %v2011
      %v2228 = vpop.f32.mrf.mxu0
      %v2229 = vadd.f32 0.0, %v2228
      %v2230 = vpop.f32.mrf.mxu0
      %v2231 = vadd.f32 0.0, %v2230
      %2232 = vmatprep.mubr.f32.mxu0 0.0
      %2233 = vmatmul.mubr.f32.gmra.mxu0 %v2014
      %v2234 = vpop.f32.mrf.mxu0
      %v2235 = vadd.f32 0.0, %v2234
      %v2236 = vpop.f32.mrf.mxu0
      %v2237 = vadd.f32 0.0, %v2236
      %2238 = vmatprep.mubr.f32.mxu0 0.0
      %2239 = vmatmul.mubr.f32.gmra.mxu0 %v2017
      %v2240 = vpop.f32.mrf.mxu0
      %v2241 = vadd.f32 0.0, %v2240
      %v2242 = vpop.f32.mrf.mxu0
      %v2243 = vadd.f32 0.0, %v2242
      %2244 = vdwg.mxu0
      %2245 = vmatprep.subr.mxu0 0.0
      %2246 = vmatpush1.msra.mxu0 0.0
      %2247 = vmatprep.subr.mxu0 0.0
      %2248 = vmatpush1.msra.mxu0 0.0
      %2249 = vmatprep.subr.mxu0 0.0
      %2250 = vmatpush1.msra.mxu0 0.0
      %2251 = vmatprep.subr.mxu0 0.0
      %2252 = vmatpush1.msra.mxu0 0.0
      %2253 = vmatprep.subr.mxu0 0.0
      %2254 = vmatpush1.msra.mxu0 0.0
      %2255 = vmatprep.subr.mxu0 0.0
      %2256 = vmatpush1.msra.mxu0 0.0
      %2257 = vmatprep.subr.mxu0 0.0
      %2258 = vmatpush1.msra.mxu0 0.0
      %2259 = vmatprep.subr.mxu0 0.0
      %2260 = vmatpush1.msra.mxu0 0.0
      %2261 = vmatprep.subr.mxu0 %v1992
      %2262 = vmatpush1.msra.mxu0 %v1991
      %2263 = vmatprep.subr.mxu0 %v1984
      %2264 = vmatpush1.msra.mxu0 %v1983
      %2265 = vmatprep.subr.mxu0 %v1976
      %2266 = vmatpush1.msra.mxu0 %v1975
      %2267 = vmatprep.subr.mxu0 %v1968
      %2268 = vmatpush1.msra.mxu0 %v1967
      %2269 = vmatprep.subr.mxu0 %v1960
      %2270 = vmatpush1.msra.mxu0 %v1959
      %2271 = vmatprep.subr.mxu0 %v1952
      %2272 = vmatpush1.msra.mxu0 %v1951
      %2273 = vmatprep.subr.mxu0 %v1944
      %2274 = vmatpush1.msra.mxu0 %v1943
      %2275 = vmatprep.subr.mxu0 %v1936
      %2276 = vmatpush1.msra.mxu0 %v1935
      %2277 = vmatprep.subr.mxu0 0.0
      %2278 = vmatpush2.msra.mxu0 0.0
      %2279 = vmatprep.subr.mxu0 0.0
      %2280 = vmatpush2.msra.mxu0 0.0
      %2281 = vmatprep.subr.mxu0 0.0
      %2282 = vmatpush2.msra.mxu0 0.0
      %2283 = vmatprep.subr.mxu0 0.0
      %2284 = vmatpush2.msra.mxu0 0.0
      %2285 = vmatprep.subr.mxu0 0.0
      %2286 = vmatpush2.msra.mxu0 0.0
      %2287 = vmatprep.subr.mxu0 0.0
      %2288 = vmatpush2.msra.mxu0 0.0
      %2289 = vmatprep.subr.mxu0 0.0
      %2290 = vmatpush2.msra.mxu0 0.0
      %2291 = vmatprep.subr.mxu0 0.0
      %2292 = vmatpush2.msra.mxu0 0.0
      %2293 = vmatprep.subr.mxu0 0.0
      %2294 = vmatpush2.msra.mxu0 0.0
      %2295 = vmatprep.subr.mxu0 0.0
      %2296 = vmatpush2.msra.mxu0 0.0
      %2297 = vmatprep.subr.mxu0 0.0
      %2298 = vmatpush2.msra.mxu0 0.0
      %2299 = vmatprep.subr.mxu0 0.0
      %2300 = vmatpush2.msra.mxu0 0.0
      %2301 = vmatprep.subr.mxu0 0.0
      %2302 = vmatpush2.msra.mxu0 0.0
      %2303 = vmatprep.subr.mxu0 0.0
      %2304 = vmatpush2.msra.mxu0 0.0
      %2305 = vmatprep.subr.mxu0 0.0
      %2306 = vmatpush2.msra.mxu0 0.0
      %2307 = vmatprep.subr.mxu0 0.0
      %2308 = vmatpush2.msra.mxu0 0.0
      %2309 = vmatprep.mubr.f32.mxu0 0.0
      %2310 = vmatmul.mubr.f32.gmra.mxu0 %v1996
      %v2311 = vpop.f32.mrf.mxu0
      %v2312 = vadd.f32 0.0, %v2311
      %v2313 = vpop.f32.mrf.mxu0
      %v2314 = vadd.f32 0.0, %v2313
      %2315 = vmatprep.mubr.f32.mxu0 0.0
      %2316 = vmatmul.mubr.f32.gmra.mxu0 %v1999
      %v2317 = vpop.f32.mrf.mxu0
      %v2318 = vadd.f32 0.0, %v2317
      %v2319 = vpop.f32.mrf.mxu0
      %v2320 = vadd.f32 0.0, %v2319
      %2321 = vmatprep.mubr.f32.mxu0 0.0
      %2322 = vmatmul.mubr.f32.gmra.mxu0 %v2002
      %v2323 = vpop.f32.mrf.mxu0
      %v2324 = vadd.f32 0.0, %v2323
      %v2325 = vpop.f32.mrf.mxu0
      %v2326 = vadd.f32 0.0, %v2325
      %2327 = vmatprep.mubr.f32.mxu0 0.0
      %2328 = vmatmul.mubr.f32.gmra.mxu0 %v2005
      %v2329 = vpop.f32.mrf.mxu0
      %v2330 = vadd.f32 0.0, %v2329
      %v2331 = vpop.f32.mrf.mxu0
      %v2332 = vadd.f32 0.0, %v2331
      %2333 = vmatprep.mubr.f32.mxu0 0.0
      %2334 = vmatmul.mubr.f32.gmra.mxu0 %v2008
      %v2335 = vpop.f32.mrf.mxu0
      %v2336 = vadd.f32 0.0, %v2335
      %v2337 = vpop.f32.mrf.mxu0
      %v2338 = vadd.f32 0.0, %v2337
      %2339 = vmatprep.mubr.f32.mxu0 0.0
      %2340 = vmatmul.mubr.f32.gmra.mxu0 %v2011
      %v2341 = vpop.f32.mrf.mxu0
      %v2342 = vadd.f32 0.0, %v2341
      %v2343 = vpop.f32.mrf.mxu0
      %v2344 = vadd.f32 0.0, %v2343
      %2345 = vmatprep.mubr.f32.mxu0 0.0
      %2346 = vmatmul.mubr.f32.gmra.mxu0 %v2014
      %v2347 = vpop.f32.mrf.mxu0
      %v2348 = vadd.f32 0.0, %v2347
      %v2349 = vpop.f32.mrf.mxu0
      %v2350 = vadd.f32 0.0, %v2349
      %2351 = vmatprep.mubr.f32.mxu0 0.0
      %2352 = vmatmul.mubr.f32.gmra.mxu0 %v2017
      %v2353 = vpop.f32.mrf.mxu0
      %v2354 = vadd.f32 0.0, %v2353
      %v2355 = vpop.f32.mrf.mxu0
      %v2356 = vadd.f32 0.0, %v2355
      %2357 = vdwg.mxu0
      %2358 = vmatprep.subr.mxu0 0.0
      %2359 = vmatpush1.msra.mxu0 0.0
      %2360 = vmatprep.subr.mxu0 0.0
      %2361 = vmatpush1.msra.mxu0 0.0
      %2362 = vmatprep.subr.mxu0 0.0
      %2363 = vmatpush1.msra.mxu0 0.0
      %2364 = vmatprep.subr.mxu0 0.0
      %2365 = vmatpush1.msra.mxu0 0.0
      %2366 = vmatprep.subr.mxu0 0.0
      %2367 = vmatpush1.msra.mxu0 0.0
      %2368 = vmatprep.subr.mxu0 0.0
      %2369 = vmatpush1.msra.mxu0 0.0
      %2370 = vmatprep.subr.mxu0 0.0
      %2371 = vmatpush1.msra.mxu0 0.0
      %2372 = vmatprep.subr.mxu0 0.0
      %2373 = vmatpush1.msra.mxu0 0.0
      %2374 = vmatprep.subr.mxu0 %v1994
      %2375 = vmatpush1.msra.mxu0 %v1993
      %2376 = vmatprep.subr.mxu0 %v1986
      %2377 = vmatpush1.msra.mxu0 %v1985
      %2378 = vmatprep.subr.mxu0 %v1978
      %2379 = vmatpush1.msra.mxu0 %v1977
      %2380 = vmatprep.subr.mxu0 %v1970
      %2381 = vmatpush1.msra.mxu0 %v1969
      %2382 = vmatprep.subr.mxu0 %v1962
      %2383 = vmatpush1.msra.mxu0 %v1961
      %2384 = vmatprep.subr.mxu0 %v1954
      %2385 = vmatpush1.msra.mxu0 %v1953
      %2386 = vmatprep.subr.mxu0 %v1946
      %2387 = vmatpush1.msra.mxu0 %v1945
      %2388 = vmatprep.subr.mxu0 %v1938
      %2389 = vmatpush1.msra.mxu0 %v1937
      %2390 = vmatprep.subr.mxu0 0.0
      %2391 = vmatpush2.msra.mxu0 0.0
      %2392 = vmatprep.subr.mxu0 0.0
      %2393 = vmatpush2.msra.mxu0 0.0
      %2394 = vmatprep.subr.mxu0 0.0
      %2395 = vmatpush2.msra.mxu0 0.0
      %2396 = vmatprep.subr.mxu0 0.0
      %2397 = vmatpush2.msra.mxu0 0.0
      %2398 = vmatprep.subr.mxu0 0.0
      %2399 = vmatpush2.msra.mxu0 0.0
      %2400 = vmatprep.subr.mxu0 0.0
      %2401 = vmatpush2.msra.mxu0 0.0
      %2402 = vmatprep.subr.mxu0 0.0
      %2403 = vmatpush2.msra.mxu0 0.0
      %2404 = vmatprep.subr.mxu0 0.0
      %2405 = vmatpush2.msra.mxu0 0.0
      %2406 = vmatprep.subr.mxu0 0.0
      %2407 = vmatpush2.msra.mxu0 0.0
      %2408 = vmatprep.subr.mxu0 0.0
      %2409 = vmatpush2.msra.mxu0 0.0
      %2410 = vmatprep.subr.mxu0 0.0
      %2411 = vmatpush2.msra.mxu0 0.0
      %2412 = vmatprep.subr.mxu0 0.0
      %2413 = vmatpush2.msra.mxu0 0.0
      %2414 = vmatprep.subr.mxu0 0.0
      %2415 = vmatpush2.msra.mxu0 0.0
      %2416 = vmatprep.subr.mxu0 0.0
      %2417 = vmatpush2.msra.mxu0 0.0
      %2418 = vmatprep.subr.mxu0 0.0
      %2419 = vmatpush2.msra.mxu0 0.0
      %2420 = vmatprep.subr.mxu0 0.0
      %2421 = vmatpush2.msra.mxu0 0.0
      %2422 = vmatprep.mubr.f32.mxu0 0.0
      %2423 = vmatmul.mubr.f32.gmra.mxu0 %v1996
      %v2424 = vpop.f32.mrf.mxu0
      %v2425 = vadd.f32 0.0, %v2424
      %v2426 = vpop.f32.mrf.mxu0
      %v2427 = vadd.f32 0.0, %v2426
      %2428 = vmatprep.mubr.f32.mxu0 0.0
      %2429 = vmatmul.mubr.f32.gmra.mxu0 %v1999
      %v2430 = vpop.f32.mrf.mxu0
      %v2431 = vadd.f32 0.0, %v2430
      %v2432 = vpop.f32.mrf.mxu0
      %v2433 = vadd.f32 0.0, %v2432
      %2434 = vmatprep.mubr.f32.mxu0 0.0
      %2435 = vmatmul.mubr.f32.gmra.mxu0 %v2002
      %v2436 = vpop.f32.mrf.mxu0
      %v2437 = vadd.f32 0.0, %v2436
      %v2438 = vpop.f32.mrf.mxu0
      %v2439 = vadd.f32 0.0, %v2438
      %2440 = vmatprep.mubr.f32.mxu0 0.0
      %2441 = vmatmul.mubr.f32.gmra.mxu0 %v2005
      %v2442 = vpop.f32.mrf.mxu0
      %v2443 = vadd.f32 0.0, %v2442
      %v2444 = vpop.f32.mrf.mxu0
      %v2445 = vadd.f32 0.0, %v2444
      %2446 = vmatprep.mubr.f32.mxu0 0.0
      %2447 = vmatmul.mubr.f32.gmra.mxu0 %v2008
      %v2448 = vpop.f32.mrf.mxu0
      %v2449 = vadd.f32 0.0, %v2448
      %v2450 = vpop.f32.mrf.mxu0
      %v2451 = vadd.f32 0.0, %v2450
      %2452 = vmatprep.mubr.f32.mxu0 0.0
      %2453 = vmatmul.mubr.f32.gmra.mxu0 %v2011
      %v2454 = vpop.f32.mrf.mxu0
      %v2455 = vadd.f32 0.0, %v2454
      %v2456 = vpop.f32.mrf.mxu0
      %v2457 = vadd.f32 0.0, %v2456
      %2458 = vmatprep.mubr.f32.mxu0 0.0
      %2459 = vmatmul.mubr.f32.gmra.mxu0 %v2014
      %v2460 = vpop.f32.mrf.mxu0
      %v2461 = vadd.f32 0.0, %v2460
      %v2462 = vpop.f32.mrf.mxu0
      %v2463 = vadd.f32 0.0, %v2462
      %2464 = vmatprep.mubr.f32.mxu0 0.0
      %2465 = vmatmul.mubr.f32.gmra.mxu0 %v2017
      %v2466 = vpop.f32.mrf.mxu0
      %v2467 = vadd.f32 0.0, %v2466
      %v2468 = vpop.f32.mrf.mxu0
      %v2469 = vadd.f32 0.0, %v2468
      %2470 = vdwg.mxu0
      %v2471 = vld [vmem:[%s12] sm:$0xff]
      %v2472 = vld [vmem:[%s12 + $0x8] sm:$0xff]
      %v2473 = vld [vmem:[%s12 + $0x10] sm:$0xff]
      %v2474 = vld [vmem:[%s12 + $0x18] sm:$0xff]
      %v2475 = vld [vmem:[%s12 + $0x20] sm:$0xff]
      %v2476 = vld [vmem:[%s12 + $0x28] sm:$0xff]
      %v2477 = vld [vmem:[%s12 + $0x30] sm:$0xff]
      %v2478 = vld [vmem:[%s12 + $0x38] sm:$0xff]
      %v2479 = vld [vmem:[%s12 + $0x40] sm:$0xff]
      %v2480 = vld [vmem:[%s12 + $0x48] sm:$0xff]
      %v2481 = vld [vmem:[%s12 + $0x50] sm:$0xff]
      %v2482 = vld [vmem:[%s12 + $0x58] sm:$0xff]
      %v2483 = vld [vmem:[%s12 + $0x60] sm:$0xff]
      %v2484 = vld [vmem:[%s12 + $0x68] sm:$0xff]
      %v2485 = vld [vmem:[%s12 + $0x70] sm:$0xff]
      %v2486 = vld [vmem:[%s12 + $0x78] sm:$0xff]
      %v2487 = vld [vmem:[%s12 + $0x80] sm:$0xff]
      %v2488 = vld [vmem:[%s12 + $0x88] sm:$0xff]
      %v2489 = vld [vmem:[%s12 + $0x90] sm:$0xff]
      %v2490 = vld [vmem:[%s12 + $0x98] sm:$0xff]
      %v2491 = vld [vmem:[%s12 + $0xa0] sm:$0xff]
      %v2492 = vld [vmem:[%s12 + $0xa8] sm:$0xff]
      %v2493 = vld [vmem:[%s12 + $0xb0] sm:$0xff]
      %v2494 = vld [vmem:[%s12 + $0xb8] sm:$0xff]
      %v2495 = vld [vmem:[%s12 + $0xc0] sm:$0xff]
      %v2496 = vld [vmem:[%s12 + $0xc8] sm:$0xff]
      %v2497 = vld [vmem:[%s12 + $0xd0] sm:$0xff]
      %v2498 = vld [vmem:[%s12 + $0xd8] sm:$0xff]
      %v2499 = vld [vmem:[%s12 + $0xe0] sm:$0xff]
      %v2500 = vld [vmem:[%s12 + $0xe8] sm:$0xff]
      %v2501 = vld [vmem:[%s12 + $0xf0] sm:$0xff]
      %v2502 = vld [vmem:[%s12 + $0xf8] sm:$0xff]
      %v2503 = vld [vmem:[%s12 + $0x100] sm:$0xff]
      %v2504 = vld [vmem:[%s12 + $0x108] sm:$0xff]
      %v2505 = vld [vmem:[%s12 + $0x110] sm:$0xff]
      %v2506 = vld [vmem:[%s12 + $0x118] sm:$0xff]
      %v2507 = vld [vmem:[%s12 + $0x120] sm:$0xff]
      %v2508 = vld [vmem:[%s12 + $0x128] sm:$0xff]
      %v2509 = vld [vmem:[%s12 + $0x130] sm:$0xff]
      %v2510 = vld [vmem:[%s12 + $0x138] sm:$0xff]
      %v2511 = vld [vmem:[%s12 + $0x140] sm:$0xff]
      %v2512 = vld [vmem:[%s12 + $0x148] sm:$0xff]
      %v2513 = vld [vmem:[%s12 + $0x150] sm:$0xff]
      %v2514 = vld [vmem:[%s12 + $0x158] sm:$0xff]
      %v2515 = vld [vmem:[%s12 + $0x160] sm:$0xff]
      %v2516 = vld [vmem:[%s12 + $0x168] sm:$0xff]
      %v2517 = vld [vmem:[%s12 + $0x170] sm:$0xff]
      %v2518 = vld [vmem:[%s12 + $0x178] sm:$0xff]
      %v2519 = vld [vmem:[%s12 + $0x180] sm:$0xff]
      %v2520 = vld [vmem:[%s12 + $0x188] sm:$0xff]
      %v2521 = vld [vmem:[%s12 + $0x190] sm:$0xff]
      %v2522 = vld [vmem:[%s12 + $0x198] sm:$0xff]
      %v2523 = vld [vmem:[%s12 + $0x1a0] sm:$0xff]
      %v2524 = vld [vmem:[%s12 + $0x1a8] sm:$0xff]
      %v2525 = vld [vmem:[%s12 + $0x1b0] sm:$0xff]
      %v2526 = vld [vmem:[%s12 + $0x1b8] sm:$0xff]
      %v2527 = vld [vmem:[%s12 + $0x1c0] sm:$0xff]
      %v2528 = vld [vmem:[%s12 + $0x1c8] sm:$0xff]
      %v2529 = vld [vmem:[%s12 + $0x1d0] sm:$0xff]
      %v2530 = vld [vmem:[%s12 + $0x1d8] sm:$0xff]
      %v2531 = vld [vmem:[%s12 + $0x1e0] sm:$0xff]
      %v2532 = vld [vmem:[%s12 + $0x1e8] sm:$0xff]
      %v2533 = vld [vmem:[%s12 + $0x1f0] sm:$0xff]
      %v2534 = vld [vmem:[%s12 + $0x1f8] sm:$0xff]
      %2535 = vmatprep.subr.mxu0 0.0
      %2536 = vmatpush1.msra.mxu0 0.0
      %2537 = vmatprep.subr.mxu0 0.0
      %2538 = vmatpush1.msra.mxu0 0.0
      %2539 = vmatprep.subr.mxu0 0.0
      %2540 = vmatpush1.msra.mxu0 0.0
      %2541 = vmatprep.subr.mxu0 0.0
      %2542 = vmatpush1.msra.mxu0 0.0
      %2543 = vmatprep.subr.mxu0 0.0
      %2544 = vmatpush1.msra.mxu0 0.0
      %2545 = vmatprep.subr.mxu0 0.0
      %2546 = vmatpush1.msra.mxu0 0.0
      %2547 = vmatprep.subr.mxu0 0.0
      %2548 = vmatpush1.msra.mxu0 0.0
      %2549 = vmatprep.subr.mxu0 0.0
      %2550 = vmatpush1.msra.mxu0 0.0
      %2551 = vmatprep.subr.mxu0 %v2528
      %2552 = vmatpush1.msra.mxu0 %v2527
      %2553 = vmatprep.subr.mxu0 %v2520
      %2554 = vmatpush1.msra.mxu0 %v2519
      %2555 = vmatprep.subr.mxu0 %v2512
      %2556 = vmatpush1.msra.mxu0 %v2511
      %2557 = vmatprep.subr.mxu0 %v2504
      %2558 = vmatpush1.msra.mxu0 %v2503
      %2559 = vmatprep.subr.mxu0 %v2496
      %2560 = vmatpush1.msra.mxu0 %v2495
      %2561 = vmatprep.subr.mxu0 %v2488
      %2562 = vmatpush1.msra.mxu0 %v2487
      %2563 = vmatprep.subr.mxu0 %v2480
      %2564 = vmatpush1.msra.mxu0 %v2479
      %2565 = vmatprep.subr.mxu0 %v2472
      %2566 = vmatpush1.msra.mxu0 %v2471
      %2567 = vmatprep.subr.mxu0 0.0
      %2568 = vmatpush2.msra.mxu0 0.0
      %2569 = vmatprep.subr.mxu0 0.0
      %2570 = vmatpush2.msra.mxu0 0.0
      %2571 = vmatprep.subr.mxu0 0.0
      %2572 = vmatpush2.msra.mxu0 0.0
      %2573 = vmatprep.subr.mxu0 0.0
      %2574 = vmatpush2.msra.mxu0 0.0
      %2575 = vmatprep.subr.mxu0 0.0
      %2576 = vmatpush2.msra.mxu0 0.0
      %2577 = vmatprep.subr.mxu0 0.0
      %2578 = vmatpush2.msra.mxu0 0.0
      %2579 = vmatprep.subr.mxu0 0.0
      %2580 = vmatpush2.msra.mxu0 0.0
      %2581 = vmatprep.subr.mxu0 0.0
      %2582 = vmatpush2.msra.mxu0 0.0
      %2583 = vmatprep.subr.mxu0 0.0
      %2584 = vmatpush2.msra.mxu0 0.0
      %2585 = vmatprep.subr.mxu0 0.0
      %2586 = vmatpush2.msra.mxu0 0.0
      %2587 = vmatprep.subr.mxu0 0.0
      %2588 = vmatpush2.msra.mxu0 0.0
      %2589 = vmatprep.subr.mxu0 0.0
      %2590 = vmatpush2.msra.mxu0 0.0
      %2591 = vmatprep.subr.mxu0 0.0
      %2592 = vmatpush2.msra.mxu0 0.0
      %2593 = vmatprep.subr.mxu0 0.0
      %2594 = vmatpush2.msra.mxu0 0.0
      %2595 = vmatprep.subr.mxu0 0.0
      %2596 = vmatpush2.msra.mxu0 0.0
      %2597 = vmatprep.subr.mxu0 0.0
      %2598 = vmatpush2.msra.mxu0 0.0
      %2599 = vmatprep.mubr.f32.mxu0 0.0
      %2600 = vmatmul.mubr.f32.gmra.mxu0 %v764
      %v2601 = vpop.f32.mrf.mxu0
      %v2602 = vadd.f32 0.0, %v2601
      %v2603 = vpop.f32.mrf.mxu0
      %v2604 = vadd.f32 0.0, %v2603
      %2605 = vmatprep.mubr.f32.mxu0 0.0
      %2606 = vmatmul.mubr.f32.gmra.mxu0 %v767
      %v2607 = vpop.f32.mrf.mxu0
      %v2608 = vadd.f32 0.0, %v2607
      %v2609 = vpop.f32.mrf.mxu0
      %v2610 = vadd.f32 0.0, %v2609
      %2611 = vmatprep.mubr.f32.mxu0 0.0
      %2612 = vmatmul.mubr.f32.gmra.mxu0 %v770
      %v2613 = vpop.f32.mrf.mxu0
      %v2614 = vadd.f32 0.0, %v2613
      %v2615 = vpop.f32.mrf.mxu0
      %v2616 = vadd.f32 0.0, %v2615
      %2617 = vmatprep.mubr.f32.mxu0 0.0
      %2618 = vmatmul.mubr.f32.gmra.mxu0 %v773
      %v2619 = vpop.f32.mrf.mxu0
      %v2620 = vadd.f32 0.0, %v2619
      %v2621 = vpop.f32.mrf.mxu0
      %v2622 = vadd.f32 0.0, %v2621
      %2623 = vmatprep.mubr.f32.mxu0 0.0
      %2624 = vmatmul.mubr.f32.gmra.mxu0 %v776
      %v2625 = vpop.f32.mrf.mxu0
      %v2626 = vadd.f32 0.0, %v2625
      %v2627 = vpop.f32.mrf.mxu0
      %v2628 = vadd.f32 0.0, %v2627
      %2629 = vmatprep.mubr.f32.mxu0 0.0
      %2630 = vmatmul.mubr.f32.gmra.mxu0 %v779
      %v2631 = vpop.f32.mrf.mxu0
      %v2632 = vadd.f32 0.0, %v2631
      %v2633 = vpop.f32.mrf.mxu0
      %v2634 = vadd.f32 0.0, %v2633
      %2635 = vmatprep.mubr.f32.mxu0 0.0
      %2636 = vmatmul.mubr.f32.gmra.mxu0 %v782
      %v2637 = vpop.f32.mrf.mxu0
      %v2638 = vadd.f32 0.0, %v2637
      %v2639 = vpop.f32.mrf.mxu0
      %v2640 = vadd.f32 0.0, %v2639
      %2641 = vmatprep.mubr.f32.mxu0 0.0
      %2642 = vmatmul.mubr.f32.gmra.mxu0 %v785
      %v2643 = vpop.f32.mrf.mxu0
      %v2644 = vadd.f32 0.0, %v2643
      %v2645 = vpop.f32.mrf.mxu0
      %v2646 = vadd.f32 0.0, %v2645
      %2647 = vdwg.mxu0
      %2648 = vmatprep.subr.mxu0 0.0
      %2649 = vmatpush1.msra.mxu0 0.0
      %2650 = vmatprep.subr.mxu0 0.0
      %2651 = vmatpush1.msra.mxu0 0.0
      %2652 = vmatprep.subr.mxu0 0.0
      %2653 = vmatpush1.msra.mxu0 0.0
      %2654 = vmatprep.subr.mxu0 0.0
      %2655 = vmatpush1.msra.mxu0 0.0
      %2656 = vmatprep.subr.mxu0 0.0
      %2657 = vmatpush1.msra.mxu0 0.0
      %2658 = vmatprep.subr.mxu0 0.0
      %2659 = vmatpush1.msra.mxu0 0.0
      %2660 = vmatprep.subr.mxu0 0.0
      %2661 = vmatpush1.msra.mxu0 0.0
      %2662 = vmatprep.subr.mxu0 0.0
      %2663 = vmatpush1.msra.mxu0 0.0
      %2664 = vmatprep.subr.mxu0 %v2530
      %2665 = vmatpush1.msra.mxu0 %v2529
      %2666 = vmatprep.subr.mxu0 %v2522
      %2667 = vmatpush1.msra.mxu0 %v2521
      %2668 = vmatprep.subr.mxu0 %v2514
      %2669 = vmatpush1.msra.mxu0 %v2513
      %2670 = vmatprep.subr.mxu0 %v2506
      %2671 = vmatpush1.msra.mxu0 %v2505
      %2672 = vmatprep.subr.mxu0 %v2498
      %2673 = vmatpush1.msra.mxu0 %v2497
      %2674 = vmatprep.subr.mxu0 %v2490
      %2675 = vmatpush1.msra.mxu0 %v2489
      %2676 = vmatprep.subr.mxu0 %v2482
      %2677 = vmatpush1.msra.mxu0 %v2481
      %2678 = vmatprep.subr.mxu0 %v2474
      %2679 = vmatpush1.msra.mxu0 %v2473
      %2680 = vmatprep.subr.mxu0 0.0
      %2681 = vmatpush2.msra.mxu0 0.0
      %2682 = vmatprep.subr.mxu0 0.0
      %2683 = vmatpush2.msra.mxu0 0.0
      %2684 = vmatprep.subr.mxu0 0.0
      %2685 = vmatpush2.msra.mxu0 0.0
      %2686 = vmatprep.subr.mxu0 0.0
      %2687 = vmatpush2.msra.mxu0 0.0
      %2688 = vmatprep.subr.mxu0 0.0
      %2689 = vmatpush2.msra.mxu0 0.0
      %2690 = vmatprep.subr.mxu0 0.0
      %2691 = vmatpush2.msra.mxu0 0.0
      %2692 = vmatprep.subr.mxu0 0.0
      %2693 = vmatpush2.msra.mxu0 0.0
      %2694 = vmatprep.subr.mxu0 0.0
      %2695 = vmatpush2.msra.mxu0 0.0
      %2696 = vmatprep.subr.mxu0 0.0
      %2697 = vmatpush2.msra.mxu0 0.0
      %2698 = vmatprep.subr.mxu0 0.0
      %2699 = vmatpush2.msra.mxu0 0.0
      %2700 = vmatprep.subr.mxu0 0.0
      %2701 = vmatpush2.msra.mxu0 0.0
      %2702 = vmatprep.subr.mxu0 0.0
      %2703 = vmatpush2.msra.mxu0 0.0
      %2704 = vmatprep.subr.mxu0 0.0
      %2705 = vmatpush2.msra.mxu0 0.0
      %2706 = vmatprep.subr.mxu0 0.0
      %2707 = vmatpush2.msra.mxu0 0.0
      %2708 = vmatprep.subr.mxu0 0.0
      %2709 = vmatpush2.msra.mxu0 0.0
      %2710 = vmatprep.subr.mxu0 0.0
      %2711 = vmatpush2.msra.mxu0 0.0
      %2712 = vmatprep.mubr.f32.mxu0 0.0
      %2713 = vmatmul.mubr.f32.gmra.mxu0 %v764
      %v2714 = vpop.f32.mrf.mxu0
      %v2715 = vadd.f32 0.0, %v2714
      %v2716 = vpop.f32.mrf.mxu0
      %v2717 = vadd.f32 0.0, %v2716
      %2718 = vmatprep.mubr.f32.mxu0 0.0
      %2719 = vmatmul.mubr.f32.gmra.mxu0 %v767
      %v2720 = vpop.f32.mrf.mxu0
      %v2721 = vadd.f32 0.0, %v2720
      %v2722 = vpop.f32.mrf.mxu0
      %v2723 = vadd.f32 0.0, %v2722
      %2724 = vmatprep.mubr.f32.mxu0 0.0
      %2725 = vmatmul.mubr.f32.gmra.mxu0 %v770
      %v2726 = vpop.f32.mrf.mxu0
      %v2727 = vadd.f32 0.0, %v2726
      %v2728 = vpop.f32.mrf.mxu0
      %v2729 = vadd.f32 0.0, %v2728
      %2730 = vmatprep.mubr.f32.mxu0 0.0
      %2731 = vmatmul.mubr.f32.gmra.mxu0 %v773
      %v2732 = vpop.f32.mrf.mxu0
      %v2733 = vadd.f32 0.0, %v2732
      %v2734 = vpop.f32.mrf.mxu0
      %v2735 = vadd.f32 0.0, %v2734
      %2736 = vmatprep.mubr.f32.mxu0 0.0
      %2737 = vmatmul.mubr.f32.gmra.mxu0 %v776
      %v2738 = vpop.f32.mrf.mxu0
      %v2739 = vadd.f32 0.0, %v2738
      %v2740 = vpop.f32.mrf.mxu0
      %v2741 = vadd.f32 0.0, %v2740
      %2742 = vmatprep.mubr.f32.mxu0 0.0
      %2743 = vmatmul.mubr.f32.gmra.mxu0 %v779
      %v2744 = vpop.f32.mrf.mxu0
      %v2745 = vadd.f32 0.0, %v2744
      %v2746 = vpop.f32.mrf.mxu0
      %v2747 = vadd.f32 0.0, %v2746
      %2748 = vmatprep.mubr.f32.mxu0 0.0
      %2749 = vmatmul.mubr.f32.gmra.mxu0 %v782
      %v2750 = vpop.f32.mrf.mxu0
      %v2751 = vadd.f32 0.0, %v2750
      %v2752 = vpop.f32.mrf.mxu0
      %v2753 = vadd.f32 0.0, %v2752
      %2754 = vmatprep.mubr.f32.mxu0 0.0
      %2755 = vmatmul.mubr.f32.gmra.mxu0 %v785
      %v2756 = vpop.f32.mrf.mxu0
      %v2757 = vadd.f32 0.0, %v2756
      %v2758 = vpop.f32.mrf.mxu0
      %v2759 = vadd.f32 0.0, %v2758
      %2760 = vdwg.mxu0
      %2761 = vmatprep.subr.mxu0 0.0
      %2762 = vmatpush1.msra.mxu0 0.0
      %2763 = vmatprep.subr.mxu0 0.0
      %2764 = vmatpush1.msra.mxu0 0.0
      %2765 = vmatprep.subr.mxu0 0.0
      %2766 = vmatpush1.msra.mxu0 0.0
      %2767 = vmatprep.subr.mxu0 0.0
      %2768 = vmatpush1.msra.mxu0 0.0
      %2769 = vmatprep.subr.mxu0 0.0
      %2770 = vmatpush1.msra.mxu0 0.0
      %2771 = vmatprep.subr.mxu0 0.0
      %2772 = vmatpush1.msra.mxu0 0.0
      %2773 = vmatprep.subr.mxu0 0.0
      %2774 = vmatpush1.msra.mxu0 0.0
      %2775 = vmatprep.subr.mxu0 0.0
      %2776 = vmatpush1.msra.mxu0 0.0
      %2777 = vmatprep.subr.mxu0 %v2532
      %2778 = vmatpush1.msra.mxu0 %v2531
      %2779 = vmatprep.subr.mxu0 %v2524
      %2780 = vmatpush1.msra.mxu0 %v2523
      %2781 = vmatprep.subr.mxu0 %v2516
      %2782 = vmatpush1.msra.mxu0 %v2515
      %2783 = vmatprep.subr.mxu0 %v2508
      %2784 = vmatpush1.msra.mxu0 %v2507
      %2785 = vmatprep.subr.mxu0 %v2500
      %2786 = vmatpush1.msra.mxu0 %v2499
      %2787 = vmatprep.subr.mxu0 %v2492
      %2788 = vmatpush1.msra.mxu0 %v2491
      %2789 = vmatprep.subr.mxu0 %v2484
      %2790 = vmatpush1.msra.mxu0 %v2483
      %2791 = vmatprep.subr.mxu0 %v2476
      %2792 = vmatpush1.msra.mxu0 %v2475
      %2793 = vmatprep.subr.mxu0 0.0
      %2794 = vmatpush2.msra.mxu0 0.0
      %2795 = vmatprep.subr.mxu0 0.0
      %2796 = vmatpush2.msra.mxu0 0.0
      %2797 = vmatprep.subr.mxu0 0.0
      %2798 = vmatpush2.msra.mxu0 0.0
      %2799 = vmatprep.subr.mxu0 0.0
      %2800 = vmatpush2.msra.mxu0 0.0
      %2801 = vmatprep.subr.mxu0 0.0
      %2802 = vmatpush2.msra.mxu0 0.0
      %2803 = vmatprep.subr.mxu0 0.0
      %2804 = vmatpush2.msra.mxu0 0.0
      %2805 = vmatprep.subr.mxu0 0.0
      %2806 = vmatpush2.msra.mxu0 0.0
      %2807 = vmatprep.subr.mxu0 0.0
      %2808 = vmatpush2.msra.mxu0 0.0
      %2809 = vmatprep.subr.mxu0 0.0
      %2810 = vmatpush2.msra.mxu0 0.0
      %2811 = vmatprep.subr.mxu0 0.0
      %2812 = vmatpush2.msra.mxu0 0.0
      %2813 = vmatprep.subr.mxu0 0.0
      %2814 = vmatpush2.msra.mxu0 0.0
      %2815 = vmatprep.subr.mxu0 0.0
      %2816 = vmatpush2.msra.mxu0 0.0
      %2817 = vmatprep.subr.mxu0 0.0
      %2818 = vmatpush2.msra.mxu0 0.0
      %2819 = vmatprep.subr.mxu0 0.0
      %2820 = vmatpush2.msra.mxu0 0.0
      %2821 = vmatprep.subr.mxu0 0.0
      %2822 = vmatpush2.msra.mxu0 0.0
      %2823 = vmatprep.subr.mxu0 0.0
      %2824 = vmatpush2.msra.mxu0 0.0
      %2825 = vmatprep.mubr.f32.mxu0 0.0
      %2826 = vmatmul.mubr.f32.gmra.mxu0 %v764
      %v2827 = vpop.f32.mrf.mxu0
      %v2828 = vadd.f32 0.0, %v2827
      %v2829 = vpop.f32.mrf.mxu0
      %v2830 = vadd.f32 0.0, %v2829
      %2831 = vmatprep.mubr.f32.mxu0 0.0
      %2832 = vmatmul.mubr.f32.gmra.mxu0 %v767
      %v2833 = vpop.f32.mrf.mxu0
      %v2834 = vadd.f32 0.0, %v2833
      %v2835 = vpop.f32.mrf.mxu0
      %v2836 = vadd.f32 0.0, %v2835
      %2837 = vmatprep.mubr.f32.mxu0 0.0
      %2838 = vmatmul.mubr.f32.gmra.mxu0 %v770
      %v2839 = vpop.f32.mrf.mxu0
      %v2840 = vadd.f32 0.0, %v2839
      %v2841 = vpop.f32.mrf.mxu0
      %v2842 = vadd.f32 0.0, %v2841
      %2843 = vmatprep.mubr.f32.mxu0 0.0
      %2844 = vmatmul.mubr.f32.gmra.mxu0 %v773
      %v2845 = vpop.f32.mrf.mxu0
      %v2846 = vadd.f32 0.0, %v2845
      %v2847 = vpop.f32.mrf.mxu0
      %v2848 = vadd.f32 0.0, %v2847
      %2849 = vmatprep.mubr.f32.mxu0 0.0
      %2850 = vmatmul.mubr.f32.gmra.mxu0 %v776
      %v2851 = vpop.f32.mrf.mxu0
      %v2852 = vadd.f32 0.0, %v2851
      %v2853 = vpop.f32.mrf.mxu0
      %v2854 = vadd.f32 0.0, %v2853
      %2855 = vmatprep.mubr.f32.mxu0 0.0
      %2856 = vmatmul.mubr.f32.gmra.mxu0 %v779
      %v2857 = vpop.f32.mrf.mxu0
      %v2858 = vadd.f32 0.0, %v2857
      %v2859 = vpop.f32.mrf.mxu0
      %v2860 = vadd.f32 0.0, %v2859
      %2861 = vmatprep.mubr.f32.mxu0 0.0
      %2862 = vmatmul.mubr.f32.gmra.mxu0 %v782
      %v2863 = vpop.f32.mrf.mxu0
      %v2864 = vadd.f32 0.0, %v2863
      %v2865 = vpop.f32.mrf.mxu0
      %v2866 = vadd.f32 0.0, %v2865
      %2867 = vmatprep.mubr.f32.mxu0 0.0
      %2868 = vmatmul.mubr.f32.gmra.mxu0 %v785
      %v2869 = vpop.f32.mrf.mxu0
      %v2870 = vadd.f32 0.0, %v2869
      %v2871 = vpop.f32.mrf.mxu0
      %v2872 = vadd.f32 0.0, %v2871
      %2873 = vdwg.mxu0
      %2874 = vmatprep.subr.mxu0 0.0
      %2875 = vmatpush1.msra.mxu0 0.0
      %2876 = vmatprep.subr.mxu0 0.0
      %2877 = vmatpush1.msra.mxu0 0.0
      %2878 = vmatprep.subr.mxu0 0.0
      %2879 = vmatpush1.msra.mxu0 0.0
      %2880 = vmatprep.subr.mxu0 0.0
      %2881 = vmatpush1.msra.mxu0 0.0
      %2882 = vmatprep.subr.mxu0 0.0
      %2883 = vmatpush1.msra.mxu0 0.0
      %2884 = vmatprep.subr.mxu0 0.0
      %2885 = vmatpush1.msra.mxu0 0.0
      %2886 = vmatprep.subr.mxu0 0.0
      %2887 = vmatpush1.msra.mxu0 0.0
      %2888 = vmatprep.subr.mxu0 0.0
      %2889 = vmatpush1.msra.mxu0 0.0
      %2890 = vmatprep.subr.mxu0 %v2534
      %2891 = vmatpush1.msra.mxu0 %v2533
      %2892 = vmatprep.subr.mxu0 %v2526
      %2893 = vmatpush1.msra.mxu0 %v2525
      %2894 = vmatprep.subr.mxu0 %v2518
      %2895 = vmatpush1.msra.mxu0 %v2517
      %2896 = vmatprep.subr.mxu0 %v2510
      %2897 = vmatpush1.msra.mxu0 %v2509
      %2898 = vmatprep.subr.mxu0 %v2502
      %2899 = vmatpush1.msra.mxu0 %v2501
      %2900 = vmatprep.subr.mxu0 %v2494
      %2901 = vmatpush1.msra.mxu0 %v2493
      %2902 = vmatprep.subr.mxu0 %v2486
      %2903 = vmatpush1.msra.mxu0 %v2485
      %2904 = vmatprep.subr.mxu0 %v2478
      %2905 = vmatpush1.msra.mxu0 %v2477
      %2906 = vmatprep.subr.mxu0 0.0
      %2907 = vmatpush2.msra.mxu0 0.0
      %2908 = vmatprep.subr.mxu0 0.0
      %2909 = vmatpush2.msra.mxu0 0.0
      %2910 = vmatprep.subr.mxu0 0.0
      %2911 = vmatpush2.msra.mxu0 0.0
      %2912 = vmatprep.subr.mxu0 0.0
      %2913 = vmatpush2.msra.mxu0 0.0
      %2914 = vmatprep.subr.mxu0 0.0
      %2915 = vmatpush2.msra.mxu0 0.0
      %2916 = vmatprep.subr.mxu0 0.0
      %2917 = vmatpush2.msra.mxu0 0.0
      %2918 = vmatprep.subr.mxu0 0.0
      %2919 = vmatpush2.msra.mxu0 0.0
      %2920 = vmatprep.subr.mxu0 0.0
      %2921 = vmatpush2.msra.mxu0 0.0
      %2922 = vmatprep.subr.mxu0 0.0
      %2923 = vmatpush2.msra.mxu0 0.0
      %2924 = vmatprep.subr.mxu0 0.0
      %2925 = vmatpush2.msra.mxu0 0.0
      %2926 = vmatprep.subr.mxu0 0.0
      %2927 = vmatpush2.msra.mxu0 0.0
      %2928 = vmatprep.subr.mxu0 0.0
      %2929 = vmatpush2.msra.mxu0 0.0
      %2930 = vmatprep.subr.mxu0 0.0
      %2931 = vmatpush2.msra.mxu0 0.0
      %2932 = vmatprep.subr.mxu0 0.0
      %2933 = vmatpush2.msra.mxu0 0.0
      %2934 = vmatprep.subr.mxu0 0.0
      %2935 = vmatpush2.msra.mxu0 0.0
      %2936 = vmatprep.subr.mxu0 0.0
      %2937 = vmatpush2.msra.mxu0 0.0
      %2938 = vmatprep.mubr.f32.mxu0 0.0
      %2939 = vmatmul.mubr.f32.gmra.mxu0 %v764
      %v2940 = vpop.f32.mrf.mxu0
      %v2941 = vadd.f32 0.0, %v2940
      %v2942 = vpop.f32.mrf.mxu0
      %v2943 = vadd.f32 0.0, %v2942
      %2944 = vmatprep.mubr.f32.mxu0 0.0
      %2945 = vmatmul.mubr.f32.gmra.mxu0 %v767
      %v2946 = vpop.f32.mrf.mxu0
      %v2947 = vadd.f32 0.0, %v2946
      %v2948 = vpop.f32.mrf.mxu0
      %v2949 = vadd.f32 0.0, %v2948
      %2950 = vmatprep.mubr.f32.mxu0 0.0
      %2951 = vmatmul.mubr.f32.gmra.mxu0 %v770
      %v2952 = vpop.f32.mrf.mxu0
      %v2953 = vadd.f32 0.0, %v2952
      %v2954 = vpop.f32.mrf.mxu0
      %v2955 = vadd.f32 0.0, %v2954
      %2956 = vmatprep.mubr.f32.mxu0 0.0
      %2957 = vmatmul.mubr.f32.gmra.mxu0 %v773
      %v2958 = vpop.f32.mrf.mxu0
      %v2959 = vadd.f32 0.0, %v2958
      %v2960 = vpop.f32.mrf.mxu0
      %v2961 = vadd.f32 0.0, %v2960
      %2962 = vmatprep.mubr.f32.mxu0 0.0
      %2963 = vmatmul.mubr.f32.gmra.mxu0 %v776
      %v2964 = vpop.f32.mrf.mxu0
      %v2965 = vadd.f32 0.0, %v2964
      %v2966 = vpop.f32.mrf.mxu0
      %v2967 = vadd.f32 0.0, %v2966
      %2968 = vmatprep.mubr.f32.mxu0 0.0
      %2969 = vmatmul.mubr.f32.gmra.mxu0 %v779
      %v2970 = vpop.f32.mrf.mxu0
      %v2971 = vadd.f32 0.0, %v2970
      %v2972 = vpop.f32.mrf.mxu0
      %v2973 = vadd.f32 0.0, %v2972
      %2974 = vmatprep.mubr.f32.mxu0 0.0
      %2975 = vmatmul.mubr.f32.gmra.mxu0 %v782
      %v2976 = vpop.f32.mrf.mxu0
      %v2977 = vadd.f32 0.0, %v2976
      %v2978 = vpop.f32.mrf.mxu0
      %v2979 = vadd.f32 0.0, %v2978
      %2980 = vmatprep.mubr.f32.mxu0 0.0
      %2981 = vmatmul.mubr.f32.gmra.mxu0 %v785
      %v2982 = vpop.f32.mrf.mxu0
      %v2983 = vadd.f32 0.0, %v2982
      %v2984 = vpop.f32.mrf.mxu0
      %v2985 = vadd.f32 0.0, %v2984
      %2986 = vdwg.mxu0
      %v2987 = vmul.f32 %v2086, %v2602
      %v2988 = vmul.f32 %v2088, %v2604
      %v2989 = vmul.f32 %v2199, %v2715
      %v2990 = vmul.f32 %v2201, %v2717
      %v2991 = vmul.f32 %v2312, %v2828
      %v2992 = vmul.f32 %v2314, %v2830
      %v2993 = vmul.f32 %v2425, %v2941
      %v2994 = vmul.f32 %v2427, %v2943
      %v2995 = vmul.f32 %v2092, %v2608
      %v2996 = vmul.f32 %v2094, %v2610
      %v2997 = vmul.f32 %v2205, %v2721
      %v2998 = vmul.f32 %v2207, %v2723
      %v2999 = vmul.f32 %v2318, %v2834
      %v3000 = vmul.f32 %v2320, %v2836
      %v3001 = vmul.f32 %v2431, %v2947
      %v3002 = vmul.f32 %v2433, %v2949
      %v3003 = vmul.f32 %v2098, %v2614
      %v3004 = vmul.f32 %v2100, %v2616
      %v3005 = vmul.f32 %v2211, %v2727
      %v3006 = vmul.f32 %v2213, %v2729
      %v3007 = vmul.f32 %v2324, %v2840
      %v3008 = vmul.f32 %v2326, %v2842
      %v3009 = vmul.f32 %v2437, %v2953
      %v3010 = vmul.f32 %v2439, %v2955
      %v3011 = vmul.f32 %v2104, %v2620
      %v3012 = vmul.f32 %v2106, %v2622
      %v3013 = vmul.f32 %v2217, %v2733
      %v3014 = vmul.f32 %v2219, %v2735
      %v3015 = vmul.f32 %v2330, %v2846
      %v3016 = vmul.f32 %v2332, %v2848
      %v3017 = vmul.f32 %v2443, %v2959
      %v3018 = vmul.f32 %v2445, %v2961
      %v3019 = vmul.f32 %v2110, %v2626
      %v3020 = vmul.f32 %v2112, %v2628
      %v3021 = vmul.f32 %v2223, %v2739
      %v3022 = vmul.f32 %v2225, %v2741
      %v3023 = vmul.f32 %v2336, %v2852
      %v3024 = vmul.f32 %v2338, %v2854
      %v3025 = vmul.f32 %v2449, %v2965
      %v3026 = vmul.f32 %v2451, %v2967
      %v3027 = vmul.f32 %v2116, %v2632
      %v3028 = vmul.f32 %v2118, %v2634
      %v3029 = vmul.f32 %v2229, %v2745
      %v3030 = vmul.f32 %v2231, %v2747
      %v3031 = vmul.f32 %v2342, %v2858
      %v3032 = vmul.f32 %v2344, %v2860
      %v3033 = vmul.f32 %v2455, %v2971
      %v3034 = vmul.f32 %v2457, %v2973
      %v3035 = vmul.f32 %v2122, %v2638
      %v3036 = vmul.f32 %v2124, %v2640
      %v3037 = vmul.f32 %v2235, %v2751
      %v3038 = vmul.f32 %v2237, %v2753
      %v3039 = vmul.f32 %v2348, %v2864
      %v3040 = vmul.f32 %v2350, %v2866
      %v3041 = vmul.f32 %v2461, %v2977
      %v3042 = vmul.f32 %v2463, %v2979
      %v3043 = vmul.f32 %v2128, %v2644
      %v3044 = vmul.f32 %v2130, %v2646
      %v3045 = vmul.f32 %v2241, %v2757
      %v3046 = vmul.f32 %v2243, %v2759
      %v3047 = vmul.f32 %v2354, %v2870
      %v3048 = vmul.f32 %v2356, %v2872
      %v3049 = vmul.f32 %v2467, %v2983
      %v3050 = vmul.f32 %v2469, %v2985
      %3051 = vst [vmem:[#allocation3] sm:$0xff] %v2987
      %3052 = vst [vmem:[#allocation3 + $0x8] sm:$0xff] %v2988
      %3053 = vst [vmem:[#allocation3 + $0x10] sm:$0xff] %v2989
      %3054 = vst [vmem:[#allocation3 + $0x18] sm:$0xff] %v2990
      %3055 = vst [vmem:[#allocation3 + $0x20] sm:$0xff] %v2991
      %3056 = vst [vmem:[#allocation3 + $0x28] sm:$0xff] %v2992
      %3057 = vst [vmem:[#allocation3 + $0x30] sm:$0xff] %v2993
      %3058 = vst [vmem:[#allocation3 + $0x38] sm:$0xff] %v2994
      %3059 = vst [vmem:[#allocation3 + $0x40] sm:$0xff] %v2995
      %3060 = vst [vmem:[#allocation3 + $0x48] sm:$0xff] %v2996
      %3061 = vst [vmem:[#allocation3 + $0x50] sm:$0xff] %v2997
      %3062 = vst [vmem:[#allocation3 + $0x58] sm:$0xff] %v2998
      %3063 = vst [vmem:[#allocation3 + $0x60] sm:$0xff] %v2999
      %3064 = vst [vmem:[#allocation3 + $0x68] sm:$0xff] %v3000
      %3065 = vst [vmem:[#allocation3 + $0x70] sm:$0xff] %v3001
      %3066 = vst [vmem:[#allocation3 + $0x78] sm:$0xff] %v3002
      %3067 = vst [vmem:[#allocation3 + $0x80] sm:$0xff] %v3003
      %3068 = vst [vmem:[#allocation3 + $0x88] sm:$0xff] %v3004
      %3069 = vst [vmem:[#allocation3 + $0x90] sm:$0xff] %v3005
      %3070 = vst [vmem:[#allocation3 + $0x98] sm:$0xff] %v3006
      %3071 = vst [vmem:[#allocation3 + $0xa0] sm:$0xff] %v3007
      %3072 = vst [vmem:[#allocation3 + $0xa8] sm:$0xff] %v3008
      %3073 = vst [vmem:[#allocation3 + $0xb0] sm:$0xff] %v3009
      %3074 = vst [vmem:[#allocation3 + $0xb8] sm:$0xff] %v3010
      %3075 = vst [vmem:[#allocation3 + $0xc0] sm:$0xff] %v3011
      %3076 = vst [vmem:[#allocation3 + $0xc8] sm:$0xff] %v3012
      %3077 = vst [vmem:[#allocation3 + $0xd0] sm:$0xff] %v3013
      %3078 = vst [vmem:[#allocation3 + $0xd8] sm:$0xff] %v3014
      %3079 = vst [vmem:[#allocation3 + $0xe0] sm:$0xff] %v3015
      %3080 = vst [vmem:[#allocation3 + $0xe8] sm:$0xff] %v3016
      %3081 = vst [vmem:[#allocation3 + $0xf0] sm:$0xff] %v3017
      %3082 = vst [vmem:[#allocation3 + $0xf8] sm:$0xff] %v3018
      %3083 = vst [vmem:[#allocation3 + $0x100] sm:$0xff] %v3019
      %3084 = vst [vmem:[#allocation3 + $0x108] sm:$0xff] %v3020
      %3085 = vst [vmem:[#allocation3 + $0x110] sm:$0xff] %v3021
      %3086 = vst [vmem:[#allocation3 + $0x118] sm:$0xff] %v3022
      %3087 = vst [vmem:[#allocation3 + $0x120] sm:$0xff] %v3023
      %3088 = vst [vmem:[#allocation3 + $0x128] sm:$0xff] %v3024
      %3089 = vst [vmem:[#allocation3 + $0x130] sm:$0xff] %v3025
      %3090 = vst [vmem:[#allocation3 + $0x138] sm:$0xff] %v3026
      %3091 = vst [vmem:[#allocation3 + $0x140] sm:$0xff] %v3027
      %3092 = vst [vmem:[#allocation3 + $0x148] sm:$0xff] %v3028
      %3093 = vst [vmem:[#allocation3 + $0x150] sm:$0xff] %v3029
      %3094 = vst [vmem:[#allocation3 + $0x158] sm:$0xff] %v3030
      %3095 = vst [vmem:[#allocation3 + $0x160] sm:$0xff] %v3031
      %3096 = vst [vmem:[#allocation3 + $0x168] sm:$0xff] %v3032
      %3097 = vst [vmem:[#allocation3 + $0x170] sm:$0xff] %v3033
      %3098 = vst [vmem:[#allocation3 + $0x178] sm:$0xff] %v3034
      %3099 = vst [vmem:[#allocation3 + $0x180] sm:$0xff] %v3035
      %3100 = vst [vmem:[#allocation3 + $0x188] sm:$0xff] %v3036
      %3101 = vst [vmem:[#allocation3 + $0x190] sm:$0xff] %v3037
      %3102 = vst [vmem:[#allocation3 + $0x198] sm:$0xff] %v3038
      %3103 = vst [vmem:[#allocation3 + $0x1a0] sm:$0xff] %v3039
      %3104 = vst [vmem:[#allocation3 + $0x1a8] sm:$0xff] %v3040
      %3105 = vst [vmem:[#allocation3 + $0x1b0] sm:$0xff] %v3041
      %3106 = vst [vmem:[#allocation3 + $0x1b8] sm:$0xff] %v3042
      %3107 = vst [vmem:[#allocation3 + $0x1c0] sm:$0xff] %v3043
      %3108 = vst [vmem:[#allocation3 + $0x1c8] sm:$0xff] %v3044
      %3109 = vst [vmem:[#allocation3 + $0x1d0] sm:$0xff] %v3045
      %3110 = vst [vmem:[#allocation3 + $0x1d8] sm:$0xff] %v3046
      %3111 = vst [vmem:[#allocation3 + $0x1e0] sm:$0xff] %v3047
      %3112 = vst [vmem:[#allocation3 + $0x1e8] sm:$0xff] %v3048
      %3113 = vst [vmem:[#allocation3 + $0x1f0] sm:$0xff] %v3049
      %3114 = vst [vmem:[#allocation3 + $0x1f8] sm:$0xff] %v3050
      %v3115 = vld [vmem:[%s13] sm:$0xff]
      %v3116 = vld [vmem:[%s13 + $0x8] sm:$0xff]
      %v3117 = vld [vmem:[%s13 + $0x10] sm:$0xff]
      %v3118 = vld [vmem:[%s13 + $0x18] sm:$0xff]
      %v3119 = vld [vmem:[%s13 + $0x20] sm:$0xff]
      %v3120 = vld [vmem:[%s13 + $0x28] sm:$0xff]
      %v3121 = vld [vmem:[%s13 + $0x30] sm:$0xff]
      %v3122 = vld [vmem:[%s13 + $0x38] sm:$0xff]
      %v3123 = vld [vmem:[%s13 + $0x40] sm:$0xff]
      %v3124 = vld [vmem:[%s13 + $0x48] sm:$0xff]
      %v3125 = vld [vmem:[%s13 + $0x50] sm:$0xff]
      %v3126 = vld [vmem:[%s13 + $0x58] sm:$0xff]
      %v3127 = vld [vmem:[%s13 + $0x60] sm:$0xff]
      %v3128 = vld [vmem:[%s13 + $0x68] sm:$0xff]
      %v3129 = vld [vmem:[%s13 + $0x70] sm:$0xff]
      %v3130 = vld [vmem:[%s13 + $0x78] sm:$0xff]
      %v3131 = vld [vmem:[%s13 + $0x80] sm:$0xff]
      %v3132 = vld [vmem:[%s13 + $0x88] sm:$0xff]
      %v3133 = vld [vmem:[%s13 + $0x90] sm:$0xff]
      %v3134 = vld [vmem:[%s13 + $0x98] sm:$0xff]
      %v3135 = vld [vmem:[%s13 + $0xa0] sm:$0xff]
      %v3136 = vld [vmem:[%s13 + $0xa8] sm:$0xff]
      %v3137 = vld [vmem:[%s13 + $0xb0] sm:$0xff]
      %v3138 = vld [vmem:[%s13 + $0xb8] sm:$0xff]
      %v3139 = vld [vmem:[%s13 + $0xc0] sm:$0xff]
      %v3140 = vld [vmem:[%s13 + $0xc8] sm:$0xff]
      %v3141 = vld [vmem:[%s13 + $0xd0] sm:$0xff]
      %v3142 = vld [vmem:[%s13 + $0xd8] sm:$0xff]
      %v3143 = vld [vmem:[%s13 + $0xe0] sm:$0xff]
      %v3144 = vld [vmem:[%s13 + $0xe8] sm:$0xff]
      %v3145 = vld [vmem:[%s13 + $0xf0] sm:$0xff]
      %v3146 = vld [vmem:[%s13 + $0xf8] sm:$0xff]
      %v3147 = vld [vmem:[%s13 + $0x100] sm:$0xff]
      %v3148 = vld [vmem:[%s13 + $0x108] sm:$0xff]
      %v3149 = vld [vmem:[%s13 + $0x110] sm:$0xff]
      %v3150 = vld [vmem:[%s13 + $0x118] sm:$0xff]
      %v3151 = vld [vmem:[%s13 + $0x120] sm:$0xff]
      %v3152 = vld [vmem:[%s13 + $0x128] sm:$0xff]
      %v3153 = vld [vmem:[%s13 + $0x130] sm:$0xff]
      %v3154 = vld [vmem:[%s13 + $0x138] sm:$0xff]
      %v3155 = vld [vmem:[%s13 + $0x140] sm:$0xff]
      %v3156 = vld [vmem:[%s13 + $0x148] sm:$0xff]
      %v3157 = vld [vmem:[%s13 + $0x150] sm:$0xff]
      %v3158 = vld [vmem:[%s13 + $0x158] sm:$0xff]
      %v3159 = vld [vmem:[%s13 + $0x160] sm:$0xff]
      %v3160 = vld [vmem:[%s13 + $0x168] sm:$0xff]
      %v3161 = vld [vmem:[%s13 + $0x170] sm:$0xff]
      %v3162 = vld [vmem:[%s13 + $0x178] sm:$0xff]
      %v3163 = vld [vmem:[%s13 + $0x180] sm:$0xff]
      %v3164 = vld [vmem:[%s13 + $0x188] sm:$0xff]
      %v3165 = vld [vmem:[%s13 + $0x190] sm:$0xff]
      %v3166 = vld [vmem:[%s13 + $0x198] sm:$0xff]
      %v3167 = vld [vmem:[%s13 + $0x1a0] sm:$0xff]
      %v3168 = vld [vmem:[%s13 + $0x1a8] sm:$0xff]
      %v3169 = vld [vmem:[%s13 + $0x1b0] sm:$0xff]
      %v3170 = vld [vmem:[%s13 + $0x1b8] sm:$0xff]
      %v3171 = vld [vmem:[%s13 + $0x1c0] sm:$0xff]
      %v3172 = vld [vmem:[%s13 + $0x1c8] sm:$0xff]
      %v3173 = vld [vmem:[%s13 + $0x1d0] sm:$0xff]
      %v3174 = vld [vmem:[%s13 + $0x1d8] sm:$0xff]
      %v3175 = vld [vmem:[%s13 + $0x1e0] sm:$0xff]
      %v3176 = vld [vmem:[%s13 + $0x1e8] sm:$0xff]
      %v3177 = vld [vmem:[%s13 + $0x1f0] sm:$0xff]
      %v3178 = vld [vmem:[%s13 + $0x1f8] sm:$0xff]
      %3179 = vmatprep.subr.mxu0 0.0
      %3180 = vmatpush1.msra.mxu0 0.0
      %3181 = vmatprep.subr.mxu0 0.0
      %3182 = vmatpush1.msra.mxu0 0.0
      %3183 = vmatprep.subr.mxu0 0.0
      %3184 = vmatpush1.msra.mxu0 0.0
      %3185 = vmatprep.subr.mxu0 0.0
      %3186 = vmatpush1.msra.mxu0 0.0
      %3187 = vmatprep.subr.mxu0 0.0
      %3188 = vmatpush1.msra.mxu0 0.0
      %3189 = vmatprep.subr.mxu0 0.0
      %3190 = vmatpush1.msra.mxu0 0.0
      %3191 = vmatprep.subr.mxu0 0.0
      %3192 = vmatpush1.msra.mxu0 0.0
      %3193 = vmatprep.subr.mxu0 0.0
      %3194 = vmatpush1.msra.mxu0 0.0
      %3195 = vmatprep.subr.mxu0 %v3172
      %3196 = vmatpush1.msra.mxu0 %v3171
      %3197 = vmatprep.subr.mxu0 %v3164
      %3198 = vmatpush1.msra.mxu0 %v3163
      %3199 = vmatprep.subr.mxu0 %v3156
      %3200 = vmatpush1.msra.mxu0 %v3155
      %3201 = vmatprep.subr.mxu0 %v3148
      %3202 = vmatpush1.msra.mxu0 %v3147
      %3203 = vmatprep.subr.mxu0 %v3140
      %3204 = vmatpush1.msra.mxu0 %v3139
      %3205 = vmatprep.subr.mxu0 %v3132
      %3206 = vmatpush1.msra.mxu0 %v3131
      %3207 = vmatprep.subr.mxu0 %v3124
      %3208 = vmatpush1.msra.mxu0 %v3123
      %3209 = vmatprep.subr.mxu0 %v3116
      %3210 = vmatpush1.msra.mxu0 %v3115
      %3211 = vmatprep.subr.mxu0 0.0
      %3212 = vmatpush2.msra.mxu0 0.0
      %3213 = vmatprep.subr.mxu0 0.0
      %3214 = vmatpush2.msra.mxu0 0.0
      %3215 = vmatprep.subr.mxu0 0.0
      %3216 = vmatpush2.msra.mxu0 0.0
      %3217 = vmatprep.subr.mxu0 0.0
      %3218 = vmatpush2.msra.mxu0 0.0
      %3219 = vmatprep.subr.mxu0 0.0
      %3220 = vmatpush2.msra.mxu0 0.0
      %3221 = vmatprep.subr.mxu0 0.0
      %3222 = vmatpush2.msra.mxu0 0.0
      %3223 = vmatprep.subr.mxu0 0.0
      %3224 = vmatpush2.msra.mxu0 0.0
      %3225 = vmatprep.subr.mxu0 0.0
      %3226 = vmatpush2.msra.mxu0 0.0
      %3227 = vmatprep.subr.mxu0 0.0
      %3228 = vmatpush2.msra.mxu0 0.0
      %3229 = vmatprep.subr.mxu0 0.0
      %3230 = vmatpush2.msra.mxu0 0.0
      %3231 = vmatprep.subr.mxu0 0.0
      %3232 = vmatpush2.msra.mxu0 0.0
      %3233 = vmatprep.subr.mxu0 0.0
      %3234 = vmatpush2.msra.mxu0 0.0
      %3235 = vmatprep.subr.mxu0 0.0
      %3236 = vmatpush2.msra.mxu0 0.0
      %3237 = vmatprep.subr.mxu0 0.0
      %3238 = vmatpush2.msra.mxu0 0.0
      %3239 = vmatprep.subr.mxu0 0.0
      %3240 = vmatpush2.msra.mxu0 0.0
      %3241 = vmatprep.subr.mxu0 0.0
      %3242 = vmatpush2.msra.mxu0 0.0
      %3243 = vmatprep.mubr.f32.mxu0 0.0
      %3244 = vmatmul.mubr.f32.gmra.mxu0 %v764
      %v3245 = vpop.f32.mrf.mxu0
      %v3246 = vadd.f32 0.0, %v3245
      %v3247 = vpop.f32.mrf.mxu0
      %v3248 = vadd.f32 0.0, %v3247
      %3249 = vmatprep.mubr.f32.mxu0 0.0
      %3250 = vmatmul.mubr.f32.gmra.mxu0 %v767
      %v3251 = vpop.f32.mrf.mxu0
      %v3252 = vadd.f32 0.0, %v3251
      %v3253 = vpop.f32.mrf.mxu0
      %v3254 = vadd.f32 0.0, %v3253
      %3255 = vmatprep.mubr.f32.mxu0 0.0
      %3256 = vmatmul.mubr.f32.gmra.mxu0 %v770
      %v3257 = vpop.f32.mrf.mxu0
      %v3258 = vadd.f32 0.0, %v3257
      %v3259 = vpop.f32.mrf.mxu0
      %v3260 = vadd.f32 0.0, %v3259
      %3261 = vmatprep.mubr.f32.mxu0 0.0
      %3262 = vmatmul.mubr.f32.gmra.mxu0 %v773
      %v3263 = vpop.f32.mrf.mxu0
      %v3264 = vadd.f32 0.0, %v3263
      %v3265 = vpop.f32.mrf.mxu0
      %v3266 = vadd.f32 0.0, %v3265
      %3267 = vmatprep.mubr.f32.mxu0 0.0
      %3268 = vmatmul.mubr.f32.gmra.mxu0 %v776
      %v3269 = vpop.f32.mrf.mxu0
      %v3270 = vadd.f32 0.0, %v3269
      %v3271 = vpop.f32.mrf.mxu0
      %v3272 = vadd.f32 0.0, %v3271
      %3273 = vmatprep.mubr.f32.mxu0 0.0
      %3274 = vmatmul.mubr.f32.gmra.mxu0 %v779
      %v3275 = vpop.f32.mrf.mxu0
      %v3276 = vadd.f32 0.0, %v3275
      %v3277 = vpop.f32.mrf.mxu0
      %v3278 = vadd.f32 0.0, %v3277
      %3279 = vmatprep.mubr.f32.mxu0 0.0
      %3280 = vmatmul.mubr.f32.gmra.mxu0 %v782
      %v3281 = vpop.f32.mrf.mxu0
      %v3282 = vadd.f32 0.0, %v3281
      %v3283 = vpop.f32.mrf.mxu0
      %v3284 = vadd.f32 0.0, %v3283
      %3285 = vmatprep.mubr.f32.mxu0 0.0
      %3286 = vmatmul.mubr.f32.gmra.mxu0 %v785
      %v3287 = vpop.f32.mrf.mxu0
      %v3288 = vadd.f32 0.0, %v3287
      %v3289 = vpop.f32.mrf.mxu0
      %v3290 = vadd.f32 0.0, %v3289
      %3291 = vdwg.mxu0
      %3292 = vmatprep.subr.mxu0 0.0
      %3293 = vmatpush1.msra.mxu0 0.0
      %3294 = vmatprep.subr.mxu0 0.0
      %3295 = vmatpush1.msra.mxu0 0.0
      %3296 = vmatprep.subr.mxu0 0.0
      %3297 = vmatpush1.msra.mxu0 0.0
      %3298 = vmatprep.subr.mxu0 0.0
      %3299 = vmatpush1.msra.mxu0 0.0
      %3300 = vmatprep.subr.mxu0 0.0
      %3301 = vmatpush1.msra.mxu0 0.0
      %3302 = vmatprep.subr.mxu0 0.0
      %3303 = vmatpush1.msra.mxu0 0.0
      %3304 = vmatprep.subr.mxu0 0.0
      %3305 = vmatpush1.msra.mxu0 0.0
      %3306 = vmatprep.subr.mxu0 0.0
      %3307 = vmatpush1.msra.mxu0 0.0
      %3308 = vmatprep.subr.mxu0 %v3174
      %3309 = vmatpush1.msra.mxu0 %v3173
      %3310 = vmatprep.subr.mxu0 %v3166
      %3311 = vmatpush1.msra.mxu0 %v3165
      %3312 = vmatprep.subr.mxu0 %v3158
      %3313 = vmatpush1.msra.mxu0 %v3157
      %3314 = vmatprep.subr.mxu0 %v3150
      %3315 = vmatpush1.msra.mxu0 %v3149
      %3316 = vmatprep.subr.mxu0 %v3142
      %3317 = vmatpush1.msra.mxu0 %v3141
      %3318 = vmatprep.subr.mxu0 %v3134
      %3319 = vmatpush1.msra.mxu0 %v3133
      %3320 = vmatprep.subr.mxu0 %v3126
      %3321 = vmatpush1.msra.mxu0 %v3125
      %3322 = vmatprep.subr.mxu0 %v3118
      %3323 = vmatpush1.msra.mxu0 %v3117
      %3324 = vmatprep.subr.mxu0 0.0
      %3325 = vmatpush2.msra.mxu0 0.0
      %3326 = vmatprep.subr.mxu0 0.0
      %3327 = vmatpush2.msra.mxu0 0.0
      %3328 = vmatprep.subr.mxu0 0.0
      %3329 = vmatpush2.msra.mxu0 0.0
      %3330 = vmatprep.subr.mxu0 0.0
      %3331 = vmatpush2.msra.mxu0 0.0
      %3332 = vmatprep.subr.mxu0 0.0
      %3333 = vmatpush2.msra.mxu0 0.0
      %3334 = vmatprep.subr.mxu0 0.0
      %3335 = vmatpush2.msra.mxu0 0.0
      %3336 = vmatprep.subr.mxu0 0.0
      %3337 = vmatpush2.msra.mxu0 0.0
      %3338 = vmatprep.subr.mxu0 0.0
      %3339 = vmatpush2.msra.mxu0 0.0
      %3340 = vmatprep.subr.mxu0 0.0
      %3341 = vmatpush2.msra.mxu0 0.0
      %3342 = vmatprep.subr.mxu0 0.0
      %3343 = vmatpush2.msra.mxu0 0.0
      %3344 = vmatprep.subr.mxu0 0.0
      %3345 = vmatpush2.msra.mxu0 0.0
      %3346 = vmatprep.subr.mxu0 0.0
      %3347 = vmatpush2.msra.mxu0 0.0
      %3348 = vmatprep.subr.mxu0 0.0
      %3349 = vmatpush2.msra.mxu0 0.0
      %3350 = vmatprep.subr.mxu0 0.0
      %3351 = vmatpush2.msra.mxu0 0.0
      %3352 = vmatprep.subr.mxu0 0.0
      %3353 = vmatpush2.msra.mxu0 0.0
      %3354 = vmatprep.subr.mxu0 0.0
      %3355 = vmatpush2.msra.mxu0 0.0
      %3356 = vmatprep.mubr.f32.mxu0 0.0
      %3357 = vmatmul.mubr.f32.gmra.mxu0 %v764
      %v3358 = vpop.f32.mrf.mxu0
      %v3359 = vadd.f32 0.0, %v3358
      %v3360 = vpop.f32.mrf.mxu0
      %v3361 = vadd.f32 0.0, %v3360
      %3362 = vmatprep.mubr.f32.mxu0 0.0
      %3363 = vmatmul.mubr.f32.gmra.mxu0 %v767
      %v3364 = vpop.f32.mrf.mxu0
      %v3365 = vadd.f32 0.0, %v3364
      %v3366 = vpop.f32.mrf.mxu0
      %v3367 = vadd.f32 0.0, %v3366
      %3368 = vmatprep.mubr.f32.mxu0 0.0
      %3369 = vmatmul.mubr.f32.gmra.mxu0 %v770
      %v3370 = vpop.f32.mrf.mxu0
      %v3371 = vadd.f32 0.0, %v3370
      %v3372 = vpop.f32.mrf.mxu0
      %v3373 = vadd.f32 0.0, %v3372
      %3374 = vmatprep.mubr.f32.mxu0 0.0
      %3375 = vmatmul.mubr.f32.gmra.mxu0 %v773
      %v3376 = vpop.f32.mrf.mxu0
      %v3377 = vadd.f32 0.0, %v3376
      %v3378 = vpop.f32.mrf.mxu0
      %v3379 = vadd.f32 0.0, %v3378
      %3380 = vmatprep.mubr.f32.mxu0 0.0
      %3381 = vmatmul.mubr.f32.gmra.mxu0 %v776
      %v3382 = vpop.f32.mrf.mxu0
      %v3383 = vadd.f32 0.0, %v3382
      %v3384 = vpop.f32.mrf.mxu0
      %v3385 = vadd.f32 0.0, %v3384
      %3386 = vmatprep.mubr.f32.mxu0 0.0
      %3387 = vmatmul.mubr.f32.gmra.mxu0 %v779
      %v3388 = vpop.f32.mrf.mxu0
      %v3389 = vadd.f32 0.0, %v3388
      %v3390 = vpop.f32.mrf.mxu0
      %v3391 = vadd.f32 0.0, %v3390
      %3392 = vmatprep.mubr.f32.mxu0 0.0
      %3393 = vmatmul.mubr.f32.gmra.mxu0 %v782
      %v3394 = vpop.f32.mrf.mxu0
      %v3395 = vadd.f32 0.0, %v3394
      %v3396 = vpop.f32.mrf.mxu0
      %v3397 = vadd.f32 0.0, %v3396
      %3398 = vmatprep.mubr.f32.mxu0 0.0
      %3399 = vmatmul.mubr.f32.gmra.mxu0 %v785
      %v3400 = vpop.f32.mrf.mxu0
      %v3401 = vadd.f32 0.0, %v3400
      %v3402 = vpop.f32.mrf.mxu0
      %v3403 = vadd.f32 0.0, %v3402
      %3404 = vdwg.mxu0
      %3405 = vmatprep.subr.mxu0 0.0
      %3406 = vmatpush1.msra.mxu0 0.0
      %3407 = vmatprep.subr.mxu0 0.0
      %3408 = vmatpush1.msra.mxu0 0.0
      %3409 = vmatprep.subr.mxu0 0.0
      %3410 = vmatpush1.msra.mxu0 0.0
      %3411 = vmatprep.subr.mxu0 0.0
      %3412 = vmatpush1.msra.mxu0 0.0
      %3413 = vmatprep.subr.mxu0 0.0
      %3414 = vmatpush1.msra.mxu0 0.0
      %3415 = vmatprep.subr.mxu0 0.0
      %3416 = vmatpush1.msra.mxu0 0.0
      %3417 = vmatprep.subr.mxu0 0.0
      %3418 = vmatpush1.msra.mxu0 0.0
      %3419 = vmatprep.subr.mxu0 0.0
      %3420 = vmatpush1.msra.mxu0 0.0
      %3421 = vmatprep.subr.mxu0 %v3176
      %3422 = vmatpush1.msra.mxu0 %v3175
      %3423 = vmatprep.subr.mxu0 %v3168
      %3424 = vmatpush1.msra.mxu0 %v3167
      %3425 = vmatprep.subr.mxu0 %v3160
      %3426 = vmatpush1.msra.mxu0 %v3159
      %3427 = vmatprep.subr.mxu0 %v3152
      %3428 = vmatpush1.msra.mxu0 %v3151
      %3429 = vmatprep.subr.mxu0 %v3144
      %3430 = vmatpush1.msra.mxu0 %v3143
      %3431 = vmatprep.subr.mxu0 %v3136
      %3432 = vmatpush1.msra.mxu0 %v3135
      %3433 = vmatprep.subr.mxu0 %v3128
      %3434 = vmatpush1.msra.mxu0 %v3127
      %3435 = vmatprep.subr.mxu0 %v3120
      %3436 = vmatpush1.msra.mxu0 %v3119
      %3437 = vmatprep.subr.mxu0 0.0
      %3438 = vmatpush2.msra.mxu0 0.0
      %3439 = vmatprep.subr.mxu0 0.0
      %3440 = vmatpush2.msra.mxu0 0.0
      %3441 = vmatprep.subr.mxu0 0.0
      %3442 = vmatpush2.msra.mxu0 0.0
      %3443 = vmatprep.subr.mxu0 0.0
      %3444 = vmatpush2.msra.mxu0 0.0
      %3445 = vmatprep.subr.mxu0 0.0
      %3446 = vmatpush2.msra.mxu0 0.0
      %3447 = vmatprep.subr.mxu0 0.0
      %3448 = vmatpush2.msra.mxu0 0.0
      %3449 = vmatprep.subr.mxu0 0.0
      %3450 = vmatpush2.msra.mxu0 0.0
      %3451 = vmatprep.subr.mxu0 0.0
      %3452 = vmatpush2.msra.mxu0 0.0
      %3453 = vmatprep.subr.mxu0 0.0
      %3454 = vmatpush2.msra.mxu0 0.0
      %3455 = vmatprep.subr.mxu0 0.0
      %3456 = vmatpush2.msra.mxu0 0.0
      %3457 = vmatprep.subr.mxu0 0.0
      %3458 = vmatpush2.msra.mxu0 0.0
      %3459 = vmatprep.subr.mxu0 0.0
      %3460 = vmatpush2.msra.mxu0 0.0
      %3461 = vmatprep.subr.mxu0 0.0
      %3462 = vmatpush2.msra.mxu0 0.0
      %3463 = vmatprep.subr.mxu0 0.0
      %3464 = vmatpush2.msra.mxu0 0.0
      %3465 = vmatprep.subr.mxu0 0.0
      %3466 = vmatpush2.msra.mxu0 0.0
      %3467 = vmatprep.subr.mxu0 0.0
      %3468 = vmatpush2.msra.mxu0 0.0
      %3469 = vmatprep.mubr.f32.mxu0 0.0
      %3470 = vmatmul.mubr.f32.gmra.mxu0 %v764
      %v3471 = vpop.f32.mrf.mxu0
      %v3472 = vadd.f32 0.0, %v3471
      %v3473 = vpop.f32.mrf.mxu0
      %v3474 = vadd.f32 0.0, %v3473
      %3475 = vmatprep.mubr.f32.mxu0 0.0
      %3476 = vmatmul.mubr.f32.gmra.mxu0 %v767
      %v3477 = vpop.f32.mrf.mxu0
      %v3478 = vadd.f32 0.0, %v3477
      %v3479 = vpop.f32.mrf.mxu0
      %v3480 = vadd.f32 0.0, %v3479
      %3481 = vmatprep.mubr.f32.mxu0 0.0
      %3482 = vmatmul.mubr.f32.gmra.mxu0 %v770
      %v3483 = vpop.f32.mrf.mxu0
      %v3484 = vadd.f32 0.0, %v3483
      %v3485 = vpop.f32.mrf.mxu0
      %v3486 = vadd.f32 0.0, %v3485
      %3487 = vmatprep.mubr.f32.mxu0 0.0
      %3488 = vmatmul.mubr.f32.gmra.mxu0 %v773
      %v3489 = vpop.f32.mrf.mxu0
      %v3490 = vadd.f32 0.0, %v3489
      %v3491 = vpop.f32.mrf.mxu0
      %v3492 = vadd.f32 0.0, %v3491
      %3493 = vmatprep.mubr.f32.mxu0 0.0
      %3494 = vmatmul.mubr.f32.gmra.mxu0 %v776
      %v3495 = vpop.f32.mrf.mxu0
      %v3496 = vadd.f32 0.0, %v3495
      %v3497 = vpop.f32.mrf.mxu0
      %v3498 = vadd.f32 0.0, %v3497
      %3499 = vmatprep.mubr.f32.mxu0 0.0
      %3500 = vmatmul.mubr.f32.gmra.mxu0 %v779
      %v3501 = vpop.f32.mrf.mxu0
      %v3502 = vadd.f32 0.0, %v3501
      %v3503 = vpop.f32.mrf.mxu0
      %v3504 = vadd.f32 0.0, %v3503
      %3505 = vmatprep.mubr.f32.mxu0 0.0
      %3506 = vmatmul.mubr.f32.gmra.mxu0 %v782
      %v3507 = vpop.f32.mrf.mxu0
      %v3508 = vadd.f32 0.0, %v3507
      %v3509 = vpop.f32.mrf.mxu0
      %v3510 = vadd.f32 0.0, %v3509
      %3511 = vmatprep.mubr.f32.mxu0 0.0
      %3512 = vmatmul.mubr.f32.gmra.mxu0 %v785
      %v3513 = vpop.f32.mrf.mxu0
      %v3514 = vadd.f32 0.0, %v3513
      %v3515 = vpop.f32.mrf.mxu0
      %v3516 = vadd.f32 0.0, %v3515
      %3517 = vdwg.mxu0
      %3518 = vmatprep.subr.mxu0 0.0
      %3519 = vmatpush1.msra.mxu0 0.0
      %3520 = vmatprep.subr.mxu0 0.0
      %3521 = vmatpush1.msra.mxu0 0.0
      %3522 = vmatprep.subr.mxu0 0.0
      %3523 = vmatpush1.msra.mxu0 0.0
      %3524 = vmatprep.subr.mxu0 0.0
      %3525 = vmatpush1.msra.mxu0 0.0
      %3526 = vmatprep.subr.mxu0 0.0
      %3527 = vmatpush1.msra.mxu0 0.0
      %3528 = vmatprep.subr.mxu0 0.0
      %3529 = vmatpush1.msra.mxu0 0.0
      %3530 = vmatprep.subr.mxu0 0.0
      %3531 = vmatpush1.msra.mxu0 0.0
      %3532 = vmatprep.subr.mxu0 0.0
      %3533 = vmatpush1.msra.mxu0 0.0
      %3534 = vmatprep.subr.mxu0 %v3178
      %3535 = vmatpush1.msra.mxu0 %v3177
      %3536 = vmatprep.subr.mxu0 %v3170
      %3537 = vmatpush1.msra.mxu0 %v3169
      %3538 = vmatprep.subr.mxu0 %v3162
      %3539 = vmatpush1.msra.mxu0 %v3161
      %3540 = vmatprep.subr.mxu0 %v3154
      %3541 = vmatpush1.msra.mxu0 %v3153
      %3542 = vmatprep.subr.mxu0 %v3146
      %3543 = vmatpush1.msra.mxu0 %v3145
      %3544 = vmatprep.subr.mxu0 %v3138
      %3545 = vmatpush1.msra.mxu0 %v3137
      %3546 = vmatprep.subr.mxu0 %v3130
      %3547 = vmatpush1.msra.mxu0 %v3129
      %3548 = vmatprep.subr.mxu0 %v3122
      %3549 = vmatpush1.msra.mxu0 %v3121
      %3550 = vmatprep.subr.mxu0 0.0
      %3551 = vmatpush2.msra.mxu0 0.0
      %3552 = vmatprep.subr.mxu0 0.0
      %3553 = vmatpush2.msra.mxu0 0.0
      %3554 = vmatprep.subr.mxu0 0.0
      %3555 = vmatpush2.msra.mxu0 0.0
      %3556 = vmatprep.subr.mxu0 0.0
      %3557 = vmatpush2.msra.mxu0 0.0
      %3558 = vmatprep.subr.mxu0 0.0
      %3559 = vmatpush2.msra.mxu0 0.0
      %3560 = vmatprep.subr.mxu0 0.0
      %3561 = vmatpush2.msra.mxu0 0.0
      %3562 = vmatprep.subr.mxu0 0.0
      %3563 = vmatpush2.msra.mxu0 0.0
      %3564 = vmatprep.subr.mxu0 0.0
      %3565 = vmatpush2.msra.mxu0 0.0
      %3566 = vmatprep.subr.mxu0 0.0
      %3567 = vmatpush2.msra.mxu0 0.0
      %3568 = vmatprep.subr.mxu0 0.0
      %3569 = vmatpush2.msra.mxu0 0.0
      %3570 = vmatprep.subr.mxu0 0.0
      %3571 = vmatpush2.msra.mxu0 0.0
      %3572 = vmatprep.subr.mxu0 0.0
      %3573 = vmatpush2.msra.mxu0 0.0
      %3574 = vmatprep.subr.mxu0 0.0
      %3575 = vmatpush2.msra.mxu0 0.0
      %3576 = vmatprep.subr.mxu0 0.0
      %3577 = vmatpush2.msra.mxu0 0.0
      %3578 = vmatprep.subr.mxu0 0.0
      %3579 = vmatpush2.msra.mxu0 0.0
      %3580 = vmatprep.subr.mxu0 0.0
      %3581 = vmatpush2.msra.mxu0 0.0
      %3582 = vmatprep.mubr.f32.mxu0 0.0
      %3583 = vmatmul.mubr.f32.gmra.mxu0 %v764
      %v3584 = vpop.f32.mrf.mxu0
      %v3585 = vadd.f32 0.0, %v3584
      %v3586 = vpop.f32.mrf.mxu0
      %v3587 = vadd.f32 0.0, %v3586
      %3588 = vmatprep.mubr.f32.mxu0 0.0
      %3589 = vmatmul.mubr.f32.gmra.mxu0 %v767
      %v3590 = vpop.f32.mrf.mxu0
      %v3591 = vadd.f32 0.0, %v3590
      %v3592 = vpop.f32.mrf.mxu0
      %v3593 = vadd.f32 0.0, %v3592
      %3594 = vmatprep.mubr.f32.mxu0 0.0
      %3595 = vmatmul.mubr.f32.gmra.mxu0 %v770
      %v3596 = vpop.f32.mrf.mxu0
      %v3597 = vadd.f32 0.0, %v3596
      %v3598 = vpop.f32.mrf.mxu0
      %v3599 = vadd.f32 0.0, %v3598
      %3600 = vmatprep.mubr.f32.mxu0 0.0
      %3601 = vmatmul.mubr.f32.gmra.mxu0 %v773
      %v3602 = vpop.f32.mrf.mxu0
      %v3603 = vadd.f32 0.0, %v3602
      %v3604 = vpop.f32.mrf.mxu0
      %v3605 = vadd.f32 0.0, %v3604
      %3606 = vmatprep.mubr.f32.mxu0 0.0
      %3607 = vmatmul.mubr.f32.gmra.mxu0 %v776
      %v3608 = vpop.f32.mrf.mxu0
      %v3609 = vadd.f32 0.0, %v3608
      %v3610 = vpop.f32.mrf.mxu0
      %v3611 = vadd.f32 0.0, %v3610
      %3612 = vmatprep.mubr.f32.mxu0 0.0
      %3613 = vmatmul.mubr.f32.gmra.mxu0 %v779
      %v3614 = vpop.f32.mrf.mxu0
      %v3615 = vadd.f32 0.0, %v3614
      %v3616 = vpop.f32.mrf.mxu0
      %v3617 = vadd.f32 0.0, %v3616
      %3618 = vmatprep.mubr.f32.mxu0 0.0
      %3619 = vmatmul.mubr.f32.gmra.mxu0 %v782
      %v3620 = vpop.f32.mrf.mxu0
      %v3621 = vadd.f32 0.0, %v3620
      %v3622 = vpop.f32.mrf.mxu0
      %v3623 = vadd.f32 0.0, %v3622
      %3624 = vmatprep.mubr.f32.mxu0 0.0
      %3625 = vmatmul.mubr.f32.gmra.mxu0 %v785
      %v3626 = vpop.f32.mrf.mxu0
      %v3627 = vadd.f32 0.0, %v3626
      %v3628 = vpop.f32.mrf.mxu0
      %v3629 = vadd.f32 0.0, %v3628
      %3630 = vdwg.mxu0
      %3631 = vst [vmem:[#allocation4] sm:$0xff] %v3246
      %3632 = vst [vmem:[#allocation4 + $0x8] sm:$0xff] %v3248
      %3633 = vst [vmem:[#allocation4 + $0x10] sm:$0xff] %v3359
      %3634 = vst [vmem:[#allocation4 + $0x18] sm:$0xff] %v3361
      %3635 = vst [vmem:[#allocation4 + $0x20] sm:$0xff] %v3472
      %3636 = vst [vmem:[#allocation4 + $0x28] sm:$0xff] %v3474
      %3637 = vst [vmem:[#allocation4 + $0x30] sm:$0xff] %v3585
      %3638 = vst [vmem:[#allocation4 + $0x38] sm:$0xff] %v3587
      %3639 = vst [vmem:[#allocation4 + $0x40] sm:$0xff] %v3252
      %3640 = vst [vmem:[#allocation4 + $0x48] sm:$0xff] %v3254
      %3641 = vst [vmem:[#allocation4 + $0x50] sm:$0xff] %v3365
      %3642 = vst [vmem:[#allocation4 + $0x58] sm:$0xff] %v3367
      %3643 = vst [vmem:[#allocation4 + $0x60] sm:$0xff] %v3478
      %3644 = vst [vmem:[#allocation4 + $0x68] sm:$0xff] %v3480
      %3645 = vst [vmem:[#allocation4 + $0x70] sm:$0xff] %v3591
      %3646 = vst [vmem:[#allocation4 + $0x78] sm:$0xff] %v3593
      %3647 = vst [vmem:[#allocation4 + $0x80] sm:$0xff] %v3258
      %3648 = vst [vmem:[#allocation4 + $0x88] sm:$0xff] %v3260
      %3649 = vst [vmem:[#allocation4 + $0x90] sm:$0xff] %v3371
      %3650 = vst [vmem:[#allocation4 + $0x98] sm:$0xff] %v3373
      %3651 = vst [vmem:[#allocation4 + $0xa0] sm:$0xff] %v3484
      %3652 = vst [vmem:[#allocation4 + $0xa8] sm:$0xff] %v3486
      %3653 = vst [vmem:[#allocation4 + $0xb0] sm:$0xff] %v3597
      %3654 = vst [vmem:[#allocation4 + $0xb8] sm:$0xff] %v3599
      %3655 = vst [vmem:[#allocation4 + $0xc0] sm:$0xff] %v3264
      %3656 = vst [vmem:[#allocation4 + $0xc8] sm:$0xff] %v3266
      %3657 = vst [vmem:[#allocation4 + $0xd0] sm:$0xff] %v3377
      %3658 = vst [vmem:[#allocation4 + $0xd8] sm:$0xff] %v3379
      %3659 = vst [vmem:[#allocation4 + $0xe0] sm:$0xff] %v3490
      %3660 = vst [vmem:[#allocation4 + $0xe8] sm:$0xff] %v3492
      %3661 = vst [vmem:[#allocation4 + $0xf0] sm:$0xff] %v3603
      %3662 = vst [vmem:[#allocation4 + $0xf8] sm:$0xff] %v3605
      %3663 = vst [vmem:[#allocation4 + $0x100] sm:$0xff] %v3270
      %3664 = vst [vmem:[#allocation4 + $0x108] sm:$0xff] %v3272
      %3665 = vst [vmem:[#allocation4 + $0x110] sm:$0xff] %v3383
      %3666 = vst [vmem:[#allocation4 + $0x118] sm:$0xff] %v3385
      %3667 = vst [vmem:[#allocation4 + $0x120] sm:$0xff] %v3496
      %3668 = vst [vmem:[#allocation4 + $0x128] sm:$0xff] %v3498
      %3669 = vst [vmem:[#allocation4 + $0x130] sm:$0xff] %v3609
      %3670 = vst [vmem:[#allocation4 + $0x138] sm:$0xff] %v3611
      %3671 = vst [vmem:[#allocation4 + $0x140] sm:$0xff] %v3276
      %3672 = vst [vmem:[#allocation4 + $0x148] sm:$0xff] %v3278
      %3673 = vst [vmem:[#allocation4 + $0x150] sm:$0xff] %v3389
      %3674 = vst [vmem:[#allocation4 + $0x158] sm:$0xff] %v3391
      %3675 = vst [vmem:[#allocation4 + $0x160] sm:$0xff] %v3502
      %3676 = vst [vmem:[#allocation4 + $0x168] sm:$0xff] %v3504
      %3677 = vst [vmem:[#allocation4 + $0x170] sm:$0xff] %v3615
      %3678 = vst [vmem:[#allocation4 + $0x178] sm:$0xff] %v3617
      %3679 = vst [vmem:[#allocation4 + $0x180] sm:$0xff] %v3282
      %3680 = vst [vmem:[#allocation4 + $0x188] sm:$0xff] %v3284
      %3681 = vst [vmem:[#allocation4 + $0x190] sm:$0xff] %v3395
      %3682 = vst [vmem:[#allocation4 + $0x198] sm:$0xff] %v3397
      %3683 = vst [vmem:[#allocation4 + $0x1a0] sm:$0xff] %v3508
      %3684 = vst [vmem:[#allocation4 + $0x1a8] sm:$0xff] %v3510
      %3685 = vst [vmem:[#allocation4 + $0x1b0] sm:$0xff] %v3621
      %3686 = vst [vmem:[#allocation4 + $0x1b8] sm:$0xff] %v3623
      %3687 = vst [vmem:[#allocation4 + $0x1c0] sm:$0xff] %v3288
      %3688 = vst [vmem:[#allocation4 + $0x1c8] sm:$0xff] %v3290
      %3689 = vst [vmem:[#allocation4 + $0x1d0] sm:$0xff] %v3401
      %3690 = vst [vmem:[#allocation4 + $0x1d8] sm:$0xff] %v3403
      %3691 = vst [vmem:[#allocation4 + $0x1e0] sm:$0xff] %v3514
      %3692 = vst [vmem:[#allocation4 + $0x1e8] sm:$0xff] %v3516
      %3693 = vst [vmem:[#allocation4 + $0x1f0] sm:$0xff] %v3627
      %3694 = vst [vmem:[#allocation4 + $0x1f8] sm:$0xff] %v3629
      %v3695 = vld [vmem:[#allocation3] sm:$0xff]
      %v3696 = vld [vmem:[#allocation3 + $0x8] sm:$0xff]
      %v3697 = vld [vmem:[#allocation3 + $0x10] sm:$0xff]
      %v3698 = vld [vmem:[#allocation3 + $0x18] sm:$0xff]
      %v3699 = vld [vmem:[#allocation3 + $0x20] sm:$0xff]
      %v3700 = vld [vmem:[#allocation3 + $0x28] sm:$0xff]
      %v3701 = vld [vmem:[#allocation3 + $0x30] sm:$0xff]
      %v3702 = vld [vmem:[#allocation3 + $0x38] sm:$0xff]
      %v3703 = vld [vmem:[#allocation4] sm:$0xff]
      %v3704 = vld [vmem:[#allocation4 + $0x8] sm:$0xff]
      %v3705 = vld [vmem:[#allocation4 + $0x10] sm:$0xff]
      %v3706 = vld [vmem:[#allocation4 + $0x18] sm:$0xff]
      %v3707 = vld [vmem:[#allocation4 + $0x20] sm:$0xff]
      %v3708 = vld [vmem:[#allocation4 + $0x28] sm:$0xff]
      %v3709 = vld [vmem:[#allocation4 + $0x30] sm:$0xff]
      %v3710 = vld [vmem:[#allocation4 + $0x38] sm:$0xff]
      %v3711 = vmul.f32 %v3695, %v3703
      %v3712 = vmul.f32 %v3696, %v3704
      %v3713 = vmul.f32 %v3697, %v3705
      %v3714 = vmul.f32 %v3698, %v3706
      %v3715 = vmul.f32 %v3699, %v3707
      %v3716 = vmul.f32 %v3700, %v3708
      %v3717 = vmul.f32 %v3701, %v3709
      %v3718 = vmul.f32 %v3702, %v3710
      %v3719 = vld [vmem:[%s11] sm:$0xff]
      %v3720 = vld [vmem:[%s11 + $0x8] sm:$0xff]
      %v3721 = vld [vmem:[%s11 + $0x10] sm:$0xff]
      %v3722 = vld [vmem:[%s11 + $0x18] sm:$0xff]
      %v3723 = vld [vmem:[%s11 + $0x20] sm:$0xff]
      %v3724 = vld [vmem:[%s11 + $0x28] sm:$0xff]
      %v3725 = vld [vmem:[%s11 + $0x30] sm:$0xff]
      %v3726 = vld [vmem:[%s11 + $0x38] sm:$0xff]
      %v3727 = vld [vmem:[%s11 + $0x40] sm:$0xff]
      %v3728 = vld [vmem:[%s11 + $0x48] sm:$0xff]
      %v3729 = vld [vmem:[%s11 + $0x50] sm:$0xff]
      %v3730 = vld [vmem:[%s11 + $0x58] sm:$0xff]
      %v3731 = vld [vmem:[%s11 + $0x60] sm:$0xff]
      %v3732 = vld [vmem:[%s11 + $0x68] sm:$0xff]
      %v3733 = vld [vmem:[%s11 + $0x70] sm:$0xff]
      %v3734 = vld [vmem:[%s11 + $0x78] sm:$0xff]
      %v3735 = vld [vmem:[%s11 + $0x80] sm:$0xff]
      %v3736 = vld [vmem:[%s11 + $0x88] sm:$0xff]
      %v3737 = vld [vmem:[%s11 + $0x90] sm:$0xff]
      %v3738 = vld [vmem:[%s11 + $0x98] sm:$0xff]
      %v3739 = vld [vmem:[%s11 + $0xa0] sm:$0xff]
      %v3740 = vld [vmem:[%s11 + $0xa8] sm:$0xff]
      %v3741 = vld [vmem:[%s11 + $0xb0] sm:$0xff]
      %v3742 = vld [vmem:[%s11 + $0xb8] sm:$0xff]
      %v3743 = vld [vmem:[%s11 + $0xc0] sm:$0xff]
      %v3744 = vld [vmem:[%s11 + $0xc8] sm:$0xff]
      %v3745 = vld [vmem:[%s11 + $0xd0] sm:$0xff]
      %v3746 = vld [vmem:[%s11 + $0xd8] sm:$0xff]
      %v3747 = vld [vmem:[%s11 + $0xe0] sm:$0xff]
      %v3748 = vld [vmem:[%s11 + $0xe8] sm:$0xff]
      %v3749 = vld [vmem:[%s11 + $0xf0] sm:$0xff]
      %v3750 = vld [vmem:[%s11 + $0xf8] sm:$0xff]
      %v3751 = vld [vmem:[%s11 + $0x100] sm:$0xff]
      %v3752 = vld [vmem:[%s11 + $0x108] sm:$0xff]
      %v3753 = vld [vmem:[%s11 + $0x110] sm:$0xff]
      %v3754 = vld [vmem:[%s11 + $0x118] sm:$0xff]
      %v3755 = vld [vmem:[%s11 + $0x120] sm:$0xff]
      %v3756 = vld [vmem:[%s11 + $0x128] sm:$0xff]
      %v3757 = vld [vmem:[%s11 + $0x130] sm:$0xff]
      %v3758 = vld [vmem:[%s11 + $0x138] sm:$0xff]
      %v3759 = vld [vmem:[%s11 + $0x140] sm:$0xff]
      %v3760 = vld [vmem:[%s11 + $0x148] sm:$0xff]
      %v3761 = vld [vmem:[%s11 + $0x150] sm:$0xff]
      %v3762 = vld [vmem:[%s11 + $0x158] sm:$0xff]
      %v3763 = vld [vmem:[%s11 + $0x160] sm:$0xff]
      %v3764 = vld [vmem:[%s11 + $0x168] sm:$0xff]
      %v3765 = vld [vmem:[%s11 + $0x170] sm:$0xff]
      %v3766 = vld [vmem:[%s11 + $0x178] sm:$0xff]
      %v3767 = vld [vmem:[%s11 + $0x180] sm:$0xff]
      %v3768 = vld [vmem:[%s11 + $0x188] sm:$0xff]
      %v3769 = vld [vmem:[%s11 + $0x190] sm:$0xff]
      %v3770 = vld [vmem:[%s11 + $0x198] sm:$0xff]
      %v3771 = vld [vmem:[%s11 + $0x1a0] sm:$0xff]
      %v3772 = vld [vmem:[%s11 + $0x1a8] sm:$0xff]
      %v3773 = vld [vmem:[%s11 + $0x1b0] sm:$0xff]
      %v3774 = vld [vmem:[%s11 + $0x1b8] sm:$0xff]
      %v3775 = vld [vmem:[%s11 + $0x1c0] sm:$0xff]
      %v3776 = vld [vmem:[%s11 + $0x1c8] sm:$0xff]
      %v3777 = vld [vmem:[%s11 + $0x1d0] sm:$0xff]
      %v3778 = vld [vmem:[%s11 + $0x1d8] sm:$0xff]
      %v3779 = vld [vmem:[%s11 + $0x1e0] sm:$0xff]
      %v3780 = vld [vmem:[%s11 + $0x1e8] sm:$0xff]
      %v3781 = vld [vmem:[%s11 + $0x1f0] sm:$0xff]
      %v3782 = vld [vmem:[%s11 + $0x1f8] sm:$0xff]
      %v3783 = vld [vmem:[%s11 + $0x200] sm:$0xff]
      %v3784 = vld [vmem:[%s11 + $0x208] sm:$0xff]
      %v3785 = vld [vmem:[%s11 + $0x210] sm:$0xff]
      %v3786 = vld [vmem:[%s11 + $0x218] sm:$0xff]
      %v3787 = vld [vmem:[%s11 + $0x220] sm:$0xff]
      %v3788 = vld [vmem:[%s11 + $0x228] sm:$0xff]
      %v3789 = vld [vmem:[%s11 + $0x230] sm:$0xff]
      %v3790 = vld [vmem:[%s11 + $0x238] sm:$0xff]
      %v3791 = vld [vmem:[%s11 + $0x240] sm:$0xff]
      %v3792 = vld [vmem:[%s11 + $0x248] sm:$0xff]
      %v3793 = vld [vmem:[%s11 + $0x250] sm:$0xff]
      %v3794 = vld [vmem:[%s11 + $0x258] sm:$0xff]
      %v3795 = vld [vmem:[%s11 + $0x260] sm:$0xff]
      %v3796 = vld [vmem:[%s11 + $0x268] sm:$0xff]
      %v3797 = vld [vmem:[%s11 + $0x270] sm:$0xff]
      %v3798 = vld [vmem:[%s11 + $0x278] sm:$0xff]
      %v3799 = vld [vmem:[%s11 + $0x280] sm:$0xff]
      %v3800 = vld [vmem:[%s11 + $0x288] sm:$0xff]
      %v3801 = vld [vmem:[%s11 + $0x290] sm:$0xff]
      %v3802 = vld [vmem:[%s11 + $0x298] sm:$0xff]
      %v3803 = vld [vmem:[%s11 + $0x2a0] sm:$0xff]
      %v3804 = vld [vmem:[%s11 + $0x2a8] sm:$0xff]
      %v3805 = vld [vmem:[%s11 + $0x2b0] sm:$0xff]
      %v3806 = vld [vmem:[%s11 + $0x2b8] sm:$0xff]
      %v3807 = vld [vmem:[%s11 + $0x2c0] sm:$0xff]
      %v3808 = vld [vmem:[%s11 + $0x2c8] sm:$0xff]
      %v3809 = vld [vmem:[%s11 + $0x2d0] sm:$0xff]
      %v3810 = vld [vmem:[%s11 + $0x2d8] sm:$0xff]
      %v3811 = vld [vmem:[%s11 + $0x2e0] sm:$0xff]
      %v3812 = vld [vmem:[%s11 + $0x2e8] sm:$0xff]
      %v3813 = vld [vmem:[%s11 + $0x2f0] sm:$0xff]
      %v3814 = vld [vmem:[%s11 + $0x2f8] sm:$0xff]
      %v3815 = vld [vmem:[%s11 + $0x300] sm:$0xff]
      %v3816 = vld [vmem:[%s11 + $0x308] sm:$0xff]
      %v3817 = vld [vmem:[%s11 + $0x310] sm:$0xff]
      %v3818 = vld [vmem:[%s11 + $0x318] sm:$0xff]
      %v3819 = vld [vmem:[%s11 + $0x320] sm:$0xff]
      %v3820 = vld [vmem:[%s11 + $0x328] sm:$0xff]
      %v3821 = vld [vmem:[%s11 + $0x330] sm:$0xff]
      %v3822 = vld [vmem:[%s11 + $0x338] sm:$0xff]
      %v3823 = vld [vmem:[%s11 + $0x340] sm:$0xff]
      %v3824 = vld [vmem:[%s11 + $0x348] sm:$0xff]
      %v3825 = vld [vmem:[%s11 + $0x350] sm:$0xff]
      %v3826 = vld [vmem:[%s11 + $0x358] sm:$0xff]
      %v3827 = vld [vmem:[%s11 + $0x360] sm:$0xff]
      %v3828 = vld [vmem:[%s11 + $0x368] sm:$0xff]
      %v3829 = vld [vmem:[%s11 + $0x370] sm:$0xff]
      %v3830 = vld [vmem:[%s11 + $0x378] sm:$0xff]
      %v3831 = vld [vmem:[%s11 + $0x380] sm:$0xff]
      %v3832 = vld [vmem:[%s11 + $0x388] sm:$0xff]
      %v3833 = vld [vmem:[%s11 + $0x390] sm:$0xff]
      %v3834 = vld [vmem:[%s11 + $0x398] sm:$0xff]
      %v3835 = vld [vmem:[%s11 + $0x3a0] sm:$0xff]
      %v3836 = vld [vmem:[%s11 + $0x3a8] sm:$0xff]
      %v3837 = vld [vmem:[%s11 + $0x3b0] sm:$0xff]
      %v3838 = vld [vmem:[%s11 + $0x3b8] sm:$0xff]
      %v3839 = vld [vmem:[%s11 + $0x3c0] sm:$0xff]
      %v3840 = vld [vmem:[%s11 + $0x3c8] sm:$0xff]
      %v3841 = vld [vmem:[%s11 + $0x3d0] sm:$0xff]
      %v3842 = vld [vmem:[%s11 + $0x3d8] sm:$0xff]
      %v3843 = vld [vmem:[%s11 + $0x3e0] sm:$0xff]
      %v3844 = vld [vmem:[%s11 + $0x3e8] sm:$0xff]
      %v3845 = vld [vmem:[%s11 + $0x3f0] sm:$0xff]
      %v3846 = vld [vmem:[%s11 + $0x3f8] sm:$0xff]
      %3847 = vmatprep.subr.mxu0 0.0
      %3848 = vmatpush1.msra.mxu0 %v3734
      %3849 = vmatprep.subr.mxu0 0.0
      %3850 = vmatpush1.msra.mxu0 %v3733
      %3851 = vmatprep.subr.mxu0 0.0
      %3852 = vmatpush1.msra.mxu0 %v3732
      %3853 = vmatprep.subr.mxu0 0.0
      %3854 = vmatpush1.msra.mxu0 %v3731
      %3855 = vmatprep.subr.mxu0 0.0
      %3856 = vmatpush1.msra.mxu0 %v3730
      %3857 = vmatprep.subr.mxu0 0.0
      %3858 = vmatpush1.msra.mxu0 %v3729
      %3859 = vmatprep.subr.mxu0 0.0
      %3860 = vmatpush1.msra.mxu0 %v3728
      %3861 = vmatprep.subr.mxu0 0.0
      %3862 = vmatpush1.msra.mxu0 %v3727
      %3863 = vmatprep.subr.mxu0 0.0
      %3864 = vmatpush1.msra.mxu0 %v3726
      %3865 = vmatprep.subr.mxu0 0.0
      %3866 = vmatpush1.msra.mxu0 %v3725
      %3867 = vmatprep.subr.mxu0 0.0
      %3868 = vmatpush1.msra.mxu0 %v3724
      %3869 = vmatprep.subr.mxu0 0.0
      %3870 = vmatpush1.msra.mxu0 %v3723
      %3871 = vmatprep.subr.mxu0 0.0
      %3872 = vmatpush1.msra.mxu0 %v3722
      %3873 = vmatprep.subr.mxu0 0.0
      %3874 = vmatpush1.msra.mxu0 %v3721
      %3875 = vmatprep.subr.mxu0 0.0
      %3876 = vmatpush1.msra.mxu0 %v3720
      %3877 = vmatprep.subr.mxu0 0.0
      %3878 = vmatpush1.msra.mxu0 %v3719
      %3879 = vmatprep.subr.mxu0 0.0
      %3880 = vmatpush2.msra.mxu0 %v3750
      %3881 = vmatprep.subr.mxu0 0.0
      %3882 = vmatpush2.msra.mxu0 %v3749
      %3883 = vmatprep.subr.mxu0 0.0
      %3884 = vmatpush2.msra.mxu0 %v3748
      %3885 = vmatprep.subr.mxu0 0.0
      %3886 = vmatpush2.msra.mxu0 %v3747
      %3887 = vmatprep.subr.mxu0 0.0
      %3888 = vmatpush2.msra.mxu0 %v3746
      %3889 = vmatprep.subr.mxu0 0.0
      %3890 = vmatpush2.msra.mxu0 %v3745
      %3891 = vmatprep.subr.mxu0 0.0
      %3892 = vmatpush2.msra.mxu0 %v3744
      %3893 = vmatprep.subr.mxu0 0.0
      %3894 = vmatpush2.msra.mxu0 %v3743
      %3895 = vmatprep.subr.mxu0 0.0
      %3896 = vmatpush2.msra.mxu0 %v3742
      %3897 = vmatprep.subr.mxu0 0.0
      %3898 = vmatpush2.msra.mxu0 %v3741
      %3899 = vmatprep.subr.mxu0 0.0
      %3900 = vmatpush2.msra.mxu0 %v3740
      %3901 = vmatprep.subr.mxu0 0.0
      %3902 = vmatpush2.msra.mxu0 %v3739
      %3903 = vmatprep.subr.mxu0 0.0
      %3904 = vmatpush2.msra.mxu0 %v3738
      %3905 = vmatprep.subr.mxu0 0.0
      %3906 = vmatpush2.msra.mxu0 %v3737
      %3907 = vmatprep.subr.mxu0 0.0
      %3908 = vmatpush2.msra.mxu0 %v3736
      %3909 = vmatprep.subr.mxu0 0.0
      %3910 = vmatpush2.msra.mxu0 %v3735
      %3911 = vmatprep.mubr.f32.mxu0 %v3712
      %3912 = vmatmul.mubr.f32.gmra.mxu0 %v3711
      %v3913 = vpop.f32.mrf.mxu0
      %v3914 = vadd.f32 0.0, %v3913
      %v3915 = vpop.f32.mrf.mxu0
      %3916 = vdwg.mxu0
      %3917 = vmatprep.subr.mxu0 0.0
      %3918 = vmatpush1.msra.mxu0 %v3766
      %3919 = vmatprep.subr.mxu0 0.0
      %3920 = vmatpush1.msra.mxu0 %v3765
      %3921 = vmatprep.subr.mxu0 0.0
      %3922 = vmatpush1.msra.mxu0 %v3764
      %3923 = vmatprep.subr.mxu0 0.0
      %3924 = vmatpush1.msra.mxu0 %v3763
      %3925 = vmatprep.subr.mxu0 0.0
      %3926 = vmatpush1.msra.mxu0 %v3762
      %3927 = vmatprep.subr.mxu0 0.0
      %3928 = vmatpush1.msra.mxu0 %v3761
      %3929 = vmatprep.subr.mxu0 0.0
      %3930 = vmatpush1.msra.mxu0 %v3760
      %3931 = vmatprep.subr.mxu0 0.0
      %3932 = vmatpush1.msra.mxu0 %v3759
      %3933 = vmatprep.subr.mxu0 0.0
      %3934 = vmatpush1.msra.mxu0 %v3758
      %3935 = vmatprep.subr.mxu0 0.0
      %3936 = vmatpush1.msra.mxu0 %v3757
      %3937 = vmatprep.subr.mxu0 0.0
      %3938 = vmatpush1.msra.mxu0 %v3756
      %3939 = vmatprep.subr.mxu0 0.0
      %3940 = vmatpush1.msra.mxu0 %v3755
      %3941 = vmatprep.subr.mxu0 0.0
      %3942 = vmatpush1.msra.mxu0 %v3754
      %3943 = vmatprep.subr.mxu0 0.0
      %3944 = vmatpush1.msra.mxu0 %v3753
      %3945 = vmatprep.subr.mxu0 0.0
      %3946 = vmatpush1.msra.mxu0 %v3752
      %3947 = vmatprep.subr.mxu0 0.0
      %3948 = vmatpush1.msra.mxu0 %v3751
      %3949 = vmatprep.subr.mxu0 0.0
      %3950 = vmatpush2.msra.mxu0 %v3782
      %3951 = vmatprep.subr.mxu0 0.0
      %3952 = vmatpush2.msra.mxu0 %v3781
      %3953 = vmatprep.subr.mxu0 0.0
      %3954 = vmatpush2.msra.mxu0 %v3780
      %3955 = vmatprep.subr.mxu0 0.0
      %3956 = vmatpush2.msra.mxu0 %v3779
      %3957 = vmatprep.subr.mxu0 0.0
      %3958 = vmatpush2.msra.mxu0 %v3778
      %3959 = vmatprep.subr.mxu0 0.0
      %3960 = vmatpush2.msra.mxu0 %v3777
      %3961 = vmatprep.subr.mxu0 0.0
      %3962 = vmatpush2.msra.mxu0 %v3776
      %3963 = vmatprep.subr.mxu0 0.0
      %3964 = vmatpush2.msra.mxu0 %v3775
      %3965 = vmatprep.subr.mxu0 0.0
      %3966 = vmatpush2.msra.mxu0 %v3774
      %3967 = vmatprep.subr.mxu0 0.0
      %3968 = vmatpush2.msra.mxu0 %v3773
      %3969 = vmatprep.subr.mxu0 0.0
      %3970 = vmatpush2.msra.mxu0 %v3772
      %3971 = vmatprep.subr.mxu0 0.0
      %3972 = vmatpush2.msra.mxu0 %v3771
      %3973 = vmatprep.subr.mxu0 0.0
      %3974 = vmatpush2.msra.mxu0 %v3770
      %3975 = vmatprep.subr.mxu0 0.0
      %3976 = vmatpush2.msra.mxu0 %v3769
      %3977 = vmatprep.subr.mxu0 0.0
      %3978 = vmatpush2.msra.mxu0 %v3768
      %3979 = vmatprep.subr.mxu0 0.0
      %3980 = vmatpush2.msra.mxu0 %v3767
      %3981 = vmatprep.mubr.f32.mxu0 %v3714
      %3982 = vmatmul.mubr.f32.gmra.mxu0 %v3713
      %v3983 = vpop.f32.mrf.mxu0
      %v3984 = vadd.f32 %v3914, %v3983
      %v3985 = vpop.f32.mrf.mxu0
      %3986 = vdwg.mxu0
      %3987 = vmatprep.subr.mxu0 0.0
      %3988 = vmatpush1.msra.mxu0 %v3798
      %3989 = vmatprep.subr.mxu0 0.0
      %3990 = vmatpush1.msra.mxu0 %v3797
      %3991 = vmatprep.subr.mxu0 0.0
      %3992 = vmatpush1.msra.mxu0 %v3796
      %3993 = vmatprep.subr.mxu0 0.0
      %3994 = vmatpush1.msra.mxu0 %v3795
      %3995 = vmatprep.subr.mxu0 0.0
      %3996 = vmatpush1.msra.mxu0 %v3794
      %3997 = vmatprep.subr.mxu0 0.0
      %3998 = vmatpush1.msra.mxu0 %v3793
      %3999 = vmatprep.subr.mxu0 0.0
      %4000 = vmatpush1.msra.mxu0 %v3792
      %4001 = vmatprep.subr.mxu0 0.0
      %4002 = vmatpush1.msra.mxu0 %v3791
      %4003 = vmatprep.subr.mxu0 0.0
      %4004 = vmatpush1.msra.mxu0 %v3790
      %4005 = vmatprep.subr.mxu0 0.0
      %4006 = vmatpush1.msra.mxu0 %v3789
      %4007 = vmatprep.subr.mxu0 0.0
      %4008 = vmatpush1.msra.mxu0 %v3788
      %4009 = vmatprep.subr.mxu0 0.0
      %4010 = vmatpush1.msra.mxu0 %v3787
      %4011 = vmatprep.subr.mxu0 0.0
      %4012 = vmatpush1.msra.mxu0 %v3786
      %4013 = vmatprep.subr.mxu0 0.0
      %4014 = vmatpush1.msra.mxu0 %v3785
      %4015 = vmatprep.subr.mxu0 0.0
      %4016 = vmatpush1.msra.mxu0 %v3784
      %4017 = vmatprep.subr.mxu0 0.0
      %4018 = vmatpush1.msra.mxu0 %v3783
      %4019 = vmatprep.subr.mxu0 0.0
      %4020 = vmatpush2.msra.mxu0 %v3814
      %4021 = vmatprep.subr.mxu0 0.0
      %4022 = vmatpush2.msra.mxu0 %v3813
      %4023 = vmatprep.subr.mxu0 0.0
      %4024 = vmatpush2.msra.mxu0 %v3812
      %4025 = vmatprep.subr.mxu0 0.0
      %4026 = vmatpush2.msra.mxu0 %v3811
      %4027 = vmatprep.subr.mxu0 0.0
      %4028 = vmatpush2.msra.mxu0 %v3810
      %4029 = vmatprep.subr.mxu0 0.0
      %4030 = vmatpush2.msra.mxu0 %v3809
      %4031 = vmatprep.subr.mxu0 0.0
      %4032 = vmatpush2.msra.mxu0 %v3808
      %4033 = vmatprep.subr.mxu0 0.0
      %4034 = vmatpush2.msra.mxu0 %v3807
      %4035 = vmatprep.subr.mxu0 0.0
      %4036 = vmatpush2.msra.mxu0 %v3806
      %4037 = vmatprep.subr.mxu0 0.0
      %4038 = vmatpush2.msra.mxu0 %v3805
      %4039 = vmatprep.subr.mxu0 0.0
      %4040 = vmatpush2.msra.mxu0 %v3804
      %4041 = vmatprep.subr.mxu0 0.0
      %4042 = vmatpush2.msra.mxu0 %v3803
      %4043 = vmatprep.subr.mxu0 0.0
      %4044 = vmatpush2.msra.mxu0 %v3802
      %4045 = vmatprep.subr.mxu0 0.0
      %4046 = vmatpush2.msra.mxu0 %v3801
      %4047 = vmatprep.subr.mxu0 0.0
      %4048 = vmatpush2.msra.mxu0 %v3800
      %4049 = vmatprep.subr.mxu0 0.0
      %4050 = vmatpush2.msra.mxu0 %v3799
      %4051 = vmatprep.mubr.f32.mxu0 %v3716
      %4052 = vmatmul.mubr.f32.gmra.mxu0 %v3715
      %v4053 = vpop.f32.mrf.mxu0
      %v4054 = vadd.f32 %v3984, %v4053
      %v4055 = vpop.f32.mrf.mxu0
      %4056 = vdwg.mxu0
      %4057 = vmatprep.subr.mxu0 0.0
      %4058 = vmatpush1.msra.mxu0 %v3830
      %4059 = vmatprep.subr.mxu0 0.0
      %4060 = vmatpush1.msra.mxu0 %v3829
      %4061 = vmatprep.subr.mxu0 0.0
      %4062 = vmatpush1.msra.mxu0 %v3828
      %4063 = vmatprep.subr.mxu0 0.0
      %4064 = vmatpush1.msra.mxu0 %v3827
      %4065 = vmatprep.subr.mxu0 0.0
      %4066 = vmatpush1.msra.mxu0 %v3826
      %4067 = vmatprep.subr.mxu0 0.0
      %4068 = vmatpush1.msra.mxu0 %v3825
      %4069 = vmatprep.subr.mxu0 0.0
      %4070 = vmatpush1.msra.mxu0 %v3824
      %4071 = vmatprep.subr.mxu0 0.0
      %4072 = vmatpush1.msra.mxu0 %v3823
      %4073 = vmatprep.subr.mxu0 0.0
      %4074 = vmatpush1.msra.mxu0 %v3822
      %4075 = vmatprep.subr.mxu0 0.0
      %4076 = vmatpush1.msra.mxu0 %v3821
      %4077 = vmatprep.subr.mxu0 0.0
      %4078 = vmatpush1.msra.mxu0 %v3820
      %4079 = vmatprep.subr.mxu0 0.0
      %4080 = vmatpush1.msra.mxu0 %v3819
      %4081 = vmatprep.subr.mxu0 0.0
      %4082 = vmatpush1.msra.mxu0 %v3818
      %4083 = vmatprep.subr.mxu0 0.0
      %4084 = vmatpush1.msra.mxu0 %v3817
      %4085 = vmatprep.subr.mxu0 0.0
      %4086 = vmatpush1.msra.mxu0 %v3816
      %4087 = vmatprep.subr.mxu0 0.0
      %4088 = vmatpush1.msra.mxu0 %v3815
      %4089 = vmatprep.subr.mxu0 0.0
      %4090 = vmatpush2.msra.mxu0 %v3846
      %4091 = vmatprep.subr.mxu0 0.0
      %4092 = vmatpush2.msra.mxu0 %v3845
      %4093 = vmatprep.subr.mxu0 0.0
      %4094 = vmatpush2.msra.mxu0 %v3844
      %4095 = vmatprep.subr.mxu0 0.0
      %4096 = vmatpush2.msra.mxu0 %v3843
      %4097 = vmatprep.subr.mxu0 0.0
      %4098 = vmatpush2.msra.mxu0 %v3842
      %4099 = vmatprep.subr.mxu0 0.0
      %4100 = vmatpush2.msra.mxu0 %v3841
      %4101 = vmatprep.subr.mxu0 0.0
      %4102 = vmatpush2.msra.mxu0 %v3840
      %4103 = vmatprep.subr.mxu0 0.0
      %4104 = vmatpush2.msra.mxu0 %v3839
      %4105 = vmatprep.subr.mxu0 0.0
      %4106 = vmatpush2.msra.mxu0 %v3838
      %4107 = vmatprep.subr.mxu0 0.0
      %4108 = vmatpush2.msra.mxu0 %v3837
      %4109 = vmatprep.subr.mxu0 0.0
      %4110 = vmatpush2.msra.mxu0 %v3836
      %4111 = vmatprep.subr.mxu0 0.0
      %4112 = vmatpush2.msra.mxu0 %v3835
      %4113 = vmatprep.subr.mxu0 0.0
      %4114 = vmatpush2.msra.mxu0 %v3834
      %4115 = vmatprep.subr.mxu0 0.0
      %4116 = vmatpush2.msra.mxu0 %v3833
      %4117 = vmatprep.subr.mxu0 0.0
      %4118 = vmatpush2.msra.mxu0 %v3832
      %4119 = vmatprep.subr.mxu0 0.0
      %4120 = vmatpush2.msra.mxu0 %v3831
      %4121 = vmatprep.mubr.f32.mxu0 %v3718
      %4122 = vmatmul.mubr.f32.gmra.mxu0 %v3717
      %v4123 = vpop.f32.mrf.mxu0
      %v4124 = vadd.f32 %v4054, %v4123
      %v4125 = vpop.f32.mrf.mxu0
      %4126 = vdwg.mxu0
      %v4127 = vld [vmem:[#allocation2 + $0x40] sm:$0xff]
      %v4128 = vld [vmem:[#allocation2 + $0x48] sm:$0xff]
      %v4129 = vld [vmem:[#allocation2 + $0x50] sm:$0xff]
      %v4130 = vld [vmem:[#allocation2 + $0x58] sm:$0xff]
      %v4131 = vld [vmem:[#allocation2 + $0x60] sm:$0xff]
      %v4132 = vld [vmem:[#allocation2 + $0x68] sm:$0xff]
      %v4133 = vld [vmem:[#allocation2 + $0x70] sm:$0xff]
      %v4134 = vld [vmem:[#allocation2 + $0x78] sm:$0xff]
      %v4135 = vmul.f32 %v4127, %v3695
      %v4136 = vmul.f32 %v4128, %v3696
      %v4137 = vmul.f32 %v4129, %v3697
      %v4138 = vmul.f32 %v4130, %v3698
      %v4139 = vmul.f32 %v4131, %v3699
      %v4140 = vmul.f32 %v4132, %v3700
      %v4141 = vmul.f32 %v4133, %v3701
      %v4142 = vmul.f32 %v4134, %v3702
      %v4143 = vld [vmem:[#allocation3 + $0x40] sm:$0xff]
      %v4144 = vld [vmem:[#allocation3 + $0x48] sm:$0xff]
      %v4145 = vld [vmem:[#allocation3 + $0x50] sm:$0xff]
      %v4146 = vld [vmem:[#allocation3 + $0x58] sm:$0xff]
      %v4147 = vld [vmem:[#allocation3 + $0x60] sm:$0xff]
      %v4148 = vld [vmem:[#allocation3 + $0x68] sm:$0xff]
      %v4149 = vld [vmem:[#allocation3 + $0x70] sm:$0xff]
      %v4150 = vld [vmem:[#allocation3 + $0x78] sm:$0xff]
      %v4151 = vadd.f32 %v4135, %v4143
      %v4152 = vadd.f32 %v4136, %v4144
      %v4153 = vadd.f32 %v4137, %v4145
      %v4154 = vadd.f32 %v4138, %v4146
      %v4155 = vadd.f32 %v4139, %v4147
      %v4156 = vadd.f32 %v4140, %v4148
      %v4157 = vadd.f32 %v4141, %v4149
      %v4158 = vadd.f32 %v4142, %v4150
      %v4159 = vld [vmem:[#allocation4 + $0x40] sm:$0xff]
      %v4160 = vld [vmem:[#allocation4 + $0x48] sm:$0xff]
      %v4161 = vld [vmem:[#allocation4 + $0x50] sm:$0xff]
      %v4162 = vld [vmem:[#allocation4 + $0x58] sm:$0xff]
      %v4163 = vld [vmem:[#allocation4 + $0x60] sm:$0xff]
      %v4164 = vld [vmem:[#allocation4 + $0x68] sm:$0xff]
      %v4165 = vld [vmem:[#allocation4 + $0x70] sm:$0xff]
      %v4166 = vld [vmem:[#allocation4 + $0x78] sm:$0xff]
      %v4167 = vmul.f32 %v4151, %v4159
      %v4168 = vmul.f32 %v4152, %v4160
      %v4169 = vmul.f32 %v4153, %v4161
      %v4170 = vmul.f32 %v4154, %v4162
      %v4171 = vmul.f32 %v4155, %v4163
      %v4172 = vmul.f32 %v4156, %v4164
      %v4173 = vmul.f32 %v4157, %v4165
      %v4174 = vmul.f32 %v4158, %v4166
      %4175 = vmatprep.subr.mxu0 0.0
      %4176 = vmatpush1.msra.mxu0 %v3734
      %4177 = vmatprep.subr.mxu0 0.0
      %4178 = vmatpush1.msra.mxu0 %v3733
      %4179 = vmatprep.subr.mxu0 0.0
      %4180 = vmatpush1.msra.mxu0 %v3732
      %4181 = vmatprep.subr.mxu0 0.0
      %4182 = vmatpush1.msra.mxu0 %v3731
      %4183 = vmatprep.subr.mxu0 0.0
      %4184 = vmatpush1.msra.mxu0 %v3730
      %4185 = vmatprep.subr.mxu0 0.0
      %4186 = vmatpush1.msra.mxu0 %v3729
      %4187 = vmatprep.subr.mxu0 0.0
      %4188 = vmatpush1.msra.mxu0 %v3728
      %4189 = vmatprep.subr.mxu0 0.0
      %4190 = vmatpush1.msra.mxu0 %v3727
      %4191 = vmatprep.subr.mxu0 0.0
      %4192 = vmatpush1.msra.mxu0 %v3726
      %4193 = vmatprep.subr.mxu0 0.0
      %4194 = vmatpush1.msra.mxu0 %v3725
      %4195 = vmatprep.subr.mxu0 0.0
      %4196 = vmatpush1.msra.mxu0 %v3724
      %4197 = vmatprep.subr.mxu0 0.0
      %4198 = vmatpush1.msra.mxu0 %v3723
      %4199 = vmatprep.subr.mxu0 0.0
      %4200 = vmatpush1.msra.mxu0 %v3722
      %4201 = vmatprep.subr.mxu0 0.0
      %4202 = vmatpush1.msra.mxu0 %v3721
      %4203 = vmatprep.subr.mxu0 0.0
      %4204 = vmatpush1.msra.mxu0 %v3720
      %4205 = vmatprep.subr.mxu0 0.0
      %4206 = vmatpush1.msra.mxu0 %v3719
      %4207 = vmatprep.subr.mxu0 0.0
      %4208 = vmatpush2.msra.mxu0 %v3750
      %4209 = vmatprep.subr.mxu0 0.0
      %4210 = vmatpush2.msra.mxu0 %v3749
      %4211 = vmatprep.subr.mxu0 0.0
      %4212 = vmatpush2.msra.mxu0 %v3748
      %4213 = vmatprep.subr.mxu0 0.0
      %4214 = vmatpush2.msra.mxu0 %v3747
      %4215 = vmatprep.subr.mxu0 0.0
      %4216 = vmatpush2.msra.mxu0 %v3746
      %4217 = vmatprep.subr.mxu0 0.0
      %4218 = vmatpush2.msra.mxu0 %v3745
      %4219 = vmatprep.subr.mxu0 0.0
      %4220 = vmatpush2.msra.mxu0 %v3744
      %4221 = vmatprep.subr.mxu0 0.0
      %4222 = vmatpush2.msra.mxu0 %v3743
      %4223 = vmatprep.subr.mxu0 0.0
      %4224 = vmatpush2.msra.mxu0 %v3742
      %4225 = vmatprep.subr.mxu0 0.0
      %4226 = vmatpush2.msra.mxu0 %v3741
      %4227 = vmatprep.subr.mxu0 0.0
      %4228 = vmatpush2.msra.mxu0 %v3740
      %4229 = vmatprep.subr.mxu0 0.0
      %4230 = vmatpush2.msra.mxu0 %v3739
      %4231 = vmatprep.subr.mxu0 0.0
      %4232 = vmatpush2.msra.mxu0 %v3738
      %4233 = vmatprep.subr.mxu0 0.0
      %4234 = vmatpush2.msra.mxu0 %v3737
      %4235 = vmatprep.subr.mxu0 0.0
      %4236 = vmatpush2.msra.mxu0 %v3736
      %4237 = vmatprep.subr.mxu0 0.0
      %4238 = vmatpush2.msra.mxu0 %v3735
      %4239 = vmatprep.mubr.f32.mxu0 %v4168
      %4240 = vmatmul.mubr.f32.gmra.mxu0 %v4167
      %v4241 = vpop.f32.mrf.mxu0
      %v4242 = vadd.f32 0.0, %v4241
      %v4243 = vpop.f32.mrf.mxu0
      %4244 = vdwg.mxu0
      %4245 = vmatprep.subr.mxu0 0.0
      %4246 = vmatpush1.msra.mxu0 %v3766
      %4247 = vmatprep.subr.mxu0 0.0
      %4248 = vmatpush1.msra.mxu0 %v3765
      %4249 = vmatprep.subr.mxu0 0.0
      %4250 = vmatpush1.msra.mxu0 %v3764
      %4251 = vmatprep.subr.mxu0 0.0
      %4252 = vmatpush1.msra.mxu0 %v3763
      %4253 = vmatprep.subr.mxu0 0.0
      %4254 = vmatpush1.msra.mxu0 %v3762
      %4255 = vmatprep.subr.mxu0 0.0
      %4256 = vmatpush1.msra.mxu0 %v3761
      %4257 = vmatprep.subr.mxu0 0.0
      %4258 = vmatpush1.msra.mxu0 %v3760
      %4259 = vmatprep.subr.mxu0 0.0
      %4260 = vmatpush1.msra.mxu0 %v3759
      %4261 = vmatprep.subr.mxu0 0.0
      %4262 = vmatpush1.msra.mxu0 %v3758
      %4263 = vmatprep.subr.mxu0 0.0
      %4264 = vmatpush1.msra.mxu0 %v3757
      %4265 = vmatprep.subr.mxu0 0.0
      %4266 = vmatpush1.msra.mxu0 %v3756
      %4267 = vmatprep.subr.mxu0 0.0
      %4268 = vmatpush1.msra.mxu0 %v3755
      %4269 = vmatprep.subr.mxu0 0.0
      %4270 = vmatpush1.msra.mxu0 %v3754
      %4271 = vmatprep.subr.mxu0 0.0
      %4272 = vmatpush1.msra.mxu0 %v3753
      %4273 = vmatprep.subr.mxu0 0.0
      %4274 = vmatpush1.msra.mxu0 %v3752
      %4275 = vmatprep.subr.mxu0 0.0
      %4276 = vmatpush1.msra.mxu0 %v3751
      %4277 = vmatprep.subr.mxu0 0.0
      %4278 = vmatpush2.msra.mxu0 %v3782
      %4279 = vmatprep.subr.mxu0 0.0
      %4280 = vmatpush2.msra.mxu0 %v3781
      %4281 = vmatprep.subr.mxu0 0.0
      %4282 = vmatpush2.msra.mxu0 %v3780
      %4283 = vmatprep.subr.mxu0 0.0
      %4284 = vmatpush2.msra.mxu0 %v3779
      %4285 = vmatprep.subr.mxu0 0.0
      %4286 = vmatpush2.msra.mxu0 %v3778
      %4287 = vmatprep.subr.mxu0 0.0
      %4288 = vmatpush2.msra.mxu0 %v3777
      %4289 = vmatprep.subr.mxu0 0.0
      %4290 = vmatpush2.msra.mxu0 %v3776
      %4291 = vmatprep.subr.mxu0 0.0
      %4292 = vmatpush2.msra.mxu0 %v3775
      %4293 = vmatprep.subr.mxu0 0.0
      %4294 = vmatpush2.msra.mxu0 %v3774
      %4295 = vmatprep.subr.mxu0 0.0
      %4296 = vmatpush2.msra.mxu0 %v3773
      %4297 = vmatprep.subr.mxu0 0.0
      %4298 = vmatpush2.msra.mxu0 %v3772
      %4299 = vmatprep.subr.mxu0 0.0
      %4300 = vmatpush2.msra.mxu0 %v3771
      %4301 = vmatprep.subr.mxu0 0.0
      %4302 = vmatpush2.msra.mxu0 %v3770
      %4303 = vmatprep.subr.mxu0 0.0
      %4304 = vmatpush2.msra.mxu0 %v3769
      %4305 = vmatprep.subr.mxu0 0.0
      %4306 = vmatpush2.msra.mxu0 %v3768
      %4307 = vmatprep.subr.mxu0 0.0
      %4308 = vmatpush2.msra.mxu0 %v3767
      %4309 = vmatprep.mubr.f32.mxu0 %v4170
      %4310 = vmatmul.mubr.f32.gmra.mxu0 %v4169
      %v4311 = vpop.f32.mrf.mxu0
      %v4312 = vadd.f32 %v4242, %v4311
      %v4313 = vpop.f32.mrf.mxu0
      %4314 = vdwg.mxu0
      %4315 = vmatprep.subr.mxu0 0.0
      %4316 = vmatpush1.msra.mxu0 %v3798
      %4317 = vmatprep.subr.mxu0 0.0
      %4318 = vmatpush1.msra.mxu0 %v3797
      %4319 = vmatprep.subr.mxu0 0.0
      %4320 = vmatpush1.msra.mxu0 %v3796
      %4321 = vmatprep.subr.mxu0 0.0
      %4322 = vmatpush1.msra.mxu0 %v3795
      %4323 = vmatprep.subr.mxu0 0.0
      %4324 = vmatpush1.msra.mxu0 %v3794
      %4325 = vmatprep.subr.mxu0 0.0
      %4326 = vmatpush1.msra.mxu0 %v3793
      %4327 = vmatprep.subr.mxu0 0.0
      %4328 = vmatpush1.msra.mxu0 %v3792
      %4329 = vmatprep.subr.mxu0 0.0
      %4330 = vmatpush1.msra.mxu0 %v3791
      %4331 = vmatprep.subr.mxu0 0.0
      %4332 = vmatpush1.msra.mxu0 %v3790
      %4333 = vmatprep.subr.mxu0 0.0
      %4334 = vmatpush1.msra.mxu0 %v3789
      %4335 = vmatprep.subr.mxu0 0.0
      %4336 = vmatpush1.msra.mxu0 %v3788
      %4337 = vmatprep.subr.mxu0 0.0
      %4338 = vmatpush1.msra.mxu0 %v3787
      %4339 = vmatprep.subr.mxu0 0.0
      %4340 = vmatpush1.msra.mxu0 %v3786
      %4341 = vmatprep.subr.mxu0 0.0
      %4342 = vmatpush1.msra.mxu0 %v3785
      %4343 = vmatprep.subr.mxu0 0.0
      %4344 = vmatpush1.msra.mxu0 %v3784
      %4345 = vmatprep.subr.mxu0 0.0
      %4346 = vmatpush1.msra.mxu0 %v3783
      %4347 = vmatprep.subr.mxu0 0.0
      %4348 = vmatpush2.msra.mxu0 %v3814
      %4349 = vmatprep.subr.mxu0 0.0
      %4350 = vmatpush2.msra.mxu0 %v3813
      %4351 = vmatprep.subr.mxu0 0.0
      %4352 = vmatpush2.msra.mxu0 %v3812
      %4353 = vmatprep.subr.mxu0 0.0
      %4354 = vmatpush2.msra.mxu0 %v3811
      %4355 = vmatprep.subr.mxu0 0.0
      %4356 = vmatpush2.msra.mxu0 %v3810
      %4357 = vmatprep.subr.mxu0 0.0
      %4358 = vmatpush2.msra.mxu0 %v3809
      %4359 = vmatprep.subr.mxu0 0.0
      %4360 = vmatpush2.msra.mxu0 %v3808
      %4361 = vmatprep.subr.mxu0 0.0
      %4362 = vmatpush2.msra.mxu0 %v3807
      %4363 = vmatprep.subr.mxu0 0.0
      %4364 = vmatpush2.msra.mxu0 %v3806
      %4365 = vmatprep.subr.mxu0 0.0
      %4366 = vmatpush2.msra.mxu0 %v3805
      %4367 = vmatprep.subr.mxu0 0.0
      %4368 = vmatpush2.msra.mxu0 %v3804
      %4369 = vmatprep.subr.mxu0 0.0
      %4370 = vmatpush2.msra.mxu0 %v3803
      %4371 = vmatprep.subr.mxu0 0.0
      %4372 = vmatpush2.msra.mxu0 %v3802
      %4373 = vmatprep.subr.mxu0 0.0
      %4374 = vmatpush2.msra.mxu0 %v3801
      %4375 = vmatprep.subr.mxu0 0.0
      %4376 = vmatpush2.msra.mxu0 %v3800
      %4377 = vmatprep.subr.mxu0 0.0
      %4378 = vmatpush2.msra.mxu0 %v3799
      %4379 = vmatprep.mubr.f32.mxu0 %v4172
      %4380 = vmatmul.mubr.f32.gmra.mxu0 %v4171
      %v4381 = vpop.f32.mrf.mxu0
      %v4382 = vadd.f32 %v4312, %v4381
      %v4383 = vpop.f32.mrf.mxu0
      %4384 = vdwg.mxu0
      %4385 = vmatprep.subr.mxu0 0.0
      %4386 = vmatpush1.msra.mxu0 %v3830
      %4387 = vmatprep.subr.mxu0 0.0
      %4388 = vmatpush1.msra.mxu0 %v3829
      %4389 = vmatprep.subr.mxu0 0.0
      %4390 = vmatpush1.msra.mxu0 %v3828
      %4391 = vmatprep.subr.mxu0 0.0
      %4392 = vmatpush1.msra.mxu0 %v3827
      %4393 = vmatprep.subr.mxu0 0.0
      %4394 = vmatpush1.msra.mxu0 %v3826
      %4395 = vmatprep.subr.mxu0 0.0
      %4396 = vmatpush1.msra.mxu0 %v3825
      %4397 = vmatprep.subr.mxu0 0.0
      %4398 = vmatpush1.msra.mxu0 %v3824
      %4399 = vmatprep.subr.mxu0 0.0
      %4400 = vmatpush1.msra.mxu0 %v3823
      %4401 = vmatprep.subr.mxu0 0.0
      %4402 = vmatpush1.msra.mxu0 %v3822
      %4403 = vmatprep.subr.mxu0 0.0
      %4404 = vmatpush1.msra.mxu0 %v3821
      %4405 = vmatprep.subr.mxu0 0.0
      %4406 = vmatpush1.msra.mxu0 %v3820
      %4407 = vmatprep.subr.mxu0 0.0
      %4408 = vmatpush1.msra.mxu0 %v3819
      %4409 = vmatprep.subr.mxu0 0.0
      %4410 = vmatpush1.msra.mxu0 %v3818
      %4411 = vmatprep.subr.mxu0 0.0
      %4412 = vmatpush1.msra.mxu0 %v3817
      %4413 = vmatprep.subr.mxu0 0.0
      %4414 = vmatpush1.msra.mxu0 %v3816
      %4415 = vmatprep.subr.mxu0 0.0
      %4416 = vmatpush1.msra.mxu0 %v3815
      %4417 = vmatprep.subr.mxu0 0.0
      %4418 = vmatpush2.msra.mxu0 %v3846
      %4419 = vmatprep.subr.mxu0 0.0
      %4420 = vmatpush2.msra.mxu0 %v3845
      %4421 = vmatprep.subr.mxu0 0.0
      %4422 = vmatpush2.msra.mxu0 %v3844
      %4423 = vmatprep.subr.mxu0 0.0
      %4424 = vmatpush2.msra.mxu0 %v3843
      %4425 = vmatprep.subr.mxu0 0.0
      %4426 = vmatpush2.msra.mxu0 %v3842
      %4427 = vmatprep.subr.mxu0 0.0
      %4428 = vmatpush2.msra.mxu0 %v3841
      %4429 = vmatprep.subr.mxu0 0.0
      %4430 = vmatpush2.msra.mxu0 %v3840
      %4431 = vmatprep.subr.mxu0 0.0
      %4432 = vmatpush2.msra.mxu0 %v3839
      %4433 = vmatprep.subr.mxu0 0.0
      %4434 = vmatpush2.msra.mxu0 %v3838
      %4435 = vmatprep.subr.mxu0 0.0
      %4436 = vmatpush2.msra.mxu0 %v3837
      %4437 = vmatprep.subr.mxu0 0.0
      %4438 = vmatpush2.msra.mxu0 %v3836
      %4439 = vmatprep.subr.mxu0 0.0
      %4440 = vmatpush2.msra.mxu0 %v3835
      %4441 = vmatprep.subr.mxu0 0.0
      %4442 = vmatpush2.msra.mxu0 %v3834
      %4443 = vmatprep.subr.mxu0 0.0
      %4444 = vmatpush2.msra.mxu0 %v3833
      %4445 = vmatprep.subr.mxu0 0.0
      %4446 = vmatpush2.msra.mxu0 %v3832
      %4447 = vmatprep.subr.mxu0 0.0
      %4448 = vmatpush2.msra.mxu0 %v3831
      %4449 = vmatprep.mubr.f32.mxu0 %v4174
      %4450 = vmatmul.mubr.f32.gmra.mxu0 %v4173
      %v4451 = vpop.f32.mrf.mxu0
      %v4452 = vadd.f32 %v4382, %v4451
      %v4453 = vpop.f32.mrf.mxu0
      %4454 = vdwg.mxu0
      %v4455 = vld [vmem:[#allocation2 + $0x80] sm:$0xff]
      %v4456 = vld [vmem:[#allocation2 + $0x88] sm:$0xff]
      %v4457 = vld [vmem:[#allocation2 + $0x90] sm:$0xff]
      %v4458 = vld [vmem:[#allocation2 + $0x98] sm:$0xff]
      %v4459 = vld [vmem:[#allocation2 + $0xa0] sm:$0xff]
      %v4460 = vld [vmem:[#allocation2 + $0xa8] sm:$0xff]
      %v4461 = vld [vmem:[#allocation2 + $0xb0] sm:$0xff]
      %v4462 = vld [vmem:[#allocation2 + $0xb8] sm:$0xff]
      %v4463 = vmul.f32 %v4455, %v4151
      %v4464 = vmul.f32 %v4456, %v4152
      %v4465 = vmul.f32 %v4457, %v4153
      %v4466 = vmul.f32 %v4458, %v4154
      %v4467 = vmul.f32 %v4459, %v4155
      %v4468 = vmul.f32 %v4460, %v4156
      %v4469 = vmul.f32 %v4461, %v4157
      %v4470 = vmul.f32 %v4462, %v4158
      %v4471 = vld [vmem:[#allocation3 + $0x80] sm:$0xff]
      %v4472 = vld [vmem:[#allocation3 + $0x88] sm:$0xff]
      %v4473 = vld [vmem:[#allocation3 + $0x90] sm:$0xff]
      %v4474 = vld [vmem:[#allocation3 + $0x98] sm:$0xff]
      %v4475 = vld [vmem:[#allocation3 + $0xa0] sm:$0xff]
      %v4476 = vld [vmem:[#allocation3 + $0xa8] sm:$0xff]
      %v4477 = vld [vmem:[#allocation3 + $0xb0] sm:$0xff]
      %v4478 = vld [vmem:[#allocation3 + $0xb8] sm:$0xff]
      %v4479 = vadd.f32 %v4463, %v4471
      %v4480 = vadd.f32 %v4464, %v4472
      %v4481 = vadd.f32 %v4465, %v4473
      %v4482 = vadd.f32 %v4466, %v4474
      %v4483 = vadd.f32 %v4467, %v4475
      %v4484 = vadd.f32 %v4468, %v4476
      %v4485 = vadd.f32 %v4469, %v4477
      %v4486 = vadd.f32 %v4470, %v4478
      %v4487 = vld [vmem:[#allocation4 + $0x80] sm:$0xff]
      %v4488 = vld [vmem:[#allocation4 + $0x88] sm:$0xff]
      %v4489 = vld [vmem:[#allocation4 + $0x90] sm:$0xff]
      %v4490 = vld [vmem:[#allocation4 + $0x98] sm:$0xff]
      %v4491 = vld [vmem:[#allocation4 + $0xa0] sm:$0xff]
      %v4492 = vld [vmem:[#allocation4 + $0xa8] sm:$0xff]
      %v4493 = vld [vmem:[#allocation4 + $0xb0] sm:$0xff]
      %v4494 = vld [vmem:[#allocation4 + $0xb8] sm:$0xff]
      %v4495 = vmul.f32 %v4479, %v4487
      %v4496 = vmul.f32 %v4480, %v4488
      %v4497 = vmul.f32 %v4481, %v4489
      %v4498 = vmul.f32 %v4482, %v4490
      %v4499 = vmul.f32 %v4483, %v4491
      %v4500 = vmul.f32 %v4484, %v4492
      %v4501 = vmul.f32 %v4485, %v4493
      %v4502 = vmul.f32 %v4486, %v4494
      %4503 = vmatprep.subr.mxu0 0.0
      %4504 = vmatpush1.msra.mxu0 %v3734
      %4505 = vmatprep.subr.mxu0 0.0
      %4506 = vmatpush1.msra.mxu0 %v3733
      %4507 = vmatprep.subr.mxu0 0.0
      %4508 = vmatpush1.msra.mxu0 %v3732
      %4509 = vmatprep.subr.mxu0 0.0
      %4510 = vmatpush1.msra.mxu0 %v3731
      %4511 = vmatprep.subr.mxu0 0.0
      %4512 = vmatpush1.msra.mxu0 %v3730
      %4513 = vmatprep.subr.mxu0 0.0
      %4514 = vmatpush1.msra.mxu0 %v3729
      %4515 = vmatprep.subr.mxu0 0.0
      %4516 = vmatpush1.msra.mxu0 %v3728
      %4517 = vmatprep.subr.mxu0 0.0
      %4518 = vmatpush1.msra.mxu0 %v3727
      %4519 = vmatprep.subr.mxu0 0.0
      %4520 = vmatpush1.msra.mxu0 %v3726
      %4521 = vmatprep.subr.mxu0 0.0
      %4522 = vmatpush1.msra.mxu0 %v3725
      %4523 = vmatprep.subr.mxu0 0.0
      %4524 = vmatpush1.msra.mxu0 %v3724
      %4525 = vmatprep.subr.mxu0 0.0
      %4526 = vmatpush1.msra.mxu0 %v3723
      %4527 = vmatprep.subr.mxu0 0.0
      %4528 = vmatpush1.msra.mxu0 %v3722
      %4529 = vmatprep.subr.mxu0 0.0
      %4530 = vmatpush1.msra.mxu0 %v3721
      %4531 = vmatprep.subr.mxu0 0.0
      %4532 = vmatpush1.msra.mxu0 %v3720
      %4533 = vmatprep.subr.mxu0 0.0
      %4534 = vmatpush1.msra.mxu0 %v3719
      %4535 = vmatprep.subr.mxu0 0.0
      %4536 = vmatpush2.msra.mxu0 %v3750
      %4537 = vmatprep.subr.mxu0 0.0
      %4538 = vmatpush2.msra.mxu0 %v3749
      %4539 = vmatprep.subr.mxu0 0.0
      %4540 = vmatpush2.msra.mxu0 %v3748
      %4541 = vmatprep.subr.mxu0 0.0
      %4542 = vmatpush2.msra.mxu0 %v3747
      %4543 = vmatprep.subr.mxu0 0.0
      %4544 = vmatpush2.msra.mxu0 %v3746
      %4545 = vmatprep.subr.mxu0 0.0
      %4546 = vmatpush2.msra.mxu0 %v3745
      %4547 = vmatprep.subr.mxu0 0.0
      %4548 = vmatpush2.msra.mxu0 %v3744
      %4549 = vmatprep.subr.mxu0 0.0
      %4550 = vmatpush2.msra.mxu0 %v3743
      %4551 = vmatprep.subr.mxu0 0.0
      %4552 = vmatpush2.msra.mxu0 %v3742
      %4553 = vmatprep.subr.mxu0 0.0
      %4554 = vmatpush2.msra.mxu0 %v3741
      %4555 = vmatprep.subr.mxu0 0.0
      %4556 = vmatpush2.msra.mxu0 %v3740
      %4557 = vmatprep.subr.mxu0 0.0
      %4558 = vmatpush2.msra.mxu0 %v3739
      %4559 = vmatprep.subr.mxu0 0.0
      %4560 = vmatpush2.msra.mxu0 %v3738
      %4561 = vmatprep.subr.mxu0 0.0
      %4562 = vmatpush2.msra.mxu0 %v3737
      %4563 = vmatprep.subr.mxu0 0.0
      %4564 = vmatpush2.msra.mxu0 %v3736
      %4565 = vmatprep.subr.mxu0 0.0
      %4566 = vmatpush2.msra.mxu0 %v3735
      %4567 = vmatprep.mubr.f32.mxu0 %v4496
      %4568 = vmatmul.mubr.f32.gmra.mxu0 %v4495
      %v4569 = vpop.f32.mrf.mxu0
      %v4570 = vadd.f32 0.0, %v4569
      %v4571 = vpop.f32.mrf.mxu0
      %4572 = vdwg.mxu0
      %4573 = vmatprep.subr.mxu0 0.0
      %4574 = vmatpush1.msra.mxu0 %v3766
      %4575 = vmatprep.subr.mxu0 0.0
      %4576 = vmatpush1.msra.mxu0 %v3765
      %4577 = vmatprep.subr.mxu0 0.0
      %4578 = vmatpush1.msra.mxu0 %v3764
      %4579 = vmatprep.subr.mxu0 0.0
      %4580 = vmatpush1.msra.mxu0 %v3763
      %4581 = vmatprep.subr.mxu0 0.0
      %4582 = vmatpush1.msra.mxu0 %v3762
      %4583 = vmatprep.subr.mxu0 0.0
      %4584 = vmatpush1.msra.mxu0 %v3761
      %4585 = vmatprep.subr.mxu0 0.0
      %4586 = vmatpush1.msra.mxu0 %v3760
      %4587 = vmatprep.subr.mxu0 0.0
      %4588 = vmatpush1.msra.mxu0 %v3759
      %4589 = vmatprep.subr.mxu0 0.0
      %4590 = vmatpush1.msra.mxu0 %v3758
      %4591 = vmatprep.subr.mxu0 0.0
      %4592 = vmatpush1.msra.mxu0 %v3757
      %4593 = vmatprep.subr.mxu0 0.0
      %4594 = vmatpush1.msra.mxu0 %v3756
      %4595 = vmatprep.subr.mxu0 0.0
      %4596 = vmatpush1.msra.mxu0 %v3755
      %4597 = vmatprep.subr.mxu0 0.0
      %4598 = vmatpush1.msra.mxu0 %v3754
      %4599 = vmatprep.subr.mxu0 0.0
      %4600 = vmatpush1.msra.mxu0 %v3753
      %4601 = vmatprep.subr.mxu0 0.0
      %4602 = vmatpush1.msra.mxu0 %v3752
      %4603 = vmatprep.subr.mxu0 0.0
      %4604 = vmatpush1.msra.mxu0 %v3751
      %4605 = vmatprep.subr.mxu0 0.0
      %4606 = vmatpush2.msra.mxu0 %v3782
      %4607 = vmatprep.subr.mxu0 0.0
      %4608 = vmatpush2.msra.mxu0 %v3781
      %4609 = vmatprep.subr.mxu0 0.0
      %4610 = vmatpush2.msra.mxu0 %v3780
      %4611 = vmatprep.subr.mxu0 0.0
      %4612 = vmatpush2.msra.mxu0 %v3779
      %4613 = vmatprep.subr.mxu0 0.0
      %4614 = vmatpush2.msra.mxu0 %v3778
      %4615 = vmatprep.subr.mxu0 0.0
      %4616 = vmatpush2.msra.mxu0 %v3777
      %4617 = vmatprep.subr.mxu0 0.0
      %4618 = vmatpush2.msra.mxu0 %v3776
      %4619 = vmatprep.subr.mxu0 0.0
      %4620 = vmatpush2.msra.mxu0 %v3775
      %4621 = vmatprep.subr.mxu0 0.0
      %4622 = vmatpush2.msra.mxu0 %v3774
      %4623 = vmatprep.subr.mxu0 0.0
      %4624 = vmatpush2.msra.mxu0 %v3773
      %4625 = vmatprep.subr.mxu0 0.0
      %4626 = vmatpush2.msra.mxu0 %v3772
      %4627 = vmatprep.subr.mxu0 0.0
      %4628 = vmatpush2.msra.mxu0 %v3771
      %4629 = vmatprep.subr.mxu0 0.0
      %4630 = vmatpush2.msra.mxu0 %v3770
      %4631 = vmatprep.subr.mxu0 0.0
      %4632 = vmatpush2.msra.mxu0 %v3769
      %4633 = vmatprep.subr.mxu0 0.0
      %4634 = vmatpush2.msra.mxu0 %v3768
      %4635 = vmatprep.subr.mxu0 0.0
      %4636 = vmatpush2.msra.mxu0 %v3767
      %4637 = vmatprep.mubr.f32.mxu0 %v4498
      %4638 = vmatmul.mubr.f32.gmra.mxu0 %v4497
      %v4639 = vpop.f32.mrf.mxu0
      %v4640 = vadd.f32 %v4570, %v4639
      %v4641 = vpop.f32.mrf.mxu0
      %4642 = vdwg.mxu0
      %4643 = vmatprep.subr.mxu0 0.0
      %4644 = vmatpush1.msra.mxu0 %v3798
      %4645 = vmatprep.subr.mxu0 0.0
      %4646 = vmatpush1.msra.mxu0 %v3797
      %4647 = vmatprep.subr.mxu0 0.0
      %4648 = vmatpush1.msra.mxu0 %v3796
      %4649 = vmatprep.subr.mxu0 0.0
      %4650 = vmatpush1.msra.mxu0 %v3795
      %4651 = vmatprep.subr.mxu0 0.0
      %4652 = vmatpush1.msra.mxu0 %v3794
      %4653 = vmatprep.subr.mxu0 0.0
      %4654 = vmatpush1.msra.mxu0 %v3793
      %4655 = vmatprep.subr.mxu0 0.0
      %4656 = vmatpush1.msra.mxu0 %v3792
      %4657 = vmatprep.subr.mxu0 0.0
      %4658 = vmatpush1.msra.mxu0 %v3791
      %4659 = vmatprep.subr.mxu0 0.0
      %4660 = vmatpush1.msra.mxu0 %v3790
      %4661 = vmatprep.subr.mxu0 0.0
      %4662 = vmatpush1.msra.mxu0 %v3789
      %4663 = vmatprep.subr.mxu0 0.0
      %4664 = vmatpush1.msra.mxu0 %v3788
      %4665 = vmatprep.subr.mxu0 0.0
      %4666 = vmatpush1.msra.mxu0 %v3787
      %4667 = vmatprep.subr.mxu0 0.0
      %4668 = vmatpush1.msra.mxu0 %v3786
      %4669 = vmatprep.subr.mxu0 0.0
      %4670 = vmatpush1.msra.mxu0 %v3785
      %4671 = vmatprep.subr.mxu0 0.0
      %4672 = vmatpush1.msra.mxu0 %v3784
      %4673 = vmatprep.subr.mxu0 0.0
      %4674 = vmatpush1.msra.mxu0 %v3783
      %4675 = vmatprep.subr.mxu0 0.0
      %4676 = vmatpush2.msra.mxu0 %v3814
      %4677 = vmatprep.subr.mxu0 0.0
      %4678 = vmatpush2.msra.mxu0 %v3813
      %4679 = vmatprep.subr.mxu0 0.0
      %4680 = vmatpush2.msra.mxu0 %v3812
      %4681 = vmatprep.subr.mxu0 0.0
      %4682 = vmatpush2.msra.mxu0 %v3811
      %4683 = vmatprep.subr.mxu0 0.0
      %4684 = vmatpush2.msra.mxu0 %v3810
      %4685 = vmatprep.subr.mxu0 0.0
      %4686 = vmatpush2.msra.mxu0 %v3809
      %4687 = vmatprep.subr.mxu0 0.0
      %4688 = vmatpush2.msra.mxu0 %v3808
      %4689 = vmatprep.subr.mxu0 0.0
      %4690 = vmatpush2.msra.mxu0 %v3807
      %4691 = vmatprep.subr.mxu0 0.0
      %4692 = vmatpush2.msra.mxu0 %v3806
      %4693 = vmatprep.subr.mxu0 0.0
      %4694 = vmatpush2.msra.mxu0 %v3805
      %4695 = vmatprep.subr.mxu0 0.0
      %4696 = vmatpush2.msra.mxu0 %v3804
      %4697 = vmatprep.subr.mxu0 0.0
      %4698 = vmatpush2.msra.mxu0 %v3803
      %4699 = vmatprep.subr.mxu0 0.0
      %4700 = vmatpush2.msra.mxu0 %v3802
      %4701 = vmatprep.subr.mxu0 0.0
      %4702 = vmatpush2.msra.mxu0 %v3801
      %4703 = vmatprep.subr.mxu0 0.0
      %4704 = vmatpush2.msra.mxu0 %v3800
      %4705 = vmatprep.subr.mxu0 0.0
      %4706 = vmatpush2.msra.mxu0 %v3799
      %4707 = vmatprep.mubr.f32.mxu0 %v4500
      %4708 = vmatmul.mubr.f32.gmra.mxu0 %v4499
      %v4709 = vpop.f32.mrf.mxu0
      %v4710 = vadd.f32 %v4640, %v4709
      %v4711 = vpop.f32.mrf.mxu0
      %4712 = vdwg.mxu0
      %4713 = vmatprep.subr.mxu0 0.0
      %4714 = vmatpush1.msra.mxu0 %v3830
      %4715 = vmatprep.subr.mxu0 0.0
      %4716 = vmatpush1.msra.mxu0 %v3829
      %4717 = vmatprep.subr.mxu0 0.0
      %4718 = vmatpush1.msra.mxu0 %v3828
      %4719 = vmatprep.subr.mxu0 0.0
      %4720 = vmatpush1.msra.mxu0 %v3827
      %4721 = vmatprep.subr.mxu0 0.0
      %4722 = vmatpush1.msra.mxu0 %v3826
      %4723 = vmatprep.subr.mxu0 0.0
      %4724 = vmatpush1.msra.mxu0 %v3825
      %4725 = vmatprep.subr.mxu0 0.0
      %4726 = vmatpush1.msra.mxu0 %v3824
      %4727 = vmatprep.subr.mxu0 0.0
      %4728 = vmatpush1.msra.mxu0 %v3823
      %4729 = vmatprep.subr.mxu0 0.0
      %4730 = vmatpush1.msra.mxu0 %v3822
      %4731 = vmatprep.subr.mxu0 0.0
      %4732 = vmatpush1.msra.mxu0 %v3821
      %4733 = vmatprep.subr.mxu0 0.0
      %4734 = vmatpush1.msra.mxu0 %v3820
      %4735 = vmatprep.subr.mxu0 0.0
      %4736 = vmatpush1.msra.mxu0 %v3819
      %4737 = vmatprep.subr.mxu0 0.0
      %4738 = vmatpush1.msra.mxu0 %v3818
      %4739 = vmatprep.subr.mxu0 0.0
      %4740 = vmatpush1.msra.mxu0 %v3817
      %4741 = vmatprep.subr.mxu0 0.0
      %4742 = vmatpush1.msra.mxu0 %v3816
      %4743 = vmatprep.subr.mxu0 0.0
      %4744 = vmatpush1.msra.mxu0 %v3815
      %4745 = vmatprep.subr.mxu0 0.0
      %4746 = vmatpush2.msra.mxu0 %v3846
      %4747 = vmatprep.subr.mxu0 0.0
      %4748 = vmatpush2.msra.mxu0 %v3845
      %4749 = vmatprep.subr.mxu0 0.0
      %4750 = vmatpush2.msra.mxu0 %v3844
      %4751 = vmatprep.subr.mxu0 0.0
      %4752 = vmatpush2.msra.mxu0 %v3843
      %4753 = vmatprep.subr.mxu0 0.0
      %4754 = vmatpush2.msra.mxu0 %v3842
      %4755 = vmatprep.subr.mxu0 0.0
      %4756 = vmatpush2.msra.mxu0 %v3841
      %4757 = vmatprep.subr.mxu0 0.0
      %4758 = vmatpush2.msra.mxu0 %v3840
      %4759 = vmatprep.subr.mxu0 0.0
      %4760 = vmatpush2.msra.mxu0 %v3839
      %4761 = vmatprep.subr.mxu0 0.0
      %4762 = vmatpush2.msra.mxu0 %v3838
      %4763 = vmatprep.subr.mxu0 0.0
      %4764 = vmatpush2.msra.mxu0 %v3837
      %4765 = vmatprep.subr.mxu0 0.0
      %4766 = vmatpush2.msra.mxu0 %v3836
      %4767 = vmatprep.subr.mxu0 0.0
      %4768 = vmatpush2.msra.mxu0 %v3835
      %4769 = vmatprep.subr.mxu0 0.0
      %4770 = vmatpush2.msra.mxu0 %v3834
      %4771 = vmatprep.subr.mxu0 0.0
      %4772 = vmatpush2.msra.mxu0 %v3833
      %4773 = vmatprep.subr.mxu0 0.0
      %4774 = vmatpush2.msra.mxu0 %v3832
      %4775 = vmatprep.subr.mxu0 0.0
      %4776 = vmatpush2.msra.mxu0 %v3831
      %4777 = vmatprep.mubr.f32.mxu0 %v4502
      %4778 = vmatmul.mubr.f32.gmra.mxu0 %v4501
      %v4779 = vpop.f32.mrf.mxu0
      %v4780 = vadd.f32 %v4710, %v4779
      %v4781 = vpop.f32.mrf.mxu0
      %4782 = vdwg.mxu0
      %v4783 = vld [vmem:[#allocation2 + $0xc0] sm:$0xff]
      %v4784 = vld [vmem:[#allocation2 + $0xc8] sm:$0xff]
      %v4785 = vld [vmem:[#allocation2 + $0xd0] sm:$0xff]
      %v4786 = vld [vmem:[#allocation2 + $0xd8] sm:$0xff]
      %v4787 = vld [vmem:[#allocation2 + $0xe0] sm:$0xff]
      %v4788 = vld [vmem:[#allocation2 + $0xe8] sm:$0xff]
      %v4789 = vld [vmem:[#allocation2 + $0xf0] sm:$0xff]
      %v4790 = vld [vmem:[#allocation2 + $0xf8] sm:$0xff]
      %v4791 = vmul.f32 %v4783, %v4479
      %v4792 = vmul.f32 %v4784, %v4480
      %v4793 = vmul.f32 %v4785, %v4481
      %v4794 = vmul.f32 %v4786, %v4482
      %v4795 = vmul.f32 %v4787, %v4483
      %v4796 = vmul.f32 %v4788, %v4484
      %v4797 = vmul.f32 %v4789, %v4485
      %v4798 = vmul.f32 %v4790, %v4486
      %v4799 = vld [vmem:[#allocation3 + $0xc0] sm:$0xff]
      %v4800 = vld [vmem:[#allocation3 + $0xc8] sm:$0xff]
      %v4801 = vld [vmem:[#allocation3 + $0xd0] sm:$0xff]
      %v4802 = vld [vmem:[#allocation3 + $0xd8] sm:$0xff]
      %v4803 = vld [vmem:[#allocation3 + $0xe0] sm:$0xff]
      %v4804 = vld [vmem:[#allocation3 + $0xe8] sm:$0xff]
      %v4805 = vld [vmem:[#allocation3 + $0xf0] sm:$0xff]
      %v4806 = vld [vmem:[#allocation3 + $0xf8] sm:$0xff]
      %v4807 = vadd.f32 %v4791, %v4799
      %v4808 = vadd.f32 %v4792, %v4800
      %v4809 = vadd.f32 %v4793, %v4801
      %v4810 = vadd.f32 %v4794, %v4802
      %v4811 = vadd.f32 %v4795, %v4803
      %v4812 = vadd.f32 %v4796, %v4804
      %v4813 = vadd.f32 %v4797, %v4805
      %v4814 = vadd.f32 %v4798, %v4806
      %v4815 = vld [vmem:[#allocation4 + $0xc0] sm:$0xff]
      %v4816 = vld [vmem:[#allocation4 + $0xc8] sm:$0xff]
      %v4817 = vld [vmem:[#allocation4 + $0xd0] sm:$0xff]
      %v4818 = vld [vmem:[#allocation4 + $0xd8] sm:$0xff]
      %v4819 = vld [vmem:[#allocation4 + $0xe0] sm:$0xff]
      %v4820 = vld [vmem:[#allocation4 + $0xe8] sm:$0xff]
      %v4821 = vld [vmem:[#allocation4 + $0xf0] sm:$0xff]
      %v4822 = vld [vmem:[#allocation4 + $0xf8] sm:$0xff]
      %v4823 = vmul.f32 %v4807, %v4815
      %v4824 = vmul.f32 %v4808, %v4816
      %v4825 = vmul.f32 %v4809, %v4817
      %v4826 = vmul.f32 %v4810, %v4818
      %v4827 = vmul.f32 %v4811, %v4819
      %v4828 = vmul.f32 %v4812, %v4820
      %v4829 = vmul.f32 %v4813, %v4821
      %v4830 = vmul.f32 %v4814, %v4822
      %4831 = vmatprep.subr.mxu0 0.0
      %4832 = vmatpush1.msra.mxu0 %v3734
      %4833 = vmatprep.subr.mxu0 0.0
      %4834 = vmatpush1.msra.mxu0 %v3733
      %4835 = vmatprep.subr.mxu0 0.0
      %4836 = vmatpush1.msra.mxu0 %v3732
      %4837 = vmatprep.subr.mxu0 0.0
      %4838 = vmatpush1.msra.mxu0 %v3731
      %4839 = vmatprep.subr.mxu0 0.0
      %4840 = vmatpush1.msra.mxu0 %v3730
      %4841 = vmatprep.subr.mxu0 0.0
      %4842 = vmatpush1.msra.mxu0 %v3729
      %4843 = vmatprep.subr.mxu0 0.0
      %4844 = vmatpush1.msra.mxu0 %v3728
      %4845 = vmatprep.subr.mxu0 0.0
      %4846 = vmatpush1.msra.mxu0 %v3727
      %4847 = vmatprep.subr.mxu0 0.0
      %4848 = vmatpush1.msra.mxu0 %v3726
      %4849 = vmatprep.subr.mxu0 0.0
      %4850 = vmatpush1.msra.mxu0 %v3725
      %4851 = vmatprep.subr.mxu0 0.0
      %4852 = vmatpush1.msra.mxu0 %v3724
      %4853 = vmatprep.subr.mxu0 0.0
      %4854 = vmatpush1.msra.mxu0 %v3723
      %4855 = vmatprep.subr.mxu0 0.0
      %4856 = vmatpush1.msra.mxu0 %v3722
      %4857 = vmatprep.subr.mxu0 0.0
      %4858 = vmatpush1.msra.mxu0 %v3721
      %4859 = vmatprep.subr.mxu0 0.0
      %4860 = vmatpush1.msra.mxu0 %v3720
      %4861 = vmatprep.subr.mxu0 0.0
      %4862 = vmatpush1.msra.mxu0 %v3719
      %4863 = vmatprep.subr.mxu0 0.0
      %4864 = vmatpush2.msra.mxu0 %v3750
      %4865 = vmatprep.subr.mxu0 0.0
      %4866 = vmatpush2.msra.mxu0 %v3749
      %4867 = vmatprep.subr.mxu0 0.0
      %4868 = vmatpush2.msra.mxu0 %v3748
      %4869 = vmatprep.subr.mxu0 0.0
      %4870 = vmatpush2.msra.mxu0 %v3747
      %4871 = vmatprep.subr.mxu0 0.0
      %4872 = vmatpush2.msra.mxu0 %v3746
      %4873 = vmatprep.subr.mxu0 0.0
      %4874 = vmatpush2.msra.mxu0 %v3745
      %4875 = vmatprep.subr.mxu0 0.0
      %4876 = vmatpush2.msra.mxu0 %v3744
      %4877 = vmatprep.subr.mxu0 0.0
      %4878 = vmatpush2.msra.mxu0 %v3743
      %4879 = vmatprep.subr.mxu0 0.0
      %4880 = vmatpush2.msra.mxu0 %v3742
      %4881 = vmatprep.subr.mxu0 0.0
      %4882 = vmatpush2.msra.mxu0 %v3741
      %4883 = vmatprep.subr.mxu0 0.0
      %4884 = vmatpush2.msra.mxu0 %v3740
      %4885 = vmatprep.subr.mxu0 0.0
      %4886 = vmatpush2.msra.mxu0 %v3739
      %4887 = vmatprep.subr.mxu0 0.0
      %4888 = vmatpush2.msra.mxu0 %v3738
      %4889 = vmatprep.subr.mxu0 0.0
      %4890 = vmatpush2.msra.mxu0 %v3737
      %4891 = vmatprep.subr.mxu0 0.0
      %4892 = vmatpush2.msra.mxu0 %v3736
      %4893 = vmatprep.subr.mxu0 0.0
      %4894 = vmatpush2.msra.mxu0 %v3735
      %4895 = vmatprep.mubr.f32.mxu0 %v4824
      %4896 = vmatmul.mubr.f32.gmra.mxu0 %v4823
      %v4897 = vpop.f32.mrf.mxu0
      %v4898 = vadd.f32 0.0, %v4897
      %v4899 = vpop.f32.mrf.mxu0
      %4900 = vdwg.mxu0
      %4901 = vmatprep.subr.mxu0 0.0
      %4902 = vmatpush1.msra.mxu0 %v3766
      %4903 = vmatprep.subr.mxu0 0.0
      %4904 = vmatpush1.msra.mxu0 %v3765
      %4905 = vmatprep.subr.mxu0 0.0
      %4906 = vmatpush1.msra.mxu0 %v3764
      %4907 = vmatprep.subr.mxu0 0.0
      %4908 = vmatpush1.msra.mxu0 %v3763
      %4909 = vmatprep.subr.mxu0 0.0
      %4910 = vmatpush1.msra.mxu0 %v3762
      %4911 = vmatprep.subr.mxu0 0.0
      %4912 = vmatpush1.msra.mxu0 %v3761
      %4913 = vmatprep.subr.mxu0 0.0
      %4914 = vmatpush1.msra.mxu0 %v3760
      %4915 = vmatprep.subr.mxu0 0.0
      %4916 = vmatpush1.msra.mxu0 %v3759
      %4917 = vmatprep.subr.mxu0 0.0
      %4918 = vmatpush1.msra.mxu0 %v3758
      %4919 = vmatprep.subr.mxu0 0.0
      %4920 = vmatpush1.msra.mxu0 %v3757
      %4921 = vmatprep.subr.mxu0 0.0
      %4922 = vmatpush1.msra.mxu0 %v3756
      %4923 = vmatprep.subr.mxu0 0.0
      %4924 = vmatpush1.msra.mxu0 %v3755
      %4925 = vmatprep.subr.mxu0 0.0
      %4926 = vmatpush1.msra.mxu0 %v3754
      %4927 = vmatprep.subr.mxu0 0.0
      %4928 = vmatpush1.msra.mxu0 %v3753
      %4929 = vmatprep.subr.mxu0 0.0
      %4930 = vmatpush1.msra.mxu0 %v3752
      %4931 = vmatprep.subr.mxu0 0.0
      %4932 = vmatpush1.msra.mxu0 %v3751
      %4933 = vmatprep.subr.mxu0 0.0
      %4934 = vmatpush2.msra.mxu0 %v3782
      %4935 = vmatprep.subr.mxu0 0.0
      %4936 = vmatpush2.msra.mxu0 %v3781
      %4937 = vmatprep.subr.mxu0 0.0
      %4938 = vmatpush2.msra.mxu0 %v3780
      %4939 = vmatprep.subr.mxu0 0.0
      %4940 = vmatpush2.msra.mxu0 %v3779
      %4941 = vmatprep.subr.mxu0 0.0
      %4942 = vmatpush2.msra.mxu0 %v3778
      %4943 = vmatprep.subr.mxu0 0.0
      %4944 = vmatpush2.msra.mxu0 %v3777
      %4945 = vmatprep.subr.mxu0 0.0
      %4946 = vmatpush2.msra.mxu0 %v3776
      %4947 = vmatprep.subr.mxu0 0.0
      %4948 = vmatpush2.msra.mxu0 %v3775
      %4949 = vmatprep.subr.mxu0 0.0
      %4950 = vmatpush2.msra.mxu0 %v3774
      %4951 = vmatprep.subr.mxu0 0.0
      %4952 = vmatpush2.msra.mxu0 %v3773
      %4953 = vmatprep.subr.mxu0 0.0
      %4954 = vmatpush2.msra.mxu0 %v3772
      %4955 = vmatprep.subr.mxu0 0.0
      %4956 = vmatpush2.msra.mxu0 %v3771
      %4957 = vmatprep.subr.mxu0 0.0
      %4958 = vmatpush2.msra.mxu0 %v3770
      %4959 = vmatprep.subr.mxu0 0.0
      %4960 = vmatpush2.msra.mxu0 %v3769
      %4961 = vmatprep.subr.mxu0 0.0
      %4962 = vmatpush2.msra.mxu0 %v3768
      %4963 = vmatprep.subr.mxu0 0.0
      %4964 = vmatpush2.msra.mxu0 %v3767
      %4965 = vmatprep.mubr.f32.mxu0 %v4826
      %4966 = vmatmul.mubr.f32.gmra.mxu0 %v4825
      %v4967 = vpop.f32.mrf.mxu0
      %v4968 = vadd.f32 %v4898, %v4967
      %v4969 = vpop.f32.mrf.mxu0
      %4970 = vdwg.mxu0
      %4971 = vmatprep.subr.mxu0 0.0
      %4972 = vmatpush1.msra.mxu0 %v3798
      %4973 = vmatprep.subr.mxu0 0.0
      %4974 = vmatpush1.msra.mxu0 %v3797
      %4975 = vmatprep.subr.mxu0 0.0
      %4976 = vmatpush1.msra.mxu0 %v3796
      %4977 = vmatprep.subr.mxu0 0.0
      %4978 = vmatpush1.msra.mxu0 %v3795
      %4979 = vmatprep.subr.mxu0 0.0
      %4980 = vmatpush1.msra.mxu0 %v3794
      %4981 = vmatprep.subr.mxu0 0.0
      %4982 = vmatpush1.msra.mxu0 %v3793
      %4983 = vmatprep.subr.mxu0 0.0
      %4984 = vmatpush1.msra.mxu0 %v3792
      %4985 = vmatprep.subr.mxu0 0.0
      %4986 = vmatpush1.msra.mxu0 %v3791
      %4987 = vmatprep.subr.mxu0 0.0
      %4988 = vmatpush1.msra.mxu0 %v3790
      %4989 = vmatprep.subr.mxu0 0.0
      %4990 = vmatpush1.msra.mxu0 %v3789
      %4991 = vmatprep.subr.mxu0 0.0
      %4992 = vmatpush1.msra.mxu0 %v3788
      %4993 = vmatprep.subr.mxu0 0.0
      %4994 = vmatpush1.msra.mxu0 %v3787
      %4995 = vmatprep.subr.mxu0 0.0
      %4996 = vmatpush1.msra.mxu0 %v3786
      %4997 = vmatprep.subr.mxu0 0.0
      %4998 = vmatpush1.msra.mxu0 %v3785
      %4999 = vmatprep.subr.mxu0 0.0
      %5000 = vmatpush1.msra.mxu0 %v3784
      %5001 = vmatprep.subr.mxu0 0.0
      %5002 = vmatpush1.msra.mxu0 %v3783
      %5003 = vmatprep.subr.mxu0 0.0
      %5004 = vmatpush2.msra.mxu0 %v3814
      %5005 = vmatprep.subr.mxu0 0.0
      %5006 = vmatpush2.msra.mxu0 %v3813
      %5007 = vmatprep.subr.mxu0 0.0
      %5008 = vmatpush2.msra.mxu0 %v3812
      %5009 = vmatprep.subr.mxu0 0.0
      %5010 = vmatpush2.msra.mxu0 %v3811
      %5011 = vmatprep.subr.mxu0 0.0
      %5012 = vmatpush2.msra.mxu0 %v3810
      %5013 = vmatprep.subr.mxu0 0.0
      %5014 = vmatpush2.msra.mxu0 %v3809
      %5015 = vmatprep.subr.mxu0 0.0
      %5016 = vmatpush2.msra.mxu0 %v3808
      %5017 = vmatprep.subr.mxu0 0.0
      %5018 = vmatpush2.msra.mxu0 %v3807
      %5019 = vmatprep.subr.mxu0 0.0
      %5020 = vmatpush2.msra.mxu0 %v3806
      %5021 = vmatprep.subr.mxu0 0.0
      %5022 = vmatpush2.msra.mxu0 %v3805
      %5023 = vmatprep.subr.mxu0 0.0
      %5024 = vmatpush2.msra.mxu0 %v3804
      %5025 = vmatprep.subr.mxu0 0.0
      %5026 = vmatpush2.msra.mxu0 %v3803
      %5027 = vmatprep.subr.mxu0 0.0
      %5028 = vmatpush2.msra.mxu0 %v3802
      %5029 = vmatprep.subr.mxu0 0.0
      %5030 = vmatpush2.msra.mxu0 %v3801
      %5031 = vmatprep.subr.mxu0 0.0
      %5032 = vmatpush2.msra.mxu0 %v3800
      %5033 = vmatprep.subr.mxu0 0.0
      %5034 = vmatpush2.msra.mxu0 %v3799
      %5035 = vmatprep.mubr.f32.mxu0 %v4828
      %5036 = vmatmul.mubr.f32.gmra.mxu0 %v4827
      %v5037 = vpop.f32.mrf.mxu0
      %v5038 = vadd.f32 %v4968, %v5037
      %v5039 = vpop.f32.mrf.mxu0
      %5040 = vdwg.mxu0
      %5041 = vmatprep.subr.mxu0 0.0
      %5042 = vmatpush1.msra.mxu0 %v3830
      %5043 = vmatprep.subr.mxu0 0.0
      %5044 = vmatpush1.msra.mxu0 %v3829
      %5045 = vmatprep.subr.mxu0 0.0
      %5046 = vmatpush1.msra.mxu0 %v3828
      %5047 = vmatprep.subr.mxu0 0.0
      %5048 = vmatpush1.msra.mxu0 %v3827
      %5049 = vmatprep.subr.mxu0 0.0
      %5050 = vmatpush1.msra.mxu0 %v3826
      %5051 = vmatprep.subr.mxu0 0.0
      %5052 = vmatpush1.msra.mxu0 %v3825
      %5053 = vmatprep.subr.mxu0 0.0
      %5054 = vmatpush1.msra.mxu0 %v3824
      %5055 = vmatprep.subr.mxu0 0.0
      %5056 = vmatpush1.msra.mxu0 %v3823
      %5057 = vmatprep.subr.mxu0 0.0
      %5058 = vmatpush1.msra.mxu0 %v3822
      %5059 = vmatprep.subr.mxu0 0.0
      %5060 = vmatpush1.msra.mxu0 %v3821
      %5061 = vmatprep.subr.mxu0 0.0
      %5062 = vmatpush1.msra.mxu0 %v3820
      %5063 = vmatprep.subr.mxu0 0.0
      %5064 = vmatpush1.msra.mxu0 %v3819
      %5065 = vmatprep.subr.mxu0 0.0
      %5066 = vmatpush1.msra.mxu0 %v3818
      %5067 = vmatprep.subr.mxu0 0.0
      %5068 = vmatpush1.msra.mxu0 %v3817
      %5069 = vmatprep.subr.mxu0 0.0
      %5070 = vmatpush1.msra.mxu0 %v3816
      %5071 = vmatprep.subr.mxu0 0.0
      %5072 = vmatpush1.msra.mxu0 %v3815
      %5073 = vmatprep.subr.mxu0 0.0
      %5074 = vmatpush2.msra.mxu0 %v3846
      %5075 = vmatprep.subr.mxu0 0.0
      %5076 = vmatpush2.msra.mxu0 %v3845
      %5077 = vmatprep.subr.mxu0 0.0
      %5078 = vmatpush2.msra.mxu0 %v3844
      %5079 = vmatprep.subr.mxu0 0.0
      %5080 = vmatpush2.msra.mxu0 %v3843
      %5081 = vmatprep.subr.mxu0 0.0
      %5082 = vmatpush2.msra.mxu0 %v3842
      %5083 = vmatprep.subr.mxu0 0.0
      %5084 = vmatpush2.msra.mxu0 %v3841
      %5085 = vmatprep.subr.mxu0 0.0
      %5086 = vmatpush2.msra.mxu0 %v3840
      %5087 = vmatprep.subr.mxu0 0.0
      %5088 = vmatpush2.msra.mxu0 %v3839
      %5089 = vmatprep.subr.mxu0 0.0
      %5090 = vmatpush2.msra.mxu0 %v3838
      %5091 = vmatprep.subr.mxu0 0.0
      %5092 = vmatpush2.msra.mxu0 %v3837
      %5093 = vmatprep.subr.mxu0 0.0
      %5094 = vmatpush2.msra.mxu0 %v3836
      %5095 = vmatprep.subr.mxu0 0.0
      %5096 = vmatpush2.msra.mxu0 %v3835
      %5097 = vmatprep.subr.mxu0 0.0
      %5098 = vmatpush2.msra.mxu0 %v3834
      %5099 = vmatprep.subr.mxu0 0.0
      %5100 = vmatpush2.msra.mxu0 %v3833
      %5101 = vmatprep.subr.mxu0 0.0
      %5102 = vmatpush2.msra.mxu0 %v3832
      %5103 = vmatprep.subr.mxu0 0.0
      %5104 = vmatpush2.msra.mxu0 %v3831
      %5105 = vmatprep.mubr.f32.mxu0 %v4830
      %5106 = vmatmul.mubr.f32.gmra.mxu0 %v4829
      %v5107 = vpop.f32.mrf.mxu0
      %v5108 = vadd.f32 %v5038, %v5107
      %v5109 = vpop.f32.mrf.mxu0
      %5110 = vdwg.mxu0
      %v5111 = vld [vmem:[#allocation2 + $0x100] sm:$0xff]
      %v5112 = vld [vmem:[#allocation2 + $0x108] sm:$0xff]
      %v5113 = vld [vmem:[#allocation2 + $0x110] sm:$0xff]
      %v5114 = vld [vmem:[#allocation2 + $0x118] sm:$0xff]
      %v5115 = vld [vmem:[#allocation2 + $0x120] sm:$0xff]
      %v5116 = vld [vmem:[#allocation2 + $0x128] sm:$0xff]
      %v5117 = vld [vmem:[#allocation2 + $0x130] sm:$0xff]
      %v5118 = vld [vmem:[#allocation2 + $0x138] sm:$0xff]
      %v5119 = vmul.f32 %v5111, %v4807
      %v5120 = vmul.f32 %v5112, %v4808
      %v5121 = vmul.f32 %v5113, %v4809
      %v5122 = vmul.f32 %v5114, %v4810
      %v5123 = vmul.f32 %v5115, %v4811
      %v5124 = vmul.f32 %v5116, %v4812
      %v5125 = vmul.f32 %v5117, %v4813
      %v5126 = vmul.f32 %v5118, %v4814
      %v5127 = vld [vmem:[#allocation3 + $0x100] sm:$0xff]
      %v5128 = vld [vmem:[#allocation3 + $0x108] sm:$0xff]
      %v5129 = vld [vmem:[#allocation3 + $0x110] sm:$0xff]
      %v5130 = vld [vmem:[#allocation3 + $0x118] sm:$0xff]
      %v5131 = vld [vmem:[#allocation3 + $0x120] sm:$0xff]
      %v5132 = vld [vmem:[#allocation3 + $0x128] sm:$0xff]
      %v5133 = vld [vmem:[#allocation3 + $0x130] sm:$0xff]
      %v5134 = vld [vmem:[#allocation3 + $0x138] sm:$0xff]
      %v5135 = vadd.f32 %v5119, %v5127
      %v5136 = vadd.f32 %v5120, %v5128
      %v5137 = vadd.f32 %v5121, %v5129
      %v5138 = vadd.f32 %v5122, %v5130
      %v5139 = vadd.f32 %v5123, %v5131
      %v5140 = vadd.f32 %v5124, %v5132
      %v5141 = vadd.f32 %v5125, %v5133
      %v5142 = vadd.f32 %v5126, %v5134
      %v5143 = vld [vmem:[#allocation4 + $0x100] sm:$0xff]
      %v5144 = vld [vmem:[#allocation4 + $0x108] sm:$0xff]
      %v5145 = vld [vmem:[#allocation4 + $0x110] sm:$0xff]
      %v5146 = vld [vmem:[#allocation4 + $0x118] sm:$0xff]
      %v5147 = vld [vmem:[#allocation4 + $0x120] sm:$0xff]
      %v5148 = vld [vmem:[#allocation4 + $0x128] sm:$0xff]
      %v5149 = vld [vmem:[#allocation4 + $0x130] sm:$0xff]
      %v5150 = vld [vmem:[#allocation4 + $0x138] sm:$0xff]
      %v5151 = vmul.f32 %v5135, %v5143
      %v5152 = vmul.f32 %v5136, %v5144
      %v5153 = vmul.f32 %v5137, %v5145
      %v5154 = vmul.f32 %v5138, %v5146
      %v5155 = vmul.f32 %v5139, %v5147
      %v5156 = vmul.f32 %v5140, %v5148
      %v5157 = vmul.f32 %v5141, %v5149
      %v5158 = vmul.f32 %v5142, %v5150
      %5159 = vmatprep.subr.mxu0 0.0
      %5160 = vmatpush1.msra.mxu0 %v3734
      %5161 = vmatprep.subr.mxu0 0.0
      %5162 = vmatpush1.msra.mxu0 %v3733
      %5163 = vmatprep.subr.mxu0 0.0
      %5164 = vmatpush1.msra.mxu0 %v3732
      %5165 = vmatprep.subr.mxu0 0.0
      %5166 = vmatpush1.msra.mxu0 %v3731
      %5167 = vmatprep.subr.mxu0 0.0
      %5168 = vmatpush1.msra.mxu0 %v3730
      %5169 = vmatprep.subr.mxu0 0.0
      %5170 = vmatpush1.msra.mxu0 %v3729
      %5171 = vmatprep.subr.mxu0 0.0
      %5172 = vmatpush1.msra.mxu0 %v3728
      %5173 = vmatprep.subr.mxu0 0.0
      %5174 = vmatpush1.msra.mxu0 %v3727
      %5175 = vmatprep.subr.mxu0 0.0
      %5176 = vmatpush1.msra.mxu0 %v3726
      %5177 = vmatprep.subr.mxu0 0.0
      %5178 = vmatpush1.msra.mxu0 %v3725
      %5179 = vmatprep.subr.mxu0 0.0
      %5180 = vmatpush1.msra.mxu0 %v3724
      %5181 = vmatprep.subr.mxu0 0.0
      %5182 = vmatpush1.msra.mxu0 %v3723
      %5183 = vmatprep.subr.mxu0 0.0
      %5184 = vmatpush1.msra.mxu0 %v3722
      %5185 = vmatprep.subr.mxu0 0.0
      %5186 = vmatpush1.msra.mxu0 %v3721
      %5187 = vmatprep.subr.mxu0 0.0
      %5188 = vmatpush1.msra.mxu0 %v3720
      %5189 = vmatprep.subr.mxu0 0.0
      %5190 = vmatpush1.msra.mxu0 %v3719
      %5191 = vmatprep.subr.mxu0 0.0
      %5192 = vmatpush2.msra.mxu0 %v3750
      %5193 = vmatprep.subr.mxu0 0.0
      %5194 = vmatpush2.msra.mxu0 %v3749
      %5195 = vmatprep.subr.mxu0 0.0
      %5196 = vmatpush2.msra.mxu0 %v3748
      %5197 = vmatprep.subr.mxu0 0.0
      %5198 = vmatpush2.msra.mxu0 %v3747
      %5199 = vmatprep.subr.mxu0 0.0
      %5200 = vmatpush2.msra.mxu0 %v3746
      %5201 = vmatprep.subr.mxu0 0.0
      %5202 = vmatpush2.msra.mxu0 %v3745
      %5203 = vmatprep.subr.mxu0 0.0
      %5204 = vmatpush2.msra.mxu0 %v3744
      %5205 = vmatprep.subr.mxu0 0.0
      %5206 = vmatpush2.msra.mxu0 %v3743
      %5207 = vmatprep.subr.mxu0 0.0
      %5208 = vmatpush2.msra.mxu0 %v3742
      %5209 = vmatprep.subr.mxu0 0.0
      %5210 = vmatpush2.msra.mxu0 %v3741
      %5211 = vmatprep.subr.mxu0 0.0
      %5212 = vmatpush2.msra.mxu0 %v3740
      %5213 = vmatprep.subr.mxu0 0.0
      %5214 = vmatpush2.msra.mxu0 %v3739
      %5215 = vmatprep.subr.mxu0 0.0
      %5216 = vmatpush2.msra.mxu0 %v3738
      %5217 = vmatprep.subr.mxu0 0.0
      %5218 = vmatpush2.msra.mxu0 %v3737
      %5219 = vmatprep.subr.mxu0 0.0
      %5220 = vmatpush2.msra.mxu0 %v3736
      %5221 = vmatprep.subr.mxu0 0.0
      %5222 = vmatpush2.msra.mxu0 %v3735
      %5223 = vmatprep.mubr.f32.mxu0 %v5152
      %5224 = vmatmul.mubr.f32.gmra.mxu0 %v5151
      %v5225 = vpop.f32.mrf.mxu0
      %v5226 = vadd.f32 0.0, %v5225
      %v5227 = vpop.f32.mrf.mxu0
      %5228 = vdwg.mxu0
      %5229 = vmatprep.subr.mxu0 0.0
      %5230 = vmatpush1.msra.mxu0 %v3766
      %5231 = vmatprep.subr.mxu0 0.0
      %5232 = vmatpush1.msra.mxu0 %v3765
      %5233 = vmatprep.subr.mxu0 0.0
      %5234 = vmatpush1.msra.mxu0 %v3764
      %5235 = vmatprep.subr.mxu0 0.0
      %5236 = vmatpush1.msra.mxu0 %v3763
      %5237 = vmatprep.subr.mxu0 0.0
      %5238 = vmatpush1.msra.mxu0 %v3762
      %5239 = vmatprep.subr.mxu0 0.0
      %5240 = vmatpush1.msra.mxu0 %v3761
      %5241 = vmatprep.subr.mxu0 0.0
      %5242 = vmatpush1.msra.mxu0 %v3760
      %5243 = vmatprep.subr.mxu0 0.0
      %5244 = vmatpush1.msra.mxu0 %v3759
      %5245 = vmatprep.subr.mxu0 0.0
      %5246 = vmatpush1.msra.mxu0 %v3758
      %5247 = vmatprep.subr.mxu0 0.0
      %5248 = vmatpush1.msra.mxu0 %v3757
      %5249 = vmatprep.subr.mxu0 0.0
      %5250 = vmatpush1.msra.mxu0 %v3756
      %5251 = vmatprep.subr.mxu0 0.0
      %5252 = vmatpush1.msra.mxu0 %v3755
      %5253 = vmatprep.subr.mxu0 0.0
      %5254 = vmatpush1.msra.mxu0 %v3754
      %5255 = vmatprep.subr.mxu0 0.0
      %5256 = vmatpush1.msra.mxu0 %v3753
      %5257 = vmatprep.subr.mxu0 0.0
      %5258 = vmatpush1.msra.mxu0 %v3752
      %5259 = vmatprep.subr.mxu0 0.0
      %5260 = vmatpush1.msra.mxu0 %v3751
      %5261 = vmatprep.subr.mxu0 0.0
      %5262 = vmatpush2.msra.mxu0 %v3782
      %5263 = vmatprep.subr.mxu0 0.0
      %5264 = vmatpush2.msra.mxu0 %v3781
      %5265 = vmatprep.subr.mxu0 0.0
      %5266 = vmatpush2.msra.mxu0 %v3780
      %5267 = vmatprep.subr.mxu0 0.0
      %5268 = vmatpush2.msra.mxu0 %v3779
      %5269 = vmatprep.subr.mxu0 0.0
      %5270 = vmatpush2.msra.mxu0 %v3778
      %5271 = vmatprep.subr.mxu0 0.0
      %5272 = vmatpush2.msra.mxu0 %v3777
      %5273 = vmatprep.subr.mxu0 0.0
      %5274 = vmatpush2.msra.mxu0 %v3776
      %5275 = vmatprep.subr.mxu0 0.0
      %5276 = vmatpush2.msra.mxu0 %v3775
      %5277 = vmatprep.subr.mxu0 0.0
      %5278 = vmatpush2.msra.mxu0 %v3774
      %5279 = vmatprep.subr.mxu0 0.0
      %5280 = vmatpush2.msra.mxu0 %v3773
      %5281 = vmatprep.subr.mxu0 0.0
      %5282 = vmatpush2.msra.mxu0 %v3772
      %5283 = vmatprep.subr.mxu0 0.0
      %5284 = vmatpush2.msra.mxu0 %v3771
      %5285 = vmatprep.subr.mxu0 0.0
      %5286 = vmatpush2.msra.mxu0 %v3770
      %5287 = vmatprep.subr.mxu0 0.0
      %5288 = vmatpush2.msra.mxu0 %v3769
      %5289 = vmatprep.subr.mxu0 0.0
      %5290 = vmatpush2.msra.mxu0 %v3768
      %5291 = vmatprep.subr.mxu0 0.0
      %5292 = vmatpush2.msra.mxu0 %v3767
      %5293 = vmatprep.mubr.f32.mxu0 %v5154
      %5294 = vmatmul.mubr.f32.gmra.mxu0 %v5153
      %v5295 = vpop.f32.mrf.mxu0
      %v5296 = vadd.f32 %v5226, %v5295
      %v5297 = vpop.f32.mrf.mxu0
      %5298 = vdwg.mxu0
      %5299 = vmatprep.subr.mxu0 0.0
      %5300 = vmatpush1.msra.mxu0 %v3798
      %5301 = vmatprep.subr.mxu0 0.0
      %5302 = vmatpush1.msra.mxu0 %v3797
      %5303 = vmatprep.subr.mxu0 0.0
      %5304 = vmatpush1.msra.mxu0 %v3796
      %5305 = vmatprep.subr.mxu0 0.0
      %5306 = vmatpush1.msra.mxu0 %v3795
      %5307 = vmatprep.subr.mxu0 0.0
      %5308 = vmatpush1.msra.mxu0 %v3794
      %5309 = vmatprep.subr.mxu0 0.0
      %5310 = vmatpush1.msra.mxu0 %v3793
      %5311 = vmatprep.subr.mxu0 0.0
      %5312 = vmatpush1.msra.mxu0 %v3792
      %5313 = vmatprep.subr.mxu0 0.0
      %5314 = vmatpush1.msra.mxu0 %v3791
      %5315 = vmatprep.subr.mxu0 0.0
      %5316 = vmatpush1.msra.mxu0 %v3790
      %5317 = vmatprep.subr.mxu0 0.0
      %5318 = vmatpush1.msra.mxu0 %v3789
      %5319 = vmatprep.subr.mxu0 0.0
      %5320 = vmatpush1.msra.mxu0 %v3788
      %5321 = vmatprep.subr.mxu0 0.0
      %5322 = vmatpush1.msra.mxu0 %v3787
      %5323 = vmatprep.subr.mxu0 0.0
      %5324 = vmatpush1.msra.mxu0 %v3786
      %5325 = vmatprep.subr.mxu0 0.0
      %5326 = vmatpush1.msra.mxu0 %v3785
      %5327 = vmatprep.subr.mxu0 0.0
      %5328 = vmatpush1.msra.mxu0 %v3784
      %5329 = vmatprep.subr.mxu0 0.0
      %5330 = vmatpush1.msra.mxu0 %v3783
      %5331 = vmatprep.subr.mxu0 0.0
      %5332 = vmatpush2.msra.mxu0 %v3814
      %5333 = vmatprep.subr.mxu0 0.0
      %5334 = vmatpush2.msra.mxu0 %v3813
      %5335 = vmatprep.subr.mxu0 0.0
      %5336 = vmatpush2.msra.mxu0 %v3812
      %5337 = vmatprep.subr.mxu0 0.0
      %5338 = vmatpush2.msra.mxu0 %v3811
      %5339 = vmatprep.subr.mxu0 0.0
      %5340 = vmatpush2.msra.mxu0 %v3810
      %5341 = vmatprep.subr.mxu0 0.0
      %5342 = vmatpush2.msra.mxu0 %v3809
      %5343 = vmatprep.subr.mxu0 0.0
      %5344 = vmatpush2.msra.mxu0 %v3808
      %5345 = vmatprep.subr.mxu0 0.0
      %5346 = vmatpush2.msra.mxu0 %v3807
      %5347 = vmatprep.subr.mxu0 0.0
      %5348 = vmatpush2.msra.mxu0 %v3806
      %5349 = vmatprep.subr.mxu0 0.0
      %5350 = vmatpush2.msra.mxu0 %v3805
      %5351 = vmatprep.subr.mxu0 0.0
      %5352 = vmatpush2.msra.mxu0 %v3804
      %5353 = vmatprep.subr.mxu0 0.0
      %5354 = vmatpush2.msra.mxu0 %v3803
      %5355 = vmatprep.subr.mxu0 0.0
      %5356 = vmatpush2.msra.mxu0 %v3802
      %5357 = vmatprep.subr.mxu0 0.0
      %5358 = vmatpush2.msra.mxu0 %v3801
      %5359 = vmatprep.subr.mxu0 0.0
      %5360 = vmatpush2.msra.mxu0 %v3800
      %5361 = vmatprep.subr.mxu0 0.0
      %5362 = vmatpush2.msra.mxu0 %v3799
      %5363 = vmatprep.mubr.f32.mxu0 %v5156
      %5364 = vmatmul.mubr.f32.gmra.mxu0 %v5155
      %v5365 = vpop.f32.mrf.mxu0
      %v5366 = vadd.f32 %v5296, %v5365
      %v5367 = vpop.f32.mrf.mxu0
      %5368 = vdwg.mxu0
      %5369 = vmatprep.subr.mxu0 0.0
      %5370 = vmatpush1.msra.mxu0 %v3830
      %5371 = vmatprep.subr.mxu0 0.0
      %5372 = vmatpush1.msra.mxu0 %v3829
      %5373 = vmatprep.subr.mxu0 0.0
      %5374 = vmatpush1.msra.mxu0 %v3828
      %5375 = vmatprep.subr.mxu0 0.0
      %5376 = vmatpush1.msra.mxu0 %v3827
      %5377 = vmatprep.subr.mxu0 0.0
      %5378 = vmatpush1.msra.mxu0 %v3826
      %5379 = vmatprep.subr.mxu0 0.0
      %5380 = vmatpush1.msra.mxu0 %v3825
      %5381 = vmatprep.subr.mxu0 0.0
      %5382 = vmatpush1.msra.mxu0 %v3824
      %5383 = vmatprep.subr.mxu0 0.0
      %5384 = vmatpush1.msra.mxu0 %v3823
      %5385 = vmatprep.subr.mxu0 0.0
      %5386 = vmatpush1.msra.mxu0 %v3822
      %5387 = vmatprep.subr.mxu0 0.0
      %5388 = vmatpush1.msra.mxu0 %v3821
      %5389 = vmatprep.subr.mxu0 0.0
      %5390 = vmatpush1.msra.mxu0 %v3820
      %5391 = vmatprep.subr.mxu0 0.0
      %5392 = vmatpush1.msra.mxu0 %v3819
      %5393 = vmatprep.subr.mxu0 0.0
      %5394 = vmatpush1.msra.mxu0 %v3818
      %5395 = vmatprep.subr.mxu0 0.0
      %5396 = vmatpush1.msra.mxu0 %v3817
      %5397 = vmatprep.subr.mxu0 0.0
      %5398 = vmatpush1.msra.mxu0 %v3816
      %5399 = vmatprep.subr.mxu0 0.0
      %5400 = vmatpush1.msra.mxu0 %v3815
      %5401 = vmatprep.subr.mxu0 0.0
      %5402 = vmatpush2.msra.mxu0 %v3846
      %5403 = vmatprep.subr.mxu0 0.0
      %5404 = vmatpush2.msra.mxu0 %v3845
      %5405 = vmatprep.subr.mxu0 0.0
      %5406 = vmatpush2.msra.mxu0 %v3844
      %5407 = vmatprep.subr.mxu0 0.0
      %5408 = vmatpush2.msra.mxu0 %v3843
      %5409 = vmatprep.subr.mxu0 0.0
      %5410 = vmatpush2.msra.mxu0 %v3842
      %5411 = vmatprep.subr.mxu0 0.0
      %5412 = vmatpush2.msra.mxu0 %v3841
      %5413 = vmatprep.subr.mxu0 0.0
      %5414 = vmatpush2.msra.mxu0 %v3840
      %5415 = vmatprep.subr.mxu0 0.0
      %5416 = vmatpush2.msra.mxu0 %v3839
      %5417 = vmatprep.subr.mxu0 0.0
      %5418 = vmatpush2.msra.mxu0 %v3838
      %5419 = vmatprep.subr.mxu0 0.0
      %5420 = vmatpush2.msra.mxu0 %v3837
      %5421 = vmatprep.subr.mxu0 0.0
      %5422 = vmatpush2.msra.mxu0 %v3836
      %5423 = vmatprep.subr.mxu0 0.0
      %5424 = vmatpush2.msra.mxu0 %v3835
      %5425 = vmatprep.subr.mxu0 0.0
      %5426 = vmatpush2.msra.mxu0 %v3834
      %5427 = vmatprep.subr.mxu0 0.0
      %5428 = vmatpush2.msra.mxu0 %v3833
      %5429 = vmatprep.subr.mxu0 0.0
      %5430 = vmatpush2.msra.mxu0 %v3832
      %5431 = vmatprep.subr.mxu0 0.0
      %5432 = vmatpush2.msra.mxu0 %v3831
      %5433 = vmatprep.mubr.f32.mxu0 %v5158
      %5434 = vmatmul.mubr.f32.gmra.mxu0 %v5157
      %v5435 = vpop.f32.mrf.mxu0
      %v5436 = vadd.f32 %v5366, %v5435
      %v5437 = vpop.f32.mrf.mxu0
      %5438 = vdwg.mxu0
      %v5439 = vld [vmem:[#allocation2 + $0x140] sm:$0xff]
      %v5440 = vld [vmem:[#allocation2 + $0x148] sm:$0xff]
      %v5441 = vld [vmem:[#allocation2 + $0x150] sm:$0xff]
      %v5442 = vld [vmem:[#allocation2 + $0x158] sm:$0xff]
      %v5443 = vld [vmem:[#allocation2 + $0x160] sm:$0xff]
      %v5444 = vld [vmem:[#allocation2 + $0x168] sm:$0xff]
      %v5445 = vld [vmem:[#allocation2 + $0x170] sm:$0xff]
      %v5446 = vld [vmem:[#allocation2 + $0x178] sm:$0xff]
      %v5447 = vmul.f32 %v5439, %v5135
      %v5448 = vmul.f32 %v5440, %v5136
      %v5449 = vmul.f32 %v5441, %v5137
      %v5450 = vmul.f32 %v5442, %v5138
      %v5451 = vmul.f32 %v5443, %v5139
      %v5452 = vmul.f32 %v5444, %v5140
      %v5453 = vmul.f32 %v5445, %v5141
      %v5454 = vmul.f32 %v5446, %v5142
      %v5455 = vld [vmem:[#allocation3 + $0x140] sm:$0xff]
      %v5456 = vld [vmem:[#allocation3 + $0x148] sm:$0xff]
      %v5457 = vld [vmem:[#allocation3 + $0x150] sm:$0xff]
      %v5458 = vld [vmem:[#allocation3 + $0x158] sm:$0xff]
      %v5459 = vld [vmem:[#allocation3 + $0x160] sm:$0xff]
      %v5460 = vld [vmem:[#allocation3 + $0x168] sm:$0xff]
      %v5461 = vld [vmem:[#allocation3 + $0x170] sm:$0xff]
      %v5462 = vld [vmem:[#allocation3 + $0x178] sm:$0xff]
      %v5463 = vadd.f32 %v5447, %v5455
      %v5464 = vadd.f32 %v5448, %v5456
      %v5465 = vadd.f32 %v5449, %v5457
      %v5466 = vadd.f32 %v5450, %v5458
      %v5467 = vadd.f32 %v5451, %v5459
      %v5468 = vadd.f32 %v5452, %v5460
      %v5469 = vadd.f32 %v5453, %v5461
      %v5470 = vadd.f32 %v5454, %v5462
      %v5471 = vld [vmem:[#allocation4 + $0x140] sm:$0xff]
      %v5472 = vld [vmem:[#allocation4 + $0x148] sm:$0xff]
      %v5473 = vld [vmem:[#allocation4 + $0x150] sm:$0xff]
      %v5474 = vld [vmem:[#allocation4 + $0x158] sm:$0xff]
      %v5475 = vld [vmem:[#allocation4 + $0x160] sm:$0xff]
      %v5476 = vld [vmem:[#allocation4 + $0x168] sm:$0xff]
      %v5477 = vld [vmem:[#allocation4 + $0x170] sm:$0xff]
      %v5478 = vld [vmem:[#allocation4 + $0x178] sm:$0xff]
      %v5479 = vmul.f32 %v5463, %v5471
      %v5480 = vmul.f32 %v5464, %v5472
      %v5481 = vmul.f32 %v5465, %v5473
      %v5482 = vmul.f32 %v5466, %v5474
      %v5483 = vmul.f32 %v5467, %v5475
      %v5484 = vmul.f32 %v5468, %v5476
      %v5485 = vmul.f32 %v5469, %v5477
      %v5486 = vmul.f32 %v5470, %v5478
      %5487 = vmatprep.subr.mxu0 0.0
      %5488 = vmatpush1.msra.mxu0 %v3734
      %5489 = vmatprep.subr.mxu0 0.0
      %5490 = vmatpush1.msra.mxu0 %v3733
      %5491 = vmatprep.subr.mxu0 0.0
      %5492 = vmatpush1.msra.mxu0 %v3732
      %5493 = vmatprep.subr.mxu0 0.0
      %5494 = vmatpush1.msra.mxu0 %v3731
      %5495 = vmatprep.subr.mxu0 0.0
      %5496 = vmatpush1.msra.mxu0 %v3730
      %5497 = vmatprep.subr.mxu0 0.0
      %5498 = vmatpush1.msra.mxu0 %v3729
      %5499 = vmatprep.subr.mxu0 0.0
      %5500 = vmatpush1.msra.mxu0 %v3728
      %5501 = vmatprep.subr.mxu0 0.0
      %5502 = vmatpush1.msra.mxu0 %v3727
      %5503 = vmatprep.subr.mxu0 0.0
      %5504 = vmatpush1.msra.mxu0 %v3726
      %5505 = vmatprep.subr.mxu0 0.0
      %5506 = vmatpush1.msra.mxu0 %v3725
      %5507 = vmatprep.subr.mxu0 0.0
      %5508 = vmatpush1.msra.mxu0 %v3724
      %5509 = vmatprep.subr.mxu0 0.0
      %5510 = vmatpush1.msra.mxu0 %v3723
      %5511 = vmatprep.subr.mxu0 0.0
      %5512 = vmatpush1.msra.mxu0 %v3722
      %5513 = vmatprep.subr.mxu0 0.0
      %5514 = vmatpush1.msra.mxu0 %v3721
      %5515 = vmatprep.subr.mxu0 0.0
      %5516 = vmatpush1.msra.mxu0 %v3720
      %5517 = vmatprep.subr.mxu0 0.0
      %5518 = vmatpush1.msra.mxu0 %v3719
      %5519 = vmatprep.subr.mxu0 0.0
      %5520 = vmatpush2.msra.mxu0 %v3750
      %5521 = vmatprep.subr.mxu0 0.0
      %5522 = vmatpush2.msra.mxu0 %v3749
      %5523 = vmatprep.subr.mxu0 0.0
      %5524 = vmatpush2.msra.mxu0 %v3748
      %5525 = vmatprep.subr.mxu0 0.0
      %5526 = vmatpush2.msra.mxu0 %v3747
      %5527 = vmatprep.subr.mxu0 0.0
      %5528 = vmatpush2.msra.mxu0 %v3746
      %5529 = vmatprep.subr.mxu0 0.0
      %5530 = vmatpush2.msra.mxu0 %v3745
      %5531 = vmatprep.subr.mxu0 0.0
      %5532 = vmatpush2.msra.mxu0 %v3744
      %5533 = vmatprep.subr.mxu0 0.0
      %5534 = vmatpush2.msra.mxu0 %v3743
      %5535 = vmatprep.subr.mxu0 0.0
      %5536 = vmatpush2.msra.mxu0 %v3742
      %5537 = vmatprep.subr.mxu0 0.0
      %5538 = vmatpush2.msra.mxu0 %v3741
      %5539 = vmatprep.subr.mxu0 0.0
      %5540 = vmatpush2.msra.mxu0 %v3740
      %5541 = vmatprep.subr.mxu0 0.0
      %5542 = vmatpush2.msra.mxu0 %v3739
      %5543 = vmatprep.subr.mxu0 0.0
      %5544 = vmatpush2.msra.mxu0 %v3738
      %5545 = vmatprep.subr.mxu0 0.0
      %5546 = vmatpush2.msra.mxu0 %v3737
      %5547 = vmatprep.subr.mxu0 0.0
      %5548 = vmatpush2.msra.mxu0 %v3736
      %5549 = vmatprep.subr.mxu0 0.0
      %5550 = vmatpush2.msra.mxu0 %v3735
      %5551 = vmatprep.mubr.f32.mxu0 %v5480
      %5552 = vmatmul.mubr.f32.gmra.mxu0 %v5479
      %v5553 = vpop.f32.mrf.mxu0
      %v5554 = vadd.f32 0.0, %v5553
      %v5555 = vpop.f32.mrf.mxu0
      %5556 = vdwg.mxu0
      %5557 = vmatprep.subr.mxu0 0.0
      %5558 = vmatpush1.msra.mxu0 %v3766
      %5559 = vmatprep.subr.mxu0 0.0
      %5560 = vmatpush1.msra.mxu0 %v3765
      %5561 = vmatprep.subr.mxu0 0.0
      %5562 = vmatpush1.msra.mxu0 %v3764
      %5563 = vmatprep.subr.mxu0 0.0
      %5564 = vmatpush1.msra.mxu0 %v3763
      %5565 = vmatprep.subr.mxu0 0.0
      %5566 = vmatpush1.msra.mxu0 %v3762
      %5567 = vmatprep.subr.mxu0 0.0
      %5568 = vmatpush1.msra.mxu0 %v3761
      %5569 = vmatprep.subr.mxu0 0.0
      %5570 = vmatpush1.msra.mxu0 %v3760
      %5571 = vmatprep.subr.mxu0 0.0
      %5572 = vmatpush1.msra.mxu0 %v3759
      %5573 = vmatprep.subr.mxu0 0.0
      %5574 = vmatpush1.msra.mxu0 %v3758
      %5575 = vmatprep.subr.mxu0 0.0
      %5576 = vmatpush1.msra.mxu0 %v3757
      %5577 = vmatprep.subr.mxu0 0.0
      %5578 = vmatpush1.msra.mxu0 %v3756
      %5579 = vmatprep.subr.mxu0 0.0
      %5580 = vmatpush1.msra.mxu0 %v3755
      %5581 = vmatprep.subr.mxu0 0.0
      %5582 = vmatpush1.msra.mxu0 %v3754
      %5583 = vmatprep.subr.mxu0 0.0
      %5584 = vmatpush1.msra.mxu0 %v3753
      %5585 = vmatprep.subr.mxu0 0.0
      %5586 = vmatpush1.msra.mxu0 %v3752
      %5587 = vmatprep.subr.mxu0 0.0
      %5588 = vmatpush1.msra.mxu0 %v3751
      %5589 = vmatprep.subr.mxu0 0.0
      %5590 = vmatpush2.msra.mxu0 %v3782
      %5591 = vmatprep.subr.mxu0 0.0
      %5592 = vmatpush2.msra.mxu0 %v3781
      %5593 = vmatprep.subr.mxu0 0.0
      %5594 = vmatpush2.msra.mxu0 %v3780
      %5595 = vmatprep.subr.mxu0 0.0
      %5596 = vmatpush2.msra.mxu0 %v3779
      %5597 = vmatprep.subr.mxu0 0.0
      %5598 = vmatpush2.msra.mxu0 %v3778
      %5599 = vmatprep.subr.mxu0 0.0
      %5600 = vmatpush2.msra.mxu0 %v3777
      %5601 = vmatprep.subr.mxu0 0.0
      %5602 = vmatpush2.msra.mxu0 %v3776
      %5603 = vmatprep.subr.mxu0 0.0
      %5604 = vmatpush2.msra.mxu0 %v3775
      %5605 = vmatprep.subr.mxu0 0.0
      %5606 = vmatpush2.msra.mxu0 %v3774
      %5607 = vmatprep.subr.mxu0 0.0
      %5608 = vmatpush2.msra.mxu0 %v3773
      %5609 = vmatprep.subr.mxu0 0.0
      %5610 = vmatpush2.msra.mxu0 %v3772
      %5611 = vmatprep.subr.mxu0 0.0
      %5612 = vmatpush2.msra.mxu0 %v3771
      %5613 = vmatprep.subr.mxu0 0.0
      %5614 = vmatpush2.msra.mxu0 %v3770
      %5615 = vmatprep.subr.mxu0 0.0
      %5616 = vmatpush2.msra.mxu0 %v3769
      %5617 = vmatprep.subr.mxu0 0.0
      %5618 = vmatpush2.msra.mxu0 %v3768
      %5619 = vmatprep.subr.mxu0 0.0
      %5620 = vmatpush2.msra.mxu0 %v3767
      %5621 = vmatprep.mubr.f32.mxu0 %v5482
      %5622 = vmatmul.mubr.f32.gmra.mxu0 %v5481
      %v5623 = vpop.f32.mrf.mxu0
      %v5624 = vadd.f32 %v5554, %v5623
      %v5625 = vpop.f32.mrf.mxu0
      %5626 = vdwg.mxu0
      %5627 = vmatprep.subr.mxu0 0.0
      %5628 = vmatpush1.msra.mxu0 %v3798
      %5629 = vmatprep.subr.mxu0 0.0
      %5630 = vmatpush1.msra.mxu0 %v3797
      %5631 = vmatprep.subr.mxu0 0.0
      %5632 = vmatpush1.msra.mxu0 %v3796
      %5633 = vmatprep.subr.mxu0 0.0
      %5634 = vmatpush1.msra.mxu0 %v3795
      %5635 = vmatprep.subr.mxu0 0.0
      %5636 = vmatpush1.msra.mxu0 %v3794
      %5637 = vmatprep.subr.mxu0 0.0
      %5638 = vmatpush1.msra.mxu0 %v3793
      %5639 = vmatprep.subr.mxu0 0.0
      %5640 = vmatpush1.msra.mxu0 %v3792
      %5641 = vmatprep.subr.mxu0 0.0
      %5642 = vmatpush1.msra.mxu0 %v3791
      %5643 = vmatprep.subr.mxu0 0.0
      %5644 = vmatpush1.msra.mxu0 %v3790
      %5645 = vmatprep.subr.mxu0 0.0
      %5646 = vmatpush1.msra.mxu0 %v3789
      %5647 = vmatprep.subr.mxu0 0.0
      %5648 = vmatpush1.msra.mxu0 %v3788
      %5649 = vmatprep.subr.mxu0 0.0
      %5650 = vmatpush1.msra.mxu0 %v3787
      %5651 = vmatprep.subr.mxu0 0.0
      %5652 = vmatpush1.msra.mxu0 %v3786
      %5653 = vmatprep.subr.mxu0 0.0
      %5654 = vmatpush1.msra.mxu0 %v3785
      %5655 = vmatprep.subr.mxu0 0.0
      %5656 = vmatpush1.msra.mxu0 %v3784
      %5657 = vmatprep.subr.mxu0 0.0
      %5658 = vmatpush1.msra.mxu0 %v3783
      %5659 = vmatprep.subr.mxu0 0.0
      %5660 = vmatpush2.msra.mxu0 %v3814
      %5661 = vmatprep.subr.mxu0 0.0
      %5662 = vmatpush2.msra.mxu0 %v3813
      %5663 = vmatprep.subr.mxu0 0.0
      %5664 = vmatpush2.msra.mxu0 %v3812
      %5665 = vmatprep.subr.mxu0 0.0
      %5666 = vmatpush2.msra.mxu0 %v3811
      %5667 = vmatprep.subr.mxu0 0.0
      %5668 = vmatpush2.msra.mxu0 %v3810
      %5669 = vmatprep.subr.mxu0 0.0
      %5670 = vmatpush2.msra.mxu0 %v3809
      %5671 = vmatprep.subr.mxu0 0.0
      %5672 = vmatpush2.msra.mxu0 %v3808
      %5673 = vmatprep.subr.mxu0 0.0
      %5674 = vmatpush2.msra.mxu0 %v3807
      %5675 = vmatprep.subr.mxu0 0.0
      %5676 = vmatpush2.msra.mxu0 %v3806
      %5677 = vmatprep.subr.mxu0 0.0
      %5678 = vmatpush2.msra.mxu0 %v3805
      %5679 = vmatprep.subr.mxu0 0.0
      %5680 = vmatpush2.msra.mxu0 %v3804
      %5681 = vmatprep.subr.mxu0 0.0
      %5682 = vmatpush2.msra.mxu0 %v3803
      %5683 = vmatprep.subr.mxu0 0.0
      %5684 = vmatpush2.msra.mxu0 %v3802
      %5685 = vmatprep.subr.mxu0 0.0
      %5686 = vmatpush2.msra.mxu0 %v3801
      %5687 = vmatprep.subr.mxu0 0.0
      %5688 = vmatpush2.msra.mxu0 %v3800
      %5689 = vmatprep.subr.mxu0 0.0
      %5690 = vmatpush2.msra.mxu0 %v3799
      %5691 = vmatprep.mubr.f32.mxu0 %v5484
      %5692 = vmatmul.mubr.f32.gmra.mxu0 %v5483
      %v5693 = vpop.f32.mrf.mxu0
      %v5694 = vadd.f32 %v5624, %v5693
      %v5695 = vpop.f32.mrf.mxu0
      %5696 = vdwg.mxu0
      %5697 = vmatprep.subr.mxu0 0.0
      %5698 = vmatpush1.msra.mxu0 %v3830
      %5699 = vmatprep.subr.mxu0 0.0
      %5700 = vmatpush1.msra.mxu0 %v3829
      %5701 = vmatprep.subr.mxu0 0.0
      %5702 = vmatpush1.msra.mxu0 %v3828
      %5703 = vmatprep.subr.mxu0 0.0
      %5704 = vmatpush1.msra.mxu0 %v3827
      %5705 = vmatprep.subr.mxu0 0.0
      %5706 = vmatpush1.msra.mxu0 %v3826
      %5707 = vmatprep.subr.mxu0 0.0
      %5708 = vmatpush1.msra.mxu0 %v3825
      %5709 = vmatprep.subr.mxu0 0.0
      %5710 = vmatpush1.msra.mxu0 %v3824
      %5711 = vmatprep.subr.mxu0 0.0
      %5712 = vmatpush1.msra.mxu0 %v3823
      %5713 = vmatprep.subr.mxu0 0.0
      %5714 = vmatpush1.msra.mxu0 %v3822
      %5715 = vmatprep.subr.mxu0 0.0
      %5716 = vmatpush1.msra.mxu0 %v3821
      %5717 = vmatprep.subr.mxu0 0.0
      %5718 = vmatpush1.msra.mxu0 %v3820
      %5719 = vmatprep.subr.mxu0 0.0
      %5720 = vmatpush1.msra.mxu0 %v3819
      %5721 = vmatprep.subr.mxu0 0.0
      %5722 = vmatpush1.msra.mxu0 %v3818
      %5723 = vmatprep.subr.mxu0 0.0
      %5724 = vmatpush1.msra.mxu0 %v3817
      %5725 = vmatprep.subr.mxu0 0.0
      %5726 = vmatpush1.msra.mxu0 %v3816
      %5727 = vmatprep.subr.mxu0 0.0
      %5728 = vmatpush1.msra.mxu0 %v3815
      %5729 = vmatprep.subr.mxu0 0.0
      %5730 = vmatpush2.msra.mxu0 %v3846
      %5731 = vmatprep.subr.mxu0 0.0
      %5732 = vmatpush2.msra.mxu0 %v3845
      %5733 = vmatprep.subr.mxu0 0.0
      %5734 = vmatpush2.msra.mxu0 %v3844
      %5735 = vmatprep.subr.mxu0 0.0
      %5736 = vmatpush2.msra.mxu0 %v3843
      %5737 = vmatprep.subr.mxu0 0.0
      %5738 = vmatpush2.msra.mxu0 %v3842
      %5739 = vmatprep.subr.mxu0 0.0
      %5740 = vmatpush2.msra.mxu0 %v3841
      %5741 = vmatprep.subr.mxu0 0.0
      %5742 = vmatpush2.msra.mxu0 %v3840
      %5743 = vmatprep.subr.mxu0 0.0
      %5744 = vmatpush2.msra.mxu0 %v3839
      %5745 = vmatprep.subr.mxu0 0.0
      %5746 = vmatpush2.msra.mxu0 %v3838
      %5747 = vmatprep.subr.mxu0 0.0
      %5748 = vmatpush2.msra.mxu0 %v3837
      %5749 = vmatprep.subr.mxu0 0.0
      %5750 = vmatpush2.msra.mxu0 %v3836
      %5751 = vmatprep.subr.mxu0 0.0
      %5752 = vmatpush2.msra.mxu0 %v3835
      %5753 = vmatprep.subr.mxu0 0.0
      %5754 = vmatpush2.msra.mxu0 %v3834
      %5755 = vmatprep.subr.mxu0 0.0
      %5756 = vmatpush2.msra.mxu0 %v3833
      %5757 = vmatprep.subr.mxu0 0.0
      %5758 = vmatpush2.msra.mxu0 %v3832
      %5759 = vmatprep.subr.mxu0 0.0
      %5760 = vmatpush2.msra.mxu0 %v3831
      %5761 = vmatprep.mubr.f32.mxu0 %v5486
      %5762 = vmatmul.mubr.f32.gmra.mxu0 %v5485
      %v5763 = vpop.f32.mrf.mxu0
      %v5764 = vadd.f32 %v5694, %v5763
      %v5765 = vpop.f32.mrf.mxu0
      %5766 = vdwg.mxu0
      %v5767 = vld [vmem:[#allocation2 + $0x180] sm:$0xff]
      %v5768 = vld [vmem:[#allocation2 + $0x188] sm:$0xff]
      %v5769 = vld [vmem:[#allocation2 + $0x190] sm:$0xff]
      %v5770 = vld [vmem:[#allocation2 + $0x198] sm:$0xff]
      %v5771 = vld [vmem:[#allocation2 + $0x1a0] sm:$0xff]
      %v5772 = vld [vmem:[#allocation2 + $0x1a8] sm:$0xff]
      %v5773 = vld [vmem:[#allocation2 + $0x1b0] sm:$0xff]
      %v5774 = vld [vmem:[#allocation2 + $0x1b8] sm:$0xff]
      %v5775 = vmul.f32 %v5767, %v5463
      %v5776 = vmul.f32 %v5768, %v5464
      %v5777 = vmul.f32 %v5769, %v5465
      %v5778 = vmul.f32 %v5770, %v5466
      %v5779 = vmul.f32 %v5771, %v5467
      %v5780 = vmul.f32 %v5772, %v5468
      %v5781 = vmul.f32 %v5773, %v5469
      %v5782 = vmul.f32 %v5774, %v5470
      %v5783 = vld [vmem:[#allocation3 + $0x180] sm:$0xff]
      %v5784 = vld [vmem:[#allocation3 + $0x188] sm:$0xff]
      %v5785 = vld [vmem:[#allocation3 + $0x190] sm:$0xff]
      %v5786 = vld [vmem:[#allocation3 + $0x198] sm:$0xff]
      %v5787 = vld [vmem:[#allocation3 + $0x1a0] sm:$0xff]
      %v5788 = vld [vmem:[#allocation3 + $0x1a8] sm:$0xff]
      %v5789 = vld [vmem:[#allocation3 + $0x1b0] sm:$0xff]
      %v5790 = vld [vmem:[#allocation3 + $0x1b8] sm:$0xff]
      %v5791 = vadd.f32 %v5775, %v5783
      %v5792 = vadd.f32 %v5776, %v5784
      %v5793 = vadd.f32 %v5777, %v5785
      %v5794 = vadd.f32 %v5778, %v5786
      %v5795 = vadd.f32 %v5779, %v5787
      %v5796 = vadd.f32 %v5780, %v5788
      %v5797 = vadd.f32 %v5781, %v5789
      %v5798 = vadd.f32 %v5782, %v5790
      %v5799 = vld [vmem:[#allocation4 + $0x180] sm:$0xff]
      %v5800 = vld [vmem:[#allocation4 + $0x188] sm:$0xff]
      %v5801 = vld [vmem:[#allocation4 + $0x190] sm:$0xff]
      %v5802 = vld [vmem:[#allocation4 + $0x198] sm:$0xff]
      %v5803 = vld [vmem:[#allocation4 + $0x1a0] sm:$0xff]
      %v5804 = vld [vmem:[#allocation4 + $0x1a8] sm:$0xff]
      %v5805 = vld [vmem:[#allocation4 + $0x1b0] sm:$0xff]
      %v5806 = vld [vmem:[#allocation4 + $0x1b8] sm:$0xff]
      %v5807 = vmul.f32 %v5791, %v5799
      %v5808 = vmul.f32 %v5792, %v5800
      %v5809 = vmul.f32 %v5793, %v5801
      %v5810 = vmul.f32 %v5794, %v5802
      %v5811 = vmul.f32 %v5795, %v5803
      %v5812 = vmul.f32 %v5796, %v5804
      %v5813 = vmul.f32 %v5797, %v5805
      %v5814 = vmul.f32 %v5798, %v5806
      %5815 = vmatprep.subr.mxu0 0.0
      %5816 = vmatpush1.msra.mxu0 %v3734
      %5817 = vmatprep.subr.mxu0 0.0
      %5818 = vmatpush1.msra.mxu0 %v3733
      %5819 = vmatprep.subr.mxu0 0.0
      %5820 = vmatpush1.msra.mxu0 %v3732
      %5821 = vmatprep.subr.mxu0 0.0
      %5822 = vmatpush1.msra.mxu0 %v3731
      %5823 = vmatprep.subr.mxu0 0.0
      %5824 = vmatpush1.msra.mxu0 %v3730
      %5825 = vmatprep.subr.mxu0 0.0
      %5826 = vmatpush1.msra.mxu0 %v3729
      %5827 = vmatprep.subr.mxu0 0.0
      %5828 = vmatpush1.msra.mxu0 %v3728
      %5829 = vmatprep.subr.mxu0 0.0
      %5830 = vmatpush1.msra.mxu0 %v3727
      %5831 = vmatprep.subr.mxu0 0.0
      %5832 = vmatpush1.msra.mxu0 %v3726
      %5833 = vmatprep.subr.mxu0 0.0
      %5834 = vmatpush1.msra.mxu0 %v3725
      %5835 = vmatprep.subr.mxu0 0.0
      %5836 = vmatpush1.msra.mxu0 %v3724
      %5837 = vmatprep.subr.mxu0 0.0
      %5838 = vmatpush1.msra.mxu0 %v3723
      %5839 = vmatprep.subr.mxu0 0.0
      %5840 = vmatpush1.msra.mxu0 %v3722
      %5841 = vmatprep.subr.mxu0 0.0
      %5842 = vmatpush1.msra.mxu0 %v3721
      %5843 = vmatprep.subr.mxu0 0.0
      %5844 = vmatpush1.msra.mxu0 %v3720
      %5845 = vmatprep.subr.mxu0 0.0
      %5846 = vmatpush1.msra.mxu0 %v3719
      %5847 = vmatprep.subr.mxu0 0.0
      %5848 = vmatpush2.msra.mxu0 %v3750
      %5849 = vmatprep.subr.mxu0 0.0
      %5850 = vmatpush2.msra.mxu0 %v3749
      %5851 = vmatprep.subr.mxu0 0.0
      %5852 = vmatpush2.msra.mxu0 %v3748
      %5853 = vmatprep.subr.mxu0 0.0
      %5854 = vmatpush2.msra.mxu0 %v3747
      %5855 = vmatprep.subr.mxu0 0.0
      %5856 = vmatpush2.msra.mxu0 %v3746
      %5857 = vmatprep.subr.mxu0 0.0
      %5858 = vmatpush2.msra.mxu0 %v3745
      %5859 = vmatprep.subr.mxu0 0.0
      %5860 = vmatpush2.msra.mxu0 %v3744
      %5861 = vmatprep.subr.mxu0 0.0
      %5862 = vmatpush2.msra.mxu0 %v3743
      %5863 = vmatprep.subr.mxu0 0.0
      %5864 = vmatpush2.msra.mxu0 %v3742
      %5865 = vmatprep.subr.mxu0 0.0
      %5866 = vmatpush2.msra.mxu0 %v3741
      %5867 = vmatprep.subr.mxu0 0.0
      %5868 = vmatpush2.msra.mxu0 %v3740
      %5869 = vmatprep.subr.mxu0 0.0
      %5870 = vmatpush2.msra.mxu0 %v3739
      %5871 = vmatprep.subr.mxu0 0.0
      %5872 = vmatpush2.msra.mxu0 %v3738
      %5873 = vmatprep.subr.mxu0 0.0
      %5874 = vmatpush2.msra.mxu0 %v3737
      %5875 = vmatprep.subr.mxu0 0.0
      %5876 = vmatpush2.msra.mxu0 %v3736
      %5877 = vmatprep.subr.mxu0 0.0
      %5878 = vmatpush2.msra.mxu0 %v3735
      %5879 = vmatprep.mubr.f32.mxu0 %v5808
      %5880 = vmatmul.mubr.f32.gmra.mxu0 %v5807
      %v5881 = vpop.f32.mrf.mxu0
      %v5882 = vadd.f32 0.0, %v5881
      %v5883 = vpop.f32.mrf.mxu0
      %5884 = vdwg.mxu0
      %5885 = vmatprep.subr.mxu0 0.0
      %5886 = vmatpush1.msra.mxu0 %v3766
      %5887 = vmatprep.subr.mxu0 0.0
      %5888 = vmatpush1.msra.mxu0 %v3765
      %5889 = vmatprep.subr.mxu0 0.0
      %5890 = vmatpush1.msra.mxu0 %v3764
      %5891 = vmatprep.subr.mxu0 0.0
      %5892 = vmatpush1.msra.mxu0 %v3763
      %5893 = vmatprep.subr.mxu0 0.0
      %5894 = vmatpush1.msra.mxu0 %v3762
      %5895 = vmatprep.subr.mxu0 0.0
      %5896 = vmatpush1.msra.mxu0 %v3761
      %5897 = vmatprep.subr.mxu0 0.0
      %5898 = vmatpush1.msra.mxu0 %v3760
      %5899 = vmatprep.subr.mxu0 0.0
      %5900 = vmatpush1.msra.mxu0 %v3759
      %5901 = vmatprep.subr.mxu0 0.0
      %5902 = vmatpush1.msra.mxu0 %v3758
      %5903 = vmatprep.subr.mxu0 0.0
      %5904 = vmatpush1.msra.mxu0 %v3757
      %5905 = vmatprep.subr.mxu0 0.0
      %5906 = vmatpush1.msra.mxu0 %v3756
      %5907 = vmatprep.subr.mxu0 0.0
      %5908 = vmatpush1.msra.mxu0 %v3755
      %5909 = vmatprep.subr.mxu0 0.0
      %5910 = vmatpush1.msra.mxu0 %v3754
      %5911 = vmatprep.subr.mxu0 0.0
      %5912 = vmatpush1.msra.mxu0 %v3753
      %5913 = vmatprep.subr.mxu0 0.0
      %5914 = vmatpush1.msra.mxu0 %v3752
      %5915 = vmatprep.subr.mxu0 0.0
      %5916 = vmatpush1.msra.mxu0 %v3751
      %5917 = vmatprep.subr.mxu0 0.0
      %5918 = vmatpush2.msra.mxu0 %v3782
      %5919 = vmatprep.subr.mxu0 0.0
      %5920 = vmatpush2.msra.mxu0 %v3781
      %5921 = vmatprep.subr.mxu0 0.0
      %5922 = vmatpush2.msra.mxu0 %v3780
      %5923 = vmatprep.subr.mxu0 0.0
      %5924 = vmatpush2.msra.mxu0 %v3779
      %5925 = vmatprep.subr.mxu0 0.0
      %5926 = vmatpush2.msra.mxu0 %v3778
      %5927 = vmatprep.subr.mxu0 0.0
      %5928 = vmatpush2.msra.mxu0 %v3777
      %5929 = vmatprep.subr.mxu0 0.0
      %5930 = vmatpush2.msra.mxu0 %v3776
      %5931 = vmatprep.subr.mxu0 0.0
      %5932 = vmatpush2.msra.mxu0 %v3775
      %5933 = vmatprep.subr.mxu0 0.0
      %5934 = vmatpush2.msra.mxu0 %v3774
      %5935 = vmatprep.subr.mxu0 0.0
      %5936 = vmatpush2.msra.mxu0 %v3773
      %5937 = vmatprep.subr.mxu0 0.0
      %5938 = vmatpush2.msra.mxu0 %v3772
      %5939 = vmatprep.subr.mxu0 0.0
      %5940 = vmatpush2.msra.mxu0 %v3771
      %5941 = vmatprep.subr.mxu0 0.0
      %5942 = vmatpush2.msra.mxu0 %v3770
      %5943 = vmatprep.subr.mxu0 0.0
      %5944 = vmatpush2.msra.mxu0 %v3769
      %5945 = vmatprep.subr.mxu0 0.0
      %5946 = vmatpush2.msra.mxu0 %v3768
      %5947 = vmatprep.subr.mxu0 0.0
      %5948 = vmatpush2.msra.mxu0 %v3767
      %5949 = vmatprep.mubr.f32.mxu0 %v5810
      %5950 = vmatmul.mubr.f32.gmra.mxu0 %v5809
      %v5951 = vpop.f32.mrf.mxu0
      %v5952 = vadd.f32 %v5882, %v5951
      %v5953 = vpop.f32.mrf.mxu0
      %5954 = vdwg.mxu0
      %5955 = vmatprep.subr.mxu0 0.0
      %5956 = vmatpush1.msra.mxu0 %v3798
      %5957 = vmatprep.subr.mxu0 0.0
      %5958 = vmatpush1.msra.mxu0 %v3797
      %5959 = vmatprep.subr.mxu0 0.0
      %5960 = vmatpush1.msra.mxu0 %v3796
      %5961 = vmatprep.subr.mxu0 0.0
      %5962 = vmatpush1.msra.mxu0 %v3795
      %5963 = vmatprep.subr.mxu0 0.0
      %5964 = vmatpush1.msra.mxu0 %v3794
      %5965 = vmatprep.subr.mxu0 0.0
      %5966 = vmatpush1.msra.mxu0 %v3793
      %5967 = vmatprep.subr.mxu0 0.0
      %5968 = vmatpush1.msra.mxu0 %v3792
      %5969 = vmatprep.subr.mxu0 0.0
      %5970 = vmatpush1.msra.mxu0 %v3791
      %5971 = vmatprep.subr.mxu0 0.0
      %5972 = vmatpush1.msra.mxu0 %v3790
      %5973 = vmatprep.subr.mxu0 0.0
      %5974 = vmatpush1.msra.mxu0 %v3789
      %5975 = vmatprep.subr.mxu0 0.0
      %5976 = vmatpush1.msra.mxu0 %v3788
      %5977 = vmatprep.subr.mxu0 0.0
      %5978 = vmatpush1.msra.mxu0 %v3787
      %5979 = vmatprep.subr.mxu0 0.0
      %5980 = vmatpush1.msra.mxu0 %v3786
      %5981 = vmatprep.subr.mxu0 0.0
      %5982 = vmatpush1.msra.mxu0 %v3785
      %5983 = vmatprep.subr.mxu0 0.0
      %5984 = vmatpush1.msra.mxu0 %v3784
      %5985 = vmatprep.subr.mxu0 0.0
      %5986 = vmatpush1.msra.mxu0 %v3783
      %5987 = vmatprep.subr.mxu0 0.0
      %5988 = vmatpush2.msra.mxu0 %v3814
      %5989 = vmatprep.subr.mxu0 0.0
      %5990 = vmatpush2.msra.mxu0 %v3813
      %5991 = vmatprep.subr.mxu0 0.0
      %5992 = vmatpush2.msra.mxu0 %v3812
      %5993 = vmatprep.subr.mxu0 0.0
      %5994 = vmatpush2.msra.mxu0 %v3811
      %5995 = vmatprep.subr.mxu0 0.0
      %5996 = vmatpush2.msra.mxu0 %v3810
      %5997 = vmatprep.subr.mxu0 0.0
      %5998 = vmatpush2.msra.mxu0 %v3809
      %5999 = vmatprep.subr.mxu0 0.0
      %6000 = vmatpush2.msra.mxu0 %v3808
      %6001 = vmatprep.subr.mxu0 0.0
      %6002 = vmatpush2.msra.mxu0 %v3807
      %6003 = vmatprep.subr.mxu0 0.0
      %6004 = vmatpush2.msra.mxu0 %v3806
      %6005 = vmatprep.subr.mxu0 0.0
      %6006 = vmatpush2.msra.mxu0 %v3805
      %6007 = vmatprep.subr.mxu0 0.0
      %6008 = vmatpush2.msra.mxu0 %v3804
      %6009 = vmatprep.subr.mxu0 0.0
      %6010 = vmatpush2.msra.mxu0 %v3803
      %6011 = vmatprep.subr.mxu0 0.0
      %6012 = vmatpush2.msra.mxu0 %v3802
      %6013 = vmatprep.subr.mxu0 0.0
      %6014 = vmatpush2.msra.mxu0 %v3801
      %6015 = vmatprep.subr.mxu0 0.0
      %6016 = vmatpush2.msra.mxu0 %v3800
      %6017 = vmatprep.subr.mxu0 0.0
      %6018 = vmatpush2.msra.mxu0 %v3799
      %6019 = vmatprep.mubr.f32.mxu0 %v5812
      %6020 = vmatmul.mubr.f32.gmra.mxu0 %v5811
      %v6021 = vpop.f32.mrf.mxu0
      %v6022 = vadd.f32 %v5952, %v6021
      %v6023 = vpop.f32.mrf.mxu0
      %6024 = vdwg.mxu0
      %6025 = vmatprep.subr.mxu0 0.0
      %6026 = vmatpush1.msra.mxu0 %v3830
      %6027 = vmatprep.subr.mxu0 0.0
      %6028 = vmatpush1.msra.mxu0 %v3829
      %6029 = vmatprep.subr.mxu0 0.0
      %6030 = vmatpush1.msra.mxu0 %v3828
      %6031 = vmatprep.subr.mxu0 0.0
      %6032 = vmatpush1.msra.mxu0 %v3827
      %6033 = vmatprep.subr.mxu0 0.0
      %6034 = vmatpush1.msra.mxu0 %v3826
      %6035 = vmatprep.subr.mxu0 0.0
      %6036 = vmatpush1.msra.mxu0 %v3825
      %6037 = vmatprep.subr.mxu0 0.0
      %6038 = vmatpush1.msra.mxu0 %v3824
      %6039 = vmatprep.subr.mxu0 0.0
      %6040 = vmatpush1.msra.mxu0 %v3823
      %6041 = vmatprep.subr.mxu0 0.0
      %6042 = vmatpush1.msra.mxu0 %v3822
      %6043 = vmatprep.subr.mxu0 0.0
      %6044 = vmatpush1.msra.mxu0 %v3821
      %6045 = vmatprep.subr.mxu0 0.0
      %6046 = vmatpush1.msra.mxu0 %v3820
      %6047 = vmatprep.subr.mxu0 0.0
      %6048 = vmatpush1.msra.mxu0 %v3819
      %6049 = vmatprep.subr.mxu0 0.0
      %6050 = vmatpush1.msra.mxu0 %v3818
      %6051 = vmatprep.subr.mxu0 0.0
      %6052 = vmatpush1.msra.mxu0 %v3817
      %6053 = vmatprep.subr.mxu0 0.0
      %6054 = vmatpush1.msra.mxu0 %v3816
      %6055 = vmatprep.subr.mxu0 0.0
      %6056 = vmatpush1.msra.mxu0 %v3815
      %6057 = vmatprep.subr.mxu0 0.0
      %6058 = vmatpush2.msra.mxu0 %v3846
      %6059 = vmatprep.subr.mxu0 0.0
      %6060 = vmatpush2.msra.mxu0 %v3845
      %6061 = vmatprep.subr.mxu0 0.0
      %6062 = vmatpush2.msra.mxu0 %v3844
      %6063 = vmatprep.subr.mxu0 0.0
      %6064 = vmatpush2.msra.mxu0 %v3843
      %6065 = vmatprep.subr.mxu0 0.0
      %6066 = vmatpush2.msra.mxu0 %v3842
      %6067 = vmatprep.subr.mxu0 0.0
      %6068 = vmatpush2.msra.mxu0 %v3841
      %6069 = vmatprep.subr.mxu0 0.0
      %6070 = vmatpush2.msra.mxu0 %v3840
      %6071 = vmatprep.subr.mxu0 0.0
      %6072 = vmatpush2.msra.mxu0 %v3839
      %6073 = vmatprep.subr.mxu0 0.0
      %6074 = vmatpush2.msra.mxu0 %v3838
      %6075 = vmatprep.subr.mxu0 0.0
      %6076 = vmatpush2.msra.mxu0 %v3837
      %6077 = vmatprep.subr.mxu0 0.0
      %6078 = vmatpush2.msra.mxu0 %v3836
      %6079 = vmatprep.subr.mxu0 0.0
      %6080 = vmatpush2.msra.mxu0 %v3835
      %6081 = vmatprep.subr.mxu0 0.0
      %6082 = vmatpush2.msra.mxu0 %v3834
      %6083 = vmatprep.subr.mxu0 0.0
      %6084 = vmatpush2.msra.mxu0 %v3833
      %6085 = vmatprep.subr.mxu0 0.0
      %6086 = vmatpush2.msra.mxu0 %v3832
      %6087 = vmatprep.subr.mxu0 0.0
      %6088 = vmatpush2.msra.mxu0 %v3831
      %6089 = vmatprep.mubr.f32.mxu0 %v5814
      %6090 = vmatmul.mubr.f32.gmra.mxu0 %v5813
      %v6091 = vpop.f32.mrf.mxu0
      %v6092 = vadd.f32 %v6022, %v6091
      %v6093 = vpop.f32.mrf.mxu0
      %6094 = vdwg.mxu0
      %v6095 = vld [vmem:[#allocation2 + $0x1c0] sm:$0xff]
      %v6096 = vld [vmem:[#allocation2 + $0x1c8] sm:$0xff]
      %v6097 = vld [vmem:[#allocation2 + $0x1d0] sm:$0xff]
      %v6098 = vld [vmem:[#allocation2 + $0x1d8] sm:$0xff]
      %v6099 = vld [vmem:[#allocation2 + $0x1e0] sm:$0xff]
      %v6100 = vld [vmem:[#allocation2 + $0x1e8] sm:$0xff]
      %v6101 = vld [vmem:[#allocation2 + $0x1f0] sm:$0xff]
      %v6102 = vld [vmem:[#allocation2 + $0x1f8] sm:$0xff]
      %v6103 = vmul.f32 %v6095, %v5791
      %v6104 = vmul.f32 %v6096, %v5792
      %v6105 = vmul.f32 %v6097, %v5793
      %v6106 = vmul.f32 %v6098, %v5794
      %v6107 = vmul.f32 %v6099, %v5795
      %v6108 = vmul.f32 %v6100, %v5796
      %v6109 = vmul.f32 %v6101, %v5797
      %v6110 = vmul.f32 %v6102, %v5798
      %v6111 = vld [vmem:[#allocation3 + $0x1c0] sm:$0xff]
      %v6112 = vld [vmem:[#allocation3 + $0x1c8] sm:$0xff]
      %v6113 = vld [vmem:[#allocation3 + $0x1d0] sm:$0xff]
      %v6114 = vld [vmem:[#allocation3 + $0x1d8] sm:$0xff]
      %v6115 = vld [vmem:[#allocation3 + $0x1e0] sm:$0xff]
      %v6116 = vld [vmem:[#allocation3 + $0x1e8] sm:$0xff]
      %v6117 = vld [vmem:[#allocation3 + $0x1f0] sm:$0xff]
      %v6118 = vld [vmem:[#allocation3 + $0x1f8] sm:$0xff]
      %v6119 = vadd.f32 %v6103, %v6111
      %v6120 = vadd.f32 %v6104, %v6112
      %v6121 = vadd.f32 %v6105, %v6113
      %v6122 = vadd.f32 %v6106, %v6114
      %v6123 = vadd.f32 %v6107, %v6115
      %v6124 = vadd.f32 %v6108, %v6116
      %v6125 = vadd.f32 %v6109, %v6117
      %v6126 = vadd.f32 %v6110, %v6118
      %v6127 = vld [vmem:[#allocation4 + $0x1c0] sm:$0xff]
      %v6128 = vld [vmem:[#allocation4 + $0x1c8] sm:$0xff]
      %v6129 = vld [vmem:[#allocation4 + $0x1d0] sm:$0xff]
      %v6130 = vld [vmem:[#allocation4 + $0x1d8] sm:$0xff]
      %v6131 = vld [vmem:[#allocation4 + $0x1e0] sm:$0xff]
      %v6132 = vld [vmem:[#allocation4 + $0x1e8] sm:$0xff]
      %v6133 = vld [vmem:[#allocation4 + $0x1f0] sm:$0xff]
      %v6134 = vld [vmem:[#allocation4 + $0x1f8] sm:$0xff]
      %v6135 = vmul.f32 %v6119, %v6127
      %v6136 = vmul.f32 %v6120, %v6128
      %v6137 = vmul.f32 %v6121, %v6129
      %v6138 = vmul.f32 %v6122, %v6130
      %v6139 = vmul.f32 %v6123, %v6131
      %v6140 = vmul.f32 %v6124, %v6132
      %v6141 = vmul.f32 %v6125, %v6133
      %v6142 = vmul.f32 %v6126, %v6134
      %6143 = vmatprep.subr.mxu0 0.0
      %6144 = vmatpush1.msra.mxu0 %v3734
      %6145 = vmatprep.subr.mxu0 0.0
      %6146 = vmatpush1.msra.mxu0 %v3733
      %6147 = vmatprep.subr.mxu0 0.0
      %6148 = vmatpush1.msra.mxu0 %v3732
      %6149 = vmatprep.subr.mxu0 0.0
      %6150 = vmatpush1.msra.mxu0 %v3731
      %6151 = vmatprep.subr.mxu0 0.0
      %6152 = vmatpush1.msra.mxu0 %v3730
      %6153 = vmatprep.subr.mxu0 0.0
      %6154 = vmatpush1.msra.mxu0 %v3729
      %6155 = vmatprep.subr.mxu0 0.0
      %6156 = vmatpush1.msra.mxu0 %v3728
      %6157 = vmatprep.subr.mxu0 0.0
      %6158 = vmatpush1.msra.mxu0 %v3727
      %6159 = vmatprep.subr.mxu0 0.0
      %6160 = vmatpush1.msra.mxu0 %v3726
      %6161 = vmatprep.subr.mxu0 0.0
      %6162 = vmatpush1.msra.mxu0 %v3725
      %6163 = vmatprep.subr.mxu0 0.0
      %6164 = vmatpush1.msra.mxu0 %v3724
      %6165 = vmatprep.subr.mxu0 0.0
      %6166 = vmatpush1.msra.mxu0 %v3723
      %6167 = vmatprep.subr.mxu0 0.0
      %6168 = vmatpush1.msra.mxu0 %v3722
      %6169 = vmatprep.subr.mxu0 0.0
      %6170 = vmatpush1.msra.mxu0 %v3721
      %6171 = vmatprep.subr.mxu0 0.0
      %6172 = vmatpush1.msra.mxu0 %v3720
      %6173 = vmatprep.subr.mxu0 0.0
      %6174 = vmatpush1.msra.mxu0 %v3719
      %6175 = vmatprep.subr.mxu0 0.0
      %6176 = vmatpush2.msra.mxu0 %v3750
      %6177 = vmatprep.subr.mxu0 0.0
      %6178 = vmatpush2.msra.mxu0 %v3749
      %6179 = vmatprep.subr.mxu0 0.0
      %6180 = vmatpush2.msra.mxu0 %v3748
      %6181 = vmatprep.subr.mxu0 0.0
      %6182 = vmatpush2.msra.mxu0 %v3747
      %6183 = vmatprep.subr.mxu0 0.0
      %6184 = vmatpush2.msra.mxu0 %v3746
      %6185 = vmatprep.subr.mxu0 0.0
      %6186 = vmatpush2.msra.mxu0 %v3745
      %6187 = vmatprep.subr.mxu0 0.0
      %6188 = vmatpush2.msra.mxu0 %v3744
      %6189 = vmatprep.subr.mxu0 0.0
      %6190 = vmatpush2.msra.mxu0 %v3743
      %6191 = vmatprep.subr.mxu0 0.0
      %6192 = vmatpush2.msra.mxu0 %v3742
      %6193 = vmatprep.subr.mxu0 0.0
      %6194 = vmatpush2.msra.mxu0 %v3741
      %6195 = vmatprep.subr.mxu0 0.0
      %6196 = vmatpush2.msra.mxu0 %v3740
      %6197 = vmatprep.subr.mxu0 0.0
      %6198 = vmatpush2.msra.mxu0 %v3739
      %6199 = vmatprep.subr.mxu0 0.0
      %6200 = vmatpush2.msra.mxu0 %v3738
      %6201 = vmatprep.subr.mxu0 0.0
      %6202 = vmatpush2.msra.mxu0 %v3737
      %6203 = vmatprep.subr.mxu0 0.0
      %6204 = vmatpush2.msra.mxu0 %v3736
      %6205 = vmatprep.subr.mxu0 0.0
      %6206 = vmatpush2.msra.mxu0 %v3735
      %6207 = vmatprep.mubr.f32.mxu0 %v6136
      %6208 = vmatmul.mubr.f32.gmra.mxu0 %v6135
      %v6209 = vpop.f32.mrf.mxu0
      %v6210 = vadd.f32 0.0, %v6209
      %v6211 = vpop.f32.mrf.mxu0
      %6212 = vdwg.mxu0
      %6213 = vmatprep.subr.mxu0 0.0
      %6214 = vmatpush1.msra.mxu0 %v3766
      %6215 = vmatprep.subr.mxu0 0.0
      %6216 = vmatpush1.msra.mxu0 %v3765
      %6217 = vmatprep.subr.mxu0 0.0
      %6218 = vmatpush1.msra.mxu0 %v3764
      %6219 = vmatprep.subr.mxu0 0.0
      %6220 = vmatpush1.msra.mxu0 %v3763
      %6221 = vmatprep.subr.mxu0 0.0
      %6222 = vmatpush1.msra.mxu0 %v3762
      %6223 = vmatprep.subr.mxu0 0.0
      %6224 = vmatpush1.msra.mxu0 %v3761
      %6225 = vmatprep.subr.mxu0 0.0
      %6226 = vmatpush1.msra.mxu0 %v3760
      %6227 = vmatprep.subr.mxu0 0.0
      %6228 = vmatpush1.msra.mxu0 %v3759
      %6229 = vmatprep.subr.mxu0 0.0
      %6230 = vmatpush1.msra.mxu0 %v3758
      %6231 = vmatprep.subr.mxu0 0.0
      %6232 = vmatpush1.msra.mxu0 %v3757
      %6233 = vmatprep.subr.mxu0 0.0
      %6234 = vmatpush1.msra.mxu0 %v3756
      %6235 = vmatprep.subr.mxu0 0.0
      %6236 = vmatpush1.msra.mxu0 %v3755
      %6237 = vmatprep.subr.mxu0 0.0
      %6238 = vmatpush1.msra.mxu0 %v3754
      %6239 = vmatprep.subr.mxu0 0.0
      %6240 = vmatpush1.msra.mxu0 %v3753
      %6241 = vmatprep.subr.mxu0 0.0
      %6242 = vmatpush1.msra.mxu0 %v3752
      %6243 = vmatprep.subr.mxu0 0.0
      %6244 = vmatpush1.msra.mxu0 %v3751
      %6245 = vmatprep.subr.mxu0 0.0
      %6246 = vmatpush2.msra.mxu0 %v3782
      %6247 = vmatprep.subr.mxu0 0.0
      %6248 = vmatpush2.msra.mxu0 %v3781
      %6249 = vmatprep.subr.mxu0 0.0
      %6250 = vmatpush2.msra.mxu0 %v3780
      %6251 = vmatprep.subr.mxu0 0.0
      %6252 = vmatpush2.msra.mxu0 %v3779
      %6253 = vmatprep.subr.mxu0 0.0
      %6254 = vmatpush2.msra.mxu0 %v3778
      %6255 = vmatprep.subr.mxu0 0.0
      %6256 = vmatpush2.msra.mxu0 %v3777
      %6257 = vmatprep.subr.mxu0 0.0
      %6258 = vmatpush2.msra.mxu0 %v3776
      %6259 = vmatprep.subr.mxu0 0.0
      %6260 = vmatpush2.msra.mxu0 %v3775
      %6261 = vmatprep.subr.mxu0 0.0
      %6262 = vmatpush2.msra.mxu0 %v3774
      %6263 = vmatprep.subr.mxu0 0.0
      %6264 = vmatpush2.msra.mxu0 %v3773
      %6265 = vmatprep.subr.mxu0 0.0
      %6266 = vmatpush2.msra.mxu0 %v3772
      %6267 = vmatprep.subr.mxu0 0.0
      %6268 = vmatpush2.msra.mxu0 %v3771
      %6269 = vmatprep.subr.mxu0 0.0
      %6270 = vmatpush2.msra.mxu0 %v3770
      %6271 = vmatprep.subr.mxu0 0.0
      %6272 = vmatpush2.msra.mxu0 %v3769
      %6273 = vmatprep.subr.mxu0 0.0
      %6274 = vmatpush2.msra.mxu0 %v3768
      %6275 = vmatprep.subr.mxu0 0.0
      %6276 = vmatpush2.msra.mxu0 %v3767
      %6277 = vmatprep.mubr.f32.mxu0 %v6138
      %6278 = vmatmul.mubr.f32.gmra.mxu0 %v6137
      %v6279 = vpop.f32.mrf.mxu0
      %v6280 = vadd.f32 %v6210, %v6279
      %v6281 = vpop.f32.mrf.mxu0
      %6282 = vdwg.mxu0
      %6283 = vmatprep.subr.mxu0 0.0
      %6284 = vmatpush1.msra.mxu0 %v3798
      %6285 = vmatprep.subr.mxu0 0.0
      %6286 = vmatpush1.msra.mxu0 %v3797
      %6287 = vmatprep.subr.mxu0 0.0
      %6288 = vmatpush1.msra.mxu0 %v3796
      %6289 = vmatprep.subr.mxu0 0.0
      %6290 = vmatpush1.msra.mxu0 %v3795
      %6291 = vmatprep.subr.mxu0 0.0
      %6292 = vmatpush1.msra.mxu0 %v3794
      %6293 = vmatprep.subr.mxu0 0.0
      %6294 = vmatpush1.msra.mxu0 %v3793
      %6295 = vmatprep.subr.mxu0 0.0
      %6296 = vmatpush1.msra.mxu0 %v3792
      %6297 = vmatprep.subr.mxu0 0.0
      %6298 = vmatpush1.msra.mxu0 %v3791
      %6299 = vmatprep.subr.mxu0 0.0
      %6300 = vmatpush1.msra.mxu0 %v3790
      %6301 = vmatprep.subr.mxu0 0.0
      %6302 = vmatpush1.msra.mxu0 %v3789
      %6303 = vmatprep.subr.mxu0 0.0
      %6304 = vmatpush1.msra.mxu0 %v3788
      %6305 = vmatprep.subr.mxu0 0.0
      %6306 = vmatpush1.msra.mxu0 %v3787
      %6307 = vmatprep.subr.mxu0 0.0
      %6308 = vmatpush1.msra.mxu0 %v3786
      %6309 = vmatprep.subr.mxu0 0.0
      %6310 = vmatpush1.msra.mxu0 %v3785
      %6311 = vmatprep.subr.mxu0 0.0
      %6312 = vmatpush1.msra.mxu0 %v3784
      %6313 = vmatprep.subr.mxu0 0.0
      %6314 = vmatpush1.msra.mxu0 %v3783
      %6315 = vmatprep.subr.mxu0 0.0
      %6316 = vmatpush2.msra.mxu0 %v3814
      %6317 = vmatprep.subr.mxu0 0.0
      %6318 = vmatpush2.msra.mxu0 %v3813
      %6319 = vmatprep.subr.mxu0 0.0
      %6320 = vmatpush2.msra.mxu0 %v3812
      %6321 = vmatprep.subr.mxu0 0.0
      %6322 = vmatpush2.msra.mxu0 %v3811
      %6323 = vmatprep.subr.mxu0 0.0
      %6324 = vmatpush2.msra.mxu0 %v3810
      %6325 = vmatprep.subr.mxu0 0.0
      %6326 = vmatpush2.msra.mxu0 %v3809
      %6327 = vmatprep.subr.mxu0 0.0
      %6328 = vmatpush2.msra.mxu0 %v3808
      %6329 = vmatprep.subr.mxu0 0.0
      %6330 = vmatpush2.msra.mxu0 %v3807
      %6331 = vmatprep.subr.mxu0 0.0
      %6332 = vmatpush2.msra.mxu0 %v3806
      %6333 = vmatprep.subr.mxu0 0.0
      %6334 = vmatpush2.msra.mxu0 %v3805
      %6335 = vmatprep.subr.mxu0 0.0
      %6336 = vmatpush2.msra.mxu0 %v3804
      %6337 = vmatprep.subr.mxu0 0.0
      %6338 = vmatpush2.msra.mxu0 %v3803
      %6339 = vmatprep.subr.mxu0 0.0
      %6340 = vmatpush2.msra.mxu0 %v3802
      %6341 = vmatprep.subr.mxu0 0.0
      %6342 = vmatpush2.msra.mxu0 %v3801
      %6343 = vmatprep.subr.mxu0 0.0
      %6344 = vmatpush2.msra.mxu0 %v3800
      %6345 = vmatprep.subr.mxu0 0.0
      %6346 = vmatpush2.msra.mxu0 %v3799
      %6347 = vmatprep.mubr.f32.mxu0 %v6140
      %6348 = vmatmul.mubr.f32.gmra.mxu0 %v6139
      %v6349 = vpop.f32.mrf.mxu0
      %v6350 = vadd.f32 %v6280, %v6349
      %v6351 = vpop.f32.mrf.mxu0
      %6352 = vdwg.mxu0
      %6353 = vmatprep.subr.mxu0 0.0
      %6354 = vmatpush1.msra.mxu0 %v3830
      %6355 = vmatprep.subr.mxu0 0.0
      %6356 = vmatpush1.msra.mxu0 %v3829
      %6357 = vmatprep.subr.mxu0 0.0
      %6358 = vmatpush1.msra.mxu0 %v3828
      %6359 = vmatprep.subr.mxu0 0.0
      %6360 = vmatpush1.msra.mxu0 %v3827
      %6361 = vmatprep.subr.mxu0 0.0
      %6362 = vmatpush1.msra.mxu0 %v3826
      %6363 = vmatprep.subr.mxu0 0.0
      %6364 = vmatpush1.msra.mxu0 %v3825
      %6365 = vmatprep.subr.mxu0 0.0
      %6366 = vmatpush1.msra.mxu0 %v3824
      %6367 = vmatprep.subr.mxu0 0.0
      %6368 = vmatpush1.msra.mxu0 %v3823
      %6369 = vmatprep.subr.mxu0 0.0
      %6370 = vmatpush1.msra.mxu0 %v3822
      %6371 = vmatprep.subr.mxu0 0.0
      %6372 = vmatpush1.msra.mxu0 %v3821
      %6373 = vmatprep.subr.mxu0 0.0
      %6374 = vmatpush1.msra.mxu0 %v3820
      %6375 = vmatprep.subr.mxu0 0.0
      %6376 = vmatpush1.msra.mxu0 %v3819
      %6377 = vmatprep.subr.mxu0 0.0
      %6378 = vmatpush1.msra.mxu0 %v3818
      %6379 = vmatprep.subr.mxu0 0.0
      %6380 = vmatpush1.msra.mxu0 %v3817
      %6381 = vmatprep.subr.mxu0 0.0
      %6382 = vmatpush1.msra.mxu0 %v3816
      %6383 = vmatprep.subr.mxu0 0.0
      %6384 = vmatpush1.msra.mxu0 %v3815
      %6385 = vmatprep.subr.mxu0 0.0
      %6386 = vmatpush2.msra.mxu0 %v3846
      %6387 = vmatprep.subr.mxu0 0.0
      %6388 = vmatpush2.msra.mxu0 %v3845
      %6389 = vmatprep.subr.mxu0 0.0
      %6390 = vmatpush2.msra.mxu0 %v3844
      %6391 = vmatprep.subr.mxu0 0.0
      %6392 = vmatpush2.msra.mxu0 %v3843
      %6393 = vmatprep.subr.mxu0 0.0
      %6394 = vmatpush2.msra.mxu0 %v3842
      %6395 = vmatprep.subr.mxu0 0.0
      %6396 = vmatpush2.msra.mxu0 %v3841
      %6397 = vmatprep.subr.mxu0 0.0
      %6398 = vmatpush2.msra.mxu0 %v3840
      %6399 = vmatprep.subr.mxu0 0.0
      %6400 = vmatpush2.msra.mxu0 %v3839
      %6401 = vmatprep.subr.mxu0 0.0
      %6402 = vmatpush2.msra.mxu0 %v3838
      %6403 = vmatprep.subr.mxu0 0.0
      %6404 = vmatpush2.msra.mxu0 %v3837
      %6405 = vmatprep.subr.mxu0 0.0
      %6406 = vmatpush2.msra.mxu0 %v3836
      %6407 = vmatprep.subr.mxu0 0.0
      %6408 = vmatpush2.msra.mxu0 %v3835
      %6409 = vmatprep.subr.mxu0 0.0
      %6410 = vmatpush2.msra.mxu0 %v3834
      %6411 = vmatprep.subr.mxu0 0.0
      %6412 = vmatpush2.msra.mxu0 %v3833
      %6413 = vmatprep.subr.mxu0 0.0
      %6414 = vmatpush2.msra.mxu0 %v3832
      %6415 = vmatprep.subr.mxu0 0.0
      %6416 = vmatpush2.msra.mxu0 %v3831
      %6417 = vmatprep.mubr.f32.mxu0 %v6142
      %6418 = vmatmul.mubr.f32.gmra.mxu0 %v6141
      %v6419 = vpop.f32.mrf.mxu0
      %v6420 = vadd.f32 %v6350, %v6419
      %v6421 = vpop.f32.mrf.mxu0
      %6422 = vdwg.mxu0
      %v6423 = vld [vmem:[%s8] sm:$0x1]
      %v6425 = vlaneseq
      %v6426 = vshrl.u32 %v6425, 7
      %v6427 = vsub.s32 0, %v6426
      %v6428 = vrot.slane %v6423, %v6427
      %v6430 = vmul.f32 %v6428, %v746
      %v6431 = vmul.f32 %v6428, %v747
      %v6432 = vmul.f32 %v6428, %v748
      %v6433 = vmul.f32 %v6428, %v749
      %v6434 = vmul.f32 %v6428, %v750
      %v6435 = vmul.f32 %v6428, %v751
      %v6436 = vmul.f32 %v6428, %v752
      %v6437 = vmul.f32 %v6428, %v753
      %v6438 = vadd.f32 %v4124, %v6430
      %v6439 = vadd.f32 %v4452, %v6431
      %v6440 = vadd.f32 %v4780, %v6432
      %v6441 = vadd.f32 %v5108, %v6433
      %v6442 = vadd.f32 %v5436, %v6434
      %v6443 = vadd.f32 %v5764, %v6435
      %v6444 = vadd.f32 %v6092, %v6436
      %v6445 = vadd.f32 %v6420, %v6437
      %v6446 = vsub.f32 0.0, %v575
      %v6447 = vsub.f32 0.0, %v580
      %v6448 = vsub.f32 0.0, %v585
      %v6449 = vsub.f32 0.0, %v590
      %v6450 = vsub.f32 0.0, %v595
      %v6451 = vsub.f32 0.0, %v600
      %v6452 = vsub.f32 0.0, %v605
      %v6453 = vsub.f32 0.0, %v610
      %v6454 = vmul.f32 %v6446, 1.442695
      %v6455 = vpow.pop %v6454
      %v6456 = vmul.f32 %v6447, 1.442695
      %v6457 = vpow.pop %v6456
      %v6458 = vmul.f32 %v6448, 1.442695
      %v6459 = vpow.pop %v6458
      %v6460 = vmul.f32 %v6449, 1.442695
      %v6461 = vpow.pop %v6460
      %v6462 = vmul.f32 %v6450, 1.442695
      %v6463 = vpow.pop %v6462
      %v6464 = vmul.f32 %v6451, 1.442695
      %v6465 = vpow.pop %v6464
      %v6466 = vmul.f32 %v6452, 1.442695
      %v6467 = vpow.pop %v6466
      %v6468 = vmul.f32 %v6453, 1.442695
      %v6469 = vpow.pop %v6468
      %v6470 = vadd.f32 %v6455, 1.0
      %v6471 = vadd.f32 %v6457, 1.0
      %v6472 = vadd.f32 %v6459, 1.0
      %v6473 = vadd.f32 %v6461, 1.0
      %v6474 = vadd.f32 %v6463, 1.0
      %v6475 = vadd.f32 %v6465, 1.0
      %v6476 = vadd.f32 %v6467, 1.0
      %v6477 = vadd.f32 %v6469, 1.0
      %v6478 = vrcp.pop %v6470
      %v6479 = vmul.f32 1.0, %v6478
      %v6480 = vrcp.pop %v6471
      %v6481 = vmul.f32 1.0, %v6480
      %v6482 = vrcp.pop %v6472
      %v6483 = vmul.f32 1.0, %v6482
      %v6484 = vrcp.pop %v6473
      %v6485 = vmul.f32 1.0, %v6484
      %v6486 = vrcp.pop %v6474
      %v6487 = vmul.f32 1.0, %v6486
      %v6488 = vrcp.pop %v6475
      %v6489 = vmul.f32 1.0, %v6488
      %v6490 = vrcp.pop %v6476
      %v6491 = vmul.f32 1.0, %v6490
      %v6492 = vrcp.pop %v6477
      %v6493 = vmul.f32 1.0, %v6492
      %v6494 = vmul.f32 %v575, %v6479
      %v6495 = vmul.f32 %v580, %v6481
      %v6496 = vmul.f32 %v585, %v6483
      %v6497 = vmul.f32 %v590, %v6485
      %v6498 = vmul.f32 %v595, %v6487
      %v6499 = vmul.f32 %v600, %v6489
      %v6500 = vmul.f32 %v605, %v6491
      %v6501 = vmul.f32 %v610, %v6493
      %6510 = vrot.lane.b32.xlu0 %v6494, 64
      %v6511 = vpop.permute.xlu0 %6510
      %6512 = vrot.lane.b32.xlu0 %v6495, 64
      %v6513 = vpop.permute.xlu0 %6512
      %6514 = vrot.lane.b32.xlu0 %v6496, 64
      %v6515 = vpop.permute.xlu0 %6514
      %6516 = vrot.lane.b32.xlu0 %v6497, 64
      %v6517 = vpop.permute.xlu0 %6516
      %6518 = vrot.lane.b32.xlu0 %v6498, 64
      %v6519 = vpop.permute.xlu0 %6518
      %6520 = vrot.lane.b32.xlu0 %v6499, 64
      %v6521 = vpop.permute.xlu0 %6520
      %6522 = vrot.lane.b32.xlu0 %v6500, 64
      %v6523 = vpop.permute.xlu0 %6522
      %6524 = vrot.lane.b32.xlu0 %v6501, 64
      %v6525 = vpop.permute.xlu0 %6524
      %v6534 = vmul.f32 %v6438, %v6511
      %v6535 = vmul.f32 %v6439, %v6513
      %v6536 = vmul.f32 %v6440, %v6515
      %v6537 = vmul.f32 %v6441, %v6517
      %v6538 = vmul.f32 %v6442, %v6519
      %v6539 = vmul.f32 %v6443, %v6521
      %v6540 = vmul.f32 %v6444, %v6523
      %v6541 = vmul.f32 %v6445, %v6525
      %v6542 = vld [vmem:[%s9] sm:$0xff]
      %v6543 = vld [vmem:[%s9 + $0x8] sm:$0xff]
      %v6544 = vld [vmem:[%s9 + $0x10] sm:$0xff]
      %v6545 = vld [vmem:[%s9 + $0x18] sm:$0xff]
      %v6546 = vld [vmem:[%s9 + $0x20] sm:$0xff]
      %v6547 = vld [vmem:[%s9 + $0x28] sm:$0xff]
      %v6548 = vld [vmem:[%s9 + $0x30] sm:$0xff]
      %v6549 = vld [vmem:[%s9 + $0x38] sm:$0xff]
      %v6551 = vsel %vm762, %v6534, 0
      %v6554 = vsel %vm762, %v6535, 0
      %v6557 = vsel %vm762, %v6536, 0
      %v6560 = vsel %vm762, %v6537, 0
      %v6563 = vsel %vm762, %v6538, 0
      %v6566 = vsel %vm762, %v6539, 0
      %v6569 = vsel %vm762, %v6540, 0
      %v6572 = vsel %vm762, %v6541, 0
      %6574 = vmatprep.subr.mxu0 0.0
      %6575 = vmatpush1.msra.mxu0 0.0
      %6576 = vmatprep.subr.mxu0 0.0
      %6577 = vmatpush1.msra.mxu0 0.0
      %6578 = vmatprep.subr.mxu0 0.0
      %6579 = vmatpush1.msra.mxu0 0.0
      %6580 = vmatprep.subr.mxu0 0.0
      %6581 = vmatpush1.msra.mxu0 0.0
      %6582 = vmatprep.subr.mxu0 0.0
      %6583 = vmatpush1.msra.mxu0 0.0
      %6584 = vmatprep.subr.mxu0 0.0
      %6585 = vmatpush1.msra.mxu0 0.0
      %6586 = vmatprep.subr.mxu0 0.0
      %6587 = vmatpush1.msra.mxu0 0.0
      %6588 = vmatprep.subr.mxu0 0.0
      %6589 = vmatpush1.msra.mxu0 0.0
      %6590 = vmatprep.subr.mxu0 0.0
      %6591 = vmatpush1.msra.mxu0 %v6549
      %6592 = vmatprep.subr.mxu0 0.0
      %6593 = vmatpush1.msra.mxu0 %v6548
      %6594 = vmatprep.subr.mxu0 0.0
      %6595 = vmatpush1.msra.mxu0 %v6547
      %6596 = vmatprep.subr.mxu0 0.0
      %6597 = vmatpush1.msra.mxu0 %v6546
      %6598 = vmatprep.subr.mxu0 0.0
      %6599 = vmatpush1.msra.mxu0 %v6545
      %6600 = vmatprep.subr.mxu0 0.0
      %6601 = vmatpush1.msra.mxu0 %v6544
      %6602 = vmatprep.subr.mxu0 0.0
      %6603 = vmatpush1.msra.mxu0 %v6543
      %6604 = vmatprep.subr.mxu0 0.0
      %6605 = vmatpush1.msra.mxu0 %v6542
      %6606 = vmatprep.subr.mxu0 0.0
      %6607 = vmatpush2.msra.mxu0 0.0
      %6608 = vmatprep.subr.mxu0 0.0
      %6609 = vmatpush2.msra.mxu0 0.0
      %6610 = vmatprep.subr.mxu0 0.0
      %6611 = vmatpush2.msra.mxu0 0.0
      %6612 = vmatprep.subr.mxu0 0.0
      %6613 = vmatpush2.msra.mxu0 0.0
      %6614 = vmatprep.subr.mxu0 0.0
      %6615 = vmatpush2.msra.mxu0 0.0
      %6616 = vmatprep.subr.mxu0 0.0
      %6617 = vmatpush2.msra.mxu0 0.0
      %6618 = vmatprep.subr.mxu0 0.0
      %6619 = vmatpush2.msra.mxu0 0.0
      %6620 = vmatprep.subr.mxu0 0.0
      %6621 = vmatpush2.msra.mxu0 0.0
      %6622 = vmatprep.subr.mxu0 0.0
      %6623 = vmatpush2.msra.mxu0 0.0
      %6624 = vmatprep.subr.mxu0 0.0
      %6625 = vmatpush2.msra.mxu0 0.0
      %6626 = vmatprep.subr.mxu0 0.0
      %6627 = vmatpush2.msra.mxu0 0.0
      %6628 = vmatprep.subr.mxu0 0.0
      %6629 = vmatpush2.msra.mxu0 0.0
      %6630 = vmatprep.subr.mxu0 0.0
      %6631 = vmatpush2.msra.mxu0 0.0
      %6632 = vmatprep.subr.mxu0 0.0
      %6633 = vmatpush2.msra.mxu0 0.0
      %6634 = vmatprep.subr.mxu0 0.0
      %6635 = vmatpush2.msra.mxu0 0.0
      %6636 = vmatprep.subr.mxu0 0.0
      %6637 = vmatpush2.msra.mxu0 0.0
      %6638 = vmatprep.mubr.f32.mxu0 0.0
      %6639 = vmatmul.mubr.f32.gmra.mxu0 %v6551
      %v6640 = vpop.f32.mrf.mxu0
      %v6641 = vadd.f32 0.0, %v6640
      %v6642 = vpop.f32.mrf.mxu0
      %6643 = vmatprep.mubr.f32.mxu0 0.0
      %6644 = vmatmul.mubr.f32.gmra.mxu0 %v6554
      %v6645 = vpop.f32.mrf.mxu0
      %v6646 = vadd.f32 0.0, %v6645
      %v6647 = vpop.f32.mrf.mxu0
      %6648 = vmatprep.mubr.f32.mxu0 0.0
      %6649 = vmatmul.mubr.f32.gmra.mxu0 %v6557
      %v6650 = vpop.f32.mrf.mxu0
      %v6651 = vadd.f32 0.0, %v6650
      %v6652 = vpop.f32.mrf.mxu0
      %6653 = vmatprep.mubr.f32.mxu0 0.0
      %6654 = vmatmul.mubr.f32.gmra.mxu0 %v6560
      %v6655 = vpop.f32.mrf.mxu0
      %v6656 = vadd.f32 0.0, %v6655
      %v6657 = vpop.f32.mrf.mxu0
      %6658 = vmatprep.mubr.f32.mxu0 0.0
      %6659 = vmatmul.mubr.f32.gmra.mxu0 %v6563
      %v6660 = vpop.f32.mrf.mxu0
      %v6661 = vadd.f32 0.0, %v6660
      %v6662 = vpop.f32.mrf.mxu0
      %6663 = vmatprep.mubr.f32.mxu0 0.0
      %6664 = vmatmul.mubr.f32.gmra.mxu0 %v6566
      %v6665 = vpop.f32.mrf.mxu0
      %v6666 = vadd.f32 0.0, %v6665
      %v6667 = vpop.f32.mrf.mxu0
      %6668 = vmatprep.mubr.f32.mxu0 0.0
      %6669 = vmatmul.mubr.f32.gmra.mxu0 %v6569
      %v6670 = vpop.f32.mrf.mxu0
      %v6671 = vadd.f32 0.0, %v6670
      %v6672 = vpop.f32.mrf.mxu0
      %6673 = vmatprep.mubr.f32.mxu0 0.0
      %6674 = vmatmul.mubr.f32.gmra.mxu0 %v6572
      %v6675 = vpop.f32.mrf.mxu0
      %v6676 = vadd.f32 0.0, %v6675
      %v6677 = vpop.f32.mrf.mxu0
      %6678 = vdwg.mxu0
      %6679 = vst.msk [vmem:[%s469] sm:$0xff] %vm483, %v6641
      %6680 = vst.msk [vmem:[%s469 + $0x8] sm:$0xff] %vm483, %v6646
      %6681 = vst.msk [vmem:[%s469 + $0x10] sm:$0xff] %vm483, %v6651
      %6682 = vst.msk [vmem:[%s469 + $0x18] sm:$0xff] %vm483, %v6656
      %6683 = vst.msk [vmem:[%s469 + $0x20] sm:$0xff] %vm483, %v6661
      %6684 = vst.msk [vmem:[%s469 + $0x28] sm:$0xff] %vm483, %v6666
      %6685 = vst.msk [vmem:[%s469 + $0x30] sm:$0xff] %vm483, %v6671
      %6686 = vst.msk [vmem:[%s469 + $0x38] sm:$0xff] %vm483, %v6676
      %s6687 = smul.u32 8, %s25
      %p6688 = scmp.lt.s32.totalorder %s6687, 15
      %s6689 = scalar_select %p6688, %s6687, 15
      %s6690 = smul.addr %s6689, 8
      %s6691 = scalar_lea.vmem %s14, %s6690
      // Predicated region
      $region77: #{tpu_custom_call.1} parent=75 // pred_check
        %p6692 = pneg %p342
      $region78: #{tpu_custom_call.1} parent=75 // pred_check_branch
        %6694 = sbr.rel (%p6692) target = $region80
      $region79: #{tpu_custom_call.1} parent=75 // pred_region
        %s6695 = smul.u32 8, %s25
      $region80: #{tpu_custom_call.1} parent=75 // pred_fallthru
        _
    $region76: #{tpu_custom_call.1} parent=5 // pred_fallthru
      _
    %p6696 = scmp.le.s32.totalorder 2, %s20
    // Predicated region
    $region81: #{tpu_custom_call.1} parent=5 // pred_check
      %p6697 = pneg %p6696
    $region82: #{tpu_custom_call.1} parent=5 // pred_check_branch
      %6699 = sbr.rel (%p6697) target = $region84
    $region83: #{tpu_custom_call.1} parent=5 // pred_region
      %s6700 = ssub.s32 %s20, 2
      // Predicated region
      $region85: #{tpu_custom_call.1} parent=83 // pred_check
        %p6701 = pneg %p348
      $region86: #{tpu_custom_call.1} parent=83 // pred_check_branch
        %6703 = sbr.rel (%p6701) target = $region88
      $region87: #{tpu_custom_call.1} parent=83 // pred_region
        %s6704 = smul.u32 8, %s26
        %p6705 = scmp.lt.s32.totalorder %s6704, 15
        %s6706 = scalar_select %p6705, %s6704, 15
        %s6707 = smul.addr %s6706, 8
        %s6708 = scalar_lea.vmem %s14, %s6707
      $region88: #{tpu_custom_call.1} parent=83 // pred_fallthru
        _
    $region84: #{tpu_custom_call.1} parent=5 // pred_fallthru
      _
  $region6: #{tpu_custom_call.1} parent=0 // loop_footer
    %s24 = sadd.s32 1, %s20
  $region7: #{tpu_custom_call.1} parent=0 // loop_footer_branch
    %19 = sbr.rel target = $region3
  $region8: #{tpu_custom_call.1} parent=0 // loop_exit
    _

</llo_original>
